<compile_context>
chip_gen: v6e
topology: v6e:2x2x1
jax: 0.10.0
libtpu: 0.0.40
codegen_flags: <defaults>
</compile_context>

<pallas_src>
import functools

import jax
import jax.numpy as jnp
from jax.experimental import pallas as pl
from jax.experimental.pallas import tpu as pltpu
import numpy as np


def stdnet_kernel(x_ref, w1a_ref, w1b_ref, b1_ref, w2_ref, b2_ref, w3_ref, b3_ref,
                  o_ref):
    # x_ref: (2, TB) -- batch in lanes. Standardization already folded into fc1.
    x0 = x_ref[0:1, :]                                              # (1, TB)
    x1 = x_ref[1:2, :]                                              # (1, TB)

    # fc1 (2 -> 256) as two broadcast multiply-adds on the VPU (K=2 would badly
    # underfill the MXU), + ReLU.  Runs in bf16 on v6e/v7x, f32 on v5e (dtype is
    # chosen wrapper-side; the kernel is dtype-agnostic).
    h1 = jnp.maximum(w1a_ref[...] * x0 + w1b_ref[...] * x1 + b1_ref[...], 0.0)

    # dropout(p=0.1): identity at inference (eval mode).
    # TODO(synk): training-mode dropout would need pltpu.prng_seed / prng_random_bits.

    # fc2 (256 -> 128) on the MXU: bf16 operands, f32 accumulation.  (M=128 means a
    # 256-wide MXU can never exceed ~50% fill here; do not try to "optimize" this.)
    h2 = jnp.dot(w2_ref[...], h1.astype(jnp.bfloat16),
                 preferred_element_type=jnp.float32) + b2_ref[...]  # (128, TB)
    h2 = jnp.maximum(h2, 0.0)

    # fc3 (128 -> 1) as elementwise mul + sublane reduction (an N=1 matmul wastes
    # the MXU; the reduce lands on the otherwise-idle XLU).
    o_ref[...] = jnp.sum(h2 * w3_ref[...], axis=0, keepdims=True) + b3_ref[0]


def _resolve_defaults(batch_tile, fc1_bf16):
    """Device-aware defaults: v5e has no bf16 VALU and a 16 MiB scoped-VMEM default."""
    kind = ""
    try:
        kind = jax.devices()[0].device_kind.lower()
    except Exception:  # pragma: no cover - defensive; fall back to v6e/v7x defaults
        pass
    is_v5 = "v5" in kind
    if batch_tile is None:
        batch_tile = 2048 if is_v5 else 4096
    if fc1_bf16 is None:
        fc1_bf16 = not is_v5
    return batch_tile, fc1_bf16


@functools.partial(jax.jit, static_argnames=("batch_tile", "fc1_bf16"))
def _stdnet_forward_impl(x, mean, std, w1, b1, w2, b2, w3, b3, *, batch_tile, fc1_bf16):
    B = x.shape[0]
    num_tiles = pl.cdiv(B, batch_tile)
    Bp = num_tiles * batch_tile
    in_dtype = jnp.bfloat16 if fc1_bf16 else jnp.float32
    itemsize = 2 if fc1_bf16 else 4

    # Batch-in-lanes layout; pad only when B is not a tile multiple (padded columns
    # compute harmless zeros and are sliced off).  Whole function is jitted so this
    # fuses with the surrounding ops rather than being separate HBM round trips.
    x_t = x.T.astype(in_dtype)                                      # (2, B)
    if Bp != B:
        x_t = jnp.pad(x_t, ((0, 0), (0, Bp - B)))

    # Fold standardization into fc1:
    #   ((x - mean)/std) @ w1.T + b1  ==  x @ (w1/std).T + (b1 - w1 @ (mean/std))
    w1f = w1 / std                                                  # (256, 2)
    w1a = w1f[:, 0:1].astype(in_dtype)                              # (256, 1)
    w1b = w1f[:, 1:2].astype(in_dtype)                              # (256, 1)
    b1f = (b1 - w1 @ (mean / std)).reshape(256, 1).astype(in_dtype)

    w2_bf = w2.astype(jnp.bfloat16)                                 # (128, 256)
    b2c = b2.reshape(128, 1).astype(jnp.float32)
    w3t = w3.reshape(128, 1).astype(jnp.float32)                    # (1,128) -> (128,1)
    b3c = b3.reshape(1).astype(jnp.float32)

    # Cost estimate: strongly compute-bound (~67 Kflop/sample, ~12 B/sample I/O).
    flops = 2 * Bp * (2 * 256 + 256 * 128 + 128)
    weight_bytes = (256 * 2 + 256 + 128 + 128 + 1) * 4 + 128 * 256 * 2
    bytes_accessed = 2 * Bp * itemsize + Bp * 4 + weight_bytes

    # Per-tile VMEM: h1 + bf16 h1 copy + h2 + double-buffered x/out + weights/scratch.
    per_tile_bytes = (batch_tile * (256 * itemsize + 256 * 2 + 128 * 4
                                    + 2 * itemsize * 2 + 4 * 2)
                      + 512 * 1024)
    vmem_limit = int(min(max(2 * per_tile_bytes, 20 * 1024 * 1024), 64 * 1024 * 1024))

    out = pl.pallas_call(
        stdnet_kernel,
        out_shape=jax.ShapeDtypeStruct((1, Bp), jnp.float32),
        grid=(num_tiles,),
        in_specs=[
            pl.BlockSpec((2, batch_tile), lambda i: (0, i)),        # x tile (pipelined)
            pl.BlockSpec((256, 1), lambda i: (0, 0)),               # w1 col 0 (resident)
            pl.BlockSpec((256, 1), lambda i: (0, 0)),               # w1 col 1 (resident)
            pl.BlockSpec((256, 1), lambda i: (0, 0)),               # b1
            pl.BlockSpec((128, 256), lambda i: (0, 0)),             # w2 (bf16, resident)
            pl.BlockSpec((128, 1), lambda i: (0, 0)),               # b2
            pl.BlockSpec((128, 1), lambda i: (0, 0)),               # w3
            pl.BlockSpec(memory_space=pltpu.MemorySpace.SMEM),      # b3 scalar
        ],
        out_specs=pl.BlockSpec((1, batch_tile), lambda i: (0, i)),  # lane-dense output
        compiler_params=pltpu.CompilerParams(
            dimension_semantics=("parallel",),                      # megacore on v7x
            vmem_limit_bytes=vmem_limit),
        cost_estimate=pl.CostEstimate(
            flops=flops, transcendentals=0, bytes_accessed=bytes_accessed),
    )(x_t, w1a, w1b, b1f, w2_bf, b2c, w3t, b3c)

    return out[:, :B].T                                             # back to (B, 1)


def stdnet_forward(x, mean, std, w1, b1, w2, b2, w3, b3, *,
                   batch_tile=None, fc1_bf16=None):
    """x: (B, 2); parameters in PyTorch-native layout (w: (out, in), b: (out,)).

    batch_tile / fc1_bf16 default per device generation (v5e: 2048 / f32 fc1;
    v6e & v7x: 4096 / bf16 fc1).  For production batches on v7x make sure
    cdiv(B, batch_tile) >= 2 so both TensorCores get work.
    """
    batch_tile, fc1_bf16 = _resolve_defaults(batch_tile, fc1_bf16)
    return _stdnet_forward_impl(x, mean, std, w1, b1, w2, b2, w3, b3,
                                batch_tile=batch_tile, fc1_bf16=fc1_bf16)


def init_params(key):
    """PyTorch nn.Linear default init, PyTorch-native (out, in) layout."""
    ks = jax.random.split(key, 6)

    def linear(kw, kb, fan_in, fan_out):
        bound = 1.0 / np.sqrt(fan_in)
        w = jax.random.uniform(kw, (fan_out, fan_in), jnp.float32, -bound, bound)
        b = jax.random.uniform(kb, (fan_out,), jnp.float32, -bound, bound)
        return w, b

    w1, b1 = linear(ks[0], ks[1], 2, 256)
    w2, b2 = linear(ks[2], ks[3], 256, 128)
    w3, b3 = linear(ks[4], ks[5], 128, 1)
    return w1, b1, w2, b2, w3, b3


def reference_forward(x, mean, std, w1, b1, w2, b2, w3, b3):
    xs = (x - mean) / std
    h1 = jnp.maximum(xs @ w1.T + b1, 0.0)
    h2 = jnp.maximum(h1 @ w2.T + b2, 0.0)
    return h2 @ w3.T + b3


if __name__ == "__main__":
    key = jax.random.PRNGKey(0)
    k_x, k_x2, k_p = jax.random.split(key, 3)

    mean = jnp.array([1.0, -0.5], dtype=jnp.float32)
    std = jnp.array([2.0, 0.7], dtype=jnp.float32)
    w1, b1, w2, b2, w3, b3 = init_params(k_p)

    # Tolerances loosened vs. pure-f32 because fc2 (and, on v6e/v7x, fc1) use bf16.
    RTOL, ATOL = 5e-2, 8e-2

    # Small demo batch with device-aware defaults (single tile; perf wins appear at large B).
    B = 8
    x = jax.random.normal(k_x, (B, 2), dtype=jnp.float32) * 3.0 + 1.0
    out = jax.block_until_ready(stdnet_forward(x, mean, std, w1, b1, w2, b2, w3, b3))
    ref = reference_forward(x, mean, std, w1, b1, w2, b2, w3, b3)
    assert out.shape == (B, 1), out.shape
    np.testing.assert_allclose(np.asarray(out), np.asarray(ref), rtol=RTOL, atol=ATOL)

    # Exercise the multi-tile + non-divisible-batch path (grid of 2, padded last tile),
    # in both the bf16-fc1 (v6e/v7x) and f32-fc1 (v5e) code paths.
    B2 = 300
    x2 = jax.random.normal(k_x2, (B2, 2), dtype=jnp.float32) * 3.0 + 1.0
    ref2 = reference_forward(x2, mean, std, w1, b1, w2, b2, w3, b3)
    for use_bf16 in (True, False):
        out2 = jax.block_until_ready(
            stdnet_forward(x2, mean, std, w1, b1, w2, b2, w3, b3,
                           batch_tile=256, fc1_bf16=use_bf16))
        assert out2.shape == (B2, 1), out2.shape
        np.testing.assert_allclose(np.asarray(out2), np.asarray(ref2),
                                   rtol=RTOL, atol=ATOL)

    print("KERNEL_OK")
</pallas_src>

<mosaic_0001>
module attributes {stable_mosaic.version = 11 : i64} {
  func.func @stdnet_kernel(%arg0: i32, %arg1: memref<2x4096xbf16, #tpu.memory_space<vmem>>, %arg2: memref<256x1xbf16, #tpu.memory_space<vmem>>, %arg3: memref<256x1xbf16, #tpu.memory_space<vmem>>, %arg4: memref<256x1xbf16, #tpu.memory_space<vmem>>, %arg5: memref<128x256xbf16, #tpu.memory_space<vmem>>, %arg6: memref<128x1xf32, #tpu.memory_space<vmem>>, %arg7: memref<128x1xf32, #tpu.memory_space<vmem>>, %arg8: memref<1xf32, #tpu.memory_space<smem>>, %arg9: memref<1x4096xf32, #tpu.memory_space<vmem>>) attributes {dimension_semantics = [#tpu.dimension_semantics<parallel>], iteration_bounds = array<i64: 1>, scalar_prefetch = 0 : i64, scratch_operands = 0 : i64, tpu.core_type = #tpu.core_type<tc>, window_params = [{transform_indices = @transform_0, window_bounds = array<i64: 2, 4096>}, {pipeline_mode = #tpu.pipeline_mode<synchronous>, transform_indices = @transform_1, window_bounds = array<i64: 256, 1>}, {pipeline_mode = #tpu.pipeline_mode<synchronous>, transform_indices = @transform_2, window_bounds = array<i64: 256, 1>}, {pipeline_mode = #tpu.pipeline_mode<synchronous>, transform_indices = @transform_3, window_bounds = array<i64: 256, 1>}, {pipeline_mode = #tpu.pipeline_mode<synchronous>, transform_indices = @transform_4, window_bounds = array<i64: 128, 256>}, {pipeline_mode = #tpu.pipeline_mode<synchronous>, transform_indices = @transform_5, window_bounds = array<i64: 128, 1>}, {pipeline_mode = #tpu.pipeline_mode<synchronous>, transform_indices = @transform_6, window_bounds = array<i64: 128, 1>}, {transform_indices = @transform_7, window_bounds = array<i64: 1>}, {transform_indices = @transform_8, window_bounds = array<i64: 1, 4096>}]} {
    %c0 = arith.constant 0 : index
    %c0_0 = arith.constant 0 : index
    %0 = vector.load %arg1[%c0, %c0_0] : memref<2x4096xbf16, #tpu.memory_space<vmem>>, vector<1x4096xbf16>
    %c1 = arith.constant 1 : index
    %c0_1 = arith.constant 0 : index
    %1 = vector.load %arg1[%c1, %c0_1] : memref<2x4096xbf16, #tpu.memory_space<vmem>>, vector<1x4096xbf16>
    %c0_2 = arith.constant 0 : index
    %c0_3 = arith.constant 0 : index
    %2 = vector.load %arg2[%c0_2, %c0_3] : memref<256x1xbf16, #tpu.memory_space<vmem>>, vector<256x1xbf16>
    %3 = vector.broadcast %2 : vector<256x1xbf16> to vector<256x4096xbf16>
    %4 = vector.broadcast %0 : vector<1x4096xbf16> to vector<256x4096xbf16>
    %5 = arith.mulf %3, %4 : vector<256x4096xbf16>
    %c0_4 = arith.constant 0 : index
    %c0_5 = arith.constant 0 : index
    %6 = vector.load %arg3[%c0_4, %c0_5] : memref<256x1xbf16, #tpu.memory_space<vmem>>, vector<256x1xbf16>
    %7 = vector.broadcast %6 : vector<256x1xbf16> to vector<256x4096xbf16>
    %8 = vector.broadcast %1 : vector<1x4096xbf16> to vector<256x4096xbf16>
    %9 = arith.mulf %7, %8 : vector<256x4096xbf16>
    %10 = arith.addf %5, %9 : vector<256x4096xbf16>
    %c0_6 = arith.constant 0 : index
    %c0_7 = arith.constant 0 : index
    %11 = vector.load %arg4[%c0_6, %c0_7] : memref<256x1xbf16, #tpu.memory_space<vmem>>, vector<256x1xbf16>
    %12 = vector.broadcast %11 : vector<256x1xbf16> to vector<256x4096xbf16>
    %13 = arith.addf %10, %12 : vector<256x4096xbf16>
    %cst = arith.constant 0.000000e+00 : bf16
    %14 = vector.broadcast %cst : bf16 to vector<256x4096xbf16>
    %15 = arith.maximumf %13, %14 : vector<256x4096xbf16>
    %c0_8 = arith.constant 0 : index
    %c0_9 = arith.constant 0 : index
    %16 = vector.load %arg5[%c0_8, %c0_9] : memref<128x256xbf16, #tpu.memory_space<vmem>>, vector<128x256xbf16>
    %cst_10 = arith.constant dense<0.000000e+00> : vector<128x4096xf32>
    %17 = tpu.matmul %16, %15, %cst_10 {dimension_numbers = #tpu.dot_dimension_numbers<[1], [0], [0], [1], [0, 0, 1, 1], [], []>} : vector<128x256xbf16>, vector<256x4096xbf16>, vector<128x4096xf32> -> vector<128x4096xf32>
    %c0_11 = arith.constant 0 : index
    %c0_12 = arith.constant 0 : index
    %18 = vector.load %arg6[%c0_11, %c0_12] : memref<128x1xf32, #tpu.memory_space<vmem>>, vector<128x1xf32>
    %19 = vector.broadcast %18 : vector<128x1xf32> to vector<128x4096xf32>
    %20 = arith.addf %17, %19 : vector<128x4096xf32>
    %cst_13 = arith.constant 0.000000e+00 : f32
    %21 = vector.broadcast %cst_13 : f32 to vector<128x4096xf32>
    %22 = arith.maximumf %20, %21 : vector<128x4096xf32>
    %c0_14 = arith.constant 0 : index
    %c0_15 = arith.constant 0 : index
    %23 = vector.load %arg7[%c0_14, %c0_15] : memref<128x1xf32, #tpu.memory_space<vmem>>, vector<128x1xf32>
    %24 = vector.broadcast %23 : vector<128x1xf32> to vector<128x4096xf32>
    %25 = arith.mulf %22, %24 : vector<128x4096xf32>
    %cst_16 = arith.constant dense<0.000000e+00> : vector<4096xf32>
    %26 = vector.multi_reduction <add>, %25, %cst_16 [0] : vector<128x4096xf32> to vector<4096xf32>
    %27 = vector.shape_cast %26 : vector<4096xf32> to vector<1x4096xf32>
    %c0_17 = arith.constant 0 : index
    %28 = memref.load %arg8[%c0_17] : memref<1xf32, #tpu.memory_space<smem>>
    %29 = vector.broadcast %28 : f32 to vector<1x4096xf32>
    %30 = arith.addf %27, %29 : vector<1x4096xf32>
    %c0_18 = arith.constant 0 : index
    %c0_19 = arith.constant 0 : index
    %31 = vector.load %arg9[%c0_18, %c0_19] : memref<1x4096xf32, #tpu.memory_space<vmem>>, vector<1x4096xf32>
    tpu.vector_store %arg9[%c0_18, %c0_19], %30 {strides = array<i32>} : memref<1x4096xf32, #tpu.memory_space<vmem>>, vector<1x4096xf32>,
    return
  }
  func.func @transform_0(%arg0: i32) -> (i32, i32) {
    %c0_i32 = arith.constant 0 : i32
    %c0_i32_0 = arith.constant 0 : i32
    return %c0_i32, %arg0 : i32, i32
  }
  func.func @transform_1(%arg0: i32) -> (i32, i32) {
    %c0_i32 = arith.constant 0 : i32
    %c0_i32_0 = arith.constant 0 : i32
    %c0_i32_1 = arith.constant 0 : i32
    return %c0_i32, %c0_i32_0 : i32, i32
  }
  func.func @transform_2(%arg0: i32) -> (i32, i32) {
    %c0_i32 = arith.constant 0 : i32
    %c0_i32_0 = arith.constant 0 : i32
    %c0_i32_1 = arith.constant 0 : i32
    return %c0_i32, %c0_i32_0 : i32, i32
  }
  func.func @transform_3(%arg0: i32) -> (i32, i32) {
    %c0_i32 = arith.constant 0 : i32
    %c0_i32_0 = arith.constant 0 : i32
    %c0_i32_1 = arith.constant 0 : i32
    return %c0_i32, %c0_i32_0 : i32, i32
  }
  func.func @transform_4(%arg0: i32) -> (i32, i32) {
    %c0_i32 = arith.constant 0 : i32
    %c0_i32_0 = arith.constant 0 : i32
    %c0_i32_1 = arith.constant 0 : i32
    return %c0_i32, %c0_i32_0 : i32, i32
  }
  func.func @transform_5(%arg0: i32) -> (i32, i32) {
    %c0_i32 = arith.constant 0 : i32
    %c0_i32_0 = arith.constant 0 : i32
    %c0_i32_1 = arith.constant 0 : i32
    return %c0_i32, %c0_i32_0 : i32, i32
  }
  func.func @transform_6(%arg0: i32) -> (i32, i32) {
    %c0_i32 = arith.constant 0 : i32
    %c0_i32_0 = arith.constant 0 : i32
    %c0_i32_1 = arith.constant 0 : i32
    return %c0_i32, %c0_i32_0 : i32, i32
  }
  func.func @transform_7(%arg0: i32) -> i32 {
    %c0_i32 = arith.constant 0 : i32
    %c0_i32_0 = arith.constant 0 : i32
    return %c0_i32 : i32
  }
  func.func @transform_8(%arg0: i32) -> (i32, i32) {
    %c0_i32 = arith.constant 0 : i32
    %c0_i32_0 = arith.constant 0 : i32
    return %c0_i32, %arg0 : i32, i32
  }
}

</mosaic_0001>

<llo_original>
// kernel: div.9
$region0: #{div.9}
  #allocation0 [shape = 's32[1]{0}', space=sflag, size = 0x4, scoped, tag = 'scoped memory for div.9']
  %s0 = inlined_call_operand.vmem [shape: f32[2], index: 0, kind: input, shape index: {}]
  %s1 = inlined_call_operand.vmem [shape: f32[2], index: 1, kind: input, shape index: {}]
  %s2 = inlined_call_operand.vmem [shape: f32[2], index: 2, kind: output, shape index: {}]
  %v3 = vld [vmem:[%s0] sm:$0x1]
  %v4 = vld [vmem:[%s1] sm:$0x1]
  %5 = xla_tuple %v3, %v4
  %6 = xla_tuple %5
  %v7 = vrcp.pop %v4
  %v8 = vmul.f32 %v3, %v7
  %9 = xla_tuple %v8
  %10 = vst [vmem:[%s2] sm:$0x1] %v8

// kernel: _stdnet_forward_impl.1
$region0: #{_stdnet_forward_impl.1}
  #allocation0 [shape = 'u32[]', space=smem, size = 0x4, offset = 0x4, fixed_abs, tag = 'smem constant byte address 0x4 - core index']
  #allocation1 [shape = 'u32[144,128]{1,0:T(1,128)}', space=vmem, size = 0x12000, scoped, tag = 'internal scratch']
  #allocation2 [shape = 'f32[1]{0:T(128)S(6)}', space=smem, size = 0x200, scoped, tag = 'scoped memory for _stdnet_forward_impl.1']
  %s0 = inlined_call_operand.vmem [shape: bf16[2,4096], index: 0, kind: input, shape index: {}]
  %s1 = inlined_call_operand.vmem [shape: bf16[256,1], index: 1, kind: input, shape index: {}]
  %s2 = inlined_call_operand.vmem [shape: bf16[256,1], index: 2, kind: input, shape index: {}]
  %s3 = inlined_call_operand.vmem [shape: bf16[256,1], index: 3, kind: input, shape index: {}]
  %s4 = inlined_call_operand.vmem [shape: bf16[128,256], index: 4, kind: input, shape index: {}]
  %s5 = inlined_call_operand.vmem [shape: f32[128,1], index: 5, kind: input, shape index: {}]
  %s6 = inlined_call_operand.vmem [shape: f32[128,1], index: 6, kind: input, shape index: {}]
  %s7 = inlined_call_operand.<no memory space> [shape: f32[1], index: 7, kind: input, shape index: {}]
  %s8 = inlined_call_operand.vmem [shape: f32[1,4096], index: 8, kind: output, shape index: {}]
  %s9 = sld [smem:[#allocation0]]
  $region42: #{_stdnet_forward_impl.1} parent=0
    _
  %s11 = ssub.s32 1, %s9
  %s12 = scalar_select 0, %s11, %s9
  %13 = sst [smem:[#allocation2]] %s7
  // Predicated region
  $region2: #{_stdnet_forward_impl.1} parent=0 // pred_check
    _
  $region3: #{_stdnet_forward_impl.1} parent=0 // pred_check_branch
    %15 = sbr.rel (0) target = $region5
  $region4: #{_stdnet_forward_impl.1} parent=0 // pred_region
    _
  $region5: #{_stdnet_forward_impl.1} parent=0 // pred_fallthru
    _
  // Predicated region
  $region6: #{_stdnet_forward_impl.1} parent=0 // pred_check
    _
  $region7: #{_stdnet_forward_impl.1} parent=0 // pred_check_branch
    %17 = sbr.rel (0) target = $region9
  $region8: #{_stdnet_forward_impl.1} parent=0 // pred_region
    _
  $region9: #{_stdnet_forward_impl.1} parent=0 // pred_fallthru
    _
  // Predicated region
  $region10: #{_stdnet_forward_impl.1} parent=0 // pred_check
    _
  $region11: #{_stdnet_forward_impl.1} parent=0 // pred_check_branch
    %19 = sbr.rel (0) target = $region13
  $region12: #{_stdnet_forward_impl.1} parent=0 // pred_region
    _
  $region13: #{_stdnet_forward_impl.1} parent=0 // pred_fallthru
    _
  // Predicated region
  $region14: #{_stdnet_forward_impl.1} parent=0 // pred_check
    _
  $region15: #{_stdnet_forward_impl.1} parent=0 // pred_check_branch
    %21 = sbr.rel (0) target = $region17
  $region16: #{_stdnet_forward_impl.1} parent=0 // pred_region
    _
  $region17: #{_stdnet_forward_impl.1} parent=0 // pred_fallthru
    _
  // Predicated region
  $region18: #{_stdnet_forward_impl.1} parent=0 // pred_check
    _
  $region19: #{_stdnet_forward_impl.1} parent=0 // pred_check_branch
    %23 = sbr.rel (0) target = $region21
  $region20: #{_stdnet_forward_impl.1} parent=0 // pred_region
    _
  $region21: #{_stdnet_forward_impl.1} parent=0 // pred_fallthru
    _
  // Predicated region
  $region22: #{_stdnet_forward_impl.1} parent=0 // pred_check
    _
  $region23: #{_stdnet_forward_impl.1} parent=0 // pred_check_branch
    %25 = sbr.rel (0) target = $region25
  $region24: #{_stdnet_forward_impl.1} parent=0 // pred_region
    _
  $region25: #{_stdnet_forward_impl.1} parent=0 // pred_fallthru
    _
  // Predicated region
  $region26: #{_stdnet_forward_impl.1} parent=0 // pred_check
    _
  $region27: #{_stdnet_forward_impl.1} parent=0 // pred_check_branch
    %27 = sbr.rel (0) target = $region29
  $region28: #{_stdnet_forward_impl.1} parent=0 // pred_region
    _
  $region29: #{_stdnet_forward_impl.1} parent=0 // pred_fallthru
    _
  // Predicated region
  $region30: #{_stdnet_forward_impl.1} parent=0 // pred_check
    _
  $region31: #{_stdnet_forward_impl.1} parent=0 // pred_check_branch
    %29 = sbr.rel (0) target = $region33
  $region32: #{_stdnet_forward_impl.1} parent=0 // pred_region
    _
  $region33: #{_stdnet_forward_impl.1} parent=0 // pred_fallthru
    _
  %v31 = vld [vmem:[%s0] sm:$0xff]
  %v32 = vld [vmem:[%s0 + $0x8] sm:$0xff]
  %v33 = vld [vmem:[%s0 + $0x10] sm:$0xff]
  %v34 = vld [vmem:[%s0 + $0x18] sm:$0xff]
  %v35 = vld [vmem:[%s1] sm:$0xf]
  %v36 = vld [vmem:[%s1 + $0x4] sm:$0xf]
  %v37 = vld [vmem:[%s1 + $0x8] sm:$0xf]
  %v38 = vld [vmem:[%s1 + $0xc] sm:$0xf]
  %v39 = vld [vmem:[%s1 + $0x10] sm:$0xf]
  %v40 = vld [vmem:[%s1 + $0x14] sm:$0xf]
  %v41 = vld [vmem:[%s1 + $0x18] sm:$0xf]
  %v42 = vld [vmem:[%s1 + $0x1c] sm:$0xf]
  %v43 = vld [vmem:[%s1 + $0x20] sm:$0xf]
  %v44 = vld [vmem:[%s1 + $0x24] sm:$0xf]
  %v45 = vld [vmem:[%s1 + $0x28] sm:$0xf]
  %v46 = vld [vmem:[%s1 + $0x2c] sm:$0xf]
  %v47 = vld [vmem:[%s1 + $0x30] sm:$0xf]
  %v48 = vld [vmem:[%s1 + $0x34] sm:$0xf]
  %v49 = vld [vmem:[%s1 + $0x38] sm:$0xf]
  %v50 = vld [vmem:[%s1 + $0x3c] sm:$0xf]
  %v51 = vld [vmem:[%s1 + $0x40] sm:$0xf]
  %v52 = vld [vmem:[%s1 + $0x44] sm:$0xf]
  %v53 = vld [vmem:[%s1 + $0x48] sm:$0xf]
  %v54 = vld [vmem:[%s1 + $0x4c] sm:$0xf]
  %v55 = vld [vmem:[%s1 + $0x50] sm:$0xf]
  %v56 = vld [vmem:[%s1 + $0x54] sm:$0xf]
  %v57 = vld [vmem:[%s1 + $0x58] sm:$0xf]
  %v58 = vld [vmem:[%s1 + $0x5c] sm:$0xf]
  %v59 = vld [vmem:[%s1 + $0x60] sm:$0xf]
  %v60 = vld [vmem:[%s1 + $0x64] sm:$0xf]
  %v61 = vld [vmem:[%s1 + $0x68] sm:$0xf]
  %v62 = vld [vmem:[%s1 + $0x6c] sm:$0xf]
  %v63 = vld [vmem:[%s1 + $0x70] sm:$0xf]
  %v64 = vld [vmem:[%s1 + $0x74] sm:$0xf]
  %v65 = vld [vmem:[%s1 + $0x78] sm:$0xf]
  %v66 = vld [vmem:[%s1 + $0x7c] sm:$0xf]
  %68 = vset.pattern.permute.xlu0 0
  %69 = vperm.xlu0 %68, %v35
  %v70 = vpop.permute.xlu0 %69
  %v73 = vunpack.c.l.s4 839922192
  %v74 = vunpack.c.0.s8 %v73
  %v75 = vlaneseq
  %v76 = vshrl.u32 %v75, 7
  %v77 = vsub.s32 %v74, %v76
  %v78 = vrot.slane %v70, %v77
  %80 = vset.pattern.permute.xlu0 0
  %81 = vperm.xlu0 %80, %v36
  %v82 = vpop.permute.xlu0 %81
  %v85 = vunpack.c.l.s4 839922192
  %v86 = vunpack.c.0.s8 %v85
  %v87 = vlaneseq
  %v88 = vshrl.u32 %v87, 7
  %v89 = vsub.s32 %v86, %v88
  %v90 = vrot.slane %v82, %v89
  %92 = vset.pattern.permute.xlu0 0
  %93 = vperm.xlu0 %92, %v37
  %v94 = vpop.permute.xlu0 %93
  %v97 = vunpack.c.l.s4 839922192
  %v98 = vunpack.c.0.s8 %v97
  %v99 = vlaneseq
  %v100 = vshrl.u32 %v99, 7
  %v101 = vsub.s32 %v98, %v100
  %v102 = vrot.slane %v94, %v101
  %104 = vset.pattern.permute.xlu0 0
  %105 = vperm.xlu0 %104, %v38
  %v106 = vpop.permute.xlu0 %105
  %v109 = vunpack.c.l.s4 839922192
  %v110 = vunpack.c.0.s8 %v109
  %v111 = vlaneseq
  %v112 = vshrl.u32 %v111, 7
  %v113 = vsub.s32 %v110, %v112
  %v114 = vrot.slane %v106, %v113
  %116 = vset.pattern.permute.xlu0 0
  %117 = vperm.xlu0 %116, %v39
  %v118 = vpop.permute.xlu0 %117
  %v121 = vunpack.c.l.s4 839922192
  %v122 = vunpack.c.0.s8 %v121
  %v123 = vlaneseq
  %v124 = vshrl.u32 %v123, 7
  %v125 = vsub.s32 %v122, %v124
  %v126 = vrot.slane %v118, %v125
  %128 = vset.pattern.permute.xlu0 0
  %129 = vperm.xlu0 %128, %v40
  %v130 = vpop.permute.xlu0 %129
  %v133 = vunpack.c.l.s4 839922192
  %v134 = vunpack.c.0.s8 %v133
  %v135 = vlaneseq
  %v136 = vshrl.u32 %v135, 7
  %v137 = vsub.s32 %v134, %v136
  %v138 = vrot.slane %v130, %v137
  %140 = vset.pattern.permute.xlu0 0
  %141 = vperm.xlu0 %140, %v41
  %v142 = vpop.permute.xlu0 %141
  %v145 = vunpack.c.l.s4 839922192
  %v146 = vunpack.c.0.s8 %v145
  %v147 = vlaneseq
  %v148 = vshrl.u32 %v147, 7
  %v149 = vsub.s32 %v146, %v148
  %v150 = vrot.slane %v142, %v149
  %152 = vset.pattern.permute.xlu0 0
  %153 = vperm.xlu0 %152, %v42
  %v154 = vpop.permute.xlu0 %153
  %v157 = vunpack.c.l.s4 839922192
  %v158 = vunpack.c.0.s8 %v157
  %v159 = vlaneseq
  %v160 = vshrl.u32 %v159, 7
  %v161 = vsub.s32 %v158, %v160
  %v162 = vrot.slane %v154, %v161
  %164 = vset.pattern.permute.xlu0 0
  %165 = vperm.xlu0 %164, %v43
  %v166 = vpop.permute.xlu0 %165
  %v169 = vunpack.c.l.s4 839922192
  %v170 = vunpack.c.0.s8 %v169
  %v171 = vlaneseq
  %v172 = vshrl.u32 %v171, 7
  %v173 = vsub.s32 %v170, %v172
  %v174 = vrot.slane %v166, %v173
  %176 = vset.pattern.permute.xlu0 0
  %177 = vperm.xlu0 %176, %v44
  %v178 = vpop.permute.xlu0 %177
  %v181 = vunpack.c.l.s4 839922192
  %v182 = vunpack.c.0.s8 %v181
  %v183 = vlaneseq
  %v184 = vshrl.u32 %v183, 7
  %v185 = vsub.s32 %v182, %v184
  %v186 = vrot.slane %v178, %v185
  %188 = vset.pattern.permute.xlu0 0
  %189 = vperm.xlu0 %188, %v45
  %v190 = vpop.permute.xlu0 %189
  %v193 = vunpack.c.l.s4 839922192
  %v194 = vunpack.c.0.s8 %v193
  %v195 = vlaneseq
  %v196 = vshrl.u32 %v195, 7
  %v197 = vsub.s32 %v194, %v196
  %v198 = vrot.slane %v190, %v197
  %200 = vset.pattern.permute.xlu0 0
  %201 = vperm.xlu0 %200, %v46
  %v202 = vpop.permute.xlu0 %201
  %v205 = vunpack.c.l.s4 839922192
  %v206 = vunpack.c.0.s8 %v205
  %v207 = vlaneseq
  %v208 = vshrl.u32 %v207, 7
  %v209 = vsub.s32 %v206, %v208
  %v210 = vrot.slane %v202, %v209
  %212 = vset.pattern.permute.xlu0 0
  %213 = vperm.xlu0 %212, %v47
  %v214 = vpop.permute.xlu0 %213
  %v217 = vunpack.c.l.s4 839922192
  %v218 = vunpack.c.0.s8 %v217
  %v219 = vlaneseq
  %v220 = vshrl.u32 %v219, 7
  %v221 = vsub.s32 %v218, %v220
  %v222 = vrot.slane %v214, %v221
  %224 = vset.pattern.permute.xlu0 0
  %225 = vperm.xlu0 %224, %v48
  %v226 = vpop.permute.xlu0 %225
  %v229 = vunpack.c.l.s4 839922192
  %v230 = vunpack.c.0.s8 %v229
  %v231 = vlaneseq
  %v232 = vshrl.u32 %v231, 7
  %v233 = vsub.s32 %v230, %v232
  %v234 = vrot.slane %v226, %v233
  %236 = vset.pattern.permute.xlu0 0
  %237 = vperm.xlu0 %236, %v49
  %v238 = vpop.permute.xlu0 %237
  %v241 = vunpack.c.l.s4 839922192
  %v242 = vunpack.c.0.s8 %v241
  %v243 = vlaneseq
  %v244 = vshrl.u32 %v243, 7
  %v245 = vsub.s32 %v242, %v244
  %v246 = vrot.slane %v238, %v245
  %248 = vset.pattern.permute.xlu0 0
  %249 = vperm.xlu0 %248, %v50
  %v250 = vpop.permute.xlu0 %249
  %v253 = vunpack.c.l.s4 839922192
  %v254 = vunpack.c.0.s8 %v253
  %v255 = vlaneseq
  %v256 = vshrl.u32 %v255, 7
  %v257 = vsub.s32 %v254, %v256
  %v258 = vrot.slane %v250, %v257
  %260 = vset.pattern.permute.xlu0 0
  %261 = vperm.xlu0 %260, %v51
  %v262 = vpop.permute.xlu0 %261
  %v265 = vunpack.c.l.s4 839922192
  %v266 = vunpack.c.0.s8 %v265
  %v267 = vlaneseq
  %v268 = vshrl.u32 %v267, 7
  %v269 = vsub.s32 %v266, %v268
  %v270 = vrot.slane %v262, %v269
  %272 = vset.pattern.permute.xlu0 0
  %273 = vperm.xlu0 %272, %v52
  %v274 = vpop.permute.xlu0 %273
  %v277 = vunpack.c.l.s4 839922192
  %v278 = vunpack.c.0.s8 %v277
  %v279 = vlaneseq
  %v280 = vshrl.u32 %v279, 7
  %v281 = vsub.s32 %v278, %v280
  %v282 = vrot.slane %v274, %v281
  %284 = vset.pattern.permute.xlu0 0
  %285 = vperm.xlu0 %284, %v53
  %v286 = vpop.permute.xlu0 %285
  %v289 = vunpack.c.l.s4 839922192
  %v290 = vunpack.c.0.s8 %v289
  %v291 = vlaneseq
  %v292 = vshrl.u32 %v291, 7
  %v293 = vsub.s32 %v290, %v292
  %v294 = vrot.slane %v286, %v293
  %296 = vset.pattern.permute.xlu0 0
  %297 = vperm.xlu0 %296, %v54
  %v298 = vpop.permute.xlu0 %297
  %v301 = vunpack.c.l.s4 839922192
  %v302 = vunpack.c.0.s8 %v301
  %v303 = vlaneseq
  %v304 = vshrl.u32 %v303, 7
  %v305 = vsub.s32 %v302, %v304
  %v306 = vrot.slane %v298, %v305
  %308 = vset.pattern.permute.xlu0 0
  %309 = vperm.xlu0 %308, %v55
  %v310 = vpop.permute.xlu0 %309
  %v313 = vunpack.c.l.s4 839922192
  %v314 = vunpack.c.0.s8 %v313
  %v315 = vlaneseq
  %v316 = vshrl.u32 %v315, 7
  %v317 = vsub.s32 %v314, %v316
  %v318 = vrot.slane %v310, %v317
  %320 = vset.pattern.permute.xlu0 0
  %321 = vperm.xlu0 %320, %v56
  %v322 = vpop.permute.xlu0 %321
  %v325 = vunpack.c.l.s4 839922192
  %v326 = vunpack.c.0.s8 %v325
  %v327 = vlaneseq
  %v328 = vshrl.u32 %v327, 7
  %v329 = vsub.s32 %v326, %v328
  %v330 = vrot.slane %v322, %v329
  %332 = vset.pattern.permute.xlu0 0
  %333 = vperm.xlu0 %332, %v57
  %v334 = vpop.permute.xlu0 %333
  %v337 = vunpack.c.l.s4 839922192
  %v338 = vunpack.c.0.s8 %v337
  %v339 = vlaneseq
  %v340 = vshrl.u32 %v339, 7
  %v341 = vsub.s32 %v338, %v340
  %v342 = vrot.slane %v334, %v341
  %344 = vset.pattern.permute.xlu0 0
  %345 = vperm.xlu0 %344, %v58
  %v346 = vpop.permute.xlu0 %345
  %v349 = vunpack.c.l.s4 839922192
  %v350 = vunpack.c.0.s8 %v349
  %v351 = vlaneseq
  %v352 = vshrl.u32 %v351, 7
  %v353 = vsub.s32 %v350, %v352
  %v354 = vrot.slane %v346, %v353
  %356 = vset.pattern.permute.xlu0 0
  %357 = vperm.xlu0 %356, %v59
  %v358 = vpop.permute.xlu0 %357
  %v361 = vunpack.c.l.s4 839922192
  %v362 = vunpack.c.0.s8 %v361
  %v363 = vlaneseq
  %v364 = vshrl.u32 %v363, 7
  %v365 = vsub.s32 %v362, %v364
  %v366 = vrot.slane %v358, %v365
  %368 = vset.pattern.permute.xlu0 0
  %369 = vperm.xlu0 %368, %v60
  %v370 = vpop.permute.xlu0 %369
  %v373 = vunpack.c.l.s4 839922192
  %v374 = vunpack.c.0.s8 %v373
  %v375 = vlaneseq
  %v376 = vshrl.u32 %v375, 7
  %v377 = vsub.s32 %v374, %v376
  %v378 = vrot.slane %v370, %v377
  %380 = vset.pattern.permute.xlu0 0
  %381 = vperm.xlu0 %380, %v61
  %v382 = vpop.permute.xlu0 %381
  %v385 = vunpack.c.l.s4 839922192
  %v386 = vunpack.c.0.s8 %v385
  %v387 = vlaneseq
  %v388 = vshrl.u32 %v387, 7
  %v389 = vsub.s32 %v386, %v388
  %v390 = vrot.slane %v382, %v389
  %392 = vset.pattern.permute.xlu0 0
  %393 = vperm.xlu0 %392, %v62
  %v394 = vpop.permute.xlu0 %393
  %v397 = vunpack.c.l.s4 839922192
  %v398 = vunpack.c.0.s8 %v397
  %v399 = vlaneseq
  %v400 = vshrl.u32 %v399, 7
  %v401 = vsub.s32 %v398, %v400
  %v402 = vrot.slane %v394, %v401
  %404 = vset.pattern.permute.xlu0 0
  %405 = vperm.xlu0 %404, %v63
  %v406 = vpop.permute.xlu0 %405
  %v409 = vunpack.c.l.s4 839922192
  %v410 = vunpack.c.0.s8 %v409
  %v411 = vlaneseq
  %v412 = vshrl.u32 %v411, 7
  %v413 = vsub.s32 %v410, %v412
  %v414 = vrot.slane %v406, %v413
  %416 = vset.pattern.permute.xlu0 0
  %417 = vperm.xlu0 %416, %v64
  %v418 = vpop.permute.xlu0 %417
  %v421 = vunpack.c.l.s4 839922192
  %v422 = vunpack.c.0.s8 %v421
  %v423 = vlaneseq
  %v424 = vshrl.u32 %v423, 7
  %v425 = vsub.s32 %v422, %v424
  %v426 = vrot.slane %v418, %v425
  %428 = vset.pattern.permute.xlu0 0
  %429 = vperm.xlu0 %428, %v65
  %v430 = vpop.permute.xlu0 %429
  %v433 = vunpack.c.l.s4 839922192
  %v434 = vunpack.c.0.s8 %v433
  %v435 = vlaneseq
  %v436 = vshrl.u32 %v435, 7
  %v437 = vsub.s32 %v434, %v436
  %v438 = vrot.slane %v430, %v437
  %440 = vset.pattern.permute.xlu0 0
  %441 = vperm.xlu0 %440, %v66
  %v442 = vpop.permute.xlu0 %441
  %v445 = vunpack.c.l.s4 839922192
  %v446 = vunpack.c.0.s8 %v445
  %v447 = vlaneseq
  %v448 = vshrl.u32 %v447, 7
  %v449 = vsub.s32 %v446, %v448
  %v450 = vrot.slane %v442, %v449
  %v455 = vcombine.high %v31, %v31
  %v457 = vunpack.c.l.s4 1966171168
  %v458 = vunpack.c.0.s8 %v457
  %v459 = vlaneseq
  %v460 = vshrl.u32 %v459, 7
  %v461 = vsub.s32 %v458, %v460
  %v462 = vrot.slane %v31, %v461
  %v464 = vunpack.c.l.s4 1966171168
  %v465 = vunpack.c.0.s8 %v464
  %v466 = vlaneseq
  %v467 = vshrl.u32 %v466, 7
  %v468 = vsub.s32 %v465, %v467
  %v469 = vrot.slane %v455, %v468
  %v470 = vcombine.high %v462, %v462
  %v471 = vcombine.high %v469, %v469
  %v473 = vunpack.c.l.s4 1966171168
  %v474 = vunpack.c.0.s8 %v473
  %v475 = vlaneseq
  %v476 = vshrl.u32 %v475, 7
  %v477 = vsub.s32 %v474, %v476
  %v478 = vrot.slane %v462, %v477
  %v480 = vunpack.c.l.s4 1966171168
  %v481 = vunpack.c.0.s8 %v480
  %v482 = vlaneseq
  %v483 = vshrl.u32 %v482, 7
  %v484 = vsub.s32 %v481, %v483
  %v485 = vrot.slane %v469, %v484
  %v487 = vunpack.c.l.s4 1966171168
  %v488 = vunpack.c.0.s8 %v487
  %v489 = vlaneseq
  %v490 = vshrl.u32 %v489, 7
  %v491 = vsub.s32 %v488, %v490
  %v492 = vrot.slane %v470, %v491
  %v494 = vunpack.c.l.s4 1966171168
  %v495 = vunpack.c.0.s8 %v494
  %v496 = vlaneseq
  %v497 = vshrl.u32 %v496, 7
  %v498 = vsub.s32 %v495, %v497
  %v499 = vrot.slane %v471, %v498
  %v500 = vcombine.high %v478, %v478
  %v501 = vcombine.high %v485, %v485
  %v502 = vcombine.high %v492, %v492
  %v503 = vcombine.high %v499, %v499
  %v504 = vcombine.high %v32, %v32
  %v506 = vunpack.c.l.s4 1966171168
  %v507 = vunpack.c.0.s8 %v506
  %v508 = vlaneseq
  %v509 = vshrl.u32 %v508, 7
  %v510 = vsub.s32 %v507, %v509
  %v511 = vrot.slane %v32, %v510
  %v513 = vunpack.c.l.s4 1966171168
  %v514 = vunpack.c.0.s8 %v513
  %v515 = vlaneseq
  %v516 = vshrl.u32 %v515, 7
  %v517 = vsub.s32 %v514, %v516
  %v518 = vrot.slane %v504, %v517
  %v519 = vcombine.high %v511, %v511
  %v520 = vcombine.high %v518, %v518
  %v522 = vunpack.c.l.s4 1966171168
  %v523 = vunpack.c.0.s8 %v522
  %v524 = vlaneseq
  %v525 = vshrl.u32 %v524, 7
  %v526 = vsub.s32 %v523, %v525
  %v527 = vrot.slane %v511, %v526
  %v529 = vunpack.c.l.s4 1966171168
  %v530 = vunpack.c.0.s8 %v529
  %v531 = vlaneseq
  %v532 = vshrl.u32 %v531, 7
  %v533 = vsub.s32 %v530, %v532
  %v534 = vrot.slane %v518, %v533
  %v536 = vunpack.c.l.s4 1966171168
  %v537 = vunpack.c.0.s8 %v536
  %v538 = vlaneseq
  %v539 = vshrl.u32 %v538, 7
  %v540 = vsub.s32 %v537, %v539
  %v541 = vrot.slane %v519, %v540
  %v543 = vunpack.c.l.s4 1966171168
  %v544 = vunpack.c.0.s8 %v543
  %v545 = vlaneseq
  %v546 = vshrl.u32 %v545, 7
  %v547 = vsub.s32 %v544, %v546
  %v548 = vrot.slane %v520, %v547
  %v549 = vcombine.high %v527, %v527
  %v550 = vcombine.high %v534, %v534
  %v551 = vcombine.high %v541, %v541
  %v552 = vcombine.high %v548, %v548
  %v553 = vcombine.high %v33, %v33
  %v555 = vunpack.c.l.s4 1966171168
  %v556 = vunpack.c.0.s8 %v555
  %v557 = vlaneseq
  %v558 = vshrl.u32 %v557, 7
  %v559 = vsub.s32 %v556, %v558
  %v560 = vrot.slane %v33, %v559
  %v562 = vunpack.c.l.s4 1966171168
  %v563 = vunpack.c.0.s8 %v562
  %v564 = vlaneseq
  %v565 = vshrl.u32 %v564, 7
  %v566 = vsub.s32 %v563, %v565
  %v567 = vrot.slane %v553, %v566
  %v568 = vcombine.high %v560, %v560
  %v569 = vcombine.high %v567, %v567
  %v571 = vunpack.c.l.s4 1966171168
  %v572 = vunpack.c.0.s8 %v571
  %v573 = vlaneseq
  %v574 = vshrl.u32 %v573, 7
  %v575 = vsub.s32 %v572, %v574
  %v576 = vrot.slane %v560, %v575
  %v578 = vunpack.c.l.s4 1966171168
  %v579 = vunpack.c.0.s8 %v578
  %v580 = vlaneseq
  %v581 = vshrl.u32 %v580, 7
  %v582 = vsub.s32 %v579, %v581
  %v583 = vrot.slane %v567, %v582
  %v585 = vunpack.c.l.s4 1966171168
  %v586 = vunpack.c.0.s8 %v585
  %v587 = vlaneseq
  %v588 = vshrl.u32 %v587, 7
  %v589 = vsub.s32 %v586, %v588
  %v590 = vrot.slane %v568, %v589
  %v592 = vunpack.c.l.s4 1966171168
  %v593 = vunpack.c.0.s8 %v592
  %v594 = vlaneseq
  %v595 = vshrl.u32 %v594, 7
  %v596 = vsub.s32 %v593, %v595
  %v597 = vrot.slane %v569, %v596
  %v598 = vcombine.high %v576, %v576
  %v599 = vcombine.high %v583, %v583
  %v600 = vcombine.high %v590, %v590
  %v601 = vcombine.high %v597, %v597
  %v602 = vcombine.high %v34, %v34
  %v604 = vunpack.c.l.s4 1966171168
  %v605 = vunpack.c.0.s8 %v604
  %v606 = vlaneseq
  %v607 = vshrl.u32 %v606, 7
  %v608 = vsub.s32 %v605, %v607
  %v609 = vrot.slane %v34, %v608
  %v611 = vunpack.c.l.s4 1966171168
  %v612 = vunpack.c.0.s8 %v611
  %v613 = vlaneseq
  %v614 = vshrl.u32 %v613, 7
  %v615 = vsub.s32 %v612, %v614
  %v616 = vrot.slane %v602, %v615
  %v617 = vcombine.high %v609, %v609
  %v618 = vcombine.high %v616, %v616
  %v620 = vunpack.c.l.s4 1966171168
  %v621 = vunpack.c.0.s8 %v620
  %v622 = vlaneseq
  %v623 = vshrl.u32 %v622, 7
  %v624 = vsub.s32 %v621, %v623
  %v625 = vrot.slane %v609, %v624
  %v627 = vunpack.c.l.s4 1966171168
  %v628 = vunpack.c.0.s8 %v627
  %v629 = vlaneseq
  %v630 = vshrl.u32 %v629, 7
  %v631 = vsub.s32 %v628, %v630
  %v632 = vrot.slane %v616, %v631
  %v634 = vunpack.c.l.s4 1966171168
  %v635 = vunpack.c.0.s8 %v634
  %v636 = vlaneseq
  %v637 = vshrl.u32 %v636, 7
  %v638 = vsub.s32 %v635, %v637
  %v639 = vrot.slane %v617, %v638
  %v641 = vunpack.c.l.s4 1966171168
  %v642 = vunpack.c.0.s8 %v641
  %v643 = vlaneseq
  %v644 = vshrl.u32 %v643, 7
  %v645 = vsub.s32 %v642, %v644
  %v646 = vrot.slane %v618, %v645
  %v647 = vcombine.high %v625, %v625
  %v648 = vcombine.high %v632, %v632
  %v649 = vcombine.high %v639, %v639
  %v650 = vcombine.high %v646, %v646
  %v652 = vpack.i.b16 %v478, %v478
  %v654 = vlaneseq
  %v655 = vshrl.u32 %v654, 7
  %v656 = vsub.s32 0, %v655
  %v657 = vrot.slane %v652, %v656
  %v659 = vpack.i.b16 %v492, %v492
  %v661 = vlaneseq
  %v662 = vshrl.u32 %v661, 7
  %v663 = vsub.s32 0, %v662
  %v664 = vrot.slane %v659, %v663
  %v666 = vpack.i.b16 %v500, %v500
  %v668 = vlaneseq
  %v669 = vshrl.u32 %v668, 7
  %v670 = vsub.s32 0, %v669
  %v671 = vrot.slane %v666, %v670
  %v673 = vpack.i.b16 %v502, %v502
  %v675 = vlaneseq
  %v676 = vshrl.u32 %v675, 7
  %v677 = vsub.s32 0, %v676
  %v678 = vrot.slane %v673, %v677
  %v680 = vpack.i.b16 %v485, %v485
  %v682 = vlaneseq
  %v683 = vshrl.u32 %v682, 7
  %v684 = vsub.s32 0, %v683
  %v685 = vrot.slane %v680, %v684
  %v687 = vpack.i.b16 %v499, %v499
  %v689 = vlaneseq
  %v690 = vshrl.u32 %v689, 7
  %v691 = vsub.s32 0, %v690
  %v692 = vrot.slane %v687, %v691
  %v694 = vpack.i.b16 %v501, %v501
  %v696 = vlaneseq
  %v697 = vshrl.u32 %v696, 7
  %v698 = vsub.s32 0, %v697
  %v699 = vrot.slane %v694, %v698
  %v701 = vpack.i.b16 %v503, %v503
  %v703 = vlaneseq
  %v704 = vshrl.u32 %v703, 7
  %v705 = vsub.s32 0, %v704
  %v706 = vrot.slane %v701, %v705
  %v708 = vpack.i.b16 %v527, %v527
  %v710 = vlaneseq
  %v711 = vshrl.u32 %v710, 7
  %v712 = vsub.s32 0, %v711
  %v713 = vrot.slane %v708, %v712
  %v715 = vpack.i.b16 %v541, %v541
  %v717 = vlaneseq
  %v718 = vshrl.u32 %v717, 7
  %v719 = vsub.s32 0, %v718
  %v720 = vrot.slane %v715, %v719
  %v722 = vpack.i.b16 %v549, %v549
  %v724 = vlaneseq
  %v725 = vshrl.u32 %v724, 7
  %v726 = vsub.s32 0, %v725
  %v727 = vrot.slane %v722, %v726
  %v729 = vpack.i.b16 %v551, %v551
  %v731 = vlaneseq
  %v732 = vshrl.u32 %v731, 7
  %v733 = vsub.s32 0, %v732
  %v734 = vrot.slane %v729, %v733
  %v736 = vpack.i.b16 %v534, %v534
  %v738 = vlaneseq
  %v739 = vshrl.u32 %v738, 7
  %v740 = vsub.s32 0, %v739
  %v741 = vrot.slane %v736, %v740
  %v743 = vpack.i.b16 %v548, %v548
  %v745 = vlaneseq
  %v746 = vshrl.u32 %v745, 7
  %v747 = vsub.s32 0, %v746
  %v748 = vrot.slane %v743, %v747
  %v750 = vpack.i.b16 %v550, %v550
  %v752 = vlaneseq
  %v753 = vshrl.u32 %v752, 7
  %v754 = vsub.s32 0, %v753
  %v755 = vrot.slane %v750, %v754
  %v757 = vpack.i.b16 %v552, %v552
  %v759 = vlaneseq
  %v760 = vshrl.u32 %v759, 7
  %v761 = vsub.s32 0, %v760
  %v762 = vrot.slane %v757, %v761
  %v764 = vpack.i.b16 %v576, %v576
  %v766 = vlaneseq
  %v767 = vshrl.u32 %v766, 7
  %v768 = vsub.s32 0, %v767
  %v769 = vrot.slane %v764, %v768
  %v771 = vpack.i.b16 %v590, %v590
  %v773 = vlaneseq
  %v774 = vshrl.u32 %v773, 7
  %v775 = vsub.s32 0, %v774
  %v776 = vrot.slane %v771, %v775
  %v778 = vpack.i.b16 %v598, %v598
  %v780 = vlaneseq
  %v781 = vshrl.u32 %v780, 7
  %v782 = vsub.s32 0, %v781
  %v783 = vrot.slane %v778, %v782
  %v785 = vpack.i.b16 %v600, %v600
  %v787 = vlaneseq
  %v788 = vshrl.u32 %v787, 7
  %v789 = vsub.s32 0, %v788
  %v790 = vrot.slane %v785, %v789
  %v792 = vpack.i.b16 %v583, %v583
  %v794 = vlaneseq
  %v795 = vshrl.u32 %v794, 7
  %v796 = vsub.s32 0, %v795
  %v797 = vrot.slane %v792, %v796
  %v799 = vpack.i.b16 %v597, %v597
  %v801 = vlaneseq
  %v802 = vshrl.u32 %v801, 7
  %v803 = vsub.s32 0, %v802
  %v804 = vrot.slane %v799, %v803
  %v806 = vpack.i.b16 %v599, %v599
  %v808 = vlaneseq
  %v809 = vshrl.u32 %v808, 7
  %v810 = vsub.s32 0, %v809
  %v811 = vrot.slane %v806, %v810
  %v813 = vpack.i.b16 %v601, %v601
  %v815 = vlaneseq
  %v816 = vshrl.u32 %v815, 7
  %v817 = vsub.s32 0, %v816
  %v818 = vrot.slane %v813, %v817
  %v820 = vpack.i.b16 %v625, %v625
  %v822 = vlaneseq
  %v823 = vshrl.u32 %v822, 7
  %v824 = vsub.s32 0, %v823
  %v825 = vrot.slane %v820, %v824
  %v827 = vpack.i.b16 %v639, %v639
  %v829 = vlaneseq
  %v830 = vshrl.u32 %v829, 7
  %v831 = vsub.s32 0, %v830
  %v832 = vrot.slane %v827, %v831
  %v834 = vpack.i.b16 %v647, %v647
  %v836 = vlaneseq
  %v837 = vshrl.u32 %v836, 7
  %v838 = vsub.s32 0, %v837
  %v839 = vrot.slane %v834, %v838
  %v841 = vpack.i.b16 %v649, %v649
  %v843 = vlaneseq
  %v844 = vshrl.u32 %v843, 7
  %v845 = vsub.s32 0, %v844
  %v846 = vrot.slane %v841, %v845
  %v848 = vpack.i.b16 %v632, %v632
  %v850 = vlaneseq
  %v851 = vshrl.u32 %v850, 7
  %v852 = vsub.s32 0, %v851
  %v853 = vrot.slane %v848, %v852
  %v855 = vpack.i.b16 %v646, %v646
  %v857 = vlaneseq
  %v858 = vshrl.u32 %v857, 7
  %v859 = vsub.s32 0, %v858
  %v860 = vrot.slane %v855, %v859
  %v862 = vpack.i.b16 %v648, %v648
  %v864 = vlaneseq
  %v865 = vshrl.u32 %v864, 7
  %v866 = vsub.s32 0, %v865
  %v867 = vrot.slane %v862, %v866
  %v869 = vpack.i.b16 %v650, %v650
  %v871 = vlaneseq
  %v872 = vshrl.u32 %v871, 7
  %v873 = vsub.s32 0, %v872
  %v874 = vrot.slane %v869, %v873
  %v907 = vunpack.c.l.b16 %v657
  %v908 = vunpack.c.l.b16 %v664
  %v909 = vunpack.c.l.b16 %v671
  %v910 = vunpack.c.l.b16 %v678
  %v911 = vunpack.c.l.b16 %v685
  %v912 = vunpack.c.l.b16 %v692
  %v913 = vunpack.c.l.b16 %v699
  %v914 = vunpack.c.l.b16 %v706
  %v915 = vunpack.c.l.b16 %v713
  %v916 = vunpack.c.l.b16 %v720
  %v917 = vunpack.c.l.b16 %v727
  %v918 = vunpack.c.l.b16 %v734
  %v919 = vunpack.c.l.b16 %v741
  %v920 = vunpack.c.l.b16 %v748
  %v921 = vunpack.c.l.b16 %v755
  %v922 = vunpack.c.l.b16 %v762
  %v923 = vunpack.c.l.b16 %v769
  %v924 = vunpack.c.l.b16 %v776
  %v925 = vunpack.c.l.b16 %v783
  %v926 = vunpack.c.l.b16 %v790
  %v927 = vunpack.c.l.b16 %v797
  %v928 = vunpack.c.l.b16 %v804
  %v929 = vunpack.c.l.b16 %v811
  %v930 = vunpack.c.l.b16 %v818
  %v931 = vunpack.c.l.b16 %v825
  %v932 = vunpack.c.l.b16 %v832
  %v933 = vunpack.c.l.b16 %v839
  %v934 = vunpack.c.l.b16 %v846
  %v935 = vunpack.c.l.b16 %v853
  %v936 = vunpack.c.l.b16 %v860
  %v937 = vunpack.c.l.b16 %v867
  %v938 = vunpack.c.l.b16 %v874
  %v939 = vpack.c.b16 %v908, %v907
  %v940 = vpack.c.b16 %v910, %v909
  %v941 = vpack.c.b16 %v912, %v911
  %v942 = vpack.c.b16 %v914, %v913
  %v943 = vpack.c.b16 %v916, %v915
  %v944 = vpack.c.b16 %v918, %v917
  %v945 = vpack.c.b16 %v920, %v919
  %v946 = vpack.c.b16 %v922, %v921
  %v947 = vpack.c.b16 %v924, %v923
  %v948 = vpack.c.b16 %v926, %v925
  %v949 = vpack.c.b16 %v928, %v927
  %v950 = vpack.c.b16 %v930, %v929
  %v951 = vpack.c.b16 %v932, %v931
  %v952 = vpack.c.b16 %v934, %v933
  %v953 = vpack.c.b16 %v936, %v935
  %v954 = vpack.c.b16 %v938, %v937
  %v971 = vmul.bf16 %v78, %v939
  %v972 = vmul.bf16 %v78, %v940
  %v973 = vmul.bf16 %v78, %v941
  %v974 = vmul.bf16 %v78, %v942
  %v975 = vmul.bf16 %v78, %v943
  %v976 = vmul.bf16 %v78, %v944
  %v977 = vmul.bf16 %v78, %v945
  %v978 = vmul.bf16 %v78, %v946
  %v979 = vmul.bf16 %v78, %v947
  %v980 = vmul.bf16 %v78, %v948
  %v981 = vmul.bf16 %v78, %v949
  %v982 = vmul.bf16 %v78, %v950
  %v983 = vmul.bf16 %v78, %v951
  %v984 = vmul.bf16 %v78, %v952
  %v985 = vmul.bf16 %v78, %v953
  %v986 = vmul.bf16 %v78, %v954
  %v987 = vmul.bf16 %v90, %v939
  %v988 = vmul.bf16 %v90, %v940
  %v989 = vmul.bf16 %v90, %v941
  %v990 = vmul.bf16 %v90, %v942
  %v991 = vmul.bf16 %v90, %v943
  %v992 = vmul.bf16 %v90, %v944
  %v993 = vmul.bf16 %v90, %v945
  %v994 = vmul.bf16 %v90, %v946
  %v995 = vmul.bf16 %v90, %v947
  %v996 = vmul.bf16 %v90, %v948
  %v997 = vmul.bf16 %v90, %v949
  %v998 = vmul.bf16 %v90, %v950
  %v999 = vmul.bf16 %v90, %v951
  %v1000 = vmul.bf16 %v90, %v952
  %v1001 = vmul.bf16 %v90, %v953
  %v1002 = vmul.bf16 %v90, %v954
  %v1003 = vmul.bf16 %v102, %v939
  %v1004 = vmul.bf16 %v102, %v940
  %v1005 = vmul.bf16 %v102, %v941
  %v1006 = vmul.bf16 %v102, %v942
  %v1007 = vmul.bf16 %v102, %v943
  %v1008 = vmul.bf16 %v102, %v944
  %v1009 = vmul.bf16 %v102, %v945
  %v1010 = vmul.bf16 %v102, %v946
  %v1011 = vmul.bf16 %v102, %v947
  %v1012 = vmul.bf16 %v102, %v948
  %v1013 = vmul.bf16 %v102, %v949
  %v1014 = vmul.bf16 %v102, %v950
  %v1015 = vmul.bf16 %v102, %v951
  %v1016 = vmul.bf16 %v102, %v952
  %v1017 = vmul.bf16 %v102, %v953
  %v1018 = vmul.bf16 %v102, %v954
  %v1019 = vmul.bf16 %v114, %v939
  %v1020 = vmul.bf16 %v114, %v940
  %v1021 = vmul.bf16 %v114, %v941
  %v1022 = vmul.bf16 %v114, %v942
  %v1023 = vmul.bf16 %v114, %v943
  %v1024 = vmul.bf16 %v114, %v944
  %v1025 = vmul.bf16 %v114, %v945
  %v1026 = vmul.bf16 %v114, %v946
  %v1027 = vmul.bf16 %v114, %v947
  %v1028 = vmul.bf16 %v114, %v948
  %v1029 = vmul.bf16 %v114, %v949
  %v1030 = vmul.bf16 %v114, %v950
  %v1031 = vmul.bf16 %v114, %v951
  %v1032 = vmul.bf16 %v114, %v952
  %v1033 = vmul.bf16 %v114, %v953
  %v1034 = vmul.bf16 %v114, %v954
  %v1035 = vmul.bf16 %v126, %v939
  %v1036 = vmul.bf16 %v126, %v940
  %v1037 = vmul.bf16 %v126, %v941
  %v1038 = vmul.bf16 %v126, %v942
  %v1039 = vmul.bf16 %v126, %v943
  %v1040 = vmul.bf16 %v126, %v944
  %v1041 = vmul.bf16 %v126, %v945
  %v1042 = vmul.bf16 %v126, %v946
  %v1043 = vmul.bf16 %v126, %v947
  %v1044 = vmul.bf16 %v126, %v948
  %v1045 = vmul.bf16 %v126, %v949
  %v1046 = vmul.bf16 %v126, %v950
  %v1047 = vmul.bf16 %v126, %v951
  %v1048 = vmul.bf16 %v126, %v952
  %v1049 = vmul.bf16 %v126, %v953
  %v1050 = vmul.bf16 %v126, %v954
  %v1051 = vmul.bf16 %v138, %v939
  %v1052 = vmul.bf16 %v138, %v940
  %v1053 = vmul.bf16 %v138, %v941
  %v1054 = vmul.bf16 %v138, %v942
  %v1055 = vmul.bf16 %v138, %v943
  %v1056 = vmul.bf16 %v138, %v944
  %v1057 = vmul.bf16 %v138, %v945
  %v1058 = vmul.bf16 %v138, %v946
  %v1059 = vmul.bf16 %v138, %v947
  %v1060 = vmul.bf16 %v138, %v948
  %v1061 = vmul.bf16 %v138, %v949
  %v1062 = vmul.bf16 %v138, %v950
  %v1063 = vmul.bf16 %v138, %v951
  %v1064 = vmul.bf16 %v138, %v952
  %v1065 = vmul.bf16 %v138, %v953
  %v1066 = vmul.bf16 %v138, %v954
  %v1067 = vmul.bf16 %v150, %v939
  %v1068 = vmul.bf16 %v150, %v940
  %v1069 = vmul.bf16 %v150, %v941
  %v1070 = vmul.bf16 %v150, %v942
  %v1071 = vmul.bf16 %v150, %v943
  %v1072 = vmul.bf16 %v150, %v944
  %v1073 = vmul.bf16 %v150, %v945
  %v1074 = vmul.bf16 %v150, %v946
  %v1075 = vmul.bf16 %v150, %v947
  %v1076 = vmul.bf16 %v150, %v948
  %v1077 = vmul.bf16 %v150, %v949
  %v1078 = vmul.bf16 %v150, %v950
  %v1079 = vmul.bf16 %v150, %v951
  %v1080 = vmul.bf16 %v150, %v952
  %v1081 = vmul.bf16 %v150, %v953
  %v1082 = vmul.bf16 %v150, %v954
  %v1083 = vmul.bf16 %v162, %v939
  %v1084 = vmul.bf16 %v162, %v940
  %v1085 = vmul.bf16 %v162, %v941
  %v1086 = vmul.bf16 %v162, %v942
  %v1087 = vmul.bf16 %v162, %v943
  %v1088 = vmul.bf16 %v162, %v944
  %v1089 = vmul.bf16 %v162, %v945
  %v1090 = vmul.bf16 %v162, %v946
  %v1091 = vmul.bf16 %v162, %v947
  %v1092 = vmul.bf16 %v162, %v948
  %v1093 = vmul.bf16 %v162, %v949
  %v1094 = vmul.bf16 %v162, %v950
  %v1095 = vmul.bf16 %v162, %v951
  %v1096 = vmul.bf16 %v162, %v952
  %v1097 = vmul.bf16 %v162, %v953
  %v1098 = vmul.bf16 %v162, %v954
  %v1099 = vmul.bf16 %v174, %v939
  %v1100 = vmul.bf16 %v174, %v940
  %v1101 = vmul.bf16 %v174, %v941
  %v1102 = vmul.bf16 %v174, %v942
  %v1103 = vmul.bf16 %v174, %v943
  %v1104 = vmul.bf16 %v174, %v944
  %v1105 = vmul.bf16 %v174, %v945
  %v1106 = vmul.bf16 %v174, %v946
  %v1107 = vmul.bf16 %v174, %v947
  %v1108 = vmul.bf16 %v174, %v948
  %v1109 = vmul.bf16 %v174, %v949
  %v1110 = vmul.bf16 %v174, %v950
  %v1111 = vmul.bf16 %v174, %v951
  %v1112 = vmul.bf16 %v174, %v952
  %v1113 = vmul.bf16 %v174, %v953
  %v1114 = vmul.bf16 %v174, %v954
  %v1115 = vmul.bf16 %v186, %v939
  %v1116 = vmul.bf16 %v186, %v940
  %v1117 = vmul.bf16 %v186, %v941
  %v1118 = vmul.bf16 %v186, %v942
  %v1119 = vmul.bf16 %v186, %v943
  %v1120 = vmul.bf16 %v186, %v944
  %v1121 = vmul.bf16 %v186, %v945
  %v1122 = vmul.bf16 %v186, %v946
  %v1123 = vmul.bf16 %v186, %v947
  %v1124 = vmul.bf16 %v186, %v948
  %v1125 = vmul.bf16 %v186, %v949
  %v1126 = vmul.bf16 %v186, %v950
  %v1127 = vmul.bf16 %v186, %v951
  %v1128 = vmul.bf16 %v186, %v952
  %v1129 = vmul.bf16 %v186, %v953
  %v1130 = vmul.bf16 %v186, %v954
  %v1131 = vmul.bf16 %v198, %v939
  %v1132 = vmul.bf16 %v198, %v940
  %v1133 = vmul.bf16 %v198, %v941
  %v1134 = vmul.bf16 %v198, %v942
  %v1135 = vmul.bf16 %v198, %v943
  %v1136 = vmul.bf16 %v198, %v944
  %v1137 = vmul.bf16 %v198, %v945
  %v1138 = vmul.bf16 %v198, %v946
  %v1139 = vmul.bf16 %v198, %v947
  %v1140 = vmul.bf16 %v198, %v948
  %v1141 = vmul.bf16 %v198, %v949
  %v1142 = vmul.bf16 %v198, %v950
  %v1143 = vmul.bf16 %v198, %v951
  %v1144 = vmul.bf16 %v198, %v952
  %v1145 = vmul.bf16 %v198, %v953
  %v1146 = vmul.bf16 %v198, %v954
  %v1147 = vmul.bf16 %v210, %v939
  %v1148 = vmul.bf16 %v210, %v940
  %v1149 = vmul.bf16 %v210, %v941
  %v1150 = vmul.bf16 %v210, %v942
  %v1151 = vmul.bf16 %v210, %v943
  %v1152 = vmul.bf16 %v210, %v944
  %v1153 = vmul.bf16 %v210, %v945
  %v1154 = vmul.bf16 %v210, %v946
  %v1155 = vmul.bf16 %v210, %v947
  %v1156 = vmul.bf16 %v210, %v948
  %v1157 = vmul.bf16 %v210, %v949
  %v1158 = vmul.bf16 %v210, %v950
  %v1159 = vmul.bf16 %v210, %v951
  %v1160 = vmul.bf16 %v210, %v952
  %v1161 = vmul.bf16 %v210, %v953
  %v1162 = vmul.bf16 %v210, %v954
  %v1163 = vmul.bf16 %v222, %v939
  %v1164 = vmul.bf16 %v222, %v940
  %v1165 = vmul.bf16 %v222, %v941
  %v1166 = vmul.bf16 %v222, %v942
  %v1167 = vmul.bf16 %v222, %v943
  %v1168 = vmul.bf16 %v222, %v944
  %v1169 = vmul.bf16 %v222, %v945
  %v1170 = vmul.bf16 %v222, %v946
  %v1171 = vmul.bf16 %v222, %v947
  %v1172 = vmul.bf16 %v222, %v948
  %v1173 = vmul.bf16 %v222, %v949
  %v1174 = vmul.bf16 %v222, %v950
  %v1175 = vmul.bf16 %v222, %v951
  %v1176 = vmul.bf16 %v222, %v952
  %v1177 = vmul.bf16 %v222, %v953
  %v1178 = vmul.bf16 %v222, %v954
  %v1179 = vmul.bf16 %v234, %v939
  %v1180 = vmul.bf16 %v234, %v940
  %v1181 = vmul.bf16 %v234, %v941
  %v1182 = vmul.bf16 %v234, %v942
  %v1183 = vmul.bf16 %v234, %v943
  %v1184 = vmul.bf16 %v234, %v944
  %v1185 = vmul.bf16 %v234, %v945
  %v1186 = vmul.bf16 %v234, %v946
  %v1187 = vmul.bf16 %v234, %v947
  %v1188 = vmul.bf16 %v234, %v948
  %v1189 = vmul.bf16 %v234, %v949
  %v1190 = vmul.bf16 %v234, %v950
  %v1191 = vmul.bf16 %v234, %v951
  %v1192 = vmul.bf16 %v234, %v952
  %v1193 = vmul.bf16 %v234, %v953
  %v1194 = vmul.bf16 %v234, %v954
  %v1195 = vmul.bf16 %v246, %v939
  %v1196 = vmul.bf16 %v246, %v940
  %v1197 = vmul.bf16 %v246, %v941
  %v1198 = vmul.bf16 %v246, %v942
  %v1199 = vmul.bf16 %v246, %v943
  %v1200 = vmul.bf16 %v246, %v944
  %v1201 = vmul.bf16 %v246, %v945
  %v1202 = vmul.bf16 %v246, %v946
  %v1203 = vmul.bf16 %v246, %v947
  %v1204 = vmul.bf16 %v246, %v948
  %v1205 = vmul.bf16 %v246, %v949
  %v1206 = vmul.bf16 %v246, %v950
  %v1207 = vmul.bf16 %v246, %v951
  %v1208 = vmul.bf16 %v246, %v952
  %v1209 = vmul.bf16 %v246, %v953
  %v1210 = vmul.bf16 %v246, %v954
  %v1211 = vmul.bf16 %v258, %v939
  %v1212 = vmul.bf16 %v258, %v940
  %v1213 = vmul.bf16 %v258, %v941
  %v1214 = vmul.bf16 %v258, %v942
  %v1215 = vmul.bf16 %v258, %v943
  %v1216 = vmul.bf16 %v258, %v944
  %v1217 = vmul.bf16 %v258, %v945
  %v1218 = vmul.bf16 %v258, %v946
  %v1219 = vmul.bf16 %v258, %v947
  %v1220 = vmul.bf16 %v258, %v948
  %v1221 = vmul.bf16 %v258, %v949
  %v1222 = vmul.bf16 %v258, %v950
  %v1223 = vmul.bf16 %v258, %v951
  %v1224 = vmul.bf16 %v258, %v952
  %v1225 = vmul.bf16 %v258, %v953
  %v1226 = vmul.bf16 %v258, %v954
  %v1227 = vmul.bf16 %v270, %v939
  %v1228 = vmul.bf16 %v270, %v940
  %v1229 = vmul.bf16 %v270, %v941
  %v1230 = vmul.bf16 %v270, %v942
  %v1231 = vmul.bf16 %v270, %v943
  %v1232 = vmul.bf16 %v270, %v944
  %v1233 = vmul.bf16 %v270, %v945
  %v1234 = vmul.bf16 %v270, %v946
  %v1235 = vmul.bf16 %v270, %v947
  %v1236 = vmul.bf16 %v270, %v948
  %v1237 = vmul.bf16 %v270, %v949
  %v1238 = vmul.bf16 %v270, %v950
  %v1239 = vmul.bf16 %v270, %v951
  %v1240 = vmul.bf16 %v270, %v952
  %v1241 = vmul.bf16 %v270, %v953
  %v1242 = vmul.bf16 %v270, %v954
  %v1243 = vmul.bf16 %v282, %v939
  %v1244 = vmul.bf16 %v282, %v940
  %v1245 = vmul.bf16 %v282, %v941
  %v1246 = vmul.bf16 %v282, %v942
  %v1247 = vmul.bf16 %v282, %v943
  %v1248 = vmul.bf16 %v282, %v944
  %v1249 = vmul.bf16 %v282, %v945
  %v1250 = vmul.bf16 %v282, %v946
  %v1251 = vmul.bf16 %v282, %v947
  %v1252 = vmul.bf16 %v282, %v948
  %v1253 = vmul.bf16 %v282, %v949
  %v1254 = vmul.bf16 %v282, %v950
  %v1255 = vmul.bf16 %v282, %v951
  %v1256 = vmul.bf16 %v282, %v952
  %v1257 = vmul.bf16 %v282, %v953
  %v1258 = vmul.bf16 %v282, %v954
  %v1259 = vmul.bf16 %v294, %v939
  %v1260 = vmul.bf16 %v294, %v940
  %v1261 = vmul.bf16 %v294, %v941
  %v1262 = vmul.bf16 %v294, %v942
  %v1263 = vmul.bf16 %v294, %v943
  %v1264 = vmul.bf16 %v294, %v944
  %v1265 = vmul.bf16 %v294, %v945
  %v1266 = vmul.bf16 %v294, %v946
  %v1267 = vmul.bf16 %v294, %v947
  %v1268 = vmul.bf16 %v294, %v948
  %v1269 = vmul.bf16 %v294, %v949
  %v1270 = vmul.bf16 %v294, %v950
  %v1271 = vmul.bf16 %v294, %v951
  %v1272 = vmul.bf16 %v294, %v952
  %v1273 = vmul.bf16 %v294, %v953
  %v1274 = vmul.bf16 %v294, %v954
  %v1275 = vmul.bf16 %v306, %v939
  %v1276 = vmul.bf16 %v306, %v940
  %v1277 = vmul.bf16 %v306, %v941
  %v1278 = vmul.bf16 %v306, %v942
  %v1279 = vmul.bf16 %v306, %v943
  %v1280 = vmul.bf16 %v306, %v944
  %v1281 = vmul.bf16 %v306, %v945
  %v1282 = vmul.bf16 %v306, %v946
  %v1283 = vmul.bf16 %v306, %v947
  %v1284 = vmul.bf16 %v306, %v948
  %v1285 = vmul.bf16 %v306, %v949
  %v1286 = vmul.bf16 %v306, %v950
  %v1287 = vmul.bf16 %v306, %v951
  %v1288 = vmul.bf16 %v306, %v952
  %v1289 = vmul.bf16 %v306, %v953
  %v1290 = vmul.bf16 %v306, %v954
  %v1291 = vmul.bf16 %v318, %v939
  %v1292 = vmul.bf16 %v318, %v940
  %v1293 = vmul.bf16 %v318, %v941
  %v1294 = vmul.bf16 %v318, %v942
  %v1295 = vmul.bf16 %v318, %v943
  %v1296 = vmul.bf16 %v318, %v944
  %v1297 = vmul.bf16 %v318, %v945
  %v1298 = vmul.bf16 %v318, %v946
  %v1299 = vmul.bf16 %v318, %v947
  %v1300 = vmul.bf16 %v318, %v948
  %v1301 = vmul.bf16 %v318, %v949
  %v1302 = vmul.bf16 %v318, %v950
  %v1303 = vmul.bf16 %v318, %v951
  %v1304 = vmul.bf16 %v318, %v952
  %v1305 = vmul.bf16 %v318, %v953
  %v1306 = vmul.bf16 %v318, %v954
  %v1307 = vmul.bf16 %v330, %v939
  %v1308 = vmul.bf16 %v330, %v940
  %v1309 = vmul.bf16 %v330, %v941
  %v1310 = vmul.bf16 %v330, %v942
  %v1311 = vmul.bf16 %v330, %v943
  %v1312 = vmul.bf16 %v330, %v944
  %v1313 = vmul.bf16 %v330, %v945
  %v1314 = vmul.bf16 %v330, %v946
  %v1315 = vmul.bf16 %v330, %v947
  %v1316 = vmul.bf16 %v330, %v948
  %v1317 = vmul.bf16 %v330, %v949
  %v1318 = vmul.bf16 %v330, %v950
  %v1319 = vmul.bf16 %v330, %v951
  %v1320 = vmul.bf16 %v330, %v952
  %v1321 = vmul.bf16 %v330, %v953
  %v1322 = vmul.bf16 %v330, %v954
  %v1323 = vmul.bf16 %v342, %v939
  %v1324 = vmul.bf16 %v342, %v940
  %v1325 = vmul.bf16 %v342, %v941
  %v1326 = vmul.bf16 %v342, %v942
  %v1327 = vmul.bf16 %v342, %v943
  %v1328 = vmul.bf16 %v342, %v944
  %v1329 = vmul.bf16 %v342, %v945
  %v1330 = vmul.bf16 %v342, %v946
  %v1331 = vmul.bf16 %v342, %v947
  %v1332 = vmul.bf16 %v342, %v948
  %v1333 = vmul.bf16 %v342, %v949
  %v1334 = vmul.bf16 %v342, %v950
  %v1335 = vmul.bf16 %v342, %v951
  %v1336 = vmul.bf16 %v342, %v952
  %v1337 = vmul.bf16 %v342, %v953
  %v1338 = vmul.bf16 %v342, %v954
  %v1339 = vmul.bf16 %v354, %v939
  %v1340 = vmul.bf16 %v354, %v940
  %v1341 = vmul.bf16 %v354, %v941
  %v1342 = vmul.bf16 %v354, %v942
  %v1343 = vmul.bf16 %v354, %v943
  %v1344 = vmul.bf16 %v354, %v944
  %v1345 = vmul.bf16 %v354, %v945
  %v1346 = vmul.bf16 %v354, %v946
  %v1347 = vmul.bf16 %v354, %v947
  %v1348 = vmul.bf16 %v354, %v948
  %v1349 = vmul.bf16 %v354, %v949
  %v1350 = vmul.bf16 %v354, %v950
  %v1351 = vmul.bf16 %v354, %v951
  %v1352 = vmul.bf16 %v354, %v952
  %v1353 = vmul.bf16 %v354, %v953
  %v1354 = vmul.bf16 %v354, %v954
  %v1355 = vmul.bf16 %v366, %v939
  %v1356 = vmul.bf16 %v366, %v940
  %v1357 = vmul.bf16 %v366, %v941
  %v1358 = vmul.bf16 %v366, %v942
  %v1359 = vmul.bf16 %v366, %v943
  %v1360 = vmul.bf16 %v366, %v944
  %v1361 = vmul.bf16 %v366, %v945
  %v1362 = vmul.bf16 %v366, %v946
  %v1363 = vmul.bf16 %v366, %v947
  %v1364 = vmul.bf16 %v366, %v948
  %v1365 = vmul.bf16 %v366, %v949
  %v1366 = vmul.bf16 %v366, %v950
  %v1367 = vmul.bf16 %v366, %v951
  %v1368 = vmul.bf16 %v366, %v952
  %v1369 = vmul.bf16 %v366, %v953
  %v1370 = vmul.bf16 %v366, %v954
  %v1371 = vmul.bf16 %v378, %v939
  %v1372 = vmul.bf16 %v378, %v940
  %v1373 = vmul.bf16 %v378, %v941
  %v1374 = vmul.bf16 %v378, %v942
  %v1375 = vmul.bf16 %v378, %v943
  %v1376 = vmul.bf16 %v378, %v944
  %v1377 = vmul.bf16 %v378, %v945
  %v1378 = vmul.bf16 %v378, %v946
  %v1379 = vmul.bf16 %v378, %v947
  %v1380 = vmul.bf16 %v378, %v948
  %v1381 = vmul.bf16 %v378, %v949
  %v1382 = vmul.bf16 %v378, %v950
  %v1383 = vmul.bf16 %v378, %v951
  %v1384 = vmul.bf16 %v378, %v952
  %v1385 = vmul.bf16 %v378, %v953
  %v1386 = vmul.bf16 %v378, %v954
  %v1387 = vmul.bf16 %v390, %v939
  %v1388 = vmul.bf16 %v390, %v940
  %v1389 = vmul.bf16 %v390, %v941
  %v1390 = vmul.bf16 %v390, %v942
  %v1391 = vmul.bf16 %v390, %v943
  %v1392 = vmul.bf16 %v390, %v944
  %v1393 = vmul.bf16 %v390, %v945
  %v1394 = vmul.bf16 %v390, %v946
  %v1395 = vmul.bf16 %v390, %v947
  %v1396 = vmul.bf16 %v390, %v948
  %v1397 = vmul.bf16 %v390, %v949
  %v1398 = vmul.bf16 %v390, %v950
  %v1399 = vmul.bf16 %v390, %v951
  %v1400 = vmul.bf16 %v390, %v952
  %v1401 = vmul.bf16 %v390, %v953
  %v1402 = vmul.bf16 %v390, %v954
  %v1403 = vmul.bf16 %v402, %v939
  %v1404 = vmul.bf16 %v402, %v940
  %v1405 = vmul.bf16 %v402, %v941
  %v1406 = vmul.bf16 %v402, %v942
  %v1407 = vmul.bf16 %v402, %v943
  %v1408 = vmul.bf16 %v402, %v944
  %v1409 = vmul.bf16 %v402, %v945
  %v1410 = vmul.bf16 %v402, %v946
  %v1411 = vmul.bf16 %v402, %v947
  %v1412 = vmul.bf16 %v402, %v948
  %v1413 = vmul.bf16 %v402, %v949
  %v1414 = vmul.bf16 %v402, %v950
  %v1415 = vmul.bf16 %v402, %v951
  %v1416 = vmul.bf16 %v402, %v952
  %v1417 = vmul.bf16 %v402, %v953
  %v1418 = vmul.bf16 %v402, %v954
  %v1419 = vmul.bf16 %v414, %v939
  %v1420 = vmul.bf16 %v414, %v940
  %v1421 = vmul.bf16 %v414, %v941
  %v1422 = vmul.bf16 %v414, %v942
  %v1423 = vmul.bf16 %v414, %v943
  %v1424 = vmul.bf16 %v414, %v944
  %v1425 = vmul.bf16 %v414, %v945
  %v1426 = vmul.bf16 %v414, %v946
  %v1427 = vmul.bf16 %v414, %v947
  %v1428 = vmul.bf16 %v414, %v948
  %v1429 = vmul.bf16 %v414, %v949
  %v1430 = vmul.bf16 %v414, %v950
  %v1431 = vmul.bf16 %v414, %v951
  %v1432 = vmul.bf16 %v414, %v952
  %v1433 = vmul.bf16 %v414, %v953
  %v1434 = vmul.bf16 %v414, %v954
  %v1435 = vmul.bf16 %v426, %v939
  %v1436 = vmul.bf16 %v426, %v940
  %v1437 = vmul.bf16 %v426, %v941
  %v1438 = vmul.bf16 %v426, %v942
  %v1439 = vmul.bf16 %v426, %v943
  %v1440 = vmul.bf16 %v426, %v944
  %v1441 = vmul.bf16 %v426, %v945
  %v1442 = vmul.bf16 %v426, %v946
  %v1443 = vmul.bf16 %v426, %v947
  %v1444 = vmul.bf16 %v426, %v948
  %v1445 = vmul.bf16 %v426, %v949
  %v1446 = vmul.bf16 %v426, %v950
  %v1447 = vmul.bf16 %v426, %v951
  %v1448 = vmul.bf16 %v426, %v952
  %v1449 = vmul.bf16 %v426, %v953
  %v1450 = vmul.bf16 %v426, %v954
  %v1451 = vmul.bf16 %v438, %v939
  %v1452 = vmul.bf16 %v438, %v940
  %v1453 = vmul.bf16 %v438, %v941
  %v1454 = vmul.bf16 %v438, %v942
  %v1455 = vmul.bf16 %v438, %v943
  %v1456 = vmul.bf16 %v438, %v944
  %v1457 = vmul.bf16 %v438, %v945
  %v1458 = vmul.bf16 %v438, %v946
  %v1459 = vmul.bf16 %v438, %v947
  %v1460 = vmul.bf16 %v438, %v948
  %v1461 = vmul.bf16 %v438, %v949
  %v1462 = vmul.bf16 %v438, %v950
  %v1463 = vmul.bf16 %v438, %v951
  %v1464 = vmul.bf16 %v438, %v952
  %v1465 = vmul.bf16 %v438, %v953
  %v1466 = vmul.bf16 %v438, %v954
  %v1467 = vmul.bf16 %v450, %v939
  %v1468 = vmul.bf16 %v450, %v940
  %v1469 = vmul.bf16 %v450, %v941
  %v1470 = vmul.bf16 %v450, %v942
  %v1471 = vmul.bf16 %v450, %v943
  %v1472 = vmul.bf16 %v450, %v944
  %v1473 = vmul.bf16 %v450, %v945
  %v1474 = vmul.bf16 %v450, %v946
  %v1475 = vmul.bf16 %v450, %v947
  %v1476 = vmul.bf16 %v450, %v948
  %v1477 = vmul.bf16 %v450, %v949
  %v1478 = vmul.bf16 %v450, %v950
  %v1479 = vmul.bf16 %v450, %v951
  %v1480 = vmul.bf16 %v450, %v952
  %v1481 = vmul.bf16 %v450, %v953
  %v1482 = vmul.bf16 %v450, %v954
  %v1483 = vld [vmem:[%s2] sm:$0xf]
  %v1484 = vld [vmem:[%s2 + $0x4] sm:$0xf]
  %v1485 = vld [vmem:[%s2 + $0x8] sm:$0xf]
  %v1486 = vld [vmem:[%s2 + $0xc] sm:$0xf]
  %v1487 = vld [vmem:[%s2 + $0x10] sm:$0xf]
  %v1488 = vld [vmem:[%s2 + $0x14] sm:$0xf]
  %v1489 = vld [vmem:[%s2 + $0x18] sm:$0xf]
  %v1490 = vld [vmem:[%s2 + $0x1c] sm:$0xf]
  %v1491 = vld [vmem:[%s2 + $0x20] sm:$0xf]
  %v1492 = vld [vmem:[%s2 + $0x24] sm:$0xf]
  %v1493 = vld [vmem:[%s2 + $0x28] sm:$0xf]
  %v1494 = vld [vmem:[%s2 + $0x2c] sm:$0xf]
  %v1495 = vld [vmem:[%s2 + $0x30] sm:$0xf]
  %v1496 = vld [vmem:[%s2 + $0x34] sm:$0xf]
  %v1497 = vld [vmem:[%s2 + $0x38] sm:$0xf]
  %v1498 = vld [vmem:[%s2 + $0x3c] sm:$0xf]
  %v1499 = vld [vmem:[%s2 + $0x40] sm:$0xf]
  %v1500 = vld [vmem:[%s2 + $0x44] sm:$0xf]
  %v1501 = vld [vmem:[%s2 + $0x48] sm:$0xf]
  %v1502 = vld [vmem:[%s2 + $0x4c] sm:$0xf]
  %v1503 = vld [vmem:[%s2 + $0x50] sm:$0xf]
  %v1504 = vld [vmem:[%s2 + $0x54] sm:$0xf]
  %v1505 = vld [vmem:[%s2 + $0x58] sm:$0xf]
  %v1506 = vld [vmem:[%s2 + $0x5c] sm:$0xf]
  %v1507 = vld [vmem:[%s2 + $0x60] sm:$0xf]
  %v1508 = vld [vmem:[%s2 + $0x64] sm:$0xf]
  %v1509 = vld [vmem:[%s2 + $0x68] sm:$0xf]
  %v1510 = vld [vmem:[%s2 + $0x6c] sm:$0xf]
  %v1511 = vld [vmem:[%s2 + $0x70] sm:$0xf]
  %v1512 = vld [vmem:[%s2 + $0x74] sm:$0xf]
  %v1513 = vld [vmem:[%s2 + $0x78] sm:$0xf]
  %v1514 = vld [vmem:[%s2 + $0x7c] sm:$0xf]
  %1516 = vset.pattern.permute.xlu0 0
  %1517 = vperm.xlu0 %1516, %v1483
  %v1518 = vpop.permute.xlu0 %1517
  %v1521 = vunpack.c.l.s4 839922192
  %v1522 = vunpack.c.0.s8 %v1521
  %v1523 = vlaneseq
  %v1524 = vshrl.u32 %v1523, 7
  %v1525 = vsub.s32 %v1522, %v1524
  %v1526 = vrot.slane %v1518, %v1525
  %1528 = vset.pattern.permute.xlu0 0
  %1529 = vperm.xlu0 %1528, %v1484
  %v1530 = vpop.permute.xlu0 %1529
  %v1533 = vunpack.c.l.s4 839922192
  %v1534 = vunpack.c.0.s8 %v1533
  %v1535 = vlaneseq
  %v1536 = vshrl.u32 %v1535, 7
  %v1537 = vsub.s32 %v1534, %v1536
  %v1538 = vrot.slane %v1530, %v1537
  %1540 = vset.pattern.permute.xlu0 0
  %1541 = vperm.xlu0 %1540, %v1485
  %v1542 = vpop.permute.xlu0 %1541
  %v1545 = vunpack.c.l.s4 839922192
  %v1546 = vunpack.c.0.s8 %v1545
  %v1547 = vlaneseq
  %v1548 = vshrl.u32 %v1547, 7
  %v1549 = vsub.s32 %v1546, %v1548
  %v1550 = vrot.slane %v1542, %v1549
  %1552 = vset.pattern.permute.xlu0 0
  %1553 = vperm.xlu0 %1552, %v1486
  %v1554 = vpop.permute.xlu0 %1553
  %v1557 = vunpack.c.l.s4 839922192
  %v1558 = vunpack.c.0.s8 %v1557
  %v1559 = vlaneseq
  %v1560 = vshrl.u32 %v1559, 7
  %v1561 = vsub.s32 %v1558, %v1560
  %v1562 = vrot.slane %v1554, %v1561
  %1564 = vset.pattern.permute.xlu0 0
  %1565 = vperm.xlu0 %1564, %v1487
  %v1566 = vpop.permute.xlu0 %1565
  %v1569 = vunpack.c.l.s4 839922192
  %v1570 = vunpack.c.0.s8 %v1569
  %v1571 = vlaneseq
  %v1572 = vshrl.u32 %v1571, 7
  %v1573 = vsub.s32 %v1570, %v1572
  %v1574 = vrot.slane %v1566, %v1573
  %1576 = vset.pattern.permute.xlu0 0
  %1577 = vperm.xlu0 %1576, %v1488
  %v1578 = vpop.permute.xlu0 %1577
  %v1581 = vunpack.c.l.s4 839922192
  %v1582 = vunpack.c.0.s8 %v1581
  %v1583 = vlaneseq
  %v1584 = vshrl.u32 %v1583, 7
  %v1585 = vsub.s32 %v1582, %v1584
  %v1586 = vrot.slane %v1578, %v1585
  %1588 = vset.pattern.permute.xlu0 0
  %1589 = vperm.xlu0 %1588, %v1489
  %v1590 = vpop.permute.xlu0 %1589
  %v1593 = vunpack.c.l.s4 839922192
  %v1594 = vunpack.c.0.s8 %v1593
  %v1595 = vlaneseq
  %v1596 = vshrl.u32 %v1595, 7
  %v1597 = vsub.s32 %v1594, %v1596
  %v1598 = vrot.slane %v1590, %v1597
  %1600 = vset.pattern.permute.xlu0 0
  %1601 = vperm.xlu0 %1600, %v1490
  %v1602 = vpop.permute.xlu0 %1601
  %v1605 = vunpack.c.l.s4 839922192
  %v1606 = vunpack.c.0.s8 %v1605
  %v1607 = vlaneseq
  %v1608 = vshrl.u32 %v1607, 7
  %v1609 = vsub.s32 %v1606, %v1608
  %v1610 = vrot.slane %v1602, %v1609
  %1612 = vset.pattern.permute.xlu0 0
  %1613 = vperm.xlu0 %1612, %v1491
  %v1614 = vpop.permute.xlu0 %1613
  %v1617 = vunpack.c.l.s4 839922192
  %v1618 = vunpack.c.0.s8 %v1617
  %v1619 = vlaneseq
  %v1620 = vshrl.u32 %v1619, 7
  %v1621 = vsub.s32 %v1618, %v1620
  %v1622 = vrot.slane %v1614, %v1621
  %1624 = vset.pattern.permute.xlu0 0
  %1625 = vperm.xlu0 %1624, %v1492
  %v1626 = vpop.permute.xlu0 %1625
  %v1629 = vunpack.c.l.s4 839922192
  %v1630 = vunpack.c.0.s8 %v1629
  %v1631 = vlaneseq
  %v1632 = vshrl.u32 %v1631, 7
  %v1633 = vsub.s32 %v1630, %v1632
  %v1634 = vrot.slane %v1626, %v1633
  %1636 = vset.pattern.permute.xlu0 0
  %1637 = vperm.xlu0 %1636, %v1493
  %v1638 = vpop.permute.xlu0 %1637
  %v1641 = vunpack.c.l.s4 839922192
  %v1642 = vunpack.c.0.s8 %v1641
  %v1643 = vlaneseq
  %v1644 = vshrl.u32 %v1643, 7
  %v1645 = vsub.s32 %v1642, %v1644
  %v1646 = vrot.slane %v1638, %v1645
  %1648 = vset.pattern.permute.xlu0 0
  %1649 = vperm.xlu0 %1648, %v1494
  %v1650 = vpop.permute.xlu0 %1649
  %v1653 = vunpack.c.l.s4 839922192
  %v1654 = vunpack.c.0.s8 %v1653
  %v1655 = vlaneseq
  %v1656 = vshrl.u32 %v1655, 7
  %v1657 = vsub.s32 %v1654, %v1656
  %v1658 = vrot.slane %v1650, %v1657
  %1660 = vset.pattern.permute.xlu0 0
  %1661 = vperm.xlu0 %1660, %v1495
  %v1662 = vpop.permute.xlu0 %1661
  %v1665 = vunpack.c.l.s4 839922192
  %v1666 = vunpack.c.0.s8 %v1665
  %v1667 = vlaneseq
  %v1668 = vshrl.u32 %v1667, 7
  %v1669 = vsub.s32 %v1666, %v1668
  %v1670 = vrot.slane %v1662, %v1669
  %1672 = vset.pattern.permute.xlu0 0
  %1673 = vperm.xlu0 %1672, %v1496
  %v1674 = vpop.permute.xlu0 %1673
  %v1677 = vunpack.c.l.s4 839922192
  %v1678 = vunpack.c.0.s8 %v1677
  %v1679 = vlaneseq
  %v1680 = vshrl.u32 %v1679, 7
  %v1681 = vsub.s32 %v1678, %v1680
  %v1682 = vrot.slane %v1674, %v1681
  %1684 = vset.pattern.permute.xlu0 0
  %1685 = vperm.xlu0 %1684, %v1497
  %v1686 = vpop.permute.xlu0 %1685
  %v1689 = vunpack.c.l.s4 839922192
  %v1690 = vunpack.c.0.s8 %v1689
  %v1691 = vlaneseq
  %v1692 = vshrl.u32 %v1691, 7
  %v1693 = vsub.s32 %v1690, %v1692
  %v1694 = vrot.slane %v1686, %v1693
  %1696 = vset.pattern.permute.xlu0 0
  %1697 = vperm.xlu0 %1696, %v1498
  %v1698 = vpop.permute.xlu0 %1697
  %v1701 = vunpack.c.l.s4 839922192
  %v1702 = vunpack.c.0.s8 %v1701
  %v1703 = vlaneseq
  %v1704 = vshrl.u32 %v1703, 7
  %v1705 = vsub.s32 %v1702, %v1704
  %v1706 = vrot.slane %v1698, %v1705
  %1708 = vset.pattern.permute.xlu0 0
  %1709 = vperm.xlu0 %1708, %v1499
  %v1710 = vpop.permute.xlu0 %1709
  %v1713 = vunpack.c.l.s4 839922192
  %v1714 = vunpack.c.0.s8 %v1713
  %v1715 = vlaneseq
  %v1716 = vshrl.u32 %v1715, 7
  %v1717 = vsub.s32 %v1714, %v1716
  %v1718 = vrot.slane %v1710, %v1717
  %1720 = vset.pattern.permute.xlu0 0
  %1721 = vperm.xlu0 %1720, %v1500
  %v1722 = vpop.permute.xlu0 %1721
  %v1725 = vunpack.c.l.s4 839922192
  %v1726 = vunpack.c.0.s8 %v1725
  %v1727 = vlaneseq
  %v1728 = vshrl.u32 %v1727, 7
  %v1729 = vsub.s32 %v1726, %v1728
  %v1730 = vrot.slane %v1722, %v1729
  %1732 = vset.pattern.permute.xlu0 0
  %1733 = vperm.xlu0 %1732, %v1501
  %v1734 = vpop.permute.xlu0 %1733
  %v1737 = vunpack.c.l.s4 839922192
  %v1738 = vunpack.c.0.s8 %v1737
  %v1739 = vlaneseq
  %v1740 = vshrl.u32 %v1739, 7
  %v1741 = vsub.s32 %v1738, %v1740
  %v1742 = vrot.slane %v1734, %v1741
  %1744 = vset.pattern.permute.xlu0 0
  %1745 = vperm.xlu0 %1744, %v1502
  %v1746 = vpop.permute.xlu0 %1745
  %v1749 = vunpack.c.l.s4 839922192
  %v1750 = vunpack.c.0.s8 %v1749
  %v1751 = vlaneseq
  %v1752 = vshrl.u32 %v1751, 7
  %v1753 = vsub.s32 %v1750, %v1752
  %v1754 = vrot.slane %v1746, %v1753
  %1756 = vset.pattern.permute.xlu0 0
  %1757 = vperm.xlu0 %1756, %v1503
  %v1758 = vpop.permute.xlu0 %1757
  %v1761 = vunpack.c.l.s4 839922192
  %v1762 = vunpack.c.0.s8 %v1761
  %v1763 = vlaneseq
  %v1764 = vshrl.u32 %v1763, 7
  %v1765 = vsub.s32 %v1762, %v1764
  %v1766 = vrot.slane %v1758, %v1765
  %1768 = vset.pattern.permute.xlu0 0
  %1769 = vperm.xlu0 %1768, %v1504
  %v1770 = vpop.permute.xlu0 %1769
  %v1773 = vunpack.c.l.s4 839922192
  %v1774 = vunpack.c.0.s8 %v1773
  %v1775 = vlaneseq
  %v1776 = vshrl.u32 %v1775, 7
  %v1777 = vsub.s32 %v1774, %v1776
  %v1778 = vrot.slane %v1770, %v1777
  %1780 = vset.pattern.permute.xlu0 0
  %1781 = vperm.xlu0 %1780, %v1505
  %v1782 = vpop.permute.xlu0 %1781
  %v1785 = vunpack.c.l.s4 839922192
  %v1786 = vunpack.c.0.s8 %v1785
  %v1787 = vlaneseq
  %v1788 = vshrl.u32 %v1787, 7
  %v1789 = vsub.s32 %v1786, %v1788
  %v1790 = vrot.slane %v1782, %v1789
  %1792 = vset.pattern.permute.xlu0 0
  %1793 = vperm.xlu0 %1792, %v1506
  %v1794 = vpop.permute.xlu0 %1793
  %v1797 = vunpack.c.l.s4 839922192
  %v1798 = vunpack.c.0.s8 %v1797
  %v1799 = vlaneseq
  %v1800 = vshrl.u32 %v1799, 7
  %v1801 = vsub.s32 %v1798, %v1800
  %v1802 = vrot.slane %v1794, %v1801
  %1804 = vset.pattern.permute.xlu0 0
  %1805 = vperm.xlu0 %1804, %v1507
  %v1806 = vpop.permute.xlu0 %1805
  %v1809 = vunpack.c.l.s4 839922192
  %v1810 = vunpack.c.0.s8 %v1809
  %v1811 = vlaneseq
  %v1812 = vshrl.u32 %v1811, 7
  %v1813 = vsub.s32 %v1810, %v1812
  %v1814 = vrot.slane %v1806, %v1813
  %1816 = vset.pattern.permute.xlu0 0
  %1817 = vperm.xlu0 %1816, %v1508
  %v1818 = vpop.permute.xlu0 %1817
  %v1821 = vunpack.c.l.s4 839922192
  %v1822 = vunpack.c.0.s8 %v1821
  %v1823 = vlaneseq
  %v1824 = vshrl.u32 %v1823, 7
  %v1825 = vsub.s32 %v1822, %v1824
  %v1826 = vrot.slane %v1818, %v1825
  %1828 = vset.pattern.permute.xlu0 0
  %1829 = vperm.xlu0 %1828, %v1509
  %v1830 = vpop.permute.xlu0 %1829
  %v1833 = vunpack.c.l.s4 839922192
  %v1834 = vunpack.c.0.s8 %v1833
  %v1835 = vlaneseq
  %v1836 = vshrl.u32 %v1835, 7
  %v1837 = vsub.s32 %v1834, %v1836
  %v1838 = vrot.slane %v1830, %v1837
  %1840 = vset.pattern.permute.xlu0 0
  %1841 = vperm.xlu0 %1840, %v1510
  %v1842 = vpop.permute.xlu0 %1841
  %v1845 = vunpack.c.l.s4 839922192
  %v1846 = vunpack.c.0.s8 %v1845
  %v1847 = vlaneseq
  %v1848 = vshrl.u32 %v1847, 7
  %v1849 = vsub.s32 %v1846, %v1848
  %v1850 = vrot.slane %v1842, %v1849
  %1852 = vset.pattern.permute.xlu0 0
  %1853 = vperm.xlu0 %1852, %v1511
  %v1854 = vpop.permute.xlu0 %1853
  %v1857 = vunpack.c.l.s4 839922192
  %v1858 = vunpack.c.0.s8 %v1857
  %v1859 = vlaneseq
  %v1860 = vshrl.u32 %v1859, 7
  %v1861 = vsub.s32 %v1858, %v1860
  %v1862 = vrot.slane %v1854, %v1861
  %1864 = vset.pattern.permute.xlu0 0
  %1865 = vperm.xlu0 %1864, %v1512
  %v1866 = vpop.permute.xlu0 %1865
  %v1869 = vunpack.c.l.s4 839922192
  %v1870 = vunpack.c.0.s8 %v1869
  %v1871 = vlaneseq
  %v1872 = vshrl.u32 %v1871, 7
  %v1873 = vsub.s32 %v1870, %v1872
  %v1874 = vrot.slane %v1866, %v1873
  %1876 = vset.pattern.permute.xlu0 0
  %1877 = vperm.xlu0 %1876, %v1513
  %v1878 = vpop.permute.xlu0 %1877
  %v1881 = vunpack.c.l.s4 839922192
  %v1882 = vunpack.c.0.s8 %v1881
  %v1883 = vlaneseq
  %v1884 = vshrl.u32 %v1883, 7
  %v1885 = vsub.s32 %v1882, %v1884
  %v1886 = vrot.slane %v1878, %v1885
  %1888 = vset.pattern.permute.xlu0 0
  %1889 = vperm.xlu0 %1888, %v1514
  %v1890 = vpop.permute.xlu0 %1889
  %v1893 = vunpack.c.l.s4 839922192
  %v1894 = vunpack.c.0.s8 %v1893
  %v1895 = vlaneseq
  %v1896 = vshrl.u32 %v1895, 7
  %v1897 = vsub.s32 %v1894, %v1896
  %v1898 = vrot.slane %v1890, %v1897
  %v1899 = vshrl.u32 %v478, 16
  %v1900 = vpack.i.b16 %v1899, %v1899
  %v1902 = vlaneseq
  %v1903 = vshrl.u32 %v1902, 7
  %v1904 = vsub.s32 0, %v1903
  %v1905 = vrot.slane %v1900, %v1904
  %v1906 = vshrl.u32 %v492, 16
  %v1907 = vpack.i.b16 %v1906, %v1906
  %v1909 = vlaneseq
  %v1910 = vshrl.u32 %v1909, 7
  %v1911 = vsub.s32 0, %v1910
  %v1912 = vrot.slane %v1907, %v1911
  %v1913 = vshrl.u32 %v500, 16
  %v1914 = vpack.i.b16 %v1913, %v1913
  %v1916 = vlaneseq
  %v1917 = vshrl.u32 %v1916, 7
  %v1918 = vsub.s32 0, %v1917
  %v1919 = vrot.slane %v1914, %v1918
  %v1920 = vshrl.u32 %v502, 16
  %v1921 = vpack.i.b16 %v1920, %v1920
  %v1923 = vlaneseq
  %v1924 = vshrl.u32 %v1923, 7
  %v1925 = vsub.s32 0, %v1924
  %v1926 = vrot.slane %v1921, %v1925
  %v1927 = vshrl.u32 %v485, 16
  %v1928 = vpack.i.b16 %v1927, %v1927
  %v1930 = vlaneseq
  %v1931 = vshrl.u32 %v1930, 7
  %v1932 = vsub.s32 0, %v1931
  %v1933 = vrot.slane %v1928, %v1932
  %v1934 = vshrl.u32 %v499, 16
  %v1935 = vpack.i.b16 %v1934, %v1934
  %v1937 = vlaneseq
  %v1938 = vshrl.u32 %v1937, 7
  %v1939 = vsub.s32 0, %v1938
  %v1940 = vrot.slane %v1935, %v1939
  %v1941 = vshrl.u32 %v501, 16
  %v1942 = vpack.i.b16 %v1941, %v1941
  %v1944 = vlaneseq
  %v1945 = vshrl.u32 %v1944, 7
  %v1946 = vsub.s32 0, %v1945
  %v1947 = vrot.slane %v1942, %v1946
  %v1948 = vshrl.u32 %v503, 16
  %v1949 = vpack.i.b16 %v1948, %v1948
  %v1951 = vlaneseq
  %v1952 = vshrl.u32 %v1951, 7
  %v1953 = vsub.s32 0, %v1952
  %v1954 = vrot.slane %v1949, %v1953
  %v1955 = vshrl.u32 %v527, 16
  %v1956 = vpack.i.b16 %v1955, %v1955
  %v1958 = vlaneseq
  %v1959 = vshrl.u32 %v1958, 7
  %v1960 = vsub.s32 0, %v1959
  %v1961 = vrot.slane %v1956, %v1960
  %v1962 = vshrl.u32 %v541, 16
  %v1963 = vpack.i.b16 %v1962, %v1962
  %v1965 = vlaneseq
  %v1966 = vshrl.u32 %v1965, 7
  %v1967 = vsub.s32 0, %v1966
  %v1968 = vrot.slane %v1963, %v1967
  %v1969 = vshrl.u32 %v549, 16
  %v1970 = vpack.i.b16 %v1969, %v1969
  %v1972 = vlaneseq
  %v1973 = vshrl.u32 %v1972, 7
  %v1974 = vsub.s32 0, %v1973
  %v1975 = vrot.slane %v1970, %v1974
  %v1976 = vshrl.u32 %v551, 16
  %v1977 = vpack.i.b16 %v1976, %v1976
  %v1979 = vlaneseq
  %v1980 = vshrl.u32 %v1979, 7
  %v1981 = vsub.s32 0, %v1980
  %v1982 = vrot.slane %v1977, %v1981
  %v1983 = vshrl.u32 %v534, 16
  %v1984 = vpack.i.b16 %v1983, %v1983
  %v1986 = vlaneseq
  %v1987 = vshrl.u32 %v1986, 7
  %v1988 = vsub.s32 0, %v1987
  %v1989 = vrot.slane %v1984, %v1988
  %v1990 = vshrl.u32 %v548, 16
  %v1991 = vpack.i.b16 %v1990, %v1990
  %v1993 = vlaneseq
  %v1994 = vshrl.u32 %v1993, 7
  %v1995 = vsub.s32 0, %v1994
  %v1996 = vrot.slane %v1991, %v1995
  %v1997 = vshrl.u32 %v550, 16
  %v1998 = vpack.i.b16 %v1997, %v1997
  %v2000 = vlaneseq
  %v2001 = vshrl.u32 %v2000, 7
  %v2002 = vsub.s32 0, %v2001
  %v2003 = vrot.slane %v1998, %v2002
  %v2004 = vshrl.u32 %v552, 16
  %v2005 = vpack.i.b16 %v2004, %v2004
  %v2007 = vlaneseq
  %v2008 = vshrl.u32 %v2007, 7
  %v2009 = vsub.s32 0, %v2008
  %v2010 = vrot.slane %v2005, %v2009
  %v2011 = vshrl.u32 %v576, 16
  %v2012 = vpack.i.b16 %v2011, %v2011
  %v2014 = vlaneseq
  %v2015 = vshrl.u32 %v2014, 7
  %v2016 = vsub.s32 0, %v2015
  %v2017 = vrot.slane %v2012, %v2016
  %v2018 = vshrl.u32 %v590, 16
  %v2019 = vpack.i.b16 %v2018, %v2018
  %v2021 = vlaneseq
  %v2022 = vshrl.u32 %v2021, 7
  %v2023 = vsub.s32 0, %v2022
  %v2024 = vrot.slane %v2019, %v2023
  %v2025 = vshrl.u32 %v598, 16
  %v2026 = vpack.i.b16 %v2025, %v2025
  %v2028 = vlaneseq
  %v2029 = vshrl.u32 %v2028, 7
  %v2030 = vsub.s32 0, %v2029
  %v2031 = vrot.slane %v2026, %v2030
  %v2032 = vshrl.u32 %v600, 16
  %v2033 = vpack.i.b16 %v2032, %v2032
  %v2035 = vlaneseq
  %v2036 = vshrl.u32 %v2035, 7
  %v2037 = vsub.s32 0, %v2036
  %v2038 = vrot.slane %v2033, %v2037
  %v2039 = vshrl.u32 %v583, 16
  %v2040 = vpack.i.b16 %v2039, %v2039
  %v2042 = vlaneseq
  %v2043 = vshrl.u32 %v2042, 7
  %v2044 = vsub.s32 0, %v2043
  %v2045 = vrot.slane %v2040, %v2044
  %v2046 = vshrl.u32 %v597, 16
  %v2047 = vpack.i.b16 %v2046, %v2046
  %v2049 = vlaneseq
  %v2050 = vshrl.u32 %v2049, 7
  %v2051 = vsub.s32 0, %v2050
  %v2052 = vrot.slane %v2047, %v2051
  %v2053 = vshrl.u32 %v599, 16
  %v2054 = vpack.i.b16 %v2053, %v2053
  %v2056 = vlaneseq
  %v2057 = vshrl.u32 %v2056, 7
  %v2058 = vsub.s32 0, %v2057
  %v2059 = vrot.slane %v2054, %v2058
  %v2060 = vshrl.u32 %v601, 16
  %v2061 = vpack.i.b16 %v2060, %v2060
  %v2063 = vlaneseq
  %v2064 = vshrl.u32 %v2063, 7
  %v2065 = vsub.s32 0, %v2064
  %v2066 = vrot.slane %v2061, %v2065
  %v2067 = vshrl.u32 %v625, 16
  %v2068 = vpack.i.b16 %v2067, %v2067
  %v2070 = vlaneseq
  %v2071 = vshrl.u32 %v2070, 7
  %v2072 = vsub.s32 0, %v2071
  %v2073 = vrot.slane %v2068, %v2072
  %v2074 = vshrl.u32 %v639, 16
  %v2075 = vpack.i.b16 %v2074, %v2074
  %v2077 = vlaneseq
  %v2078 = vshrl.u32 %v2077, 7
  %v2079 = vsub.s32 0, %v2078
  %v2080 = vrot.slane %v2075, %v2079
  %v2081 = vshrl.u32 %v647, 16
  %v2082 = vpack.i.b16 %v2081, %v2081
  %v2084 = vlaneseq
  %v2085 = vshrl.u32 %v2084, 7
  %v2086 = vsub.s32 0, %v2085
  %v2087 = vrot.slane %v2082, %v2086
  %v2088 = vshrl.u32 %v649, 16
  %v2089 = vpack.i.b16 %v2088, %v2088
  %v2091 = vlaneseq
  %v2092 = vshrl.u32 %v2091, 7
  %v2093 = vsub.s32 0, %v2092
  %v2094 = vrot.slane %v2089, %v2093
  %v2095 = vshrl.u32 %v632, 16
  %v2096 = vpack.i.b16 %v2095, %v2095
  %v2098 = vlaneseq
  %v2099 = vshrl.u32 %v2098, 7
  %v2100 = vsub.s32 0, %v2099
  %v2101 = vrot.slane %v2096, %v2100
  %v2102 = vshrl.u32 %v646, 16
  %v2103 = vpack.i.b16 %v2102, %v2102
  %v2105 = vlaneseq
  %v2106 = vshrl.u32 %v2105, 7
  %v2107 = vsub.s32 0, %v2106
  %v2108 = vrot.slane %v2103, %v2107
  %v2109 = vshrl.u32 %v648, 16
  %v2110 = vpack.i.b16 %v2109, %v2109
  %v2112 = vlaneseq
  %v2113 = vshrl.u32 %v2112, 7
  %v2114 = vsub.s32 0, %v2113
  %v2115 = vrot.slane %v2110, %v2114
  %v2116 = vshrl.u32 %v650, 16
  %v2117 = vpack.i.b16 %v2116, %v2116
  %v2119 = vlaneseq
  %v2120 = vshrl.u32 %v2119, 7
  %v2121 = vsub.s32 0, %v2120
  %v2122 = vrot.slane %v2117, %v2121
  %v2155 = vunpack.c.l.b16 %v1905
  %v2156 = vunpack.c.l.b16 %v1912
  %v2157 = vunpack.c.l.b16 %v1919
  %v2158 = vunpack.c.l.b16 %v1926
  %v2159 = vunpack.c.l.b16 %v1933
  %v2160 = vunpack.c.l.b16 %v1940
  %v2161 = vunpack.c.l.b16 %v1947
  %v2162 = vunpack.c.l.b16 %v1954
  %v2163 = vunpack.c.l.b16 %v1961
  %v2164 = vunpack.c.l.b16 %v1968
  %v2165 = vunpack.c.l.b16 %v1975
  %v2166 = vunpack.c.l.b16 %v1982
  %v2167 = vunpack.c.l.b16 %v1989
  %v2168 = vunpack.c.l.b16 %v1996
  %v2169 = vunpack.c.l.b16 %v2003
  %v2170 = vunpack.c.l.b16 %v2010
  %v2171 = vunpack.c.l.b16 %v2017
  %v2172 = vunpack.c.l.b16 %v2024
  %v2173 = vunpack.c.l.b16 %v2031
  %v2174 = vunpack.c.l.b16 %v2038
  %v2175 = vunpack.c.l.b16 %v2045
  %v2176 = vunpack.c.l.b16 %v2052
  %v2177 = vunpack.c.l.b16 %v2059
  %v2178 = vunpack.c.l.b16 %v2066
  %v2179 = vunpack.c.l.b16 %v2073
  %v2180 = vunpack.c.l.b16 %v2080
  %v2181 = vunpack.c.l.b16 %v2087
  %v2182 = vunpack.c.l.b16 %v2094
  %v2183 = vunpack.c.l.b16 %v2101
  %v2184 = vunpack.c.l.b16 %v2108
  %v2185 = vunpack.c.l.b16 %v2115
  %v2186 = vunpack.c.l.b16 %v2122
  %v2187 = vpack.c.b16 %v2156, %v2155
  %v2188 = vpack.c.b16 %v2158, %v2157
  %v2189 = vpack.c.b16 %v2160, %v2159
  %v2190 = vpack.c.b16 %v2162, %v2161
  %v2191 = vpack.c.b16 %v2164, %v2163
  %v2192 = vpack.c.b16 %v2166, %v2165
  %v2193 = vpack.c.b16 %v2168, %v2167
  %v2194 = vpack.c.b16 %v2170, %v2169
  %v2195 = vpack.c.b16 %v2172, %v2171
  %v2196 = vpack.c.b16 %v2174, %v2173
  %v2197 = vpack.c.b16 %v2176, %v2175
  %v2198 = vpack.c.b16 %v2178, %v2177
  %v2199 = vpack.c.b16 %v2180, %v2179
  %v2200 = vpack.c.b16 %v2182, %v2181
  %v2201 = vpack.c.b16 %v2184, %v2183
  %v2202 = vpack.c.b16 %v2186, %v2185
  %v2219 = vmul.bf16 %v1526, %v2187
  %v2220 = vmul.bf16 %v1526, %v2188
  %v2221 = vmul.bf16 %v1526, %v2189
  %v2222 = vmul.bf16 %v1526, %v2190
  %v2223 = vmul.bf16 %v1526, %v2191
  %v2224 = vmul.bf16 %v1526, %v2192
  %v2225 = vmul.bf16 %v1526, %v2193
  %v2226 = vmul.bf16 %v1526, %v2194
  %v2227 = vmul.bf16 %v1526, %v2195
  %v2228 = vmul.bf16 %v1526, %v2196
  %v2229 = vmul.bf16 %v1526, %v2197
  %v2230 = vmul.bf16 %v1526, %v2198
  %v2231 = vmul.bf16 %v1526, %v2199
  %v2232 = vmul.bf16 %v1526, %v2200
  %v2233 = vmul.bf16 %v1526, %v2201
  %v2234 = vmul.bf16 %v1526, %v2202
  %v2235 = vmul.bf16 %v1538, %v2187
  %v2236 = vmul.bf16 %v1538, %v2188
  %v2237 = vmul.bf16 %v1538, %v2189
  %v2238 = vmul.bf16 %v1538, %v2190
  %v2239 = vmul.bf16 %v1538, %v2191
  %v2240 = vmul.bf16 %v1538, %v2192
  %v2241 = vmul.bf16 %v1538, %v2193
  %v2242 = vmul.bf16 %v1538, %v2194
  %v2243 = vmul.bf16 %v1538, %v2195
  %v2244 = vmul.bf16 %v1538, %v2196
  %v2245 = vmul.bf16 %v1538, %v2197
  %v2246 = vmul.bf16 %v1538, %v2198
  %v2247 = vmul.bf16 %v1538, %v2199
  %v2248 = vmul.bf16 %v1538, %v2200
  %v2249 = vmul.bf16 %v1538, %v2201
  %v2250 = vmul.bf16 %v1538, %v2202
  %v2251 = vmul.bf16 %v1550, %v2187
  %v2252 = vmul.bf16 %v1550, %v2188
  %v2253 = vmul.bf16 %v1550, %v2189
  %v2254 = vmul.bf16 %v1550, %v2190
  %v2255 = vmul.bf16 %v1550, %v2191
  %v2256 = vmul.bf16 %v1550, %v2192
  %v2257 = vmul.bf16 %v1550, %v2193
  %v2258 = vmul.bf16 %v1550, %v2194
  %v2259 = vmul.bf16 %v1550, %v2195
  %v2260 = vmul.bf16 %v1550, %v2196
  %v2261 = vmul.bf16 %v1550, %v2197
  %v2262 = vmul.bf16 %v1550, %v2198
  %v2263 = vmul.bf16 %v1550, %v2199
  %v2264 = vmul.bf16 %v1550, %v2200
  %v2265 = vmul.bf16 %v1550, %v2201
  %v2266 = vmul.bf16 %v1550, %v2202
  %v2267 = vmul.bf16 %v1562, %v2187
  %v2268 = vmul.bf16 %v1562, %v2188
  %v2269 = vmul.bf16 %v1562, %v2189
  %v2270 = vmul.bf16 %v1562, %v2190
  %v2271 = vmul.bf16 %v1562, %v2191
  %v2272 = vmul.bf16 %v1562, %v2192
  %v2273 = vmul.bf16 %v1562, %v2193
  %v2274 = vmul.bf16 %v1562, %v2194
  %v2275 = vmul.bf16 %v1562, %v2195
  %v2276 = vmul.bf16 %v1562, %v2196
  %v2277 = vmul.bf16 %v1562, %v2197
  %v2278 = vmul.bf16 %v1562, %v2198
  %v2279 = vmul.bf16 %v1562, %v2199
  %v2280 = vmul.bf16 %v1562, %v2200
  %v2281 = vmul.bf16 %v1562, %v2201
  %v2282 = vmul.bf16 %v1562, %v2202
  %v2283 = vmul.bf16 %v1574, %v2187
  %v2284 = vmul.bf16 %v1574, %v2188
  %v2285 = vmul.bf16 %v1574, %v2189
  %v2286 = vmul.bf16 %v1574, %v2190
  %v2287 = vmul.bf16 %v1574, %v2191
  %v2288 = vmul.bf16 %v1574, %v2192
  %v2289 = vmul.bf16 %v1574, %v2193
  %v2290 = vmul.bf16 %v1574, %v2194
  %v2291 = vmul.bf16 %v1574, %v2195
  %v2292 = vmul.bf16 %v1574, %v2196
  %v2293 = vmul.bf16 %v1574, %v2197
  %v2294 = vmul.bf16 %v1574, %v2198
  %v2295 = vmul.bf16 %v1574, %v2199
  %v2296 = vmul.bf16 %v1574, %v2200
  %v2297 = vmul.bf16 %v1574, %v2201
  %v2298 = vmul.bf16 %v1574, %v2202
  %v2299 = vmul.bf16 %v1586, %v2187
  %v2300 = vmul.bf16 %v1586, %v2188
  %v2301 = vmul.bf16 %v1586, %v2189
  %v2302 = vmul.bf16 %v1586, %v2190
  %v2303 = vmul.bf16 %v1586, %v2191
  %v2304 = vmul.bf16 %v1586, %v2192
  %v2305 = vmul.bf16 %v1586, %v2193
  %v2306 = vmul.bf16 %v1586, %v2194
  %v2307 = vmul.bf16 %v1586, %v2195
  %v2308 = vmul.bf16 %v1586, %v2196
  %v2309 = vmul.bf16 %v1586, %v2197
  %v2310 = vmul.bf16 %v1586, %v2198
  %v2311 = vmul.bf16 %v1586, %v2199
  %v2312 = vmul.bf16 %v1586, %v2200
  %v2313 = vmul.bf16 %v1586, %v2201
  %v2314 = vmul.bf16 %v1586, %v2202
  %v2315 = vmul.bf16 %v1598, %v2187
  %v2316 = vmul.bf16 %v1598, %v2188
  %v2317 = vmul.bf16 %v1598, %v2189
  %v2318 = vmul.bf16 %v1598, %v2190
  %v2319 = vmul.bf16 %v1598, %v2191
  %v2320 = vmul.bf16 %v1598, %v2192
  %v2321 = vmul.bf16 %v1598, %v2193
  %v2322 = vmul.bf16 %v1598, %v2194
  %v2323 = vmul.bf16 %v1598, %v2195
  %v2324 = vmul.bf16 %v1598, %v2196
  %v2325 = vmul.bf16 %v1598, %v2197
  %v2326 = vmul.bf16 %v1598, %v2198
  %v2327 = vmul.bf16 %v1598, %v2199
  %v2328 = vmul.bf16 %v1598, %v2200
  %v2329 = vmul.bf16 %v1598, %v2201
  %v2330 = vmul.bf16 %v1598, %v2202
  %v2331 = vmul.bf16 %v1610, %v2187
  %v2332 = vmul.bf16 %v1610, %v2188
  %v2333 = vmul.bf16 %v1610, %v2189
  %v2334 = vmul.bf16 %v1610, %v2190
  %v2335 = vmul.bf16 %v1610, %v2191
  %v2336 = vmul.bf16 %v1610, %v2192
  %v2337 = vmul.bf16 %v1610, %v2193
  %v2338 = vmul.bf16 %v1610, %v2194
  %v2339 = vmul.bf16 %v1610, %v2195
  %v2340 = vmul.bf16 %v1610, %v2196
  %v2341 = vmul.bf16 %v1610, %v2197
  %v2342 = vmul.bf16 %v1610, %v2198
  %v2343 = vmul.bf16 %v1610, %v2199
  %v2344 = vmul.bf16 %v1610, %v2200
  %v2345 = vmul.bf16 %v1610, %v2201
  %v2346 = vmul.bf16 %v1610, %v2202
  %v2347 = vmul.bf16 %v1622, %v2187
  %v2348 = vmul.bf16 %v1622, %v2188
  %v2349 = vmul.bf16 %v1622, %v2189
  %v2350 = vmul.bf16 %v1622, %v2190
  %v2351 = vmul.bf16 %v1622, %v2191
  %v2352 = vmul.bf16 %v1622, %v2192
  %v2353 = vmul.bf16 %v1622, %v2193
  %v2354 = vmul.bf16 %v1622, %v2194
  %v2355 = vmul.bf16 %v1622, %v2195
  %v2356 = vmul.bf16 %v1622, %v2196
  %v2357 = vmul.bf16 %v1622, %v2197
  %v2358 = vmul.bf16 %v1622, %v2198
  %v2359 = vmul.bf16 %v1622, %v2199
  %v2360 = vmul.bf16 %v1622, %v2200
  %v2361 = vmul.bf16 %v1622, %v2201
  %v2362 = vmul.bf16 %v1622, %v2202
  %v2363 = vmul.bf16 %v1634, %v2187
  %v2364 = vmul.bf16 %v1634, %v2188
  %v2365 = vmul.bf16 %v1634, %v2189
  %v2366 = vmul.bf16 %v1634, %v2190
  %v2367 = vmul.bf16 %v1634, %v2191
  %v2368 = vmul.bf16 %v1634, %v2192
  %v2369 = vmul.bf16 %v1634, %v2193
  %v2370 = vmul.bf16 %v1634, %v2194
  %v2371 = vmul.bf16 %v1634, %v2195
  %v2372 = vmul.bf16 %v1634, %v2196
  %v2373 = vmul.bf16 %v1634, %v2197
  %v2374 = vmul.bf16 %v1634, %v2198
  %v2375 = vmul.bf16 %v1634, %v2199
  %v2376 = vmul.bf16 %v1634, %v2200
  %v2377 = vmul.bf16 %v1634, %v2201
  %v2378 = vmul.bf16 %v1634, %v2202
  %v2379 = vmul.bf16 %v1646, %v2187
  %v2380 = vmul.bf16 %v1646, %v2188
  %v2381 = vmul.bf16 %v1646, %v2189
  %v2382 = vmul.bf16 %v1646, %v2190
  %v2383 = vmul.bf16 %v1646, %v2191
  %v2384 = vmul.bf16 %v1646, %v2192
  %v2385 = vmul.bf16 %v1646, %v2193
  %v2386 = vmul.bf16 %v1646, %v2194
  %v2387 = vmul.bf16 %v1646, %v2195
  %v2388 = vmul.bf16 %v1646, %v2196
  %v2389 = vmul.bf16 %v1646, %v2197
  %v2390 = vmul.bf16 %v1646, %v2198
  %v2391 = vmul.bf16 %v1646, %v2199
  %v2392 = vmul.bf16 %v1646, %v2200
  %v2393 = vmul.bf16 %v1646, %v2201
  %v2394 = vmul.bf16 %v1646, %v2202
  %v2395 = vmul.bf16 %v1658, %v2187
  %v2396 = vmul.bf16 %v1658, %v2188
  %v2397 = vmul.bf16 %v1658, %v2189
  %v2398 = vmul.bf16 %v1658, %v2190
  %v2399 = vmul.bf16 %v1658, %v2191
  %v2400 = vmul.bf16 %v1658, %v2192
  %v2401 = vmul.bf16 %v1658, %v2193
  %v2402 = vmul.bf16 %v1658, %v2194
  %v2403 = vmul.bf16 %v1658, %v2195
  %v2404 = vmul.bf16 %v1658, %v2196
  %v2405 = vmul.bf16 %v1658, %v2197
  %v2406 = vmul.bf16 %v1658, %v2198
  %v2407 = vmul.bf16 %v1658, %v2199
  %v2408 = vmul.bf16 %v1658, %v2200
  %v2409 = vmul.bf16 %v1658, %v2201
  %v2410 = vmul.bf16 %v1658, %v2202
  %v2411 = vmul.bf16 %v1670, %v2187
  %v2412 = vmul.bf16 %v1670, %v2188
  %v2413 = vmul.bf16 %v1670, %v2189
  %v2414 = vmul.bf16 %v1670, %v2190
  %v2415 = vmul.bf16 %v1670, %v2191
  %v2416 = vmul.bf16 %v1670, %v2192
  %v2417 = vmul.bf16 %v1670, %v2193
  %v2418 = vmul.bf16 %v1670, %v2194
  %v2419 = vmul.bf16 %v1670, %v2195
  %v2420 = vmul.bf16 %v1670, %v2196
  %v2421 = vmul.bf16 %v1670, %v2197
  %v2422 = vmul.bf16 %v1670, %v2198
  %v2423 = vmul.bf16 %v1670, %v2199
  %v2424 = vmul.bf16 %v1670, %v2200
  %v2425 = vmul.bf16 %v1670, %v2201
  %v2426 = vmul.bf16 %v1670, %v2202
  %v2427 = vmul.bf16 %v1682, %v2187
  %v2428 = vmul.bf16 %v1682, %v2188
  %v2429 = vmul.bf16 %v1682, %v2189
  %v2430 = vmul.bf16 %v1682, %v2190
  %v2431 = vmul.bf16 %v1682, %v2191
  %v2432 = vmul.bf16 %v1682, %v2192
  %v2433 = vmul.bf16 %v1682, %v2193
  %v2434 = vmul.bf16 %v1682, %v2194
  %v2435 = vmul.bf16 %v1682, %v2195
  %v2436 = vmul.bf16 %v1682, %v2196
  %v2437 = vmul.bf16 %v1682, %v2197
  %v2438 = vmul.bf16 %v1682, %v2198
  %v2439 = vmul.bf16 %v1682, %v2199
  %v2440 = vmul.bf16 %v1682, %v2200
  %v2441 = vmul.bf16 %v1682, %v2201
  %v2442 = vmul.bf16 %v1682, %v2202
  %v2443 = vmul.bf16 %v1694, %v2187
  %v2444 = vmul.bf16 %v1694, %v2188
  %v2445 = vmul.bf16 %v1694, %v2189
  %v2446 = vmul.bf16 %v1694, %v2190
  %v2447 = vmul.bf16 %v1694, %v2191
  %v2448 = vmul.bf16 %v1694, %v2192
  %v2449 = vmul.bf16 %v1694, %v2193
  %v2450 = vmul.bf16 %v1694, %v2194
  %v2451 = vmul.bf16 %v1694, %v2195
  %v2452 = vmul.bf16 %v1694, %v2196
  %v2453 = vmul.bf16 %v1694, %v2197
  %v2454 = vmul.bf16 %v1694, %v2198
  %v2455 = vmul.bf16 %v1694, %v2199
  %v2456 = vmul.bf16 %v1694, %v2200
  %v2457 = vmul.bf16 %v1694, %v2201
  %v2458 = vmul.bf16 %v1694, %v2202
  %v2459 = vmul.bf16 %v1706, %v2187
  %v2460 = vmul.bf16 %v1706, %v2188
  %v2461 = vmul.bf16 %v1706, %v2189
  %v2462 = vmul.bf16 %v1706, %v2190
  %v2463 = vmul.bf16 %v1706, %v2191
  %v2464 = vmul.bf16 %v1706, %v2192
  %v2465 = vmul.bf16 %v1706, %v2193
  %v2466 = vmul.bf16 %v1706, %v2194
  %v2467 = vmul.bf16 %v1706, %v2195
  %v2468 = vmul.bf16 %v1706, %v2196
  %v2469 = vmul.bf16 %v1706, %v2197
  %v2470 = vmul.bf16 %v1706, %v2198
  %v2471 = vmul.bf16 %v1706, %v2199
  %v2472 = vmul.bf16 %v1706, %v2200
  %v2473 = vmul.bf16 %v1706, %v2201
  %v2474 = vmul.bf16 %v1706, %v2202
  %v2475 = vmul.bf16 %v1718, %v2187
  %v2476 = vmul.bf16 %v1718, %v2188
  %v2477 = vmul.bf16 %v1718, %v2189
  %v2478 = vmul.bf16 %v1718, %v2190
  %v2479 = vmul.bf16 %v1718, %v2191
  %v2480 = vmul.bf16 %v1718, %v2192
  %v2481 = vmul.bf16 %v1718, %v2193
  %v2482 = vmul.bf16 %v1718, %v2194
  %v2483 = vmul.bf16 %v1718, %v2195
  %v2484 = vmul.bf16 %v1718, %v2196
  %v2485 = vmul.bf16 %v1718, %v2197
  %v2486 = vmul.bf16 %v1718, %v2198
  %v2487 = vmul.bf16 %v1718, %v2199
  %v2488 = vmul.bf16 %v1718, %v2200
  %v2489 = vmul.bf16 %v1718, %v2201
  %v2490 = vmul.bf16 %v1718, %v2202
  %v2491 = vmul.bf16 %v1730, %v2187
  %v2492 = vmul.bf16 %v1730, %v2188
  %v2493 = vmul.bf16 %v1730, %v2189
  %v2494 = vmul.bf16 %v1730, %v2190
  %v2495 = vmul.bf16 %v1730, %v2191
  %v2496 = vmul.bf16 %v1730, %v2192
  %v2497 = vmul.bf16 %v1730, %v2193
  %v2498 = vmul.bf16 %v1730, %v2194
  %v2499 = vmul.bf16 %v1730, %v2195
  %v2500 = vmul.bf16 %v1730, %v2196
  %v2501 = vmul.bf16 %v1730, %v2197
  %v2502 = vmul.bf16 %v1730, %v2198
  %v2503 = vmul.bf16 %v1730, %v2199
  %v2504 = vmul.bf16 %v1730, %v2200
  %v2505 = vmul.bf16 %v1730, %v2201
  %v2506 = vmul.bf16 %v1730, %v2202
  %v2507 = vmul.bf16 %v1742, %v2187
  %v2508 = vmul.bf16 %v1742, %v2188
  %v2509 = vmul.bf16 %v1742, %v2189
  %v2510 = vmul.bf16 %v1742, %v2190
  %v2511 = vmul.bf16 %v1742, %v2191
  %v2512 = vmul.bf16 %v1742, %v2192
  %v2513 = vmul.bf16 %v1742, %v2193
  %v2514 = vmul.bf16 %v1742, %v2194
  %v2515 = vmul.bf16 %v1742, %v2195
  %v2516 = vmul.bf16 %v1742, %v2196
  %v2517 = vmul.bf16 %v1742, %v2197
  %v2518 = vmul.bf16 %v1742, %v2198
  %v2519 = vmul.bf16 %v1742, %v2199
  %v2520 = vmul.bf16 %v1742, %v2200
  %v2521 = vmul.bf16 %v1742, %v2201
  %v2522 = vmul.bf16 %v1742, %v2202
  %v2523 = vmul.bf16 %v1754, %v2187
  %v2524 = vmul.bf16 %v1754, %v2188
  %v2525 = vmul.bf16 %v1754, %v2189
  %v2526 = vmul.bf16 %v1754, %v2190
  %v2527 = vmul.bf16 %v1754, %v2191
  %v2528 = vmul.bf16 %v1754, %v2192
  %v2529 = vmul.bf16 %v1754, %v2193
  %v2530 = vmul.bf16 %v1754, %v2194
  %v2531 = vmul.bf16 %v1754, %v2195
  %v2532 = vmul.bf16 %v1754, %v2196
  %v2533 = vmul.bf16 %v1754, %v2197
  %v2534 = vmul.bf16 %v1754, %v2198
  %v2535 = vmul.bf16 %v1754, %v2199
  %v2536 = vmul.bf16 %v1754, %v2200
  %v2537 = vmul.bf16 %v1754, %v2201
  %v2538 = vmul.bf16 %v1754, %v2202
  %v2539 = vmul.bf16 %v1766, %v2187
  %v2540 = vmul.bf16 %v1766, %v2188
  %v2541 = vmul.bf16 %v1766, %v2189
  %v2542 = vmul.bf16 %v1766, %v2190
  %v2543 = vmul.bf16 %v1766, %v2191
  %v2544 = vmul.bf16 %v1766, %v2192
  %v2545 = vmul.bf16 %v1766, %v2193
  %v2546 = vmul.bf16 %v1766, %v2194
  %v2547 = vmul.bf16 %v1766, %v2195
  %v2548 = vmul.bf16 %v1766, %v2196
  %v2549 = vmul.bf16 %v1766, %v2197
  %v2550 = vmul.bf16 %v1766, %v2198
  %v2551 = vmul.bf16 %v1766, %v2199
  %v2552 = vmul.bf16 %v1766, %v2200
  %v2553 = vmul.bf16 %v1766, %v2201
  %v2554 = vmul.bf16 %v1766, %v2202
  %v2555 = vmul.bf16 %v1778, %v2187
  %v2556 = vmul.bf16 %v1778, %v2188
  %v2557 = vmul.bf16 %v1778, %v2189
  %v2558 = vmul.bf16 %v1778, %v2190
  %v2559 = vmul.bf16 %v1778, %v2191
  %v2560 = vmul.bf16 %v1778, %v2192
  %v2561 = vmul.bf16 %v1778, %v2193
  %v2562 = vmul.bf16 %v1778, %v2194
  %v2563 = vmul.bf16 %v1778, %v2195
  %v2564 = vmul.bf16 %v1778, %v2196
  %v2565 = vmul.bf16 %v1778, %v2197
  %v2566 = vmul.bf16 %v1778, %v2198
  %v2567 = vmul.bf16 %v1778, %v2199
  %v2568 = vmul.bf16 %v1778, %v2200
  %v2569 = vmul.bf16 %v1778, %v2201
  %v2570 = vmul.bf16 %v1778, %v2202
  %v2571 = vmul.bf16 %v1790, %v2187
  %v2572 = vmul.bf16 %v1790, %v2188
  %v2573 = vmul.bf16 %v1790, %v2189
  %v2574 = vmul.bf16 %v1790, %v2190
  %v2575 = vmul.bf16 %v1790, %v2191
  %v2576 = vmul.bf16 %v1790, %v2192
  %v2577 = vmul.bf16 %v1790, %v2193
  %v2578 = vmul.bf16 %v1790, %v2194
  %v2579 = vmul.bf16 %v1790, %v2195
  %v2580 = vmul.bf16 %v1790, %v2196
  %v2581 = vmul.bf16 %v1790, %v2197
  %v2582 = vmul.bf16 %v1790, %v2198
  %v2583 = vmul.bf16 %v1790, %v2199
  %v2584 = vmul.bf16 %v1790, %v2200
  %v2585 = vmul.bf16 %v1790, %v2201
  %v2586 = vmul.bf16 %v1790, %v2202
  %v2587 = vmul.bf16 %v1802, %v2187
  %v2588 = vmul.bf16 %v1802, %v2188
  %v2589 = vmul.bf16 %v1802, %v2189
  %v2590 = vmul.bf16 %v1802, %v2190
  %v2591 = vmul.bf16 %v1802, %v2191
  %v2592 = vmul.bf16 %v1802, %v2192
  %v2593 = vmul.bf16 %v1802, %v2193
  %v2594 = vmul.bf16 %v1802, %v2194
  %v2595 = vmul.bf16 %v1802, %v2195
  %v2596 = vmul.bf16 %v1802, %v2196
  %v2597 = vmul.bf16 %v1802, %v2197
  %v2598 = vmul.bf16 %v1802, %v2198
  %v2599 = vmul.bf16 %v1802, %v2199
  %v2600 = vmul.bf16 %v1802, %v2200
  %v2601 = vmul.bf16 %v1802, %v2201
  %v2602 = vmul.bf16 %v1802, %v2202
  %v2603 = vmul.bf16 %v1814, %v2187
  %v2604 = vmul.bf16 %v1814, %v2188
  %v2605 = vmul.bf16 %v1814, %v2189
  %v2606 = vmul.bf16 %v1814, %v2190
  %v2607 = vmul.bf16 %v1814, %v2191
  %v2608 = vmul.bf16 %v1814, %v2192
  %v2609 = vmul.bf16 %v1814, %v2193
  %v2610 = vmul.bf16 %v1814, %v2194
  %v2611 = vmul.bf16 %v1814, %v2195
  %v2612 = vmul.bf16 %v1814, %v2196
  %v2613 = vmul.bf16 %v1814, %v2197
  %v2614 = vmul.bf16 %v1814, %v2198
  %v2615 = vmul.bf16 %v1814, %v2199
  %v2616 = vmul.bf16 %v1814, %v2200
  %v2617 = vmul.bf16 %v1814, %v2201
  %v2618 = vmul.bf16 %v1814, %v2202
  %v2619 = vmul.bf16 %v1826, %v2187
  %v2620 = vmul.bf16 %v1826, %v2188
  %v2621 = vmul.bf16 %v1826, %v2189
  %v2622 = vmul.bf16 %v1826, %v2190
  %v2623 = vmul.bf16 %v1826, %v2191
  %v2624 = vmul.bf16 %v1826, %v2192
  %v2625 = vmul.bf16 %v1826, %v2193
  %v2626 = vmul.bf16 %v1826, %v2194
  %v2627 = vmul.bf16 %v1826, %v2195
  %v2628 = vmul.bf16 %v1826, %v2196
  %v2629 = vmul.bf16 %v1826, %v2197
  %v2630 = vmul.bf16 %v1826, %v2198
  %v2631 = vmul.bf16 %v1826, %v2199
  %v2632 = vmul.bf16 %v1826, %v2200
  %v2633 = vmul.bf16 %v1826, %v2201
  %v2634 = vmul.bf16 %v1826, %v2202
  %v2635 = vmul.bf16 %v1838, %v2187
  %v2636 = vmul.bf16 %v1838, %v2188
  %v2637 = vmul.bf16 %v1838, %v2189
  %v2638 = vmul.bf16 %v1838, %v2190
  %v2639 = vmul.bf16 %v1838, %v2191
  %v2640 = vmul.bf16 %v1838, %v2192
  %v2641 = vmul.bf16 %v1838, %v2193
  %v2642 = vmul.bf16 %v1838, %v2194
  %v2643 = vmul.bf16 %v1838, %v2195
  %v2644 = vmul.bf16 %v1838, %v2196
  %v2645 = vmul.bf16 %v1838, %v2197
  %v2646 = vmul.bf16 %v1838, %v2198
  %v2647 = vmul.bf16 %v1838, %v2199
  %v2648 = vmul.bf16 %v1838, %v2200
  %v2649 = vmul.bf16 %v1838, %v2201
  %v2650 = vmul.bf16 %v1838, %v2202
  %v2651 = vmul.bf16 %v1850, %v2187
  %v2652 = vmul.bf16 %v1850, %v2188
  %v2653 = vmul.bf16 %v1850, %v2189
  %v2654 = vmul.bf16 %v1850, %v2190
  %v2655 = vmul.bf16 %v1850, %v2191
  %v2656 = vmul.bf16 %v1850, %v2192
  %v2657 = vmul.bf16 %v1850, %v2193
  %v2658 = vmul.bf16 %v1850, %v2194
  %v2659 = vmul.bf16 %v1850, %v2195
  %v2660 = vmul.bf16 %v1850, %v2196
  %v2661 = vmul.bf16 %v1850, %v2197
  %v2662 = vmul.bf16 %v1850, %v2198
  %v2663 = vmul.bf16 %v1850, %v2199
  %v2664 = vmul.bf16 %v1850, %v2200
  %v2665 = vmul.bf16 %v1850, %v2201
  %v2666 = vmul.bf16 %v1850, %v2202
  %v2667 = vmul.bf16 %v1862, %v2187
  %v2668 = vmul.bf16 %v1862, %v2188
  %v2669 = vmul.bf16 %v1862, %v2189
  %v2670 = vmul.bf16 %v1862, %v2190
  %v2671 = vmul.bf16 %v1862, %v2191
  %v2672 = vmul.bf16 %v1862, %v2192
  %v2673 = vmul.bf16 %v1862, %v2193
  %v2674 = vmul.bf16 %v1862, %v2194
  %v2675 = vmul.bf16 %v1862, %v2195
  %v2676 = vmul.bf16 %v1862, %v2196
  %v2677 = vmul.bf16 %v1862, %v2197
  %v2678 = vmul.bf16 %v1862, %v2198
  %v2679 = vmul.bf16 %v1862, %v2199
  %v2680 = vmul.bf16 %v1862, %v2200
  %v2681 = vmul.bf16 %v1862, %v2201
  %v2682 = vmul.bf16 %v1862, %v2202
  %v2683 = vmul.bf16 %v1874, %v2187
  %v2684 = vmul.bf16 %v1874, %v2188
  %v2685 = vmul.bf16 %v1874, %v2189
  %v2686 = vmul.bf16 %v1874, %v2190
  %v2687 = vmul.bf16 %v1874, %v2191
  %v2688 = vmul.bf16 %v1874, %v2192
  %v2689 = vmul.bf16 %v1874, %v2193
  %v2690 = vmul.bf16 %v1874, %v2194
  %v2691 = vmul.bf16 %v1874, %v2195
  %v2692 = vmul.bf16 %v1874, %v2196
  %v2693 = vmul.bf16 %v1874, %v2197
  %v2694 = vmul.bf16 %v1874, %v2198
  %v2695 = vmul.bf16 %v1874, %v2199
  %v2696 = vmul.bf16 %v1874, %v2200
  %v2697 = vmul.bf16 %v1874, %v2201
  %v2698 = vmul.bf16 %v1874, %v2202
  %v2699 = vmul.bf16 %v1886, %v2187
  %v2700 = vmul.bf16 %v1886, %v2188
  %v2701 = vmul.bf16 %v1886, %v2189
  %v2702 = vmul.bf16 %v1886, %v2190
  %v2703 = vmul.bf16 %v1886, %v2191
  %v2704 = vmul.bf16 %v1886, %v2192
  %v2705 = vmul.bf16 %v1886, %v2193
  %v2706 = vmul.bf16 %v1886, %v2194
  %v2707 = vmul.bf16 %v1886, %v2195
  %v2708 = vmul.bf16 %v1886, %v2196
  %v2709 = vmul.bf16 %v1886, %v2197
  %v2710 = vmul.bf16 %v1886, %v2198
  %v2711 = vmul.bf16 %v1886, %v2199
  %v2712 = vmul.bf16 %v1886, %v2200
  %v2713 = vmul.bf16 %v1886, %v2201
  %v2714 = vmul.bf16 %v1886, %v2202
  %v2715 = vmul.bf16 %v1898, %v2187
  %v2716 = vmul.bf16 %v1898, %v2188
  %v2717 = vmul.bf16 %v1898, %v2189
  %v2718 = vmul.bf16 %v1898, %v2190
  %v2719 = vmul.bf16 %v1898, %v2191
  %v2720 = vmul.bf16 %v1898, %v2192
  %v2721 = vmul.bf16 %v1898, %v2193
  %v2722 = vmul.bf16 %v1898, %v2194
  %v2723 = vmul.bf16 %v1898, %v2195
  %v2724 = vmul.bf16 %v1898, %v2196
  %v2725 = vmul.bf16 %v1898, %v2197
  %v2726 = vmul.bf16 %v1898, %v2198
  %v2727 = vmul.bf16 %v1898, %v2199
  %v2728 = vmul.bf16 %v1898, %v2200
  %v2729 = vmul.bf16 %v1898, %v2201
  %v2730 = vmul.bf16 %v1898, %v2202
  %v2731 = vadd.bf16 %v971, %v2219
  %v2732 = vadd.bf16 %v972, %v2220
  %v2733 = vadd.bf16 %v973, %v2221
  %v2734 = vadd.bf16 %v974, %v2222
  %v2735 = vadd.bf16 %v975, %v2223
  %v2736 = vadd.bf16 %v976, %v2224
  %v2737 = vadd.bf16 %v977, %v2225
  %v2738 = vadd.bf16 %v978, %v2226
  %v2739 = vadd.bf16 %v979, %v2227
  %v2740 = vadd.bf16 %v980, %v2228
  %v2741 = vadd.bf16 %v981, %v2229
  %v2742 = vadd.bf16 %v982, %v2230
  %v2743 = vadd.bf16 %v983, %v2231
  %v2744 = vadd.bf16 %v984, %v2232
  %v2745 = vadd.bf16 %v985, %v2233
  %v2746 = vadd.bf16 %v986, %v2234
  %v2747 = vadd.bf16 %v987, %v2235
  %v2748 = vadd.bf16 %v988, %v2236
  %v2749 = vadd.bf16 %v989, %v2237
  %v2750 = vadd.bf16 %v990, %v2238
  %v2751 = vadd.bf16 %v991, %v2239
  %v2752 = vadd.bf16 %v992, %v2240
  %v2753 = vadd.bf16 %v993, %v2241
  %v2754 = vadd.bf16 %v994, %v2242
  %v2755 = vadd.bf16 %v995, %v2243
  %v2756 = vadd.bf16 %v996, %v2244
  %v2757 = vadd.bf16 %v997, %v2245
  %v2758 = vadd.bf16 %v998, %v2246
  %v2759 = vadd.bf16 %v999, %v2247
  %v2760 = vadd.bf16 %v1000, %v2248
  %v2761 = vadd.bf16 %v1001, %v2249
  %v2762 = vadd.bf16 %v1002, %v2250
  %v2763 = vadd.bf16 %v1003, %v2251
  %v2764 = vadd.bf16 %v1004, %v2252
  %v2765 = vadd.bf16 %v1005, %v2253
  %v2766 = vadd.bf16 %v1006, %v2254
  %v2767 = vadd.bf16 %v1007, %v2255
  %v2768 = vadd.bf16 %v1008, %v2256
  %v2769 = vadd.bf16 %v1009, %v2257
  %v2770 = vadd.bf16 %v1010, %v2258
  %v2771 = vadd.bf16 %v1011, %v2259
  %v2772 = vadd.bf16 %v1012, %v2260
  %v2773 = vadd.bf16 %v1013, %v2261
  %v2774 = vadd.bf16 %v1014, %v2262
  %v2775 = vadd.bf16 %v1015, %v2263
  %v2776 = vadd.bf16 %v1016, %v2264
  %v2777 = vadd.bf16 %v1017, %v2265
  %v2778 = vadd.bf16 %v1018, %v2266
  %v2779 = vadd.bf16 %v1019, %v2267
  %v2780 = vadd.bf16 %v1020, %v2268
  %v2781 = vadd.bf16 %v1021, %v2269
  %v2782 = vadd.bf16 %v1022, %v2270
  %v2783 = vadd.bf16 %v1023, %v2271
  %v2784 = vadd.bf16 %v1024, %v2272
  %v2785 = vadd.bf16 %v1025, %v2273
  %v2786 = vadd.bf16 %v1026, %v2274
  %v2787 = vadd.bf16 %v1027, %v2275
  %v2788 = vadd.bf16 %v1028, %v2276
  %v2789 = vadd.bf16 %v1029, %v2277
  %v2790 = vadd.bf16 %v1030, %v2278
  %v2791 = vadd.bf16 %v1031, %v2279
  %v2792 = vadd.bf16 %v1032, %v2280
  %v2793 = vadd.bf16 %v1033, %v2281
  %v2794 = vadd.bf16 %v1034, %v2282
  %v2795 = vadd.bf16 %v1035, %v2283
  %v2796 = vadd.bf16 %v1036, %v2284
  %v2797 = vadd.bf16 %v1037, %v2285
  %v2798 = vadd.bf16 %v1038, %v2286
  %v2799 = vadd.bf16 %v1039, %v2287
  %v2800 = vadd.bf16 %v1040, %v2288
  %v2801 = vadd.bf16 %v1041, %v2289
  %v2802 = vadd.bf16 %v1042, %v2290
  %v2803 = vadd.bf16 %v1043, %v2291
  %v2804 = vadd.bf16 %v1044, %v2292
  %v2805 = vadd.bf16 %v1045, %v2293
  %v2806 = vadd.bf16 %v1046, %v2294
  %v2807 = vadd.bf16 %v1047, %v2295
  %v2808 = vadd.bf16 %v1048, %v2296
  %v2809 = vadd.bf16 %v1049, %v2297
  %v2810 = vadd.bf16 %v1050, %v2298
  %v2811 = vadd.bf16 %v1051, %v2299
  %v2812 = vadd.bf16 %v1052, %v2300
  %v2813 = vadd.bf16 %v1053, %v2301
  %v2814 = vadd.bf16 %v1054, %v2302
  %v2815 = vadd.bf16 %v1055, %v2303
  %v2816 = vadd.bf16 %v1056, %v2304
  %v2817 = vadd.bf16 %v1057, %v2305
  %v2818 = vadd.bf16 %v1058, %v2306
  %v2819 = vadd.bf16 %v1059, %v2307
  %v2820 = vadd.bf16 %v1060, %v2308
  %v2821 = vadd.bf16 %v1061, %v2309
  %v2822 = vadd.bf16 %v1062, %v2310
  %v2823 = vadd.bf16 %v1063, %v2311
  %v2824 = vadd.bf16 %v1064, %v2312
  %v2825 = vadd.bf16 %v1065, %v2313
  %v2826 = vadd.bf16 %v1066, %v2314
  %v2827 = vadd.bf16 %v1067, %v2315
  %v2828 = vadd.bf16 %v1068, %v2316
  %v2829 = vadd.bf16 %v1069, %v2317
  %v2830 = vadd.bf16 %v1070, %v2318
  %v2831 = vadd.bf16 %v1071, %v2319
  %v2832 = vadd.bf16 %v1072, %v2320
  %v2833 = vadd.bf16 %v1073, %v2321
  %v2834 = vadd.bf16 %v1074, %v2322
  %v2835 = vadd.bf16 %v1075, %v2323
  %v2836 = vadd.bf16 %v1076, %v2324
  %v2837 = vadd.bf16 %v1077, %v2325
  %v2838 = vadd.bf16 %v1078, %v2326
  %v2839 = vadd.bf16 %v1079, %v2327
  %v2840 = vadd.bf16 %v1080, %v2328
  %v2841 = vadd.bf16 %v1081, %v2329
  %v2842 = vadd.bf16 %v1082, %v2330
  %v2843 = vadd.bf16 %v1083, %v2331
  %v2844 = vadd.bf16 %v1084, %v2332
  %v2845 = vadd.bf16 %v1085, %v2333
  %v2846 = vadd.bf16 %v1086, %v2334
  %v2847 = vadd.bf16 %v1087, %v2335
  %v2848 = vadd.bf16 %v1088, %v2336
  %v2849 = vadd.bf16 %v1089, %v2337
  %v2850 = vadd.bf16 %v1090, %v2338
  %v2851 = vadd.bf16 %v1091, %v2339
  %v2852 = vadd.bf16 %v1092, %v2340
  %v2853 = vadd.bf16 %v1093, %v2341
  %v2854 = vadd.bf16 %v1094, %v2342
  %v2855 = vadd.bf16 %v1095, %v2343
  %v2856 = vadd.bf16 %v1096, %v2344
  %v2857 = vadd.bf16 %v1097, %v2345
  %v2858 = vadd.bf16 %v1098, %v2346
  %v2859 = vadd.bf16 %v1099, %v2347
  %v2860 = vadd.bf16 %v1100, %v2348
  %v2861 = vadd.bf16 %v1101, %v2349
  %v2862 = vadd.bf16 %v1102, %v2350
  %v2863 = vadd.bf16 %v1103, %v2351
  %v2864 = vadd.bf16 %v1104, %v2352
  %v2865 = vadd.bf16 %v1105, %v2353
  %v2866 = vadd.bf16 %v1106, %v2354
  %v2867 = vadd.bf16 %v1107, %v2355
  %v2868 = vadd.bf16 %v1108, %v2356
  %v2869 = vadd.bf16 %v1109, %v2357
  %v2870 = vadd.bf16 %v1110, %v2358
  %v2871 = vadd.bf16 %v1111, %v2359
  %v2872 = vadd.bf16 %v1112, %v2360
  %v2873 = vadd.bf16 %v1113, %v2361
  %v2874 = vadd.bf16 %v1114, %v2362
  %v2875 = vadd.bf16 %v1115, %v2363
  %v2876 = vadd.bf16 %v1116, %v2364
  %v2877 = vadd.bf16 %v1117, %v2365
  %v2878 = vadd.bf16 %v1118, %v2366
  %v2879 = vadd.bf16 %v1119, %v2367
  %v2880 = vadd.bf16 %v1120, %v2368
  %v2881 = vadd.bf16 %v1121, %v2369
  %v2882 = vadd.bf16 %v1122, %v2370
  %v2883 = vadd.bf16 %v1123, %v2371
  %v2884 = vadd.bf16 %v1124, %v2372
  %v2885 = vadd.bf16 %v1125, %v2373
  %v2886 = vadd.bf16 %v1126, %v2374
  %v2887 = vadd.bf16 %v1127, %v2375
  %v2888 = vadd.bf16 %v1128, %v2376
  %v2889 = vadd.bf16 %v1129, %v2377
  %v2890 = vadd.bf16 %v1130, %v2378
  %v2891 = vadd.bf16 %v1131, %v2379
  %v2892 = vadd.bf16 %v1132, %v2380
  %v2893 = vadd.bf16 %v1133, %v2381
  %v2894 = vadd.bf16 %v1134, %v2382
  %v2895 = vadd.bf16 %v1135, %v2383
  %v2896 = vadd.bf16 %v1136, %v2384
  %v2897 = vadd.bf16 %v1137, %v2385
  %v2898 = vadd.bf16 %v1138, %v2386
  %v2899 = vadd.bf16 %v1139, %v2387
  %v2900 = vadd.bf16 %v1140, %v2388
  %v2901 = vadd.bf16 %v1141, %v2389
  %v2902 = vadd.bf16 %v1142, %v2390
  %v2903 = vadd.bf16 %v1143, %v2391
  %v2904 = vadd.bf16 %v1144, %v2392
  %v2905 = vadd.bf16 %v1145, %v2393
  %v2906 = vadd.bf16 %v1146, %v2394
  %v2907 = vadd.bf16 %v1147, %v2395
  %v2908 = vadd.bf16 %v1148, %v2396
  %v2909 = vadd.bf16 %v1149, %v2397
  %v2910 = vadd.bf16 %v1150, %v2398
  %v2911 = vadd.bf16 %v1151, %v2399
  %v2912 = vadd.bf16 %v1152, %v2400
  %v2913 = vadd.bf16 %v1153, %v2401
  %v2914 = vadd.bf16 %v1154, %v2402
  %v2915 = vadd.bf16 %v1155, %v2403
  %v2916 = vadd.bf16 %v1156, %v2404
  %v2917 = vadd.bf16 %v1157, %v2405
  %v2918 = vadd.bf16 %v1158, %v2406
  %v2919 = vadd.bf16 %v1159, %v2407
  %v2920 = vadd.bf16 %v1160, %v2408
  %v2921 = vadd.bf16 %v1161, %v2409
  %v2922 = vadd.bf16 %v1162, %v2410
  %v2923 = vadd.bf16 %v1163, %v2411
  %v2924 = vadd.bf16 %v1164, %v2412
  %v2925 = vadd.bf16 %v1165, %v2413
  %v2926 = vadd.bf16 %v1166, %v2414
  %v2927 = vadd.bf16 %v1167, %v2415
  %v2928 = vadd.bf16 %v1168, %v2416
  %v2929 = vadd.bf16 %v1169, %v2417
  %v2930 = vadd.bf16 %v1170, %v2418
  %v2931 = vadd.bf16 %v1171, %v2419
  %v2932 = vadd.bf16 %v1172, %v2420
  %v2933 = vadd.bf16 %v1173, %v2421
  %v2934 = vadd.bf16 %v1174, %v2422
  %v2935 = vadd.bf16 %v1175, %v2423
  %v2936 = vadd.bf16 %v1176, %v2424
  %v2937 = vadd.bf16 %v1177, %v2425
  %v2938 = vadd.bf16 %v1178, %v2426
  %v2939 = vadd.bf16 %v1179, %v2427
  %v2940 = vadd.bf16 %v1180, %v2428
  %v2941 = vadd.bf16 %v1181, %v2429
  %v2942 = vadd.bf16 %v1182, %v2430
  %v2943 = vadd.bf16 %v1183, %v2431
  %v2944 = vadd.bf16 %v1184, %v2432
  %v2945 = vadd.bf16 %v1185, %v2433
  %v2946 = vadd.bf16 %v1186, %v2434
  %v2947 = vadd.bf16 %v1187, %v2435
  %v2948 = vadd.bf16 %v1188, %v2436
  %v2949 = vadd.bf16 %v1189, %v2437
  %v2950 = vadd.bf16 %v1190, %v2438
  %v2951 = vadd.bf16 %v1191, %v2439
  %v2952 = vadd.bf16 %v1192, %v2440
  %v2953 = vadd.bf16 %v1193, %v2441
  %v2954 = vadd.bf16 %v1194, %v2442
  %v2955 = vadd.bf16 %v1195, %v2443
  %v2956 = vadd.bf16 %v1196, %v2444
  %v2957 = vadd.bf16 %v1197, %v2445
  %v2958 = vadd.bf16 %v1198, %v2446
  %v2959 = vadd.bf16 %v1199, %v2447
  %v2960 = vadd.bf16 %v1200, %v2448
  %v2961 = vadd.bf16 %v1201, %v2449
  %v2962 = vadd.bf16 %v1202, %v2450
  %v2963 = vadd.bf16 %v1203, %v2451
  %v2964 = vadd.bf16 %v1204, %v2452
  %v2965 = vadd.bf16 %v1205, %v2453
  %v2966 = vadd.bf16 %v1206, %v2454
  %v2967 = vadd.bf16 %v1207, %v2455
  %v2968 = vadd.bf16 %v1208, %v2456
  %v2969 = vadd.bf16 %v1209, %v2457
  %v2970 = vadd.bf16 %v1210, %v2458
  %v2971 = vadd.bf16 %v1211, %v2459
  %v2972 = vadd.bf16 %v1212, %v2460
  %v2973 = vadd.bf16 %v1213, %v2461
  %v2974 = vadd.bf16 %v1214, %v2462
  %v2975 = vadd.bf16 %v1215, %v2463
  %v2976 = vadd.bf16 %v1216, %v2464
  %v2977 = vadd.bf16 %v1217, %v2465
  %v2978 = vadd.bf16 %v1218, %v2466
  %v2979 = vadd.bf16 %v1219, %v2467
  %v2980 = vadd.bf16 %v1220, %v2468
  %v2981 = vadd.bf16 %v1221, %v2469
  %v2982 = vadd.bf16 %v1222, %v2470
  %v2983 = vadd.bf16 %v1223, %v2471
  %v2984 = vadd.bf16 %v1224, %v2472
  %v2985 = vadd.bf16 %v1225, %v2473
  %v2986 = vadd.bf16 %v1226, %v2474
  %v2987 = vadd.bf16 %v1227, %v2475
  %v2988 = vadd.bf16 %v1228, %v2476
  %v2989 = vadd.bf16 %v1229, %v2477
  %v2990 = vadd.bf16 %v1230, %v2478
  %v2991 = vadd.bf16 %v1231, %v2479
  %v2992 = vadd.bf16 %v1232, %v2480
  %v2993 = vadd.bf16 %v1233, %v2481
  %v2994 = vadd.bf16 %v1234, %v2482
  %v2995 = vadd.bf16 %v1235, %v2483
  %v2996 = vadd.bf16 %v1236, %v2484
  %v2997 = vadd.bf16 %v1237, %v2485
  %v2998 = vadd.bf16 %v1238, %v2486
  %v2999 = vadd.bf16 %v1239, %v2487
  %v3000 = vadd.bf16 %v1240, %v2488
  %v3001 = vadd.bf16 %v1241, %v2489
  %v3002 = vadd.bf16 %v1242, %v2490
  %v3003 = vadd.bf16 %v1243, %v2491
  %v3004 = vadd.bf16 %v1244, %v2492
  %v3005 = vadd.bf16 %v1245, %v2493
  %v3006 = vadd.bf16 %v1246, %v2494
  %v3007 = vadd.bf16 %v1247, %v2495
  %v3008 = vadd.bf16 %v1248, %v2496
  %v3009 = vadd.bf16 %v1249, %v2497
  %v3010 = vadd.bf16 %v1250, %v2498
  %v3011 = vadd.bf16 %v1251, %v2499
  %v3012 = vadd.bf16 %v1252, %v2500
  %v3013 = vadd.bf16 %v1253, %v2501
  %v3014 = vadd.bf16 %v1254, %v2502
  %v3015 = vadd.bf16 %v1255, %v2503
  %v3016 = vadd.bf16 %v1256, %v2504
  %v3017 = vadd.bf16 %v1257, %v2505
  %v3018 = vadd.bf16 %v1258, %v2506
  %v3019 = vadd.bf16 %v1259, %v2507
  %v3020 = vadd.bf16 %v1260, %v2508
  %v3021 = vadd.bf16 %v1261, %v2509
  %v3022 = vadd.bf16 %v1262, %v2510
  %v3023 = vadd.bf16 %v1263, %v2511
  %v3024 = vadd.bf16 %v1264, %v2512
  %v3025 = vadd.bf16 %v1265, %v2513
  %v3026 = vadd.bf16 %v1266, %v2514
  %v3027 = vadd.bf16 %v1267, %v2515
  %v3028 = vadd.bf16 %v1268, %v2516
  %v3029 = vadd.bf16 %v1269, %v2517
  %v3030 = vadd.bf16 %v1270, %v2518
  %v3031 = vadd.bf16 %v1271, %v2519
  %v3032 = vadd.bf16 %v1272, %v2520
  %v3033 = vadd.bf16 %v1273, %v2521
  %v3034 = vadd.bf16 %v1274, %v2522
  %v3035 = vadd.bf16 %v1275, %v2523
  %v3036 = vadd.bf16 %v1276, %v2524
  %v3037 = vadd.bf16 %v1277, %v2525
  %v3038 = vadd.bf16 %v1278, %v2526
  %v3039 = vadd.bf16 %v1279, %v2527
  %v3040 = vadd.bf16 %v1280, %v2528
  %v3041 = vadd.bf16 %v1281, %v2529
  %v3042 = vadd.bf16 %v1282, %v2530
  %v3043 = vadd.bf16 %v1283, %v2531
  %v3044 = vadd.bf16 %v1284, %v2532
  %v3045 = vadd.bf16 %v1285, %v2533
  %v3046 = vadd.bf16 %v1286, %v2534
  %v3047 = vadd.bf16 %v1287, %v2535
  %v3048 = vadd.bf16 %v1288, %v2536
  %v3049 = vadd.bf16 %v1289, %v2537
  %v3050 = vadd.bf16 %v1290, %v2538
  %v3051 = vadd.bf16 %v1291, %v2539
  %v3052 = vadd.bf16 %v1292, %v2540
  %v3053 = vadd.bf16 %v1293, %v2541
  %v3054 = vadd.bf16 %v1294, %v2542
  %v3055 = vadd.bf16 %v1295, %v2543
  %v3056 = vadd.bf16 %v1296, %v2544
  %v3057 = vadd.bf16 %v1297, %v2545
  %v3058 = vadd.bf16 %v1298, %v2546
  %v3059 = vadd.bf16 %v1299, %v2547
  %v3060 = vadd.bf16 %v1300, %v2548
  %v3061 = vadd.bf16 %v1301, %v2549
  %v3062 = vadd.bf16 %v1302, %v2550
  %v3063 = vadd.bf16 %v1303, %v2551
  %v3064 = vadd.bf16 %v1304, %v2552
  %v3065 = vadd.bf16 %v1305, %v2553
  %v3066 = vadd.bf16 %v1306, %v2554
  %v3067 = vadd.bf16 %v1307, %v2555
  %v3068 = vadd.bf16 %v1308, %v2556
  %v3069 = vadd.bf16 %v1309, %v2557
  %v3070 = vadd.bf16 %v1310, %v2558
  %v3071 = vadd.bf16 %v1311, %v2559
  %v3072 = vadd.bf16 %v1312, %v2560
  %v3073 = vadd.bf16 %v1313, %v2561
  %v3074 = vadd.bf16 %v1314, %v2562
  %v3075 = vadd.bf16 %v1315, %v2563
  %v3076 = vadd.bf16 %v1316, %v2564
  %v3077 = vadd.bf16 %v1317, %v2565
  %v3078 = vadd.bf16 %v1318, %v2566
  %v3079 = vadd.bf16 %v1319, %v2567
  %v3080 = vadd.bf16 %v1320, %v2568
  %v3081 = vadd.bf16 %v1321, %v2569
  %v3082 = vadd.bf16 %v1322, %v2570
  %v3083 = vadd.bf16 %v1323, %v2571
  %v3084 = vadd.bf16 %v1324, %v2572
  %v3085 = vadd.bf16 %v1325, %v2573
  %v3086 = vadd.bf16 %v1326, %v2574
  %v3087 = vadd.bf16 %v1327, %v2575
  %v3088 = vadd.bf16 %v1328, %v2576
  %v3089 = vadd.bf16 %v1329, %v2577
  %v3090 = vadd.bf16 %v1330, %v2578
  %v3091 = vadd.bf16 %v1331, %v2579
  %v3092 = vadd.bf16 %v1332, %v2580
  %v3093 = vadd.bf16 %v1333, %v2581
  %v3094 = vadd.bf16 %v1334, %v2582
  %v3095 = vadd.bf16 %v1335, %v2583
  %v3096 = vadd.bf16 %v1336, %v2584
  %v3097 = vadd.bf16 %v1337, %v2585
  %v3098 = vadd.bf16 %v1338, %v2586
  %v3099 = vadd.bf16 %v1339, %v2587
  %v3100 = vadd.bf16 %v1340, %v2588
  %v3101 = vadd.bf16 %v1341, %v2589
  %v3102 = vadd.bf16 %v1342, %v2590
  %v3103 = vadd.bf16 %v1343, %v2591
  %v3104 = vadd.bf16 %v1344, %v2592
  %v3105 = vadd.bf16 %v1345, %v2593
  %v3106 = vadd.bf16 %v1346, %v2594
  %v3107 = vadd.bf16 %v1347, %v2595
  %v3108 = vadd.bf16 %v1348, %v2596
  %v3109 = vadd.bf16 %v1349, %v2597
  %v3110 = vadd.bf16 %v1350, %v2598
  %v3111 = vadd.bf16 %v1351, %v2599
  %v3112 = vadd.bf16 %v1352, %v2600
  %v3113 = vadd.bf16 %v1353, %v2601
  %v3114 = vadd.bf16 %v1354, %v2602
  %v3115 = vadd.bf16 %v1355, %v2603
  %v3116 = vadd.bf16 %v1356, %v2604
  %v3117 = vadd.bf16 %v1357, %v2605
  %v3118 = vadd.bf16 %v1358, %v2606
  %v3119 = vadd.bf16 %v1359, %v2607
  %v3120 = vadd.bf16 %v1360, %v2608
  %v3121 = vadd.bf16 %v1361, %v2609
  %v3122 = vadd.bf16 %v1362, %v2610
  %v3123 = vadd.bf16 %v1363, %v2611
  %v3124 = vadd.bf16 %v1364, %v2612
  %v3125 = vadd.bf16 %v1365, %v2613
  %v3126 = vadd.bf16 %v1366, %v2614
  %v3127 = vadd.bf16 %v1367, %v2615
  %v3128 = vadd.bf16 %v1368, %v2616
  %v3129 = vadd.bf16 %v1369, %v2617
  %v3130 = vadd.bf16 %v1370, %v2618
  %v3131 = vadd.bf16 %v1371, %v2619
  %v3132 = vadd.bf16 %v1372, %v2620
  %v3133 = vadd.bf16 %v1373, %v2621
  %v3134 = vadd.bf16 %v1374, %v2622
  %v3135 = vadd.bf16 %v1375, %v2623
  %v3136 = vadd.bf16 %v1376, %v2624
  %v3137 = vadd.bf16 %v1377, %v2625
  %v3138 = vadd.bf16 %v1378, %v2626
  %v3139 = vadd.bf16 %v1379, %v2627
  %v3140 = vadd.bf16 %v1380, %v2628
  %v3141 = vadd.bf16 %v1381, %v2629
  %v3142 = vadd.bf16 %v1382, %v2630
  %v3143 = vadd.bf16 %v1383, %v2631
  %v3144 = vadd.bf16 %v1384, %v2632
  %v3145 = vadd.bf16 %v1385, %v2633
  %v3146 = vadd.bf16 %v1386, %v2634
  %v3147 = vadd.bf16 %v1387, %v2635
  %v3148 = vadd.bf16 %v1388, %v2636
  %v3149 = vadd.bf16 %v1389, %v2637
  %v3150 = vadd.bf16 %v1390, %v2638
  %v3151 = vadd.bf16 %v1391, %v2639
  %v3152 = vadd.bf16 %v1392, %v2640
  %v3153 = vadd.bf16 %v1393, %v2641
  %v3154 = vadd.bf16 %v1394, %v2642
  %v3155 = vadd.bf16 %v1395, %v2643
  %v3156 = vadd.bf16 %v1396, %v2644
  %v3157 = vadd.bf16 %v1397, %v2645
  %v3158 = vadd.bf16 %v1398, %v2646
  %v3159 = vadd.bf16 %v1399, %v2647
  %v3160 = vadd.bf16 %v1400, %v2648
  %v3161 = vadd.bf16 %v1401, %v2649
  %v3162 = vadd.bf16 %v1402, %v2650
  %v3163 = vadd.bf16 %v1403, %v2651
  %v3164 = vadd.bf16 %v1404, %v2652
  %v3165 = vadd.bf16 %v1405, %v2653
  %v3166 = vadd.bf16 %v1406, %v2654
  %v3167 = vadd.bf16 %v1407, %v2655
  %v3168 = vadd.bf16 %v1408, %v2656
  %v3169 = vadd.bf16 %v1409, %v2657
  %v3170 = vadd.bf16 %v1410, %v2658
  %v3171 = vadd.bf16 %v1411, %v2659
  %v3172 = vadd.bf16 %v1412, %v2660
  %v3173 = vadd.bf16 %v1413, %v2661
  %v3174 = vadd.bf16 %v1414, %v2662
  %v3175 = vadd.bf16 %v1415, %v2663
  %v3176 = vadd.bf16 %v1416, %v2664
  %v3177 = vadd.bf16 %v1417, %v2665
  %v3178 = vadd.bf16 %v1418, %v2666
  %v3179 = vadd.bf16 %v1419, %v2667
  %v3180 = vadd.bf16 %v1420, %v2668
  %v3181 = vadd.bf16 %v1421, %v2669
  %v3182 = vadd.bf16 %v1422, %v2670
  %v3183 = vadd.bf16 %v1423, %v2671
  %v3184 = vadd.bf16 %v1424, %v2672
  %v3185 = vadd.bf16 %v1425, %v2673
  %v3186 = vadd.bf16 %v1426, %v2674
  %v3187 = vadd.bf16 %v1427, %v2675
  %v3188 = vadd.bf16 %v1428, %v2676
  %v3189 = vadd.bf16 %v1429, %v2677
  %v3190 = vadd.bf16 %v1430, %v2678
  %v3191 = vadd.bf16 %v1431, %v2679
  %v3192 = vadd.bf16 %v1432, %v2680
  %v3193 = vadd.bf16 %v1433, %v2681
  %v3194 = vadd.bf16 %v1434, %v2682
  %v3195 = vadd.bf16 %v1435, %v2683
  %v3196 = vadd.bf16 %v1436, %v2684
  %v3197 = vadd.bf16 %v1437, %v2685
  %v3198 = vadd.bf16 %v1438, %v2686
  %v3199 = vadd.bf16 %v1439, %v2687
  %v3200 = vadd.bf16 %v1440, %v2688
  %v3201 = vadd.bf16 %v1441, %v2689
  %v3202 = vadd.bf16 %v1442, %v2690
  %v3203 = vadd.bf16 %v1443, %v2691
  %v3204 = vadd.bf16 %v1444, %v2692
  %v3205 = vadd.bf16 %v1445, %v2693
  %v3206 = vadd.bf16 %v1446, %v2694
  %v3207 = vadd.bf16 %v1447, %v2695
  %v3208 = vadd.bf16 %v1448, %v2696
  %v3209 = vadd.bf16 %v1449, %v2697
  %v3210 = vadd.bf16 %v1450, %v2698
  %v3211 = vadd.bf16 %v1451, %v2699
  %v3212 = vadd.bf16 %v1452, %v2700
  %v3213 = vadd.bf16 %v1453, %v2701
  %v3214 = vadd.bf16 %v1454, %v2702
  %v3215 = vadd.bf16 %v1455, %v2703
  %v3216 = vadd.bf16 %v1456, %v2704
  %v3217 = vadd.bf16 %v1457, %v2705
  %v3218 = vadd.bf16 %v1458, %v2706
  %v3219 = vadd.bf16 %v1459, %v2707
  %v3220 = vadd.bf16 %v1460, %v2708
  %v3221 = vadd.bf16 %v1461, %v2709
  %v3222 = vadd.bf16 %v1462, %v2710
  %v3223 = vadd.bf16 %v1463, %v2711
  %v3224 = vadd.bf16 %v1464, %v2712
  %v3225 = vadd.bf16 %v1465, %v2713
  %v3226 = vadd.bf16 %v1466, %v2714
  %v3227 = vadd.bf16 %v1467, %v2715
  %v3228 = vadd.bf16 %v1468, %v2716
  %v3229 = vadd.bf16 %v1469, %v2717
  %v3230 = vadd.bf16 %v1470, %v2718
  %v3231 = vadd.bf16 %v1471, %v2719
  %v3232 = vadd.bf16 %v1472, %v2720
  %v3233 = vadd.bf16 %v1473, %v2721
  %v3234 = vadd.bf16 %v1474, %v2722
  %v3235 = vadd.bf16 %v1475, %v2723
  %v3236 = vadd.bf16 %v1476, %v2724
  %v3237 = vadd.bf16 %v1477, %v2725
  %v3238 = vadd.bf16 %v1478, %v2726
  %v3239 = vadd.bf16 %v1479, %v2727
  %v3240 = vadd.bf16 %v1480, %v2728
  %v3241 = vadd.bf16 %v1481, %v2729
  %v3242 = vadd.bf16 %v1482, %v2730
  %v3243 = vld [vmem:[%s3] sm:$0xf]
  %v3244 = vld [vmem:[%s3 + $0x4] sm:$0xf]
  %v3245 = vld [vmem:[%s3 + $0x8] sm:$0xf]
  %v3246 = vld [vmem:[%s3 + $0xc] sm:$0xf]
  %v3247 = vld [vmem:[%s3 + $0x10] sm:$0xf]
  %v3248 = vld [vmem:[%s3 + $0x14] sm:$0xf]
  %v3249 = vld [vmem:[%s3 + $0x18] sm:$0xf]
  %v3250 = vld [vmem:[%s3 + $0x1c] sm:$0xf]
  %v3251 = vld [vmem:[%s3 + $0x20] sm:$0xf]
  %v3252 = vld [vmem:[%s3 + $0x24] sm:$0xf]
  %v3253 = vld [vmem:[%s3 + $0x28] sm:$0xf]
  %v3254 = vld [vmem:[%s3 + $0x2c] sm:$0xf]
  %v3255 = vld [vmem:[%s3 + $0x30] sm:$0xf]
  %v3256 = vld [vmem:[%s3 + $0x34] sm:$0xf]
  %v3257 = vld [vmem:[%s3 + $0x38] sm:$0xf]
  %v3258 = vld [vmem:[%s3 + $0x3c] sm:$0xf]
  %v3259 = vld [vmem:[%s3 + $0x40] sm:$0xf]
  %v3260 = vld [vmem:[%s3 + $0x44] sm:$0xf]
  %v3261 = vld [vmem:[%s3 + $0x48] sm:$0xf]
  %v3262 = vld [vmem:[%s3 + $0x4c] sm:$0xf]
  %v3263 = vld [vmem:[%s3 + $0x50] sm:$0xf]
  %v3264 = vld [vmem:[%s3 + $0x54] sm:$0xf]
  %v3265 = vld [vmem:[%s3 + $0x58] sm:$0xf]
  %v3266 = vld [vmem:[%s3 + $0x5c] sm:$0xf]
  %v3267 = vld [vmem:[%s3 + $0x60] sm:$0xf]
  %v3268 = vld [vmem:[%s3 + $0x64] sm:$0xf]
  %v3269 = vld [vmem:[%s3 + $0x68] sm:$0xf]
  %v3270 = vld [vmem:[%s3 + $0x6c] sm:$0xf]
  %v3271 = vld [vmem:[%s3 + $0x70] sm:$0xf]
  %v3272 = vld [vmem:[%s3 + $0x74] sm:$0xf]
  %v3273 = vld [vmem:[%s3 + $0x78] sm:$0xf]
  %v3274 = vld [vmem:[%s3 + $0x7c] sm:$0xf]
  %3276 = vset.pattern.permute.xlu0 0
  %3277 = vperm.xlu0 %3276, %v3243
  %v3278 = vpop.permute.xlu0 %3277
  %v3281 = vunpack.c.l.s4 839922192
  %v3282 = vunpack.c.0.s8 %v3281
  %v3283 = vlaneseq
  %v3284 = vshrl.u32 %v3283, 7
  %v3285 = vsub.s32 %v3282, %v3284
  %v3286 = vrot.slane %v3278, %v3285
  %3288 = vset.pattern.permute.xlu0 0
  %3289 = vperm.xlu0 %3288, %v3244
  %v3290 = vpop.permute.xlu0 %3289
  %v3293 = vunpack.c.l.s4 839922192
  %v3294 = vunpack.c.0.s8 %v3293
  %v3295 = vlaneseq
  %v3296 = vshrl.u32 %v3295, 7
  %v3297 = vsub.s32 %v3294, %v3296
  %v3298 = vrot.slane %v3290, %v3297
  %3300 = vset.pattern.permute.xlu0 0
  %3301 = vperm.xlu0 %3300, %v3245
  %v3302 = vpop.permute.xlu0 %3301
  %v3305 = vunpack.c.l.s4 839922192
  %v3306 = vunpack.c.0.s8 %v3305
  %v3307 = vlaneseq
  %v3308 = vshrl.u32 %v3307, 7
  %v3309 = vsub.s32 %v3306, %v3308
  %v3310 = vrot.slane %v3302, %v3309
  %3312 = vset.pattern.permute.xlu0 0
  %3313 = vperm.xlu0 %3312, %v3246
  %v3314 = vpop.permute.xlu0 %3313
  %v3317 = vunpack.c.l.s4 839922192
  %v3318 = vunpack.c.0.s8 %v3317
  %v3319 = vlaneseq
  %v3320 = vshrl.u32 %v3319, 7
  %v3321 = vsub.s32 %v3318, %v3320
  %v3322 = vrot.slane %v3314, %v3321
  %3324 = vset.pattern.permute.xlu0 0
  %3325 = vperm.xlu0 %3324, %v3247
  %v3326 = vpop.permute.xlu0 %3325
  %v3329 = vunpack.c.l.s4 839922192
  %v3330 = vunpack.c.0.s8 %v3329
  %v3331 = vlaneseq
  %v3332 = vshrl.u32 %v3331, 7
  %v3333 = vsub.s32 %v3330, %v3332
  %v3334 = vrot.slane %v3326, %v3333
  %3336 = vset.pattern.permute.xlu0 0
  %3337 = vperm.xlu0 %3336, %v3248
  %v3338 = vpop.permute.xlu0 %3337
  %v3341 = vunpack.c.l.s4 839922192
  %v3342 = vunpack.c.0.s8 %v3341
  %v3343 = vlaneseq
  %v3344 = vshrl.u32 %v3343, 7
  %v3345 = vsub.s32 %v3342, %v3344
  %v3346 = vrot.slane %v3338, %v3345
  %3348 = vset.pattern.permute.xlu0 0
  %3349 = vperm.xlu0 %3348, %v3249
  %v3350 = vpop.permute.xlu0 %3349
  %v3353 = vunpack.c.l.s4 839922192
  %v3354 = vunpack.c.0.s8 %v3353
  %v3355 = vlaneseq
  %v3356 = vshrl.u32 %v3355, 7
  %v3357 = vsub.s32 %v3354, %v3356
  %v3358 = vrot.slane %v3350, %v3357
  %3360 = vset.pattern.permute.xlu0 0
  %3361 = vperm.xlu0 %3360, %v3250
  %v3362 = vpop.permute.xlu0 %3361
  %v3365 = vunpack.c.l.s4 839922192
  %v3366 = vunpack.c.0.s8 %v3365
  %v3367 = vlaneseq
  %v3368 = vshrl.u32 %v3367, 7
  %v3369 = vsub.s32 %v3366, %v3368
  %v3370 = vrot.slane %v3362, %v3369
  %3372 = vset.pattern.permute.xlu0 0
  %3373 = vperm.xlu0 %3372, %v3251
  %v3374 = vpop.permute.xlu0 %3373
  %v3377 = vunpack.c.l.s4 839922192
  %v3378 = vunpack.c.0.s8 %v3377
  %v3379 = vlaneseq
  %v3380 = vshrl.u32 %v3379, 7
  %v3381 = vsub.s32 %v3378, %v3380
  %v3382 = vrot.slane %v3374, %v3381
  %3384 = vset.pattern.permute.xlu0 0
  %3385 = vperm.xlu0 %3384, %v3252
  %v3386 = vpop.permute.xlu0 %3385
  %v3389 = vunpack.c.l.s4 839922192
  %v3390 = vunpack.c.0.s8 %v3389
  %v3391 = vlaneseq
  %v3392 = vshrl.u32 %v3391, 7
  %v3393 = vsub.s32 %v3390, %v3392
  %v3394 = vrot.slane %v3386, %v3393
  %3396 = vset.pattern.permute.xlu0 0
  %3397 = vperm.xlu0 %3396, %v3253
  %v3398 = vpop.permute.xlu0 %3397
  %v3401 = vunpack.c.l.s4 839922192
  %v3402 = vunpack.c.0.s8 %v3401
  %v3403 = vlaneseq
  %v3404 = vshrl.u32 %v3403, 7
  %v3405 = vsub.s32 %v3402, %v3404
  %v3406 = vrot.slane %v3398, %v3405
  %3408 = vset.pattern.permute.xlu0 0
  %3409 = vperm.xlu0 %3408, %v3254
  %v3410 = vpop.permute.xlu0 %3409
  %v3413 = vunpack.c.l.s4 839922192
  %v3414 = vunpack.c.0.s8 %v3413
  %v3415 = vlaneseq
  %v3416 = vshrl.u32 %v3415, 7
  %v3417 = vsub.s32 %v3414, %v3416
  %v3418 = vrot.slane %v3410, %v3417
  %3420 = vset.pattern.permute.xlu0 0
  %3421 = vperm.xlu0 %3420, %v3255
  %v3422 = vpop.permute.xlu0 %3421
  %v3425 = vunpack.c.l.s4 839922192
  %v3426 = vunpack.c.0.s8 %v3425
  %v3427 = vlaneseq
  %v3428 = vshrl.u32 %v3427, 7
  %v3429 = vsub.s32 %v3426, %v3428
  %v3430 = vrot.slane %v3422, %v3429
  %3432 = vset.pattern.permute.xlu0 0
  %3433 = vperm.xlu0 %3432, %v3256
  %v3434 = vpop.permute.xlu0 %3433
  %v3437 = vunpack.c.l.s4 839922192
  %v3438 = vunpack.c.0.s8 %v3437
  %v3439 = vlaneseq
  %v3440 = vshrl.u32 %v3439, 7
  %v3441 = vsub.s32 %v3438, %v3440
  %v3442 = vrot.slane %v3434, %v3441
  %3444 = vset.pattern.permute.xlu0 0
  %3445 = vperm.xlu0 %3444, %v3257
  %v3446 = vpop.permute.xlu0 %3445
  %v3449 = vunpack.c.l.s4 839922192
  %v3450 = vunpack.c.0.s8 %v3449
  %v3451 = vlaneseq
  %v3452 = vshrl.u32 %v3451, 7
  %v3453 = vsub.s32 %v3450, %v3452
  %v3454 = vrot.slane %v3446, %v3453
  %3456 = vset.pattern.permute.xlu0 0
  %3457 = vperm.xlu0 %3456, %v3258
  %v3458 = vpop.permute.xlu0 %3457
  %v3461 = vunpack.c.l.s4 839922192
  %v3462 = vunpack.c.0.s8 %v3461
  %v3463 = vlaneseq
  %v3464 = vshrl.u32 %v3463, 7
  %v3465 = vsub.s32 %v3462, %v3464
  %v3466 = vrot.slane %v3458, %v3465
  %3468 = vset.pattern.permute.xlu0 0
  %3469 = vperm.xlu0 %3468, %v3259
  %v3470 = vpop.permute.xlu0 %3469
  %v3473 = vunpack.c.l.s4 839922192
  %v3474 = vunpack.c.0.s8 %v3473
  %v3475 = vlaneseq
  %v3476 = vshrl.u32 %v3475, 7
  %v3477 = vsub.s32 %v3474, %v3476
  %v3478 = vrot.slane %v3470, %v3477
  %3480 = vset.pattern.permute.xlu0 0
  %3481 = vperm.xlu0 %3480, %v3260
  %v3482 = vpop.permute.xlu0 %3481
  %v3485 = vunpack.c.l.s4 839922192
  %v3486 = vunpack.c.0.s8 %v3485
  %v3487 = vlaneseq
  %v3488 = vshrl.u32 %v3487, 7
  %v3489 = vsub.s32 %v3486, %v3488
  %v3490 = vrot.slane %v3482, %v3489
  %3492 = vset.pattern.permute.xlu0 0
  %3493 = vperm.xlu0 %3492, %v3261
  %v3494 = vpop.permute.xlu0 %3493
  %v3497 = vunpack.c.l.s4 839922192
  %v3498 = vunpack.c.0.s8 %v3497
  %v3499 = vlaneseq
  %v3500 = vshrl.u32 %v3499, 7
  %v3501 = vsub.s32 %v3498, %v3500
  %v3502 = vrot.slane %v3494, %v3501
  %3504 = vset.pattern.permute.xlu0 0
  %3505 = vperm.xlu0 %3504, %v3262
  %v3506 = vpop.permute.xlu0 %3505
  %v3509 = vunpack.c.l.s4 839922192
  %v3510 = vunpack.c.0.s8 %v3509
  %v3511 = vlaneseq
  %v3512 = vshrl.u32 %v3511, 7
  %v3513 = vsub.s32 %v3510, %v3512
  %v3514 = vrot.slane %v3506, %v3513
  %3516 = vset.pattern.permute.xlu0 0
  %3517 = vperm.xlu0 %3516, %v3263
  %v3518 = vpop.permute.xlu0 %3517
  %v3521 = vunpack.c.l.s4 839922192
  %v3522 = vunpack.c.0.s8 %v3521
  %v3523 = vlaneseq
  %v3524 = vshrl.u32 %v3523, 7
  %v3525 = vsub.s32 %v3522, %v3524
  %v3526 = vrot.slane %v3518, %v3525
  %3528 = vset.pattern.permute.xlu0 0
  %3529 = vperm.xlu0 %3528, %v3264
  %v3530 = vpop.permute.xlu0 %3529
  %v3533 = vunpack.c.l.s4 839922192
  %v3534 = vunpack.c.0.s8 %v3533
  %v3535 = vlaneseq
  %v3536 = vshrl.u32 %v3535, 7
  %v3537 = vsub.s32 %v3534, %v3536
  %v3538 = vrot.slane %v3530, %v3537
  %3540 = vset.pattern.permute.xlu0 0
  %3541 = vperm.xlu0 %3540, %v3265
  %v3542 = vpop.permute.xlu0 %3541
  %v3545 = vunpack.c.l.s4 839922192
  %v3546 = vunpack.c.0.s8 %v3545
  %v3547 = vlaneseq
  %v3548 = vshrl.u32 %v3547, 7
  %v3549 = vsub.s32 %v3546, %v3548
  %v3550 = vrot.slane %v3542, %v3549
  %3552 = vset.pattern.permute.xlu0 0
  %3553 = vperm.xlu0 %3552, %v3266
  %v3554 = vpop.permute.xlu0 %3553
  %v3557 = vunpack.c.l.s4 839922192
  %v3558 = vunpack.c.0.s8 %v3557
  %v3559 = vlaneseq
  %v3560 = vshrl.u32 %v3559, 7
  %v3561 = vsub.s32 %v3558, %v3560
  %v3562 = vrot.slane %v3554, %v3561
  %3564 = vset.pattern.permute.xlu0 0
  %3565 = vperm.xlu0 %3564, %v3267
  %v3566 = vpop.permute.xlu0 %3565
  %v3569 = vunpack.c.l.s4 839922192
  %v3570 = vunpack.c.0.s8 %v3569
  %v3571 = vlaneseq
  %v3572 = vshrl.u32 %v3571, 7
  %v3573 = vsub.s32 %v3570, %v3572
  %v3574 = vrot.slane %v3566, %v3573
  %3576 = vset.pattern.permute.xlu0 0
  %3577 = vperm.xlu0 %3576, %v3268
  %v3578 = vpop.permute.xlu0 %3577
  %v3581 = vunpack.c.l.s4 839922192
  %v3582 = vunpack.c.0.s8 %v3581
  %v3583 = vlaneseq
  %v3584 = vshrl.u32 %v3583, 7
  %v3585 = vsub.s32 %v3582, %v3584
  %v3586 = vrot.slane %v3578, %v3585
  %3588 = vset.pattern.permute.xlu0 0
  %3589 = vperm.xlu0 %3588, %v3269
  %v3590 = vpop.permute.xlu0 %3589
  %v3593 = vunpack.c.l.s4 839922192
  %v3594 = vunpack.c.0.s8 %v3593
  %v3595 = vlaneseq
  %v3596 = vshrl.u32 %v3595, 7
  %v3597 = vsub.s32 %v3594, %v3596
  %v3598 = vrot.slane %v3590, %v3597
  %3600 = vset.pattern.permute.xlu0 0
  %3601 = vperm.xlu0 %3600, %v3270
  %v3602 = vpop.permute.xlu0 %3601
  %v3605 = vunpack.c.l.s4 839922192
  %v3606 = vunpack.c.0.s8 %v3605
  %v3607 = vlaneseq
  %v3608 = vshrl.u32 %v3607, 7
  %v3609 = vsub.s32 %v3606, %v3608
  %v3610 = vrot.slane %v3602, %v3609
  %3612 = vset.pattern.permute.xlu0 0
  %3613 = vperm.xlu0 %3612, %v3271
  %v3614 = vpop.permute.xlu0 %3613
  %v3617 = vunpack.c.l.s4 839922192
  %v3618 = vunpack.c.0.s8 %v3617
  %v3619 = vlaneseq
  %v3620 = vshrl.u32 %v3619, 7
  %v3621 = vsub.s32 %v3618, %v3620
  %v3622 = vrot.slane %v3614, %v3621
  %3624 = vset.pattern.permute.xlu0 0
  %3625 = vperm.xlu0 %3624, %v3272
  %v3626 = vpop.permute.xlu0 %3625
  %v3629 = vunpack.c.l.s4 839922192
  %v3630 = vunpack.c.0.s8 %v3629
  %v3631 = vlaneseq
  %v3632 = vshrl.u32 %v3631, 7
  %v3633 = vsub.s32 %v3630, %v3632
  %v3634 = vrot.slane %v3626, %v3633
  %3636 = vset.pattern.permute.xlu0 0
  %3637 = vperm.xlu0 %3636, %v3273
  %v3638 = vpop.permute.xlu0 %3637
  %v3641 = vunpack.c.l.s4 839922192
  %v3642 = vunpack.c.0.s8 %v3641
  %v3643 = vlaneseq
  %v3644 = vshrl.u32 %v3643, 7
  %v3645 = vsub.s32 %v3642, %v3644
  %v3646 = vrot.slane %v3638, %v3645
  %3648 = vset.pattern.permute.xlu0 0
  %3649 = vperm.xlu0 %3648, %v3274
  %v3650 = vpop.permute.xlu0 %3649
  %v3653 = vunpack.c.l.s4 839922192
  %v3654 = vunpack.c.0.s8 %v3653
  %v3655 = vlaneseq
  %v3656 = vshrl.u32 %v3655, 7
  %v3657 = vsub.s32 %v3654, %v3656
  %v3658 = vrot.slane %v3650, %v3657
  %v3659 = vadd.bf16 %v2731, %v3286
  %v3660 = vadd.bf16 %v2732, %v3286
  %v3661 = vadd.bf16 %v2733, %v3286
  %v3662 = vadd.bf16 %v2734, %v3286
  %v3663 = vadd.bf16 %v2735, %v3286
  %v3664 = vadd.bf16 %v2736, %v3286
  %v3665 = vadd.bf16 %v2737, %v3286
  %v3666 = vadd.bf16 %v2738, %v3286
  %v3667 = vadd.bf16 %v2739, %v3286
  %v3668 = vadd.bf16 %v2740, %v3286
  %v3669 = vadd.bf16 %v2741, %v3286
  %v3670 = vadd.bf16 %v2742, %v3286
  %v3671 = vadd.bf16 %v2743, %v3286
  %v3672 = vadd.bf16 %v2744, %v3286
  %v3673 = vadd.bf16 %v2745, %v3286
  %v3674 = vadd.bf16 %v2746, %v3286
  %v3675 = vadd.bf16 %v2747, %v3298
  %v3676 = vadd.bf16 %v2748, %v3298
  %v3677 = vadd.bf16 %v2749, %v3298
  %v3678 = vadd.bf16 %v2750, %v3298
  %v3679 = vadd.bf16 %v2751, %v3298
  %v3680 = vadd.bf16 %v2752, %v3298
  %v3681 = vadd.bf16 %v2753, %v3298
  %v3682 = vadd.bf16 %v2754, %v3298
  %v3683 = vadd.bf16 %v2755, %v3298
  %v3684 = vadd.bf16 %v2756, %v3298
  %v3685 = vadd.bf16 %v2757, %v3298
  %v3686 = vadd.bf16 %v2758, %v3298
  %v3687 = vadd.bf16 %v2759, %v3298
  %v3688 = vadd.bf16 %v2760, %v3298
  %v3689 = vadd.bf16 %v2761, %v3298
  %v3690 = vadd.bf16 %v2762, %v3298
  %v3691 = vadd.bf16 %v2763, %v3310
  %v3692 = vadd.bf16 %v2764, %v3310
  %v3693 = vadd.bf16 %v2765, %v3310
  %v3694 = vadd.bf16 %v2766, %v3310
  %v3695 = vadd.bf16 %v2767, %v3310
  %v3696 = vadd.bf16 %v2768, %v3310
  %v3697 = vadd.bf16 %v2769, %v3310
  %v3698 = vadd.bf16 %v2770, %v3310
  %v3699 = vadd.bf16 %v2771, %v3310
  %v3700 = vadd.bf16 %v2772, %v3310
  %v3701 = vadd.bf16 %v2773, %v3310
  %v3702 = vadd.bf16 %v2774, %v3310
  %v3703 = vadd.bf16 %v2775, %v3310
  %v3704 = vadd.bf16 %v2776, %v3310
  %v3705 = vadd.bf16 %v2777, %v3310
  %v3706 = vadd.bf16 %v2778, %v3310
  %v3707 = vadd.bf16 %v2779, %v3322
  %v3708 = vadd.bf16 %v2780, %v3322
  %v3709 = vadd.bf16 %v2781, %v3322
  %v3710 = vadd.bf16 %v2782, %v3322
  %v3711 = vadd.bf16 %v2783, %v3322
  %v3712 = vadd.bf16 %v2784, %v3322
  %v3713 = vadd.bf16 %v2785, %v3322
  %v3714 = vadd.bf16 %v2786, %v3322
  %v3715 = vadd.bf16 %v2787, %v3322
  %v3716 = vadd.bf16 %v2788, %v3322
  %v3717 = vadd.bf16 %v2789, %v3322
  %v3718 = vadd.bf16 %v2790, %v3322
  %v3719 = vadd.bf16 %v2791, %v3322
  %v3720 = vadd.bf16 %v2792, %v3322
  %v3721 = vadd.bf16 %v2793, %v3322
  %v3722 = vadd.bf16 %v2794, %v3322
  %v3723 = vadd.bf16 %v2795, %v3334
  %v3724 = vadd.bf16 %v2796, %v3334
  %v3725 = vadd.bf16 %v2797, %v3334
  %v3726 = vadd.bf16 %v2798, %v3334
  %v3727 = vadd.bf16 %v2799, %v3334
  %v3728 = vadd.bf16 %v2800, %v3334
  %v3729 = vadd.bf16 %v2801, %v3334
  %v3730 = vadd.bf16 %v2802, %v3334
  %v3731 = vadd.bf16 %v2803, %v3334
  %v3732 = vadd.bf16 %v2804, %v3334
  %v3733 = vadd.bf16 %v2805, %v3334
  %v3734 = vadd.bf16 %v2806, %v3334
  %v3735 = vadd.bf16 %v2807, %v3334
  %v3736 = vadd.bf16 %v2808, %v3334
  %v3737 = vadd.bf16 %v2809, %v3334
  %v3738 = vadd.bf16 %v2810, %v3334
  %v3739 = vadd.bf16 %v2811, %v3346
  %v3740 = vadd.bf16 %v2812, %v3346
  %v3741 = vadd.bf16 %v2813, %v3346
  %v3742 = vadd.bf16 %v2814, %v3346
  %v3743 = vadd.bf16 %v2815, %v3346
  %v3744 = vadd.bf16 %v2816, %v3346
  %v3745 = vadd.bf16 %v2817, %v3346
  %v3746 = vadd.bf16 %v2818, %v3346
  %v3747 = vadd.bf16 %v2819, %v3346
  %v3748 = vadd.bf16 %v2820, %v3346
  %v3749 = vadd.bf16 %v2821, %v3346
  %v3750 = vadd.bf16 %v2822, %v3346
  %v3751 = vadd.bf16 %v2823, %v3346
  %v3752 = vadd.bf16 %v2824, %v3346
  %v3753 = vadd.bf16 %v2825, %v3346
  %v3754 = vadd.bf16 %v2826, %v3346
  %v3755 = vadd.bf16 %v2827, %v3358
  %v3756 = vadd.bf16 %v2828, %v3358
  %v3757 = vadd.bf16 %v2829, %v3358
  %v3758 = vadd.bf16 %v2830, %v3358
  %v3759 = vadd.bf16 %v2831, %v3358
  %v3760 = vadd.bf16 %v2832, %v3358
  %v3761 = vadd.bf16 %v2833, %v3358
  %v3762 = vadd.bf16 %v2834, %v3358
  %v3763 = vadd.bf16 %v2835, %v3358
  %v3764 = vadd.bf16 %v2836, %v3358
  %v3765 = vadd.bf16 %v2837, %v3358
  %v3766 = vadd.bf16 %v2838, %v3358
  %v3767 = vadd.bf16 %v2839, %v3358
  %v3768 = vadd.bf16 %v2840, %v3358
  %v3769 = vadd.bf16 %v2841, %v3358
  %v3770 = vadd.bf16 %v2842, %v3358
  %v3771 = vadd.bf16 %v2843, %v3370
  %v3772 = vadd.bf16 %v2844, %v3370
  %v3773 = vadd.bf16 %v2845, %v3370
  %v3774 = vadd.bf16 %v2846, %v3370
  %v3775 = vadd.bf16 %v2847, %v3370
  %v3776 = vadd.bf16 %v2848, %v3370
  %v3777 = vadd.bf16 %v2849, %v3370
  %v3778 = vadd.bf16 %v2850, %v3370
  %v3779 = vadd.bf16 %v2851, %v3370
  %v3780 = vadd.bf16 %v2852, %v3370
  %v3781 = vadd.bf16 %v2853, %v3370
  %v3782 = vadd.bf16 %v2854, %v3370
  %v3783 = vadd.bf16 %v2855, %v3370
  %v3784 = vadd.bf16 %v2856, %v3370
  %v3785 = vadd.bf16 %v2857, %v3370
  %v3786 = vadd.bf16 %v2858, %v3370
  %v3787 = vadd.bf16 %v2859, %v3382
  %v3788 = vadd.bf16 %v2860, %v3382
  %v3789 = vadd.bf16 %v2861, %v3382
  %v3790 = vadd.bf16 %v2862, %v3382
  %v3791 = vadd.bf16 %v2863, %v3382
  %v3792 = vadd.bf16 %v2864, %v3382
  %v3793 = vadd.bf16 %v2865, %v3382
  %v3794 = vadd.bf16 %v2866, %v3382
  %v3795 = vadd.bf16 %v2867, %v3382
  %v3796 = vadd.bf16 %v2868, %v3382
  %v3797 = vadd.bf16 %v2869, %v3382
  %v3798 = vadd.bf16 %v2870, %v3382
  %v3799 = vadd.bf16 %v2871, %v3382
  %v3800 = vadd.bf16 %v2872, %v3382
  %v3801 = vadd.bf16 %v2873, %v3382
  %v3802 = vadd.bf16 %v2874, %v3382
  %v3803 = vadd.bf16 %v2875, %v3394
  %v3804 = vadd.bf16 %v2876, %v3394
  %v3805 = vadd.bf16 %v2877, %v3394
  %v3806 = vadd.bf16 %v2878, %v3394
  %v3807 = vadd.bf16 %v2879, %v3394
  %v3808 = vadd.bf16 %v2880, %v3394
  %v3809 = vadd.bf16 %v2881, %v3394
  %v3810 = vadd.bf16 %v2882, %v3394
  %v3811 = vadd.bf16 %v2883, %v3394
  %v3812 = vadd.bf16 %v2884, %v3394
  %v3813 = vadd.bf16 %v2885, %v3394
  %v3814 = vadd.bf16 %v2886, %v3394
  %v3815 = vadd.bf16 %v2887, %v3394
  %v3816 = vadd.bf16 %v2888, %v3394
  %v3817 = vadd.bf16 %v2889, %v3394
  %v3818 = vadd.bf16 %v2890, %v3394
  %v3819 = vadd.bf16 %v2891, %v3406
  %v3820 = vadd.bf16 %v2892, %v3406
  %v3821 = vadd.bf16 %v2893, %v3406
  %v3822 = vadd.bf16 %v2894, %v3406
  %v3823 = vadd.bf16 %v2895, %v3406
  %v3824 = vadd.bf16 %v2896, %v3406
  %v3825 = vadd.bf16 %v2897, %v3406
  %v3826 = vadd.bf16 %v2898, %v3406
  %v3827 = vadd.bf16 %v2899, %v3406
  %v3828 = vadd.bf16 %v2900, %v3406
  %v3829 = vadd.bf16 %v2901, %v3406
  %v3830 = vadd.bf16 %v2902, %v3406
  %v3831 = vadd.bf16 %v2903, %v3406
  %v3832 = vadd.bf16 %v2904, %v3406
  %v3833 = vadd.bf16 %v2905, %v3406
  %v3834 = vadd.bf16 %v2906, %v3406
  %v3835 = vadd.bf16 %v2907, %v3418
  %v3836 = vadd.bf16 %v2908, %v3418
  %v3837 = vadd.bf16 %v2909, %v3418
  %v3838 = vadd.bf16 %v2910, %v3418
  %v3839 = vadd.bf16 %v2911, %v3418
  %v3840 = vadd.bf16 %v2912, %v3418
  %v3841 = vadd.bf16 %v2913, %v3418
  %v3842 = vadd.bf16 %v2914, %v3418
  %v3843 = vadd.bf16 %v2915, %v3418
  %v3844 = vadd.bf16 %v2916, %v3418
  %v3845 = vadd.bf16 %v2917, %v3418
  %v3846 = vadd.bf16 %v2918, %v3418
  %v3847 = vadd.bf16 %v2919, %v3418
  %v3848 = vadd.bf16 %v2920, %v3418
  %v3849 = vadd.bf16 %v2921, %v3418
  %v3850 = vadd.bf16 %v2922, %v3418
  %v3851 = vadd.bf16 %v2923, %v3430
  %v3852 = vadd.bf16 %v2924, %v3430
  %v3853 = vadd.bf16 %v2925, %v3430
  %v3854 = vadd.bf16 %v2926, %v3430
  %v3855 = vadd.bf16 %v2927, %v3430
  %v3856 = vadd.bf16 %v2928, %v3430
  %v3857 = vadd.bf16 %v2929, %v3430
  %v3858 = vadd.bf16 %v2930, %v3430
  %v3859 = vadd.bf16 %v2931, %v3430
  %v3860 = vadd.bf16 %v2932, %v3430
  %v3861 = vadd.bf16 %v2933, %v3430
  %v3862 = vadd.bf16 %v2934, %v3430
  %v3863 = vadd.bf16 %v2935, %v3430
  %v3864 = vadd.bf16 %v2936, %v3430
  %v3865 = vadd.bf16 %v2937, %v3430
  %v3866 = vadd.bf16 %v2938, %v3430
  %v3867 = vadd.bf16 %v2939, %v3442
  %v3868 = vadd.bf16 %v2940, %v3442
  %v3869 = vadd.bf16 %v2941, %v3442
  %v3870 = vadd.bf16 %v2942, %v3442
  %v3871 = vadd.bf16 %v2943, %v3442
  %v3872 = vadd.bf16 %v2944, %v3442
  %v3873 = vadd.bf16 %v2945, %v3442
  %v3874 = vadd.bf16 %v2946, %v3442
  %v3875 = vadd.bf16 %v2947, %v3442
  %v3876 = vadd.bf16 %v2948, %v3442
  %v3877 = vadd.bf16 %v2949, %v3442
  %v3878 = vadd.bf16 %v2950, %v3442
  %v3879 = vadd.bf16 %v2951, %v3442
  %v3880 = vadd.bf16 %v2952, %v3442
  %v3881 = vadd.bf16 %v2953, %v3442
  %v3882 = vadd.bf16 %v2954, %v3442
  %v3883 = vadd.bf16 %v2955, %v3454
  %v3884 = vadd.bf16 %v2956, %v3454
  %v3885 = vadd.bf16 %v2957, %v3454
  %v3886 = vadd.bf16 %v2958, %v3454
  %v3887 = vadd.bf16 %v2959, %v3454
  %v3888 = vadd.bf16 %v2960, %v3454
  %v3889 = vadd.bf16 %v2961, %v3454
  %v3890 = vadd.bf16 %v2962, %v3454
  %v3891 = vadd.bf16 %v2963, %v3454
  %v3892 = vadd.bf16 %v2964, %v3454
  %v3893 = vadd.bf16 %v2965, %v3454
  %v3894 = vadd.bf16 %v2966, %v3454
  %v3895 = vadd.bf16 %v2967, %v3454
  %v3896 = vadd.bf16 %v2968, %v3454
  %v3897 = vadd.bf16 %v2969, %v3454
  %v3898 = vadd.bf16 %v2970, %v3454
  %v3899 = vadd.bf16 %v2971, %v3466
  %v3900 = vadd.bf16 %v2972, %v3466
  %v3901 = vadd.bf16 %v2973, %v3466
  %v3902 = vadd.bf16 %v2974, %v3466
  %v3903 = vadd.bf16 %v2975, %v3466
  %v3904 = vadd.bf16 %v2976, %v3466
  %v3905 = vadd.bf16 %v2977, %v3466
  %v3906 = vadd.bf16 %v2978, %v3466
  %v3907 = vadd.bf16 %v2979, %v3466
  %v3908 = vadd.bf16 %v2980, %v3466
  %v3909 = vadd.bf16 %v2981, %v3466
  %v3910 = vadd.bf16 %v2982, %v3466
  %v3911 = vadd.bf16 %v2983, %v3466
  %v3912 = vadd.bf16 %v2984, %v3466
  %v3913 = vadd.bf16 %v2985, %v3466
  %v3914 = vadd.bf16 %v2986, %v3466
  %v3915 = vadd.bf16 %v2987, %v3478
  %v3916 = vadd.bf16 %v2988, %v3478
  %v3917 = vadd.bf16 %v2989, %v3478
  %v3918 = vadd.bf16 %v2990, %v3478
  %v3919 = vadd.bf16 %v2991, %v3478
  %v3920 = vadd.bf16 %v2992, %v3478
  %v3921 = vadd.bf16 %v2993, %v3478
  %v3922 = vadd.bf16 %v2994, %v3478
  %v3923 = vadd.bf16 %v2995, %v3478
  %v3924 = vadd.bf16 %v2996, %v3478
  %v3925 = vadd.bf16 %v2997, %v3478
  %v3926 = vadd.bf16 %v2998, %v3478
  %v3927 = vadd.bf16 %v2999, %v3478
  %v3928 = vadd.bf16 %v3000, %v3478
  %v3929 = vadd.bf16 %v3001, %v3478
  %v3930 = vadd.bf16 %v3002, %v3478
  %v3931 = vadd.bf16 %v3003, %v3490
  %v3932 = vadd.bf16 %v3004, %v3490
  %v3933 = vadd.bf16 %v3005, %v3490
  %v3934 = vadd.bf16 %v3006, %v3490
  %v3935 = vadd.bf16 %v3007, %v3490
  %v3936 = vadd.bf16 %v3008, %v3490
  %v3937 = vadd.bf16 %v3009, %v3490
  %v3938 = vadd.bf16 %v3010, %v3490
  %v3939 = vadd.bf16 %v3011, %v3490
  %v3940 = vadd.bf16 %v3012, %v3490
  %v3941 = vadd.bf16 %v3013, %v3490
  %v3942 = vadd.bf16 %v3014, %v3490
  %v3943 = vadd.bf16 %v3015, %v3490
  %v3944 = vadd.bf16 %v3016, %v3490
  %v3945 = vadd.bf16 %v3017, %v3490
  %v3946 = vadd.bf16 %v3018, %v3490
  %v3947 = vadd.bf16 %v3019, %v3502
  %v3948 = vadd.bf16 %v3020, %v3502
  %v3949 = vadd.bf16 %v3021, %v3502
  %v3950 = vadd.bf16 %v3022, %v3502
  %v3951 = vadd.bf16 %v3023, %v3502
  %v3952 = vadd.bf16 %v3024, %v3502
  %v3953 = vadd.bf16 %v3025, %v3502
  %v3954 = vadd.bf16 %v3026, %v3502
  %v3955 = vadd.bf16 %v3027, %v3502
  %v3956 = vadd.bf16 %v3028, %v3502
  %v3957 = vadd.bf16 %v3029, %v3502
  %v3958 = vadd.bf16 %v3030, %v3502
  %v3959 = vadd.bf16 %v3031, %v3502
  %v3960 = vadd.bf16 %v3032, %v3502
  %v3961 = vadd.bf16 %v3033, %v3502
  %v3962 = vadd.bf16 %v3034, %v3502
  %v3963 = vadd.bf16 %v3035, %v3514
  %v3964 = vadd.bf16 %v3036, %v3514
  %v3965 = vadd.bf16 %v3037, %v3514
  %v3966 = vadd.bf16 %v3038, %v3514
  %v3967 = vadd.bf16 %v3039, %v3514
  %v3968 = vadd.bf16 %v3040, %v3514
  %v3969 = vadd.bf16 %v3041, %v3514
  %v3970 = vadd.bf16 %v3042, %v3514
  %v3971 = vadd.bf16 %v3043, %v3514
  %v3972 = vadd.bf16 %v3044, %v3514
  %v3973 = vadd.bf16 %v3045, %v3514
  %v3974 = vadd.bf16 %v3046, %v3514
  %v3975 = vadd.bf16 %v3047, %v3514
  %v3976 = vadd.bf16 %v3048, %v3514
  %v3977 = vadd.bf16 %v3049, %v3514
  %v3978 = vadd.bf16 %v3050, %v3514
  %v3979 = vadd.bf16 %v3051, %v3526
  %v3980 = vadd.bf16 %v3052, %v3526
  %v3981 = vadd.bf16 %v3053, %v3526
  %v3982 = vadd.bf16 %v3054, %v3526
  %v3983 = vadd.bf16 %v3055, %v3526
  %v3984 = vadd.bf16 %v3056, %v3526
  %v3985 = vadd.bf16 %v3057, %v3526
  %v3986 = vadd.bf16 %v3058, %v3526
  %v3987 = vadd.bf16 %v3059, %v3526
  %v3988 = vadd.bf16 %v3060, %v3526
  %v3989 = vadd.bf16 %v3061, %v3526
  %v3990 = vadd.bf16 %v3062, %v3526
  %v3991 = vadd.bf16 %v3063, %v3526
  %v3992 = vadd.bf16 %v3064, %v3526
  %v3993 = vadd.bf16 %v3065, %v3526
  %v3994 = vadd.bf16 %v3066, %v3526
  %v3995 = vadd.bf16 %v3067, %v3538
  %v3996 = vadd.bf16 %v3068, %v3538
  %v3997 = vadd.bf16 %v3069, %v3538
  %v3998 = vadd.bf16 %v3070, %v3538
  %v3999 = vadd.bf16 %v3071, %v3538
  %v4000 = vadd.bf16 %v3072, %v3538
  %v4001 = vadd.bf16 %v3073, %v3538
  %v4002 = vadd.bf16 %v3074, %v3538
  %v4003 = vadd.bf16 %v3075, %v3538
  %v4004 = vadd.bf16 %v3076, %v3538
  %v4005 = vadd.bf16 %v3077, %v3538
  %v4006 = vadd.bf16 %v3078, %v3538
  %v4007 = vadd.bf16 %v3079, %v3538
  %v4008 = vadd.bf16 %v3080, %v3538
  %v4009 = vadd.bf16 %v3081, %v3538
  %v4010 = vadd.bf16 %v3082, %v3538
  %v4011 = vadd.bf16 %v3083, %v3550
  %v4012 = vadd.bf16 %v3084, %v3550
  %v4013 = vadd.bf16 %v3085, %v3550
  %v4014 = vadd.bf16 %v3086, %v3550
  %v4015 = vadd.bf16 %v3087, %v3550
  %v4016 = vadd.bf16 %v3088, %v3550
  %v4017 = vadd.bf16 %v3089, %v3550
  %v4018 = vadd.bf16 %v3090, %v3550
  %v4019 = vadd.bf16 %v3091, %v3550
  %v4020 = vadd.bf16 %v3092, %v3550
  %v4021 = vadd.bf16 %v3093, %v3550
  %v4022 = vadd.bf16 %v3094, %v3550
  %v4023 = vadd.bf16 %v3095, %v3550
  %v4024 = vadd.bf16 %v3096, %v3550
  %v4025 = vadd.bf16 %v3097, %v3550
  %v4026 = vadd.bf16 %v3098, %v3550
  %v4027 = vadd.bf16 %v3099, %v3562
  %v4028 = vadd.bf16 %v3100, %v3562
  %v4029 = vadd.bf16 %v3101, %v3562
  %v4030 = vadd.bf16 %v3102, %v3562
  %v4031 = vadd.bf16 %v3103, %v3562
  %v4032 = vadd.bf16 %v3104, %v3562
  %v4033 = vadd.bf16 %v3105, %v3562
  %v4034 = vadd.bf16 %v3106, %v3562
  %v4035 = vadd.bf16 %v3107, %v3562
  %v4036 = vadd.bf16 %v3108, %v3562
  %v4037 = vadd.bf16 %v3109, %v3562
  %v4038 = vadd.bf16 %v3110, %v3562
  %v4039 = vadd.bf16 %v3111, %v3562
  %v4040 = vadd.bf16 %v3112, %v3562
  %v4041 = vadd.bf16 %v3113, %v3562
  %v4042 = vadd.bf16 %v3114, %v3562
  %v4043 = vadd.bf16 %v3115, %v3574
  %v4044 = vadd.bf16 %v3116, %v3574
  %v4045 = vadd.bf16 %v3117, %v3574
  %v4046 = vadd.bf16 %v3118, %v3574
  %v4047 = vadd.bf16 %v3119, %v3574
  %v4048 = vadd.bf16 %v3120, %v3574
  %v4049 = vadd.bf16 %v3121, %v3574
  %v4050 = vadd.bf16 %v3122, %v3574
  %v4051 = vadd.bf16 %v3123, %v3574
  %v4052 = vadd.bf16 %v3124, %v3574
  %v4053 = vadd.bf16 %v3125, %v3574
  %v4054 = vadd.bf16 %v3126, %v3574
  %v4055 = vadd.bf16 %v3127, %v3574
  %v4056 = vadd.bf16 %v3128, %v3574
  %v4057 = vadd.bf16 %v3129, %v3574
  %v4058 = vadd.bf16 %v3130, %v3574
  %v4059 = vadd.bf16 %v3131, %v3586
  %v4060 = vadd.bf16 %v3132, %v3586
  %v4061 = vadd.bf16 %v3133, %v3586
  %v4062 = vadd.bf16 %v3134, %v3586
  %v4063 = vadd.bf16 %v3135, %v3586
  %v4064 = vadd.bf16 %v3136, %v3586
  %v4065 = vadd.bf16 %v3137, %v3586
  %v4066 = vadd.bf16 %v3138, %v3586
  %v4067 = vadd.bf16 %v3139, %v3586
  %v4068 = vadd.bf16 %v3140, %v3586
  %v4069 = vadd.bf16 %v3141, %v3586
  %v4070 = vadd.bf16 %v3142, %v3586
  %v4071 = vadd.bf16 %v3143, %v3586
  %v4072 = vadd.bf16 %v3144, %v3586
  %v4073 = vadd.bf16 %v3145, %v3586
  %v4074 = vadd.bf16 %v3146, %v3586
  %v4075 = vadd.bf16 %v3147, %v3598
  %v4076 = vadd.bf16 %v3148, %v3598
  %v4077 = vadd.bf16 %v3149, %v3598
  %v4078 = vadd.bf16 %v3150, %v3598
  %v4079 = vadd.bf16 %v3151, %v3598
  %v4080 = vadd.bf16 %v3152, %v3598
  %v4081 = vadd.bf16 %v3153, %v3598
  %v4082 = vadd.bf16 %v3154, %v3598
  %v4083 = vadd.bf16 %v3155, %v3598
  %v4084 = vadd.bf16 %v3156, %v3598
  %v4085 = vadd.bf16 %v3157, %v3598
  %v4086 = vadd.bf16 %v3158, %v3598
  %v4087 = vadd.bf16 %v3159, %v3598
  %v4088 = vadd.bf16 %v3160, %v3598
  %v4089 = vadd.bf16 %v3161, %v3598
  %v4090 = vadd.bf16 %v3162, %v3598
  %v4091 = vadd.bf16 %v3163, %v3610
  %v4092 = vadd.bf16 %v3164, %v3610
  %v4093 = vadd.bf16 %v3165, %v3610
  %v4094 = vadd.bf16 %v3166, %v3610
  %v4095 = vadd.bf16 %v3167, %v3610
  %v4096 = vadd.bf16 %v3168, %v3610
  %v4097 = vadd.bf16 %v3169, %v3610
  %v4098 = vadd.bf16 %v3170, %v3610
  %v4099 = vadd.bf16 %v3171, %v3610
  %v4100 = vadd.bf16 %v3172, %v3610
  %v4101 = vadd.bf16 %v3173, %v3610
  %v4102 = vadd.bf16 %v3174, %v3610
  %v4103 = vadd.bf16 %v3175, %v3610
  %v4104 = vadd.bf16 %v3176, %v3610
  %v4105 = vadd.bf16 %v3177, %v3610
  %v4106 = vadd.bf16 %v3178, %v3610
  %v4107 = vadd.bf16 %v3179, %v3622
  %v4108 = vadd.bf16 %v3180, %v3622
  %v4109 = vadd.bf16 %v3181, %v3622
  %v4110 = vadd.bf16 %v3182, %v3622
  %v4111 = vadd.bf16 %v3183, %v3622
  %v4112 = vadd.bf16 %v3184, %v3622
  %v4113 = vadd.bf16 %v3185, %v3622
  %v4114 = vadd.bf16 %v3186, %v3622
  %v4115 = vadd.bf16 %v3187, %v3622
  %v4116 = vadd.bf16 %v3188, %v3622
  %v4117 = vadd.bf16 %v3189, %v3622
  %v4118 = vadd.bf16 %v3190, %v3622
  %v4119 = vadd.bf16 %v3191, %v3622
  %v4120 = vadd.bf16 %v3192, %v3622
  %v4121 = vadd.bf16 %v3193, %v3622
  %v4122 = vadd.bf16 %v3194, %v3622
  %v4123 = vadd.bf16 %v3195, %v3634
  %v4124 = vadd.bf16 %v3196, %v3634
  %v4125 = vadd.bf16 %v3197, %v3634
  %v4126 = vadd.bf16 %v3198, %v3634
  %v4127 = vadd.bf16 %v3199, %v3634
  %v4128 = vadd.bf16 %v3200, %v3634
  %v4129 = vadd.bf16 %v3201, %v3634
  %v4130 = vadd.bf16 %v3202, %v3634
  %v4131 = vadd.bf16 %v3203, %v3634
  %v4132 = vadd.bf16 %v3204, %v3634
  %v4133 = vadd.bf16 %v3205, %v3634
  %v4134 = vadd.bf16 %v3206, %v3634
  %v4135 = vadd.bf16 %v3207, %v3634
  %v4136 = vadd.bf16 %v3208, %v3634
  %v4137 = vadd.bf16 %v3209, %v3634
  %v4138 = vadd.bf16 %v3210, %v3634
  %v4139 = vadd.bf16 %v3211, %v3646
  %v4140 = vadd.bf16 %v3212, %v3646
  %v4141 = vadd.bf16 %v3213, %v3646
  %v4142 = vadd.bf16 %v3214, %v3646
  %v4143 = vadd.bf16 %v3215, %v3646
  %v4144 = vadd.bf16 %v3216, %v3646
  %v4145 = vadd.bf16 %v3217, %v3646
  %v4146 = vadd.bf16 %v3218, %v3646
  %v4147 = vadd.bf16 %v3219, %v3646
  %v4148 = vadd.bf16 %v3220, %v3646
  %v4149 = vadd.bf16 %v3221, %v3646
  %v4150 = vadd.bf16 %v3222, %v3646
  %v4151 = vadd.bf16 %v3223, %v3646
  %v4152 = vadd.bf16 %v3224, %v3646
  %v4153 = vadd.bf16 %v3225, %v3646
  %v4154 = vadd.bf16 %v3226, %v3646
  %v4155 = vadd.bf16 %v3227, %v3658
  %v4156 = vadd.bf16 %v3228, %v3658
  %v4157 = vadd.bf16 %v3229, %v3658
  %v4158 = vadd.bf16 %v3230, %v3658
  %v4159 = vadd.bf16 %v3231, %v3658
  %v4160 = vadd.bf16 %v3232, %v3658
  %v4161 = vadd.bf16 %v3233, %v3658
  %v4162 = vadd.bf16 %v3234, %v3658
  %v4163 = vadd.bf16 %v3235, %v3658
  %v4164 = vadd.bf16 %v3236, %v3658
  %v4165 = vadd.bf16 %v3237, %v3658
  %v4166 = vadd.bf16 %v3238, %v3658
  %v4167 = vadd.bf16 %v3239, %v3658
  %v4168 = vadd.bf16 %v3240, %v3658
  %v4169 = vadd.bf16 %v3241, %v3658
  %v4170 = vadd.bf16 %v3242, %v3658
  %v4171 = vmax.bf16 %v3659, 0
  %v4172 = vmax.bf16 %v3660, 0
  %v4173 = vmax.bf16 %v3661, 0
  %v4174 = vmax.bf16 %v3662, 0
  %v4175 = vmax.bf16 %v3663, 0
  %v4176 = vmax.bf16 %v3664, 0
  %v4177 = vmax.bf16 %v3665, 0
  %v4178 = vmax.bf16 %v3666, 0
  %v4179 = vmax.bf16 %v3667, 0
  %v4180 = vmax.bf16 %v3668, 0
  %v4181 = vmax.bf16 %v3669, 0
  %v4182 = vmax.bf16 %v3670, 0
  %v4183 = vmax.bf16 %v3671, 0
  %v4184 = vmax.bf16 %v3672, 0
  %v4185 = vmax.bf16 %v3673, 0
  %v4186 = vmax.bf16 %v3674, 0
  %v4187 = vmax.bf16 %v3675, 0
  %v4188 = vmax.bf16 %v3676, 0
  %v4189 = vmax.bf16 %v3677, 0
  %v4190 = vmax.bf16 %v3678, 0
  %v4191 = vmax.bf16 %v3679, 0
  %v4192 = vmax.bf16 %v3680, 0
  %v4193 = vmax.bf16 %v3681, 0
  %v4194 = vmax.bf16 %v3682, 0
  %v4195 = vmax.bf16 %v3683, 0
  %v4196 = vmax.bf16 %v3684, 0
  %v4197 = vmax.bf16 %v3685, 0
  %v4198 = vmax.bf16 %v3686, 0
  %v4199 = vmax.bf16 %v3687, 0
  %v4200 = vmax.bf16 %v3688, 0
  %v4201 = vmax.bf16 %v3689, 0
  %v4202 = vmax.bf16 %v3690, 0
  %v4203 = vmax.bf16 %v3691, 0
  %v4204 = vmax.bf16 %v3692, 0
  %v4205 = vmax.bf16 %v3693, 0
  %v4206 = vmax.bf16 %v3694, 0
  %v4207 = vmax.bf16 %v3695, 0
  %v4208 = vmax.bf16 %v3696, 0
  %v4209 = vmax.bf16 %v3697, 0
  %v4210 = vmax.bf16 %v3698, 0
  %v4211 = vmax.bf16 %v3699, 0
  %v4212 = vmax.bf16 %v3700, 0
  %v4213 = vmax.bf16 %v3701, 0
  %v4214 = vmax.bf16 %v3702, 0
  %v4215 = vmax.bf16 %v3703, 0
  %v4216 = vmax.bf16 %v3704, 0
  %v4217 = vmax.bf16 %v3705, 0
  %v4218 = vmax.bf16 %v3706, 0
  %v4219 = vmax.bf16 %v3707, 0
  %v4220 = vmax.bf16 %v3708, 0
  %v4221 = vmax.bf16 %v3709, 0
  %v4222 = vmax.bf16 %v3710, 0
  %v4223 = vmax.bf16 %v3711, 0
  %v4224 = vmax.bf16 %v3712, 0
  %v4225 = vmax.bf16 %v3713, 0
  %v4226 = vmax.bf16 %v3714, 0
  %v4227 = vmax.bf16 %v3715, 0
  %v4228 = vmax.bf16 %v3716, 0
  %v4229 = vmax.bf16 %v3717, 0
  %v4230 = vmax.bf16 %v3718, 0
  %v4231 = vmax.bf16 %v3719, 0
  %v4232 = vmax.bf16 %v3720, 0
  %v4233 = vmax.bf16 %v3721, 0
  %v4234 = vmax.bf16 %v3722, 0
  %v4235 = vmax.bf16 %v3723, 0
  %v4236 = vmax.bf16 %v3724, 0
  %v4237 = vmax.bf16 %v3725, 0
  %v4238 = vmax.bf16 %v3726, 0
  %v4239 = vmax.bf16 %v3727, 0
  %v4240 = vmax.bf16 %v3728, 0
  %v4241 = vmax.bf16 %v3729, 0
  %v4242 = vmax.bf16 %v3730, 0
  %v4243 = vmax.bf16 %v3731, 0
  %v4244 = vmax.bf16 %v3732, 0
  %v4245 = vmax.bf16 %v3733, 0
  %v4246 = vmax.bf16 %v3734, 0
  %v4247 = vmax.bf16 %v3735, 0
  %v4248 = vmax.bf16 %v3736, 0
  %v4249 = vmax.bf16 %v3737, 0
  %v4250 = vmax.bf16 %v3738, 0
  %v4251 = vmax.bf16 %v3739, 0
  %v4252 = vmax.bf16 %v3740, 0
  %v4253 = vmax.bf16 %v3741, 0
  %v4254 = vmax.bf16 %v3742, 0
  %v4255 = vmax.bf16 %v3743, 0
  %v4256 = vmax.bf16 %v3744, 0
  %v4257 = vmax.bf16 %v3745, 0
  %v4258 = vmax.bf16 %v3746, 0
  %v4259 = vmax.bf16 %v3747, 0
  %v4260 = vmax.bf16 %v3748, 0
  %v4261 = vmax.bf16 %v3749, 0
  %v4262 = vmax.bf16 %v3750, 0
  %v4263 = vmax.bf16 %v3751, 0
  %v4264 = vmax.bf16 %v3752, 0
  %v4265 = vmax.bf16 %v3753, 0
  %v4266 = vmax.bf16 %v3754, 0
  %v4267 = vmax.bf16 %v3755, 0
  %v4268 = vmax.bf16 %v3756, 0
  %v4269 = vmax.bf16 %v3757, 0
  %v4270 = vmax.bf16 %v3758, 0
  %v4271 = vmax.bf16 %v3759, 0
  %v4272 = vmax.bf16 %v3760, 0
  %v4273 = vmax.bf16 %v3761, 0
  %v4274 = vmax.bf16 %v3762, 0
  %v4275 = vmax.bf16 %v3763, 0
  %v4276 = vmax.bf16 %v3764, 0
  %v4277 = vmax.bf16 %v3765, 0
  %v4278 = vmax.bf16 %v3766, 0
  %v4279 = vmax.bf16 %v3767, 0
  %v4280 = vmax.bf16 %v3768, 0
  %v4281 = vmax.bf16 %v3769, 0
  %v4282 = vmax.bf16 %v3770, 0
  %v4283 = vmax.bf16 %v3771, 0
  %v4284 = vmax.bf16 %v3772, 0
  %v4285 = vmax.bf16 %v3773, 0
  %v4286 = vmax.bf16 %v3774, 0
  %v4287 = vmax.bf16 %v3775, 0
  %v4288 = vmax.bf16 %v3776, 0
  %v4289 = vmax.bf16 %v3777, 0
  %v4290 = vmax.bf16 %v3778, 0
  %v4291 = vmax.bf16 %v3779, 0
  %v4292 = vmax.bf16 %v3780, 0
  %v4293 = vmax.bf16 %v3781, 0
  %v4294 = vmax.bf16 %v3782, 0
  %v4295 = vmax.bf16 %v3783, 0
  %v4296 = vmax.bf16 %v3784, 0
  %v4297 = vmax.bf16 %v3785, 0
  %v4298 = vmax.bf16 %v3786, 0
  %v4299 = vmax.bf16 %v3787, 0
  %v4300 = vmax.bf16 %v3788, 0
  %v4301 = vmax.bf16 %v3789, 0
  %v4302 = vmax.bf16 %v3790, 0
  %v4303 = vmax.bf16 %v3791, 0
  %v4304 = vmax.bf16 %v3792, 0
  %v4305 = vmax.bf16 %v3793, 0
  %v4306 = vmax.bf16 %v3794, 0
  %v4307 = vmax.bf16 %v3795, 0
  %v4308 = vmax.bf16 %v3796, 0
  %v4309 = vmax.bf16 %v3797, 0
  %v4310 = vmax.bf16 %v3798, 0
  %v4311 = vmax.bf16 %v3799, 0
  %v4312 = vmax.bf16 %v3800, 0
  %v4313 = vmax.bf16 %v3801, 0
  %v4314 = vmax.bf16 %v3802, 0
  %v4315 = vmax.bf16 %v3803, 0
  %v4316 = vmax.bf16 %v3804, 0
  %v4317 = vmax.bf16 %v3805, 0
  %v4318 = vmax.bf16 %v3806, 0
  %v4319 = vmax.bf16 %v3807, 0
  %v4320 = vmax.bf16 %v3808, 0
  %v4321 = vmax.bf16 %v3809, 0
  %v4322 = vmax.bf16 %v3810, 0
  %v4323 = vmax.bf16 %v3811, 0
  %v4324 = vmax.bf16 %v3812, 0
  %v4325 = vmax.bf16 %v3813, 0
  %v4326 = vmax.bf16 %v3814, 0
  %v4327 = vmax.bf16 %v3815, 0
  %v4328 = vmax.bf16 %v3816, 0
  %v4329 = vmax.bf16 %v3817, 0
  %v4330 = vmax.bf16 %v3818, 0
  %v4331 = vmax.bf16 %v3819, 0
  %v4332 = vmax.bf16 %v3820, 0
  %v4333 = vmax.bf16 %v3821, 0
  %v4334 = vmax.bf16 %v3822, 0
  %v4335 = vmax.bf16 %v3823, 0
  %v4336 = vmax.bf16 %v3824, 0
  %v4337 = vmax.bf16 %v3825, 0
  %v4338 = vmax.bf16 %v3826, 0
  %v4339 = vmax.bf16 %v3827, 0
  %v4340 = vmax.bf16 %v3828, 0
  %v4341 = vmax.bf16 %v3829, 0
  %v4342 = vmax.bf16 %v3830, 0
  %v4343 = vmax.bf16 %v3831, 0
  %v4344 = vmax.bf16 %v3832, 0
  %v4345 = vmax.bf16 %v3833, 0
  %v4346 = vmax.bf16 %v3834, 0
  %v4347 = vmax.bf16 %v3835, 0
  %v4348 = vmax.bf16 %v3836, 0
  %v4349 = vmax.bf16 %v3837, 0
  %v4350 = vmax.bf16 %v3838, 0
  %v4351 = vmax.bf16 %v3839, 0
  %v4352 = vmax.bf16 %v3840, 0
  %v4353 = vmax.bf16 %v3841, 0
  %v4354 = vmax.bf16 %v3842, 0
  %v4355 = vmax.bf16 %v3843, 0
  %v4356 = vmax.bf16 %v3844, 0
  %v4357 = vmax.bf16 %v3845, 0
  %v4358 = vmax.bf16 %v3846, 0
  %v4359 = vmax.bf16 %v3847, 0
  %v4360 = vmax.bf16 %v3848, 0
  %v4361 = vmax.bf16 %v3849, 0
  %v4362 = vmax.bf16 %v3850, 0
  %v4363 = vmax.bf16 %v3851, 0
  %v4364 = vmax.bf16 %v3852, 0
  %v4365 = vmax.bf16 %v3853, 0
  %v4366 = vmax.bf16 %v3854, 0
  %v4367 = vmax.bf16 %v3855, 0
  %v4368 = vmax.bf16 %v3856, 0
  %v4369 = vmax.bf16 %v3857, 0
  %v4370 = vmax.bf16 %v3858, 0
  %v4371 = vmax.bf16 %v3859, 0
  %v4372 = vmax.bf16 %v3860, 0
  %v4373 = vmax.bf16 %v3861, 0
  %v4374 = vmax.bf16 %v3862, 0
  %v4375 = vmax.bf16 %v3863, 0
  %v4376 = vmax.bf16 %v3864, 0
  %v4377 = vmax.bf16 %v3865, 0
  %v4378 = vmax.bf16 %v3866, 0
  %v4379 = vmax.bf16 %v3867, 0
  %v4380 = vmax.bf16 %v3868, 0
  %v4381 = vmax.bf16 %v3869, 0
  %v4382 = vmax.bf16 %v3870, 0
  %v4383 = vmax.bf16 %v3871, 0
  %v4384 = vmax.bf16 %v3872, 0
  %v4385 = vmax.bf16 %v3873, 0
  %v4386 = vmax.bf16 %v3874, 0
  %v4387 = vmax.bf16 %v3875, 0
  %v4388 = vmax.bf16 %v3876, 0
  %v4389 = vmax.bf16 %v3877, 0
  %v4390 = vmax.bf16 %v3878, 0
  %v4391 = vmax.bf16 %v3879, 0
  %v4392 = vmax.bf16 %v3880, 0
  %v4393 = vmax.bf16 %v3881, 0
  %v4394 = vmax.bf16 %v3882, 0
  %v4395 = vmax.bf16 %v3883, 0
  %v4396 = vmax.bf16 %v3884, 0
  %v4397 = vmax.bf16 %v3885, 0
  %v4398 = vmax.bf16 %v3886, 0
  %v4399 = vmax.bf16 %v3887, 0
  %v4400 = vmax.bf16 %v3888, 0
  %v4401 = vmax.bf16 %v3889, 0
  %v4402 = vmax.bf16 %v3890, 0
  %v4403 = vmax.bf16 %v3891, 0
  %v4404 = vmax.bf16 %v3892, 0
  %v4405 = vmax.bf16 %v3893, 0
  %v4406 = vmax.bf16 %v3894, 0
  %v4407 = vmax.bf16 %v3895, 0
  %v4408 = vmax.bf16 %v3896, 0
  %v4409 = vmax.bf16 %v3897, 0
  %v4410 = vmax.bf16 %v3898, 0
  %v4411 = vmax.bf16 %v3899, 0
  %v4412 = vmax.bf16 %v3900, 0
  %v4413 = vmax.bf16 %v3901, 0
  %v4414 = vmax.bf16 %v3902, 0
  %v4415 = vmax.bf16 %v3903, 0
  %v4416 = vmax.bf16 %v3904, 0
  %v4417 = vmax.bf16 %v3905, 0
  %v4418 = vmax.bf16 %v3906, 0
  %v4419 = vmax.bf16 %v3907, 0
  %v4420 = vmax.bf16 %v3908, 0
  %v4421 = vmax.bf16 %v3909, 0
  %v4422 = vmax.bf16 %v3910, 0
  %v4423 = vmax.bf16 %v3911, 0
  %v4424 = vmax.bf16 %v3912, 0
  %v4425 = vmax.bf16 %v3913, 0
  %v4426 = vmax.bf16 %v3914, 0
  %v4427 = vmax.bf16 %v3915, 0
  %v4428 = vmax.bf16 %v3916, 0
  %v4429 = vmax.bf16 %v3917, 0
  %v4430 = vmax.bf16 %v3918, 0
  %v4431 = vmax.bf16 %v3919, 0
  %v4432 = vmax.bf16 %v3920, 0
  %v4433 = vmax.bf16 %v3921, 0
  %v4434 = vmax.bf16 %v3922, 0
  %v4435 = vmax.bf16 %v3923, 0
  %v4436 = vmax.bf16 %v3924, 0
  %v4437 = vmax.bf16 %v3925, 0
  %v4438 = vmax.bf16 %v3926, 0
  %v4439 = vmax.bf16 %v3927, 0
  %v4440 = vmax.bf16 %v3928, 0
  %v4441 = vmax.bf16 %v3929, 0
  %v4442 = vmax.bf16 %v3930, 0
  %v4443 = vmax.bf16 %v3931, 0
  %v4444 = vmax.bf16 %v3932, 0
  %v4445 = vmax.bf16 %v3933, 0
  %v4446 = vmax.bf16 %v3934, 0
  %v4447 = vmax.bf16 %v3935, 0
  %v4448 = vmax.bf16 %v3936, 0
  %v4449 = vmax.bf16 %v3937, 0
  %v4450 = vmax.bf16 %v3938, 0
  %v4451 = vmax.bf16 %v3939, 0
  %v4452 = vmax.bf16 %v3940, 0
  %v4453 = vmax.bf16 %v3941, 0
  %v4454 = vmax.bf16 %v3942, 0
  %v4455 = vmax.bf16 %v3943, 0
  %v4456 = vmax.bf16 %v3944, 0
  %v4457 = vmax.bf16 %v3945, 0
  %v4458 = vmax.bf16 %v3946, 0
  %v4459 = vmax.bf16 %v3947, 0
  %v4460 = vmax.bf16 %v3948, 0
  %v4461 = vmax.bf16 %v3949, 0
  %v4462 = vmax.bf16 %v3950, 0
  %v4463 = vmax.bf16 %v3951, 0
  %v4464 = vmax.bf16 %v3952, 0
  %v4465 = vmax.bf16 %v3953, 0
  %v4466 = vmax.bf16 %v3954, 0
  %v4467 = vmax.bf16 %v3955, 0
  %v4468 = vmax.bf16 %v3956, 0
  %v4469 = vmax.bf16 %v3957, 0
  %v4470 = vmax.bf16 %v3958, 0
  %v4471 = vmax.bf16 %v3959, 0
  %v4472 = vmax.bf16 %v3960, 0
  %v4473 = vmax.bf16 %v3961, 0
  %v4474 = vmax.bf16 %v3962, 0
  %v4475 = vmax.bf16 %v3963, 0
  %v4476 = vmax.bf16 %v3964, 0
  %v4477 = vmax.bf16 %v3965, 0
  %v4478 = vmax.bf16 %v3966, 0
  %v4479 = vmax.bf16 %v3967, 0
  %v4480 = vmax.bf16 %v3968, 0
  %v4481 = vmax.bf16 %v3969, 0
  %v4482 = vmax.bf16 %v3970, 0
  %v4483 = vmax.bf16 %v3971, 0
  %v4484 = vmax.bf16 %v3972, 0
  %v4485 = vmax.bf16 %v3973, 0
  %v4486 = vmax.bf16 %v3974, 0
  %v4487 = vmax.bf16 %v3975, 0
  %v4488 = vmax.bf16 %v3976, 0
  %v4489 = vmax.bf16 %v3977, 0
  %v4490 = vmax.bf16 %v3978, 0
  %v4491 = vmax.bf16 %v3979, 0
  %v4492 = vmax.bf16 %v3980, 0
  %v4493 = vmax.bf16 %v3981, 0
  %v4494 = vmax.bf16 %v3982, 0
  %v4495 = vmax.bf16 %v3983, 0
  %v4496 = vmax.bf16 %v3984, 0
  %v4497 = vmax.bf16 %v3985, 0
  %v4498 = vmax.bf16 %v3986, 0
  %v4499 = vmax.bf16 %v3987, 0
  %v4500 = vmax.bf16 %v3988, 0
  %v4501 = vmax.bf16 %v3989, 0
  %v4502 = vmax.bf16 %v3990, 0
  %v4503 = vmax.bf16 %v3991, 0
  %v4504 = vmax.bf16 %v3992, 0
  %v4505 = vmax.bf16 %v3993, 0
  %v4506 = vmax.bf16 %v3994, 0
  %v4507 = vmax.bf16 %v3995, 0
  %v4508 = vmax.bf16 %v3996, 0
  %v4509 = vmax.bf16 %v3997, 0
  %v4510 = vmax.bf16 %v3998, 0
  %v4511 = vmax.bf16 %v3999, 0
  %v4512 = vmax.bf16 %v4000, 0
  %v4513 = vmax.bf16 %v4001, 0
  %v4514 = vmax.bf16 %v4002, 0
  %v4515 = vmax.bf16 %v4003, 0
  %v4516 = vmax.bf16 %v4004, 0
  %v4517 = vmax.bf16 %v4005, 0
  %v4518 = vmax.bf16 %v4006, 0
  %v4519 = vmax.bf16 %v4007, 0
  %v4520 = vmax.bf16 %v4008, 0
  %v4521 = vmax.bf16 %v4009, 0
  %v4522 = vmax.bf16 %v4010, 0
  %v4523 = vmax.bf16 %v4011, 0
  %v4524 = vmax.bf16 %v4012, 0
  %v4525 = vmax.bf16 %v4013, 0
  %v4526 = vmax.bf16 %v4014, 0
  %v4527 = vmax.bf16 %v4015, 0
  %v4528 = vmax.bf16 %v4016, 0
  %v4529 = vmax.bf16 %v4017, 0
  %v4530 = vmax.bf16 %v4018, 0
  %v4531 = vmax.bf16 %v4019, 0
  %v4532 = vmax.bf16 %v4020, 0
  %v4533 = vmax.bf16 %v4021, 0
  %v4534 = vmax.bf16 %v4022, 0
  %v4535 = vmax.bf16 %v4023, 0
  %v4536 = vmax.bf16 %v4024, 0
  %v4537 = vmax.bf16 %v4025, 0
  %v4538 = vmax.bf16 %v4026, 0
  %v4539 = vmax.bf16 %v4027, 0
  %v4540 = vmax.bf16 %v4028, 0
  %v4541 = vmax.bf16 %v4029, 0
  %v4542 = vmax.bf16 %v4030, 0
  %v4543 = vmax.bf16 %v4031, 0
  %v4544 = vmax.bf16 %v4032, 0
  %v4545 = vmax.bf16 %v4033, 0
  %v4546 = vmax.bf16 %v4034, 0
  %v4547 = vmax.bf16 %v4035, 0
  %v4548 = vmax.bf16 %v4036, 0
  %v4549 = vmax.bf16 %v4037, 0
  %v4550 = vmax.bf16 %v4038, 0
  %v4551 = vmax.bf16 %v4039, 0
  %v4552 = vmax.bf16 %v4040, 0
  %v4553 = vmax.bf16 %v4041, 0
  %v4554 = vmax.bf16 %v4042, 0
  %v4555 = vmax.bf16 %v4043, 0
  %v4556 = vmax.bf16 %v4044, 0
  %v4557 = vmax.bf16 %v4045, 0
  %v4558 = vmax.bf16 %v4046, 0
  %v4559 = vmax.bf16 %v4047, 0
  %v4560 = vmax.bf16 %v4048, 0
  %v4561 = vmax.bf16 %v4049, 0
  %v4562 = vmax.bf16 %v4050, 0
  %v4563 = vmax.bf16 %v4051, 0
  %v4564 = vmax.bf16 %v4052, 0
  %v4565 = vmax.bf16 %v4053, 0
  %v4566 = vmax.bf16 %v4054, 0
  %v4567 = vmax.bf16 %v4055, 0
  %v4568 = vmax.bf16 %v4056, 0
  %v4569 = vmax.bf16 %v4057, 0
  %v4570 = vmax.bf16 %v4058, 0
  %v4571 = vmax.bf16 %v4059, 0
  %v4572 = vmax.bf16 %v4060, 0
  %v4573 = vmax.bf16 %v4061, 0
  %v4574 = vmax.bf16 %v4062, 0
  %v4575 = vmax.bf16 %v4063, 0
  %v4576 = vmax.bf16 %v4064, 0
  %v4577 = vmax.bf16 %v4065, 0
  %v4578 = vmax.bf16 %v4066, 0
  %v4579 = vmax.bf16 %v4067, 0
  %v4580 = vmax.bf16 %v4068, 0
  %v4581 = vmax.bf16 %v4069, 0
  %v4582 = vmax.bf16 %v4070, 0
  %v4583 = vmax.bf16 %v4071, 0
  %v4584 = vmax.bf16 %v4072, 0
  %v4585 = vmax.bf16 %v4073, 0
  %v4586 = vmax.bf16 %v4074, 0
  %v4587 = vmax.bf16 %v4075, 0
  %v4588 = vmax.bf16 %v4076, 0
  %v4589 = vmax.bf16 %v4077, 0
  %v4590 = vmax.bf16 %v4078, 0
  %v4591 = vmax.bf16 %v4079, 0
  %v4592 = vmax.bf16 %v4080, 0
  %v4593 = vmax.bf16 %v4081, 0
  %v4594 = vmax.bf16 %v4082, 0
  %v4595 = vmax.bf16 %v4083, 0
  %v4596 = vmax.bf16 %v4084, 0
  %v4597 = vmax.bf16 %v4085, 0
  %v4598 = vmax.bf16 %v4086, 0
  %v4599 = vmax.bf16 %v4087, 0
  %v4600 = vmax.bf16 %v4088, 0
  %v4601 = vmax.bf16 %v4089, 0
  %v4602 = vmax.bf16 %v4090, 0
  %v4603 = vmax.bf16 %v4091, 0
  %v4604 = vmax.bf16 %v4092, 0
  %v4605 = vmax.bf16 %v4093, 0
  %v4606 = vmax.bf16 %v4094, 0
  %v4607 = vmax.bf16 %v4095, 0
  %v4608 = vmax.bf16 %v4096, 0
  %v4609 = vmax.bf16 %v4097, 0
  %v4610 = vmax.bf16 %v4098, 0
  %v4611 = vmax.bf16 %v4099, 0
  %v4612 = vmax.bf16 %v4100, 0
  %v4613 = vmax.bf16 %v4101, 0
  %v4614 = vmax.bf16 %v4102, 0
  %v4615 = vmax.bf16 %v4103, 0
  %v4616 = vmax.bf16 %v4104, 0
  %v4617 = vmax.bf16 %v4105, 0
  %v4618 = vmax.bf16 %v4106, 0
  %v4619 = vmax.bf16 %v4107, 0
  %v4620 = vmax.bf16 %v4108, 0
  %v4621 = vmax.bf16 %v4109, 0
  %v4622 = vmax.bf16 %v4110, 0
  %v4623 = vmax.bf16 %v4111, 0
  %v4624 = vmax.bf16 %v4112, 0
  %v4625 = vmax.bf16 %v4113, 0
  %v4626 = vmax.bf16 %v4114, 0
  %v4627 = vmax.bf16 %v4115, 0
  %v4628 = vmax.bf16 %v4116, 0
  %v4629 = vmax.bf16 %v4117, 0
  %v4630 = vmax.bf16 %v4118, 0
  %v4631 = vmax.bf16 %v4119, 0
  %v4632 = vmax.bf16 %v4120, 0
  %v4633 = vmax.bf16 %v4121, 0
  %v4634 = vmax.bf16 %v4122, 0
  %v4635 = vmax.bf16 %v4123, 0
  %v4636 = vmax.bf16 %v4124, 0
  %v4637 = vmax.bf16 %v4125, 0
  %v4638 = vmax.bf16 %v4126, 0
  %v4639 = vmax.bf16 %v4127, 0
  %v4640 = vmax.bf16 %v4128, 0
  %v4641 = vmax.bf16 %v4129, 0
  %v4642 = vmax.bf16 %v4130, 0
  %v4643 = vmax.bf16 %v4131, 0
  %v4644 = vmax.bf16 %v4132, 0
  %v4645 = vmax.bf16 %v4133, 0
  %v4646 = vmax.bf16 %v4134, 0
  %v4647 = vmax.bf16 %v4135, 0
  %v4648 = vmax.bf16 %v4136, 0
  %v4649 = vmax.bf16 %v4137, 0
  %v4650 = vmax.bf16 %v4138, 0
  %v4651 = vmax.bf16 %v4139, 0
  %v4652 = vmax.bf16 %v4140, 0
  %v4653 = vmax.bf16 %v4141, 0
  %v4654 = vmax.bf16 %v4142, 0
  %v4655 = vmax.bf16 %v4143, 0
  %v4656 = vmax.bf16 %v4144, 0
  %v4657 = vmax.bf16 %v4145, 0
  %v4658 = vmax.bf16 %v4146, 0
  %v4659 = vmax.bf16 %v4147, 0
  %v4660 = vmax.bf16 %v4148, 0
  %v4661 = vmax.bf16 %v4149, 0
  %v4662 = vmax.bf16 %v4150, 0
  %v4663 = vmax.bf16 %v4151, 0
  %v4664 = vmax.bf16 %v4152, 0
  %v4665 = vmax.bf16 %v4153, 0
  %v4666 = vmax.bf16 %v4154, 0
  %v4667 = vmax.bf16 %v4155, 0
  %v4668 = vmax.bf16 %v4156, 0
  %v4669 = vmax.bf16 %v4157, 0
  %v4670 = vmax.bf16 %v4158, 0
  %v4671 = vmax.bf16 %v4159, 0
  %v4672 = vmax.bf16 %v4160, 0
  %v4673 = vmax.bf16 %v4161, 0
  %v4674 = vmax.bf16 %v4162, 0
  %v4675 = vmax.bf16 %v4163, 0
  %v4676 = vmax.bf16 %v4164, 0
  %v4677 = vmax.bf16 %v4165, 0
  %v4678 = vmax.bf16 %v4166, 0
  %v4679 = vmax.bf16 %v4167, 0
  %v4680 = vmax.bf16 %v4168, 0
  %v4681 = vmax.bf16 %v4169, 0
  %v4682 = vmax.bf16 %v4170, 0
  %v4683 = vld [vmem:[%s4] sm:$0xff]
  %v4684 = vld [vmem:[%s4 + $0x8] sm:$0xff]
  %v4685 = vld [vmem:[%s4 + $0x10] sm:$0xff]
  %v4686 = vld [vmem:[%s4 + $0x18] sm:$0xff]
  %v4687 = vld [vmem:[%s4 + $0x20] sm:$0xff]
  %v4688 = vld [vmem:[%s4 + $0x28] sm:$0xff]
  %v4689 = vld [vmem:[%s4 + $0x30] sm:$0xff]
  %v4690 = vld [vmem:[%s4 + $0x38] sm:$0xff]
  %v4691 = vld [vmem:[%s4 + $0x40] sm:$0xff]
  %v4692 = vld [vmem:[%s4 + $0x48] sm:$0xff]
  %v4693 = vld [vmem:[%s4 + $0x50] sm:$0xff]
  %v4694 = vld [vmem:[%s4 + $0x58] sm:$0xff]
  %v4695 = vld [vmem:[%s4 + $0x60] sm:$0xff]
  %v4696 = vld [vmem:[%s4 + $0x68] sm:$0xff]
  %v4697 = vld [vmem:[%s4 + $0x70] sm:$0xff]
  %v4698 = vld [vmem:[%s4 + $0x78] sm:$0xff]
  %v4699 = vld [vmem:[%s5] sm:$0xff]
  %v4700 = vld [vmem:[%s5 + $0x8] sm:$0xff]
  %v4701 = vld [vmem:[%s5 + $0x10] sm:$0xff]
  %v4702 = vld [vmem:[%s5 + $0x18] sm:$0xff]
  %v4703 = vld [vmem:[%s5 + $0x20] sm:$0xff]
  %v4704 = vld [vmem:[%s5 + $0x28] sm:$0xff]
  %v4705 = vld [vmem:[%s5 + $0x30] sm:$0xff]
  %v4706 = vld [vmem:[%s5 + $0x38] sm:$0xff]
  %v4707 = vld [vmem:[%s5 + $0x40] sm:$0xff]
  %v4708 = vld [vmem:[%s5 + $0x48] sm:$0xff]
  %v4709 = vld [vmem:[%s5 + $0x50] sm:$0xff]
  %v4710 = vld [vmem:[%s5 + $0x58] sm:$0xff]
  %v4711 = vld [vmem:[%s5 + $0x60] sm:$0xff]
  %v4712 = vld [vmem:[%s5 + $0x68] sm:$0xff]
  %v4713 = vld [vmem:[%s5 + $0x70] sm:$0xff]
  %v4714 = vld [vmem:[%s5 + $0x78] sm:$0xff]
  %4716 = vset.pattern.permute.xlu0 0
  %4717 = vperm.xlu0 %4716, %v4699
  %v4718 = vpop.permute.xlu0 %4717
  %4721 = vset.pattern.permute.xlu0 0
  %4722 = vperm.xlu0 %4721, %v4700
  %v4723 = vpop.permute.xlu0 %4722
  %4726 = vset.pattern.permute.xlu0 0
  %4727 = vperm.xlu0 %4726, %v4701
  %v4728 = vpop.permute.xlu0 %4727
  %4731 = vset.pattern.permute.xlu0 0
  %4732 = vperm.xlu0 %4731, %v4702
  %v4733 = vpop.permute.xlu0 %4732
  %4736 = vset.pattern.permute.xlu0 0
  %4737 = vperm.xlu0 %4736, %v4703
  %v4738 = vpop.permute.xlu0 %4737
  %4741 = vset.pattern.permute.xlu0 0
  %4742 = vperm.xlu0 %4741, %v4704
  %v4743 = vpop.permute.xlu0 %4742
  %4746 = vset.pattern.permute.xlu0 0
  %4747 = vperm.xlu0 %4746, %v4705
  %v4748 = vpop.permute.xlu0 %4747
  %4751 = vset.pattern.permute.xlu0 0
  %4752 = vperm.xlu0 %4751, %v4706
  %v4753 = vpop.permute.xlu0 %4752
  %4756 = vset.pattern.permute.xlu0 0
  %4757 = vperm.xlu0 %4756, %v4707
  %v4758 = vpop.permute.xlu0 %4757
  %4761 = vset.pattern.permute.xlu0 0
  %4762 = vperm.xlu0 %4761, %v4708
  %v4763 = vpop.permute.xlu0 %4762
  %4766 = vset.pattern.permute.xlu0 0
  %4767 = vperm.xlu0 %4766, %v4709
  %v4768 = vpop.permute.xlu0 %4767
  %4771 = vset.pattern.permute.xlu0 0
  %4772 = vperm.xlu0 %4771, %v4710
  %v4773 = vpop.permute.xlu0 %4772
  %4776 = vset.pattern.permute.xlu0 0
  %4777 = vperm.xlu0 %4776, %v4711
  %v4778 = vpop.permute.xlu0 %4777
  %4781 = vset.pattern.permute.xlu0 0
  %4782 = vperm.xlu0 %4781, %v4712
  %v4783 = vpop.permute.xlu0 %4782
  %4786 = vset.pattern.permute.xlu0 0
  %4787 = vperm.xlu0 %4786, %v4713
  %v4788 = vpop.permute.xlu0 %4787
  %4791 = vset.pattern.permute.xlu0 0
  %4792 = vperm.xlu0 %4791, %v4714
  %v4793 = vpop.permute.xlu0 %4792
  %v4811 = vunpack.c.l.b16 %v4683
  %v4812 = vunpack.c.h.b16 %v4683
  %v4813 = vunpack.c.l.b16 %v4684
  %v4814 = vunpack.c.h.b16 %v4684
  %v4815 = vunpack.c.l.b16 %v4685
  %v4816 = vunpack.c.h.b16 %v4685
  %v4817 = vunpack.c.l.b16 %v4686
  %v4818 = vunpack.c.h.b16 %v4686
  %v4819 = vunpack.c.l.b16 %v4687
  %v4820 = vunpack.c.h.b16 %v4687
  %v4821 = vunpack.c.l.b16 %v4688
  %v4822 = vunpack.c.h.b16 %v4688
  %v4823 = vunpack.c.l.b16 %v4689
  %v4824 = vunpack.c.h.b16 %v4689
  %v4825 = vunpack.c.l.b16 %v4690
  %v4826 = vunpack.c.h.b16 %v4690
  %v4827 = vunpack.c.l.b16 %v4691
  %v4828 = vunpack.c.h.b16 %v4691
  %v4829 = vunpack.c.l.b16 %v4692
  %v4830 = vunpack.c.h.b16 %v4692
  %v4831 = vunpack.c.l.b16 %v4693
  %v4832 = vunpack.c.h.b16 %v4693
  %v4833 = vunpack.c.l.b16 %v4694
  %v4834 = vunpack.c.h.b16 %v4694
  %v4835 = vunpack.c.l.b16 %v4695
  %v4836 = vunpack.c.h.b16 %v4695
  %v4837 = vunpack.c.l.b16 %v4696
  %v4838 = vunpack.c.h.b16 %v4696
  %v4839 = vunpack.c.l.b16 %v4697
  %v4840 = vunpack.c.h.b16 %v4697
  %v4841 = vunpack.c.l.b16 %v4698
  %v4842 = vunpack.c.h.b16 %v4698
  %v4843 = vpack.c.b16 %v4813, %v4811
  %v4844 = vpack.c.b16 %v4814, %v4812
  %v4845 = vpack.c.b16 %v4817, %v4815
  %v4846 = vpack.c.b16 %v4818, %v4816
  %v4847 = vpack.c.b16 %v4821, %v4819
  %v4848 = vpack.c.b16 %v4822, %v4820
  %v4849 = vpack.c.b16 %v4825, %v4823
  %v4850 = vpack.c.b16 %v4826, %v4824
  %v4851 = vpack.c.b16 %v4829, %v4827
  %v4852 = vpack.c.b16 %v4830, %v4828
  %v4853 = vpack.c.b16 %v4833, %v4831
  %v4854 = vpack.c.b16 %v4834, %v4832
  %v4855 = vpack.c.b16 %v4837, %v4835
  %v4856 = vpack.c.b16 %v4838, %v4836
  %v4857 = vpack.c.b16 %v4841, %v4839
  %v4858 = vpack.c.b16 %v4842, %v4840
  %v5387 = vunpack.c.l.b16 %v4171
  %v5388 = vunpack.c.h.b16 %v4171
  %v5389 = vunpack.c.l.b16 %v4172
  %v5390 = vunpack.c.h.b16 %v4172
  %v5391 = vunpack.c.l.b16 %v4173
  %v5392 = vunpack.c.h.b16 %v4173
  %v5393 = vunpack.c.l.b16 %v4174
  %v5394 = vunpack.c.h.b16 %v4174
  %v5395 = vunpack.c.l.b16 %v4175
  %v5396 = vunpack.c.h.b16 %v4175
  %v5397 = vunpack.c.l.b16 %v4176
  %v5398 = vunpack.c.h.b16 %v4176
  %v5399 = vunpack.c.l.b16 %v4177
  %v5400 = vunpack.c.h.b16 %v4177
  %v5401 = vunpack.c.l.b16 %v4178
  %v5402 = vunpack.c.h.b16 %v4178
  %v5403 = vunpack.c.l.b16 %v4179
  %v5404 = vunpack.c.h.b16 %v4179
  %v5405 = vunpack.c.l.b16 %v4180
  %v5406 = vunpack.c.h.b16 %v4180
  %v5407 = vunpack.c.l.b16 %v4181
  %v5408 = vunpack.c.h.b16 %v4181
  %v5409 = vunpack.c.l.b16 %v4182
  %v5410 = vunpack.c.h.b16 %v4182
  %v5411 = vunpack.c.l.b16 %v4183
  %v5412 = vunpack.c.h.b16 %v4183
  %v5413 = vunpack.c.l.b16 %v4184
  %v5414 = vunpack.c.h.b16 %v4184
  %v5415 = vunpack.c.l.b16 %v4185
  %v5416 = vunpack.c.h.b16 %v4185
  %v5417 = vunpack.c.l.b16 %v4186
  %v5418 = vunpack.c.h.b16 %v4186
  %v5419 = vunpack.c.l.b16 %v4187
  %v5420 = vunpack.c.h.b16 %v4187
  %v5421 = vunpack.c.l.b16 %v4188
  %v5422 = vunpack.c.h.b16 %v4188
  %v5423 = vunpack.c.l.b16 %v4189
  %v5424 = vunpack.c.h.b16 %v4189
  %v5425 = vunpack.c.l.b16 %v4190
  %v5426 = vunpack.c.h.b16 %v4190
  %v5427 = vunpack.c.l.b16 %v4191
  %v5428 = vunpack.c.h.b16 %v4191
  %v5429 = vunpack.c.l.b16 %v4192
  %v5430 = vunpack.c.h.b16 %v4192
  %v5431 = vunpack.c.l.b16 %v4193
  %v5432 = vunpack.c.h.b16 %v4193
  %v5433 = vunpack.c.l.b16 %v4194
  %v5434 = vunpack.c.h.b16 %v4194
  %v5435 = vunpack.c.l.b16 %v4195
  %v5436 = vunpack.c.h.b16 %v4195
  %v5437 = vunpack.c.l.b16 %v4196
  %v5438 = vunpack.c.h.b16 %v4196
  %v5439 = vunpack.c.l.b16 %v4197
  %v5440 = vunpack.c.h.b16 %v4197
  %v5441 = vunpack.c.l.b16 %v4198
  %v5442 = vunpack.c.h.b16 %v4198
  %v5443 = vunpack.c.l.b16 %v4199
  %v5444 = vunpack.c.h.b16 %v4199
  %v5445 = vunpack.c.l.b16 %v4200
  %v5446 = vunpack.c.h.b16 %v4200
  %v5447 = vunpack.c.l.b16 %v4201
  %v5448 = vunpack.c.h.b16 %v4201
  %v5449 = vunpack.c.l.b16 %v4202
  %v5450 = vunpack.c.h.b16 %v4202
  %v5451 = vunpack.c.l.b16 %v4203
  %v5452 = vunpack.c.h.b16 %v4203
  %v5453 = vunpack.c.l.b16 %v4204
  %v5454 = vunpack.c.h.b16 %v4204
  %v5455 = vunpack.c.l.b16 %v4205
  %v5456 = vunpack.c.h.b16 %v4205
  %v5457 = vunpack.c.l.b16 %v4206
  %v5458 = vunpack.c.h.b16 %v4206
  %v5459 = vunpack.c.l.b16 %v4207
  %v5460 = vunpack.c.h.b16 %v4207
  %v5461 = vunpack.c.l.b16 %v4208
  %v5462 = vunpack.c.h.b16 %v4208
  %v5463 = vunpack.c.l.b16 %v4209
  %v5464 = vunpack.c.h.b16 %v4209
  %v5465 = vunpack.c.l.b16 %v4210
  %v5466 = vunpack.c.h.b16 %v4210
  %v5467 = vunpack.c.l.b16 %v4211
  %v5468 = vunpack.c.h.b16 %v4211
  %v5469 = vunpack.c.l.b16 %v4212
  %v5470 = vunpack.c.h.b16 %v4212
  %v5471 = vunpack.c.l.b16 %v4213
  %v5472 = vunpack.c.h.b16 %v4213
  %v5473 = vunpack.c.l.b16 %v4214
  %v5474 = vunpack.c.h.b16 %v4214
  %v5475 = vunpack.c.l.b16 %v4215
  %v5476 = vunpack.c.h.b16 %v4215
  %v5477 = vunpack.c.l.b16 %v4216
  %v5478 = vunpack.c.h.b16 %v4216
  %v5479 = vunpack.c.l.b16 %v4217
  %v5480 = vunpack.c.h.b16 %v4217
  %v5481 = vunpack.c.l.b16 %v4218
  %v5482 = vunpack.c.h.b16 %v4218
  %v5483 = vunpack.c.l.b16 %v4219
  %v5484 = vunpack.c.h.b16 %v4219
  %v5485 = vunpack.c.l.b16 %v4220
  %v5486 = vunpack.c.h.b16 %v4220
  %v5487 = vunpack.c.l.b16 %v4221
  %v5488 = vunpack.c.h.b16 %v4221
  %v5489 = vunpack.c.l.b16 %v4222
  %v5490 = vunpack.c.h.b16 %v4222
  %v5491 = vunpack.c.l.b16 %v4223
  %v5492 = vunpack.c.h.b16 %v4223
  %v5493 = vunpack.c.l.b16 %v4224
  %v5494 = vunpack.c.h.b16 %v4224
  %v5495 = vunpack.c.l.b16 %v4225
  %v5496 = vunpack.c.h.b16 %v4225
  %v5497 = vunpack.c.l.b16 %v4226
  %v5498 = vunpack.c.h.b16 %v4226
  %v5499 = vunpack.c.l.b16 %v4227
  %v5500 = vunpack.c.h.b16 %v4227
  %v5501 = vunpack.c.l.b16 %v4228
  %v5502 = vunpack.c.h.b16 %v4228
  %v5503 = vunpack.c.l.b16 %v4229
  %v5504 = vunpack.c.h.b16 %v4229
  %v5505 = vunpack.c.l.b16 %v4230
  %v5506 = vunpack.c.h.b16 %v4230
  %v5507 = vunpack.c.l.b16 %v4231
  %v5508 = vunpack.c.h.b16 %v4231
  %v5509 = vunpack.c.l.b16 %v4232
  %v5510 = vunpack.c.h.b16 %v4232
  %v5511 = vunpack.c.l.b16 %v4233
  %v5512 = vunpack.c.h.b16 %v4233
  %v5513 = vunpack.c.l.b16 %v4234
  %v5514 = vunpack.c.h.b16 %v4234
  %v5515 = vunpack.c.l.b16 %v4235
  %v5516 = vunpack.c.h.b16 %v4235
  %v5517 = vunpack.c.l.b16 %v4236
  %v5518 = vunpack.c.h.b16 %v4236
  %v5519 = vunpack.c.l.b16 %v4237
  %v5520 = vunpack.c.h.b16 %v4237
  %v5521 = vunpack.c.l.b16 %v4238
  %v5522 = vunpack.c.h.b16 %v4238
  %v5523 = vunpack.c.l.b16 %v4239
  %v5524 = vunpack.c.h.b16 %v4239
  %v5525 = vunpack.c.l.b16 %v4240
  %v5526 = vunpack.c.h.b16 %v4240
  %v5527 = vunpack.c.l.b16 %v4241
  %v5528 = vunpack.c.h.b16 %v4241
  %v5529 = vunpack.c.l.b16 %v4242
  %v5530 = vunpack.c.h.b16 %v4242
  %v5531 = vunpack.c.l.b16 %v4243
  %v5532 = vunpack.c.h.b16 %v4243
  %v5533 = vunpack.c.l.b16 %v4244
  %v5534 = vunpack.c.h.b16 %v4244
  %v5535 = vunpack.c.l.b16 %v4245
  %v5536 = vunpack.c.h.b16 %v4245
  %v5537 = vunpack.c.l.b16 %v4246
  %v5538 = vunpack.c.h.b16 %v4246
  %v5539 = vunpack.c.l.b16 %v4247
  %v5540 = vunpack.c.h.b16 %v4247
  %v5541 = vunpack.c.l.b16 %v4248
  %v5542 = vunpack.c.h.b16 %v4248
  %v5543 = vunpack.c.l.b16 %v4249
  %v5544 = vunpack.c.h.b16 %v4249
  %v5545 = vunpack.c.l.b16 %v4250
  %v5546 = vunpack.c.h.b16 %v4250
  %v5547 = vunpack.c.l.b16 %v4251
  %v5548 = vunpack.c.h.b16 %v4251
  %v5549 = vunpack.c.l.b16 %v4252
  %v5550 = vunpack.c.h.b16 %v4252
  %v5551 = vunpack.c.l.b16 %v4253
  %v5552 = vunpack.c.h.b16 %v4253
  %v5553 = vunpack.c.l.b16 %v4254
  %v5554 = vunpack.c.h.b16 %v4254
  %v5555 = vunpack.c.l.b16 %v4255
  %v5556 = vunpack.c.h.b16 %v4255
  %v5557 = vunpack.c.l.b16 %v4256
  %v5558 = vunpack.c.h.b16 %v4256
  %v5559 = vunpack.c.l.b16 %v4257
  %v5560 = vunpack.c.h.b16 %v4257
  %v5561 = vunpack.c.l.b16 %v4258
  %v5562 = vunpack.c.h.b16 %v4258
  %v5563 = vunpack.c.l.b16 %v4259
  %v5564 = vunpack.c.h.b16 %v4259
  %v5565 = vunpack.c.l.b16 %v4260
  %v5566 = vunpack.c.h.b16 %v4260
  %v5567 = vunpack.c.l.b16 %v4261
  %v5568 = vunpack.c.h.b16 %v4261
  %v5569 = vunpack.c.l.b16 %v4262
  %v5570 = vunpack.c.h.b16 %v4262
  %v5571 = vunpack.c.l.b16 %v4263
  %v5572 = vunpack.c.h.b16 %v4263
  %v5573 = vunpack.c.l.b16 %v4264
  %v5574 = vunpack.c.h.b16 %v4264
  %v5575 = vunpack.c.l.b16 %v4265
  %v5576 = vunpack.c.h.b16 %v4265
  %v5577 = vunpack.c.l.b16 %v4266
  %v5578 = vunpack.c.h.b16 %v4266
  %v5579 = vunpack.c.l.b16 %v4267
  %v5580 = vunpack.c.h.b16 %v4267
  %v5581 = vunpack.c.l.b16 %v4268
  %v5582 = vunpack.c.h.b16 %v4268
  %v5583 = vunpack.c.l.b16 %v4269
  %v5584 = vunpack.c.h.b16 %v4269
  %v5585 = vunpack.c.l.b16 %v4270
  %v5586 = vunpack.c.h.b16 %v4270
  %v5587 = vunpack.c.l.b16 %v4271
  %v5588 = vunpack.c.h.b16 %v4271
  %v5589 = vunpack.c.l.b16 %v4272
  %v5590 = vunpack.c.h.b16 %v4272
  %v5591 = vunpack.c.l.b16 %v4273
  %v5592 = vunpack.c.h.b16 %v4273
  %v5593 = vunpack.c.l.b16 %v4274
  %v5594 = vunpack.c.h.b16 %v4274
  %v5595 = vunpack.c.l.b16 %v4275
  %v5596 = vunpack.c.h.b16 %v4275
  %v5597 = vunpack.c.l.b16 %v4276
  %v5598 = vunpack.c.h.b16 %v4276
  %v5599 = vunpack.c.l.b16 %v4277
  %v5600 = vunpack.c.h.b16 %v4277
  %v5601 = vunpack.c.l.b16 %v4278
  %v5602 = vunpack.c.h.b16 %v4278
  %v5603 = vunpack.c.l.b16 %v4279
  %v5604 = vunpack.c.h.b16 %v4279
  %v5605 = vunpack.c.l.b16 %v4280
  %v5606 = vunpack.c.h.b16 %v4280
  %v5607 = vunpack.c.l.b16 %v4281
  %v5608 = vunpack.c.h.b16 %v4281
  %v5609 = vunpack.c.l.b16 %v4282
  %v5610 = vunpack.c.h.b16 %v4282
  %v5611 = vunpack.c.l.b16 %v4283
  %v5612 = vunpack.c.h.b16 %v4283
  %v5613 = vunpack.c.l.b16 %v4284
  %v5614 = vunpack.c.h.b16 %v4284
  %v5615 = vunpack.c.l.b16 %v4285
  %v5616 = vunpack.c.h.b16 %v4285
  %v5617 = vunpack.c.l.b16 %v4286
  %v5618 = vunpack.c.h.b16 %v4286
  %v5619 = vunpack.c.l.b16 %v4287
  %v5620 = vunpack.c.h.b16 %v4287
  %v5621 = vunpack.c.l.b16 %v4288
  %v5622 = vunpack.c.h.b16 %v4288
  %v5623 = vunpack.c.l.b16 %v4289
  %v5624 = vunpack.c.h.b16 %v4289
  %v5625 = vunpack.c.l.b16 %v4290
  %v5626 = vunpack.c.h.b16 %v4290
  %v5627 = vunpack.c.l.b16 %v4291
  %v5628 = vunpack.c.h.b16 %v4291
  %v5629 = vunpack.c.l.b16 %v4292
  %v5630 = vunpack.c.h.b16 %v4292
  %v5631 = vunpack.c.l.b16 %v4293
  %v5632 = vunpack.c.h.b16 %v4293
  %v5633 = vunpack.c.l.b16 %v4294
  %v5634 = vunpack.c.h.b16 %v4294
  %v5635 = vunpack.c.l.b16 %v4295
  %v5636 = vunpack.c.h.b16 %v4295
  %v5637 = vunpack.c.l.b16 %v4296
  %v5638 = vunpack.c.h.b16 %v4296
  %v5639 = vunpack.c.l.b16 %v4297
  %v5640 = vunpack.c.h.b16 %v4297
  %v5641 = vunpack.c.l.b16 %v4298
  %v5642 = vunpack.c.h.b16 %v4298
  %v5643 = vunpack.c.l.b16 %v4299
  %v5644 = vunpack.c.h.b16 %v4299
  %v5645 = vunpack.c.l.b16 %v4300
  %v5646 = vunpack.c.h.b16 %v4300
  %v5647 = vunpack.c.l.b16 %v4301
  %v5648 = vunpack.c.h.b16 %v4301
  %v5649 = vunpack.c.l.b16 %v4302
  %v5650 = vunpack.c.h.b16 %v4302
  %v5651 = vunpack.c.l.b16 %v4303
  %v5652 = vunpack.c.h.b16 %v4303
  %v5653 = vunpack.c.l.b16 %v4304
  %v5654 = vunpack.c.h.b16 %v4304
  %v5655 = vunpack.c.l.b16 %v4305
  %v5656 = vunpack.c.h.b16 %v4305
  %v5657 = vunpack.c.l.b16 %v4306
  %v5658 = vunpack.c.h.b16 %v4306
  %v5659 = vunpack.c.l.b16 %v4307
  %v5660 = vunpack.c.h.b16 %v4307
  %v5661 = vunpack.c.l.b16 %v4308
  %v5662 = vunpack.c.h.b16 %v4308
  %v5663 = vunpack.c.l.b16 %v4309
  %v5664 = vunpack.c.h.b16 %v4309
  %v5665 = vunpack.c.l.b16 %v4310
  %v5666 = vunpack.c.h.b16 %v4310
  %v5667 = vunpack.c.l.b16 %v4311
  %v5668 = vunpack.c.h.b16 %v4311
  %v5669 = vunpack.c.l.b16 %v4312
  %v5670 = vunpack.c.h.b16 %v4312
  %v5671 = vunpack.c.l.b16 %v4313
  %v5672 = vunpack.c.h.b16 %v4313
  %v5673 = vunpack.c.l.b16 %v4314
  %v5674 = vunpack.c.h.b16 %v4314
  %v5675 = vunpack.c.l.b16 %v4315
  %v5676 = vunpack.c.h.b16 %v4315
  %v5677 = vunpack.c.l.b16 %v4316
  %v5678 = vunpack.c.h.b16 %v4316
  %v5679 = vunpack.c.l.b16 %v4317
  %v5680 = vunpack.c.h.b16 %v4317
  %v5681 = vunpack.c.l.b16 %v4318
  %v5682 = vunpack.c.h.b16 %v4318
  %v5683 = vunpack.c.l.b16 %v4319
  %v5684 = vunpack.c.h.b16 %v4319
  %v5685 = vunpack.c.l.b16 %v4320
  %v5686 = vunpack.c.h.b16 %v4320
  %v5687 = vunpack.c.l.b16 %v4321
  %v5688 = vunpack.c.h.b16 %v4321
  %v5689 = vunpack.c.l.b16 %v4322
  %v5690 = vunpack.c.h.b16 %v4322
  %v5691 = vunpack.c.l.b16 %v4323
  %v5692 = vunpack.c.h.b16 %v4323
  %v5693 = vunpack.c.l.b16 %v4324
  %v5694 = vunpack.c.h.b16 %v4324
  %v5695 = vunpack.c.l.b16 %v4325
  %v5696 = vunpack.c.h.b16 %v4325
  %v5697 = vunpack.c.l.b16 %v4326
  %v5698 = vunpack.c.h.b16 %v4326
  %v5699 = vunpack.c.l.b16 %v4327
  %v5700 = vunpack.c.h.b16 %v4327
  %v5701 = vunpack.c.l.b16 %v4328
  %v5702 = vunpack.c.h.b16 %v4328
  %v5703 = vunpack.c.l.b16 %v4329
  %v5704 = vunpack.c.h.b16 %v4329
  %v5705 = vunpack.c.l.b16 %v4330
  %v5706 = vunpack.c.h.b16 %v4330
  %v5707 = vunpack.c.l.b16 %v4331
  %v5708 = vunpack.c.h.b16 %v4331
  %v5709 = vunpack.c.l.b16 %v4332
  %v5710 = vunpack.c.h.b16 %v4332
  %v5711 = vunpack.c.l.b16 %v4333
  %v5712 = vunpack.c.h.b16 %v4333
  %v5713 = vunpack.c.l.b16 %v4334
  %v5714 = vunpack.c.h.b16 %v4334
  %v5715 = vunpack.c.l.b16 %v4335
  %v5716 = vunpack.c.h.b16 %v4335
  %v5717 = vunpack.c.l.b16 %v4336
  %v5718 = vunpack.c.h.b16 %v4336
  %v5719 = vunpack.c.l.b16 %v4337
  %v5720 = vunpack.c.h.b16 %v4337
  %v5721 = vunpack.c.l.b16 %v4338
  %v5722 = vunpack.c.h.b16 %v4338
  %v5723 = vunpack.c.l.b16 %v4339
  %v5724 = vunpack.c.h.b16 %v4339
  %v5725 = vunpack.c.l.b16 %v4340
  %v5726 = vunpack.c.h.b16 %v4340
  %v5727 = vunpack.c.l.b16 %v4341
  %v5728 = vunpack.c.h.b16 %v4341
  %v5729 = vunpack.c.l.b16 %v4342
  %v5730 = vunpack.c.h.b16 %v4342
  %v5731 = vunpack.c.l.b16 %v4343
  %v5732 = vunpack.c.h.b16 %v4343
  %v5733 = vunpack.c.l.b16 %v4344
  %v5734 = vunpack.c.h.b16 %v4344
  %v5735 = vunpack.c.l.b16 %v4345
  %v5736 = vunpack.c.h.b16 %v4345
  %v5737 = vunpack.c.l.b16 %v4346
  %v5738 = vunpack.c.h.b16 %v4346
  %v5739 = vunpack.c.l.b16 %v4347
  %v5740 = vunpack.c.h.b16 %v4347
  %v5741 = vunpack.c.l.b16 %v4348
  %v5742 = vunpack.c.h.b16 %v4348
  %v5743 = vunpack.c.l.b16 %v4349
  %v5744 = vunpack.c.h.b16 %v4349
  %v5745 = vunpack.c.l.b16 %v4350
  %v5746 = vunpack.c.h.b16 %v4350
  %v5747 = vunpack.c.l.b16 %v4351
  %v5748 = vunpack.c.h.b16 %v4351
  %v5749 = vunpack.c.l.b16 %v4352
  %v5750 = vunpack.c.h.b16 %v4352
  %v5751 = vunpack.c.l.b16 %v4353
  %v5752 = vunpack.c.h.b16 %v4353
  %v5753 = vunpack.c.l.b16 %v4354
  %v5754 = vunpack.c.h.b16 %v4354
  %v5755 = vunpack.c.l.b16 %v4355
  %v5756 = vunpack.c.h.b16 %v4355
  %v5757 = vunpack.c.l.b16 %v4356
  %v5758 = vunpack.c.h.b16 %v4356
  %v5759 = vunpack.c.l.b16 %v4357
  %v5760 = vunpack.c.h.b16 %v4357
  %v5761 = vunpack.c.l.b16 %v4358
  %v5762 = vunpack.c.h.b16 %v4358
  %v5763 = vunpack.c.l.b16 %v4359
  %v5764 = vunpack.c.h.b16 %v4359
  %v5765 = vunpack.c.l.b16 %v4360
  %v5766 = vunpack.c.h.b16 %v4360
  %v5767 = vunpack.c.l.b16 %v4361
  %v5768 = vunpack.c.h.b16 %v4361
  %v5769 = vunpack.c.l.b16 %v4362
  %v5770 = vunpack.c.h.b16 %v4362
  %v5771 = vunpack.c.l.b16 %v4363
  %v5772 = vunpack.c.h.b16 %v4363
  %v5773 = vunpack.c.l.b16 %v4364
  %v5774 = vunpack.c.h.b16 %v4364
  %v5775 = vunpack.c.l.b16 %v4365
  %v5776 = vunpack.c.h.b16 %v4365
  %v5777 = vunpack.c.l.b16 %v4366
  %v5778 = vunpack.c.h.b16 %v4366
  %v5779 = vunpack.c.l.b16 %v4367
  %v5780 = vunpack.c.h.b16 %v4367
  %v5781 = vunpack.c.l.b16 %v4368
  %v5782 = vunpack.c.h.b16 %v4368
  %v5783 = vunpack.c.l.b16 %v4369
  %v5784 = vunpack.c.h.b16 %v4369
  %v5785 = vunpack.c.l.b16 %v4370
  %v5786 = vunpack.c.h.b16 %v4370
  %v5787 = vunpack.c.l.b16 %v4371
  %v5788 = vunpack.c.h.b16 %v4371
  %v5789 = vunpack.c.l.b16 %v4372
  %v5790 = vunpack.c.h.b16 %v4372
  %v5791 = vunpack.c.l.b16 %v4373
  %v5792 = vunpack.c.h.b16 %v4373
  %v5793 = vunpack.c.l.b16 %v4374
  %v5794 = vunpack.c.h.b16 %v4374
  %v5795 = vunpack.c.l.b16 %v4375
  %v5796 = vunpack.c.h.b16 %v4375
  %v5797 = vunpack.c.l.b16 %v4376
  %v5798 = vunpack.c.h.b16 %v4376
  %v5799 = vunpack.c.l.b16 %v4377
  %v5800 = vunpack.c.h.b16 %v4377
  %v5801 = vunpack.c.l.b16 %v4378
  %v5802 = vunpack.c.h.b16 %v4378
  %v5803 = vunpack.c.l.b16 %v4379
  %v5804 = vunpack.c.h.b16 %v4379
  %v5805 = vunpack.c.l.b16 %v4380
  %v5806 = vunpack.c.h.b16 %v4380
  %v5807 = vunpack.c.l.b16 %v4381
  %v5808 = vunpack.c.h.b16 %v4381
  %v5809 = vunpack.c.l.b16 %v4382
  %v5810 = vunpack.c.h.b16 %v4382
  %v5811 = vunpack.c.l.b16 %v4383
  %v5812 = vunpack.c.h.b16 %v4383
  %v5813 = vunpack.c.l.b16 %v4384
  %v5814 = vunpack.c.h.b16 %v4384
  %v5815 = vunpack.c.l.b16 %v4385
  %v5816 = vunpack.c.h.b16 %v4385
  %v5817 = vunpack.c.l.b16 %v4386
  %v5818 = vunpack.c.h.b16 %v4386
  %v5819 = vunpack.c.l.b16 %v4387
  %v5820 = vunpack.c.h.b16 %v4387
  %v5821 = vunpack.c.l.b16 %v4388
  %v5822 = vunpack.c.h.b16 %v4388
  %v5823 = vunpack.c.l.b16 %v4389
  %v5824 = vunpack.c.h.b16 %v4389
  %v5825 = vunpack.c.l.b16 %v4390
  %v5826 = vunpack.c.h.b16 %v4390
  %v5827 = vunpack.c.l.b16 %v4391
  %v5828 = vunpack.c.h.b16 %v4391
  %v5829 = vunpack.c.l.b16 %v4392
  %v5830 = vunpack.c.h.b16 %v4392
  %v5831 = vunpack.c.l.b16 %v4393
  %v5832 = vunpack.c.h.b16 %v4393
  %v5833 = vunpack.c.l.b16 %v4394
  %v5834 = vunpack.c.h.b16 %v4394
  %v5835 = vunpack.c.l.b16 %v4395
  %v5836 = vunpack.c.h.b16 %v4395
  %v5837 = vunpack.c.l.b16 %v4396
  %v5838 = vunpack.c.h.b16 %v4396
  %v5839 = vunpack.c.l.b16 %v4397
  %v5840 = vunpack.c.h.b16 %v4397
  %v5841 = vunpack.c.l.b16 %v4398
  %v5842 = vunpack.c.h.b16 %v4398
  %v5843 = vunpack.c.l.b16 %v4399
  %v5844 = vunpack.c.h.b16 %v4399
  %v5845 = vunpack.c.l.b16 %v4400
  %v5846 = vunpack.c.h.b16 %v4400
  %v5847 = vunpack.c.l.b16 %v4401
  %v5848 = vunpack.c.h.b16 %v4401
  %v5849 = vunpack.c.l.b16 %v4402
  %v5850 = vunpack.c.h.b16 %v4402
  %v5851 = vunpack.c.l.b16 %v4403
  %v5852 = vunpack.c.h.b16 %v4403
  %v5853 = vunpack.c.l.b16 %v4404
  %v5854 = vunpack.c.h.b16 %v4404
  %v5855 = vunpack.c.l.b16 %v4405
  %v5856 = vunpack.c.h.b16 %v4405
  %v5857 = vunpack.c.l.b16 %v4406
  %v5858 = vunpack.c.h.b16 %v4406
  %v5859 = vunpack.c.l.b16 %v4407
  %v5860 = vunpack.c.h.b16 %v4407
  %v5861 = vunpack.c.l.b16 %v4408
  %v5862 = vunpack.c.h.b16 %v4408
  %v5863 = vunpack.c.l.b16 %v4409
  %v5864 = vunpack.c.h.b16 %v4409
  %v5865 = vunpack.c.l.b16 %v4410
  %v5866 = vunpack.c.h.b16 %v4410
  %v5867 = vunpack.c.l.b16 %v4411
  %v5868 = vunpack.c.h.b16 %v4411
  %v5869 = vunpack.c.l.b16 %v4412
  %v5870 = vunpack.c.h.b16 %v4412
  %v5871 = vunpack.c.l.b16 %v4413
  %v5872 = vunpack.c.h.b16 %v4413
  %v5873 = vunpack.c.l.b16 %v4414
  %v5874 = vunpack.c.h.b16 %v4414
  %v5875 = vunpack.c.l.b16 %v4415
  %v5876 = vunpack.c.h.b16 %v4415
  %v5877 = vunpack.c.l.b16 %v4416
  %v5878 = vunpack.c.h.b16 %v4416
  %v5879 = vunpack.c.l.b16 %v4417
  %v5880 = vunpack.c.h.b16 %v4417
  %v5881 = vunpack.c.l.b16 %v4418
  %v5882 = vunpack.c.h.b16 %v4418
  %v5883 = vunpack.c.l.b16 %v4419
  %v5884 = vunpack.c.h.b16 %v4419
  %v5885 = vunpack.c.l.b16 %v4420
  %v5886 = vunpack.c.h.b16 %v4420
  %v5887 = vunpack.c.l.b16 %v4421
  %v5888 = vunpack.c.h.b16 %v4421
  %v5889 = vunpack.c.l.b16 %v4422
  %v5890 = vunpack.c.h.b16 %v4422
  %v5891 = vunpack.c.l.b16 %v4423
  %v5892 = vunpack.c.h.b16 %v4423
  %v5893 = vunpack.c.l.b16 %v4424
  %v5894 = vunpack.c.h.b16 %v4424
  %v5895 = vunpack.c.l.b16 %v4425
  %v5896 = vunpack.c.h.b16 %v4425
  %v5897 = vunpack.c.l.b16 %v4426
  %v5898 = vunpack.c.h.b16 %v4426
  %v5899 = vunpack.c.l.b16 %v4427
  %v5900 = vunpack.c.h.b16 %v4427
  %v5901 = vunpack.c.l.b16 %v4428
  %v5902 = vunpack.c.h.b16 %v4428
  %v5903 = vunpack.c.l.b16 %v4429
  %v5904 = vunpack.c.h.b16 %v4429
  %v5905 = vunpack.c.l.b16 %v4430
  %v5906 = vunpack.c.h.b16 %v4430
  %v5907 = vunpack.c.l.b16 %v4431
  %v5908 = vunpack.c.h.b16 %v4431
  %v5909 = vunpack.c.l.b16 %v4432
  %v5910 = vunpack.c.h.b16 %v4432
  %v5911 = vunpack.c.l.b16 %v4433
  %v5912 = vunpack.c.h.b16 %v4433
  %v5913 = vunpack.c.l.b16 %v4434
  %v5914 = vunpack.c.h.b16 %v4434
  %v5915 = vunpack.c.l.b16 %v4435
  %v5916 = vunpack.c.h.b16 %v4435
  %v5917 = vunpack.c.l.b16 %v4436
  %v5918 = vunpack.c.h.b16 %v4436
  %v5919 = vunpack.c.l.b16 %v4437
  %v5920 = vunpack.c.h.b16 %v4437
  %v5921 = vunpack.c.l.b16 %v4438
  %v5922 = vunpack.c.h.b16 %v4438
  %v5923 = vunpack.c.l.b16 %v4439
  %v5924 = vunpack.c.h.b16 %v4439
  %v5925 = vunpack.c.l.b16 %v4440
  %v5926 = vunpack.c.h.b16 %v4440
  %v5927 = vunpack.c.l.b16 %v4441
  %v5928 = vunpack.c.h.b16 %v4441
  %v5929 = vunpack.c.l.b16 %v4442
  %v5930 = vunpack.c.h.b16 %v4442
  %v5931 = vunpack.c.l.b16 %v4443
  %v5932 = vunpack.c.h.b16 %v4443
  %v5933 = vunpack.c.l.b16 %v4444
  %v5934 = vunpack.c.h.b16 %v4444
  %v5935 = vunpack.c.l.b16 %v4445
  %v5936 = vunpack.c.h.b16 %v4445
  %v5937 = vunpack.c.l.b16 %v4446
  %v5938 = vunpack.c.h.b16 %v4446
  %v5939 = vunpack.c.l.b16 %v4447
  %v5940 = vunpack.c.h.b16 %v4447
  %v5941 = vunpack.c.l.b16 %v4448
  %v5942 = vunpack.c.h.b16 %v4448
  %v5943 = vunpack.c.l.b16 %v4449
  %v5944 = vunpack.c.h.b16 %v4449
  %v5945 = vunpack.c.l.b16 %v4450
  %v5946 = vunpack.c.h.b16 %v4450
  %v5947 = vunpack.c.l.b16 %v4451
  %v5948 = vunpack.c.h.b16 %v4451
  %v5949 = vunpack.c.l.b16 %v4452
  %v5950 = vunpack.c.h.b16 %v4452
  %v5951 = vunpack.c.l.b16 %v4453
  %v5952 = vunpack.c.h.b16 %v4453
  %v5953 = vunpack.c.l.b16 %v4454
  %v5954 = vunpack.c.h.b16 %v4454
  %v5955 = vunpack.c.l.b16 %v4455
  %v5956 = vunpack.c.h.b16 %v4455
  %v5957 = vunpack.c.l.b16 %v4456
  %v5958 = vunpack.c.h.b16 %v4456
  %v5959 = vunpack.c.l.b16 %v4457
  %v5960 = vunpack.c.h.b16 %v4457
  %v5961 = vunpack.c.l.b16 %v4458
  %v5962 = vunpack.c.h.b16 %v4458
  %v5963 = vunpack.c.l.b16 %v4459
  %v5964 = vunpack.c.h.b16 %v4459
  %v5965 = vunpack.c.l.b16 %v4460
  %v5966 = vunpack.c.h.b16 %v4460
  %v5967 = vunpack.c.l.b16 %v4461
  %v5968 = vunpack.c.h.b16 %v4461
  %v5969 = vunpack.c.l.b16 %v4462
  %v5970 = vunpack.c.h.b16 %v4462
  %v5971 = vunpack.c.l.b16 %v4463
  %v5972 = vunpack.c.h.b16 %v4463
  %v5973 = vunpack.c.l.b16 %v4464
  %v5974 = vunpack.c.h.b16 %v4464
  %v5975 = vunpack.c.l.b16 %v4465
  %v5976 = vunpack.c.h.b16 %v4465
  %v5977 = vunpack.c.l.b16 %v4466
  %v5978 = vunpack.c.h.b16 %v4466
  %v5979 = vunpack.c.l.b16 %v4467
  %v5980 = vunpack.c.h.b16 %v4467
  %v5981 = vunpack.c.l.b16 %v4468
  %v5982 = vunpack.c.h.b16 %v4468
  %v5983 = vunpack.c.l.b16 %v4469
  %v5984 = vunpack.c.h.b16 %v4469
  %v5985 = vunpack.c.l.b16 %v4470
  %v5986 = vunpack.c.h.b16 %v4470
  %v5987 = vunpack.c.l.b16 %v4471
  %v5988 = vunpack.c.h.b16 %v4471
  %v5989 = vunpack.c.l.b16 %v4472
  %v5990 = vunpack.c.h.b16 %v4472
  %v5991 = vunpack.c.l.b16 %v4473
  %v5992 = vunpack.c.h.b16 %v4473
  %v5993 = vunpack.c.l.b16 %v4474
  %v5994 = vunpack.c.h.b16 %v4474
  %v5995 = vunpack.c.l.b16 %v4475
  %v5996 = vunpack.c.h.b16 %v4475
  %v5997 = vunpack.c.l.b16 %v4476
  %v5998 = vunpack.c.h.b16 %v4476
  %v5999 = vunpack.c.l.b16 %v4477
  %v6000 = vunpack.c.h.b16 %v4477
  %v6001 = vunpack.c.l.b16 %v4478
  %v6002 = vunpack.c.h.b16 %v4478
  %v6003 = vunpack.c.l.b16 %v4479
  %v6004 = vunpack.c.h.b16 %v4479
  %v6005 = vunpack.c.l.b16 %v4480
  %v6006 = vunpack.c.h.b16 %v4480
  %v6007 = vunpack.c.l.b16 %v4481
  %v6008 = vunpack.c.h.b16 %v4481
  %v6009 = vunpack.c.l.b16 %v4482
  %v6010 = vunpack.c.h.b16 %v4482
  %v6011 = vunpack.c.l.b16 %v4483
  %v6012 = vunpack.c.h.b16 %v4483
  %v6013 = vunpack.c.l.b16 %v4484
  %v6014 = vunpack.c.h.b16 %v4484
  %v6015 = vunpack.c.l.b16 %v4485
  %v6016 = vunpack.c.h.b16 %v4485
  %v6017 = vunpack.c.l.b16 %v4486
  %v6018 = vunpack.c.h.b16 %v4486
  %v6019 = vunpack.c.l.b16 %v4487
  %v6020 = vunpack.c.h.b16 %v4487
  %v6021 = vunpack.c.l.b16 %v4488
  %v6022 = vunpack.c.h.b16 %v4488
  %v6023 = vunpack.c.l.b16 %v4489
  %v6024 = vunpack.c.h.b16 %v4489
  %v6025 = vunpack.c.l.b16 %v4490
  %v6026 = vunpack.c.h.b16 %v4490
  %v6027 = vunpack.c.l.b16 %v4491
  %v6028 = vunpack.c.h.b16 %v4491
  %v6029 = vunpack.c.l.b16 %v4492
  %v6030 = vunpack.c.h.b16 %v4492
  %v6031 = vunpack.c.l.b16 %v4493
  %v6032 = vunpack.c.h.b16 %v4493
  %v6033 = vunpack.c.l.b16 %v4494
  %v6034 = vunpack.c.h.b16 %v4494
  %v6035 = vunpack.c.l.b16 %v4495
  %v6036 = vunpack.c.h.b16 %v4495
  %v6037 = vunpack.c.l.b16 %v4496
  %v6038 = vunpack.c.h.b16 %v4496
  %v6039 = vunpack.c.l.b16 %v4497
  %v6040 = vunpack.c.h.b16 %v4497
  %v6041 = vunpack.c.l.b16 %v4498
  %v6042 = vunpack.c.h.b16 %v4498
  %v6043 = vunpack.c.l.b16 %v4499
  %v6044 = vunpack.c.h.b16 %v4499
  %v6045 = vunpack.c.l.b16 %v4500
  %v6046 = vunpack.c.h.b16 %v4500
  %v6047 = vunpack.c.l.b16 %v4501
  %v6048 = vunpack.c.h.b16 %v4501
  %v6049 = vunpack.c.l.b16 %v4502
  %v6050 = vunpack.c.h.b16 %v4502
  %v6051 = vunpack.c.l.b16 %v4503
  %v6052 = vunpack.c.h.b16 %v4503
  %v6053 = vunpack.c.l.b16 %v4504
  %v6054 = vunpack.c.h.b16 %v4504
  %v6055 = vunpack.c.l.b16 %v4505
  %v6056 = vunpack.c.h.b16 %v4505
  %v6057 = vunpack.c.l.b16 %v4506
  %v6058 = vunpack.c.h.b16 %v4506
  %v6059 = vunpack.c.l.b16 %v4507
  %v6060 = vunpack.c.h.b16 %v4507
  %v6061 = vunpack.c.l.b16 %v4508
  %v6062 = vunpack.c.h.b16 %v4508
  %v6063 = vunpack.c.l.b16 %v4509
  %v6064 = vunpack.c.h.b16 %v4509
  %v6065 = vunpack.c.l.b16 %v4510
  %v6066 = vunpack.c.h.b16 %v4510
  %v6067 = vunpack.c.l.b16 %v4511
  %v6068 = vunpack.c.h.b16 %v4511
  %v6069 = vunpack.c.l.b16 %v4512
  %v6070 = vunpack.c.h.b16 %v4512
  %v6071 = vunpack.c.l.b16 %v4513
  %v6072 = vunpack.c.h.b16 %v4513
  %v6073 = vunpack.c.l.b16 %v4514
  %v6074 = vunpack.c.h.b16 %v4514
  %v6075 = vunpack.c.l.b16 %v4515
  %v6076 = vunpack.c.h.b16 %v4515
  %v6077 = vunpack.c.l.b16 %v4516
  %v6078 = vunpack.c.h.b16 %v4516
  %v6079 = vunpack.c.l.b16 %v4517
  %v6080 = vunpack.c.h.b16 %v4517
  %v6081 = vunpack.c.l.b16 %v4518
  %v6082 = vunpack.c.h.b16 %v4518
  %v6083 = vunpack.c.l.b16 %v4519
  %v6084 = vunpack.c.h.b16 %v4519
  %v6085 = vunpack.c.l.b16 %v4520
  %v6086 = vunpack.c.h.b16 %v4520
  %v6087 = vunpack.c.l.b16 %v4521
  %v6088 = vunpack.c.h.b16 %v4521
  %v6089 = vunpack.c.l.b16 %v4522
  %v6090 = vunpack.c.h.b16 %v4522
  %v6091 = vunpack.c.l.b16 %v4523
  %v6092 = vunpack.c.h.b16 %v4523
  %v6093 = vunpack.c.l.b16 %v4524
  %v6094 = vunpack.c.h.b16 %v4524
  %v6095 = vunpack.c.l.b16 %v4525
  %v6096 = vunpack.c.h.b16 %v4525
  %v6097 = vunpack.c.l.b16 %v4526
  %v6098 = vunpack.c.h.b16 %v4526
  %v6099 = vunpack.c.l.b16 %v4527
  %v6100 = vunpack.c.h.b16 %v4527
  %v6101 = vunpack.c.l.b16 %v4528
  %v6102 = vunpack.c.h.b16 %v4528
  %v6103 = vunpack.c.l.b16 %v4529
  %v6104 = vunpack.c.h.b16 %v4529
  %v6105 = vunpack.c.l.b16 %v4530
  %v6106 = vunpack.c.h.b16 %v4530
  %v6107 = vunpack.c.l.b16 %v4531
  %v6108 = vunpack.c.h.b16 %v4531
  %v6109 = vunpack.c.l.b16 %v4532
  %v6110 = vunpack.c.h.b16 %v4532
  %v6111 = vunpack.c.l.b16 %v4533
  %v6112 = vunpack.c.h.b16 %v4533
  %v6113 = vunpack.c.l.b16 %v4534
  %v6114 = vunpack.c.h.b16 %v4534
  %v6115 = vunpack.c.l.b16 %v4535
  %v6116 = vunpack.c.h.b16 %v4535
  %v6117 = vunpack.c.l.b16 %v4536
  %v6118 = vunpack.c.h.b16 %v4536
  %v6119 = vunpack.c.l.b16 %v4537
  %v6120 = vunpack.c.h.b16 %v4537
  %v6121 = vunpack.c.l.b16 %v4538
  %v6122 = vunpack.c.h.b16 %v4538
  %v6123 = vunpack.c.l.b16 %v4539
  %v6124 = vunpack.c.h.b16 %v4539
  %v6125 = vunpack.c.l.b16 %v4540
  %v6126 = vunpack.c.h.b16 %v4540
  %v6127 = vunpack.c.l.b16 %v4541
  %v6128 = vunpack.c.h.b16 %v4541
  %v6129 = vunpack.c.l.b16 %v4542
  %v6130 = vunpack.c.h.b16 %v4542
  %v6131 = vunpack.c.l.b16 %v4543
  %v6132 = vunpack.c.h.b16 %v4543
  %v6133 = vunpack.c.l.b16 %v4544
  %v6134 = vunpack.c.h.b16 %v4544
  %v6135 = vunpack.c.l.b16 %v4545
  %v6136 = vunpack.c.h.b16 %v4545
  %v6137 = vunpack.c.l.b16 %v4546
  %v6138 = vunpack.c.h.b16 %v4546
  %v6139 = vunpack.c.l.b16 %v4547
  %v6140 = vunpack.c.h.b16 %v4547
  %v6141 = vunpack.c.l.b16 %v4548
  %v6142 = vunpack.c.h.b16 %v4548
  %v6143 = vunpack.c.l.b16 %v4549
  %v6144 = vunpack.c.h.b16 %v4549
  %v6145 = vunpack.c.l.b16 %v4550
  %v6146 = vunpack.c.h.b16 %v4550
  %v6147 = vunpack.c.l.b16 %v4551
  %v6148 = vunpack.c.h.b16 %v4551
  %v6149 = vunpack.c.l.b16 %v4552
  %v6150 = vunpack.c.h.b16 %v4552
  %v6151 = vunpack.c.l.b16 %v4553
  %v6152 = vunpack.c.h.b16 %v4553
  %v6153 = vunpack.c.l.b16 %v4554
  %v6154 = vunpack.c.h.b16 %v4554
  %v6155 = vunpack.c.l.b16 %v4555
  %v6156 = vunpack.c.h.b16 %v4555
  %v6157 = vunpack.c.l.b16 %v4556
  %v6158 = vunpack.c.h.b16 %v4556
  %v6159 = vunpack.c.l.b16 %v4557
  %v6160 = vunpack.c.h.b16 %v4557
  %v6161 = vunpack.c.l.b16 %v4558
  %v6162 = vunpack.c.h.b16 %v4558
  %v6163 = vunpack.c.l.b16 %v4559
  %v6164 = vunpack.c.h.b16 %v4559
  %v6165 = vunpack.c.l.b16 %v4560
  %v6166 = vunpack.c.h.b16 %v4560
  %v6167 = vunpack.c.l.b16 %v4561
  %v6168 = vunpack.c.h.b16 %v4561
  %v6169 = vunpack.c.l.b16 %v4562
  %v6170 = vunpack.c.h.b16 %v4562
  %v6171 = vunpack.c.l.b16 %v4563
  %v6172 = vunpack.c.h.b16 %v4563
  %v6173 = vunpack.c.l.b16 %v4564
  %v6174 = vunpack.c.h.b16 %v4564
  %v6175 = vunpack.c.l.b16 %v4565
  %v6176 = vunpack.c.h.b16 %v4565
  %v6177 = vunpack.c.l.b16 %v4566
  %v6178 = vunpack.c.h.b16 %v4566
  %v6179 = vunpack.c.l.b16 %v4567
  %v6180 = vunpack.c.h.b16 %v4567
  %v6181 = vunpack.c.l.b16 %v4568
  %v6182 = vunpack.c.h.b16 %v4568
  %v6183 = vunpack.c.l.b16 %v4569
  %v6184 = vunpack.c.h.b16 %v4569
  %v6185 = vunpack.c.l.b16 %v4570
  %v6186 = vunpack.c.h.b16 %v4570
  %v6187 = vunpack.c.l.b16 %v4571
  %v6188 = vunpack.c.h.b16 %v4571
  %v6189 = vunpack.c.l.b16 %v4572
  %v6190 = vunpack.c.h.b16 %v4572
  %v6191 = vunpack.c.l.b16 %v4573
  %v6192 = vunpack.c.h.b16 %v4573
  %v6193 = vunpack.c.l.b16 %v4574
  %v6194 = vunpack.c.h.b16 %v4574
  %v6195 = vunpack.c.l.b16 %v4575
  %v6196 = vunpack.c.h.b16 %v4575
  %v6197 = vunpack.c.l.b16 %v4576
  %v6198 = vunpack.c.h.b16 %v4576
  %v6199 = vunpack.c.l.b16 %v4577
  %v6200 = vunpack.c.h.b16 %v4577
  %v6201 = vunpack.c.l.b16 %v4578
  %v6202 = vunpack.c.h.b16 %v4578
  %v6203 = vunpack.c.l.b16 %v4579
  %v6204 = vunpack.c.h.b16 %v4579
  %v6205 = vunpack.c.l.b16 %v4580
  %v6206 = vunpack.c.h.b16 %v4580
  %v6207 = vunpack.c.l.b16 %v4581
  %v6208 = vunpack.c.h.b16 %v4581
  %v6209 = vunpack.c.l.b16 %v4582
  %v6210 = vunpack.c.h.b16 %v4582
  %v6211 = vunpack.c.l.b16 %v4583
  %v6212 = vunpack.c.h.b16 %v4583
  %v6213 = vunpack.c.l.b16 %v4584
  %v6214 = vunpack.c.h.b16 %v4584
  %v6215 = vunpack.c.l.b16 %v4585
  %v6216 = vunpack.c.h.b16 %v4585
  %v6217 = vunpack.c.l.b16 %v4586
  %v6218 = vunpack.c.h.b16 %v4586
  %v6219 = vunpack.c.l.b16 %v4587
  %v6220 = vunpack.c.h.b16 %v4587
  %v6221 = vunpack.c.l.b16 %v4588
  %v6222 = vunpack.c.h.b16 %v4588
  %v6223 = vunpack.c.l.b16 %v4589
  %v6224 = vunpack.c.h.b16 %v4589
  %v6225 = vunpack.c.l.b16 %v4590
  %v6226 = vunpack.c.h.b16 %v4590
  %v6227 = vunpack.c.l.b16 %v4591
  %v6228 = vunpack.c.h.b16 %v4591
  %v6229 = vunpack.c.l.b16 %v4592
  %v6230 = vunpack.c.h.b16 %v4592
  %v6231 = vunpack.c.l.b16 %v4593
  %v6232 = vunpack.c.h.b16 %v4593
  %v6233 = vunpack.c.l.b16 %v4594
  %v6234 = vunpack.c.h.b16 %v4594
  %v6235 = vunpack.c.l.b16 %v4595
  %v6236 = vunpack.c.h.b16 %v4595
  %v6237 = vunpack.c.l.b16 %v4596
  %v6238 = vunpack.c.h.b16 %v4596
  %v6239 = vunpack.c.l.b16 %v4597
  %v6240 = vunpack.c.h.b16 %v4597
  %v6241 = vunpack.c.l.b16 %v4598
  %v6242 = vunpack.c.h.b16 %v4598
  %v6243 = vunpack.c.l.b16 %v4599
  %v6244 = vunpack.c.h.b16 %v4599
  %v6245 = vunpack.c.l.b16 %v4600
  %v6246 = vunpack.c.h.b16 %v4600
  %v6247 = vunpack.c.l.b16 %v4601
  %v6248 = vunpack.c.h.b16 %v4601
  %v6249 = vunpack.c.l.b16 %v4602
  %v6250 = vunpack.c.h.b16 %v4602
  %v6251 = vunpack.c.l.b16 %v4603
  %v6252 = vunpack.c.h.b16 %v4603
  %v6253 = vunpack.c.l.b16 %v4604
  %v6254 = vunpack.c.h.b16 %v4604
  %v6255 = vunpack.c.l.b16 %v4605
  %v6256 = vunpack.c.h.b16 %v4605
  %v6257 = vunpack.c.l.b16 %v4606
  %v6258 = vunpack.c.h.b16 %v4606
  %v6259 = vunpack.c.l.b16 %v4607
  %v6260 = vunpack.c.h.b16 %v4607
  %v6261 = vunpack.c.l.b16 %v4608
  %v6262 = vunpack.c.h.b16 %v4608
  %v6263 = vunpack.c.l.b16 %v4609
  %v6264 = vunpack.c.h.b16 %v4609
  %v6265 = vunpack.c.l.b16 %v4610
  %v6266 = vunpack.c.h.b16 %v4610
  %v6267 = vunpack.c.l.b16 %v4611
  %v6268 = vunpack.c.h.b16 %v4611
  %v6269 = vunpack.c.l.b16 %v4612
  %v6270 = vunpack.c.h.b16 %v4612
  %v6271 = vunpack.c.l.b16 %v4613
  %v6272 = vunpack.c.h.b16 %v4613
  %v6273 = vunpack.c.l.b16 %v4614
  %v6274 = vunpack.c.h.b16 %v4614
  %v6275 = vunpack.c.l.b16 %v4615
  %v6276 = vunpack.c.h.b16 %v4615
  %v6277 = vunpack.c.l.b16 %v4616
  %v6278 = vunpack.c.h.b16 %v4616
  %v6279 = vunpack.c.l.b16 %v4617
  %v6280 = vunpack.c.h.b16 %v4617
  %v6281 = vunpack.c.l.b16 %v4618
  %v6282 = vunpack.c.h.b16 %v4618
  %v6283 = vunpack.c.l.b16 %v4619
  %v6284 = vunpack.c.h.b16 %v4619
  %v6285 = vunpack.c.l.b16 %v4620
  %v6286 = vunpack.c.h.b16 %v4620
  %v6287 = vunpack.c.l.b16 %v4621
  %v6288 = vunpack.c.h.b16 %v4621
  %v6289 = vunpack.c.l.b16 %v4622
  %v6290 = vunpack.c.h.b16 %v4622
  %v6291 = vunpack.c.l.b16 %v4623
  %v6292 = vunpack.c.h.b16 %v4623
  %v6293 = vunpack.c.l.b16 %v4624
  %v6294 = vunpack.c.h.b16 %v4624
  %v6295 = vunpack.c.l.b16 %v4625
  %v6296 = vunpack.c.h.b16 %v4625
  %v6297 = vunpack.c.l.b16 %v4626
  %v6298 = vunpack.c.h.b16 %v4626
  %v6299 = vunpack.c.l.b16 %v4627
  %v6300 = vunpack.c.h.b16 %v4627
  %v6301 = vunpack.c.l.b16 %v4628
  %v6302 = vunpack.c.h.b16 %v4628
  %v6303 = vunpack.c.l.b16 %v4629
  %v6304 = vunpack.c.h.b16 %v4629
  %v6305 = vunpack.c.l.b16 %v4630
  %v6306 = vunpack.c.h.b16 %v4630
  %v6307 = vunpack.c.l.b16 %v4631
  %v6308 = vunpack.c.h.b16 %v4631
  %v6309 = vunpack.c.l.b16 %v4632
  %v6310 = vunpack.c.h.b16 %v4632
  %v6311 = vunpack.c.l.b16 %v4633
  %v6312 = vunpack.c.h.b16 %v4633
  %v6313 = vunpack.c.l.b16 %v4634
  %v6314 = vunpack.c.h.b16 %v4634
  %v6315 = vunpack.c.l.b16 %v4635
  %v6316 = vunpack.c.h.b16 %v4635
  %v6317 = vunpack.c.l.b16 %v4636
  %v6318 = vunpack.c.h.b16 %v4636
  %v6319 = vunpack.c.l.b16 %v4637
  %v6320 = vunpack.c.h.b16 %v4637
  %v6321 = vunpack.c.l.b16 %v4638
  %v6322 = vunpack.c.h.b16 %v4638
  %v6323 = vunpack.c.l.b16 %v4639
  %v6324 = vunpack.c.h.b16 %v4639
  %v6325 = vunpack.c.l.b16 %v4640
  %v6326 = vunpack.c.h.b16 %v4640
  %v6327 = vunpack.c.l.b16 %v4641
  %v6328 = vunpack.c.h.b16 %v4641
  %v6329 = vunpack.c.l.b16 %v4642
  %v6330 = vunpack.c.h.b16 %v4642
  %v6331 = vunpack.c.l.b16 %v4643
  %v6332 = vunpack.c.h.b16 %v4643
  %v6333 = vunpack.c.l.b16 %v4644
  %v6334 = vunpack.c.h.b16 %v4644
  %v6335 = vunpack.c.l.b16 %v4645
  %v6336 = vunpack.c.h.b16 %v4645
  %v6337 = vunpack.c.l.b16 %v4646
  %v6338 = vunpack.c.h.b16 %v4646
  %v6339 = vunpack.c.l.b16 %v4647
  %v6340 = vunpack.c.h.b16 %v4647
  %v6341 = vunpack.c.l.b16 %v4648
  %v6342 = vunpack.c.h.b16 %v4648
  %v6343 = vunpack.c.l.b16 %v4649
  %v6344 = vunpack.c.h.b16 %v4649
  %v6345 = vunpack.c.l.b16 %v4650
  %v6346 = vunpack.c.h.b16 %v4650
  %v6347 = vunpack.c.l.b16 %v4651
  %v6348 = vunpack.c.h.b16 %v4651
  %v6349 = vunpack.c.l.b16 %v4652
  %v6350 = vunpack.c.h.b16 %v4652
  %v6351 = vunpack.c.l.b16 %v4653
  %v6352 = vunpack.c.h.b16 %v4653
  %v6353 = vunpack.c.l.b16 %v4654
  %v6354 = vunpack.c.h.b16 %v4654
  %v6355 = vunpack.c.l.b16 %v4655
  %v6356 = vunpack.c.h.b16 %v4655
  %v6357 = vunpack.c.l.b16 %v4656
  %v6358 = vunpack.c.h.b16 %v4656
  %v6359 = vunpack.c.l.b16 %v4657
  %v6360 = vunpack.c.h.b16 %v4657
  %v6361 = vunpack.c.l.b16 %v4658
  %v6362 = vunpack.c.h.b16 %v4658
  %v6363 = vunpack.c.l.b16 %v4659
  %v6364 = vunpack.c.h.b16 %v4659
  %v6365 = vunpack.c.l.b16 %v4660
  %v6366 = vunpack.c.h.b16 %v4660
  %v6367 = vunpack.c.l.b16 %v4661
  %v6368 = vunpack.c.h.b16 %v4661
  %v6369 = vunpack.c.l.b16 %v4662
  %v6370 = vunpack.c.h.b16 %v4662
  %v6371 = vunpack.c.l.b16 %v4663
  %v6372 = vunpack.c.h.b16 %v4663
  %v6373 = vunpack.c.l.b16 %v4664
  %v6374 = vunpack.c.h.b16 %v4664
  %v6375 = vunpack.c.l.b16 %v4665
  %v6376 = vunpack.c.h.b16 %v4665
  %v6377 = vunpack.c.l.b16 %v4666
  %v6378 = vunpack.c.h.b16 %v4666
  %v6379 = vunpack.c.l.b16 %v4667
  %v6380 = vunpack.c.h.b16 %v4667
  %v6381 = vunpack.c.l.b16 %v4668
  %v6382 = vunpack.c.h.b16 %v4668
  %v6383 = vunpack.c.l.b16 %v4669
  %v6384 = vunpack.c.h.b16 %v4669
  %v6385 = vunpack.c.l.b16 %v4670
  %v6386 = vunpack.c.h.b16 %v4670
  %v6387 = vunpack.c.l.b16 %v4671
  %v6388 = vunpack.c.h.b16 %v4671
  %v6389 = vunpack.c.l.b16 %v4672
  %v6390 = vunpack.c.h.b16 %v4672
  %v6391 = vunpack.c.l.b16 %v4673
  %v6392 = vunpack.c.h.b16 %v4673
  %v6393 = vunpack.c.l.b16 %v4674
  %v6394 = vunpack.c.h.b16 %v4674
  %v6395 = vunpack.c.l.b16 %v4675
  %v6396 = vunpack.c.h.b16 %v4675
  %v6397 = vunpack.c.l.b16 %v4676
  %v6398 = vunpack.c.h.b16 %v4676
  %v6399 = vunpack.c.l.b16 %v4677
  %v6400 = vunpack.c.h.b16 %v4677
  %v6401 = vunpack.c.l.b16 %v4678
  %v6402 = vunpack.c.h.b16 %v4678
  %v6403 = vunpack.c.l.b16 %v4679
  %v6404 = vunpack.c.h.b16 %v4679
  %v6405 = vunpack.c.l.b16 %v4680
  %v6406 = vunpack.c.h.b16 %v4680
  %v6407 = vunpack.c.l.b16 %v4681
  %v6408 = vunpack.c.h.b16 %v4681
  %v6409 = vunpack.c.l.b16 %v4682
  %v6410 = vunpack.c.h.b16 %v4682
  %v6411 = vpack.c.b16 %v5419, %v5387
  %v6412 = vpack.c.b16 %v5420, %v5388
  %v6413 = vpack.c.b16 %v5421, %v5389
  %v6414 = vpack.c.b16 %v5422, %v5390
  %v6415 = vpack.c.b16 %v5423, %v5391
  %v6416 = vpack.c.b16 %v5424, %v5392
  %v6417 = vpack.c.b16 %v5425, %v5393
  %v6418 = vpack.c.b16 %v5426, %v5394
  %v6419 = vpack.c.b16 %v5427, %v5395
  %v6420 = vpack.c.b16 %v5428, %v5396
  %v6421 = vpack.c.b16 %v5429, %v5397
  %v6422 = vpack.c.b16 %v5430, %v5398
  %v6423 = vpack.c.b16 %v5431, %v5399
  %v6424 = vpack.c.b16 %v5432, %v5400
  %v6425 = vpack.c.b16 %v5433, %v5401
  %v6426 = vpack.c.b16 %v5434, %v5402
  %v6427 = vpack.c.b16 %v5435, %v5403
  %v6428 = vpack.c.b16 %v5436, %v5404
  %v6429 = vpack.c.b16 %v5437, %v5405
  %v6430 = vpack.c.b16 %v5438, %v5406
  %v6431 = vpack.c.b16 %v5439, %v5407
  %v6432 = vpack.c.b16 %v5440, %v5408
  %v6433 = vpack.c.b16 %v5441, %v5409
  %v6434 = vpack.c.b16 %v5442, %v5410
  %v6435 = vpack.c.b16 %v5443, %v5411
  %v6436 = vpack.c.b16 %v5444, %v5412
  %v6437 = vpack.c.b16 %v5445, %v5413
  %v6438 = vpack.c.b16 %v5446, %v5414
  %v6439 = vpack.c.b16 %v5447, %v5415
  %v6440 = vpack.c.b16 %v5448, %v5416
  %v6441 = vpack.c.b16 %v5449, %v5417
  %v6442 = vpack.c.b16 %v5450, %v5418
  %v6443 = vpack.c.b16 %v5483, %v5451
  %v6444 = vpack.c.b16 %v5484, %v5452
  %v6445 = vpack.c.b16 %v5485, %v5453
  %v6446 = vpack.c.b16 %v5486, %v5454
  %v6447 = vpack.c.b16 %v5487, %v5455
  %v6448 = vpack.c.b16 %v5488, %v5456
  %v6449 = vpack.c.b16 %v5489, %v5457
  %v6450 = vpack.c.b16 %v5490, %v5458
  %v6451 = vpack.c.b16 %v5491, %v5459
  %v6452 = vpack.c.b16 %v5492, %v5460
  %v6453 = vpack.c.b16 %v5493, %v5461
  %v6454 = vpack.c.b16 %v5494, %v5462
  %v6455 = vpack.c.b16 %v5495, %v5463
  %v6456 = vpack.c.b16 %v5496, %v5464
  %v6457 = vpack.c.b16 %v5497, %v5465
  %v6458 = vpack.c.b16 %v5498, %v5466
  %v6459 = vpack.c.b16 %v5499, %v5467
  %v6460 = vpack.c.b16 %v5500, %v5468
  %v6461 = vpack.c.b16 %v5501, %v5469
  %v6462 = vpack.c.b16 %v5502, %v5470
  %v6463 = vpack.c.b16 %v5503, %v5471
  %v6464 = vpack.c.b16 %v5504, %v5472
  %v6465 = vpack.c.b16 %v5505, %v5473
  %v6466 = vpack.c.b16 %v5506, %v5474
  %v6467 = vpack.c.b16 %v5507, %v5475
  %v6468 = vpack.c.b16 %v5508, %v5476
  %v6469 = vpack.c.b16 %v5509, %v5477
  %v6470 = vpack.c.b16 %v5510, %v5478
  %v6471 = vpack.c.b16 %v5511, %v5479
  %v6472 = vpack.c.b16 %v5512, %v5480
  %v6473 = vpack.c.b16 %v5513, %v5481
  %v6474 = vpack.c.b16 %v5514, %v5482
  %v6475 = vpack.c.b16 %v5547, %v5515
  %v6476 = vpack.c.b16 %v5548, %v5516
  %v6477 = vpack.c.b16 %v5549, %v5517
  %v6478 = vpack.c.b16 %v5550, %v5518
  %v6479 = vpack.c.b16 %v5551, %v5519
  %v6480 = vpack.c.b16 %v5552, %v5520
  %v6481 = vpack.c.b16 %v5553, %v5521
  %v6482 = vpack.c.b16 %v5554, %v5522
  %v6483 = vpack.c.b16 %v5555, %v5523
  %v6484 = vpack.c.b16 %v5556, %v5524
  %v6485 = vpack.c.b16 %v5557, %v5525
  %v6486 = vpack.c.b16 %v5558, %v5526
  %v6487 = vpack.c.b16 %v5559, %v5527
  %v6488 = vpack.c.b16 %v5560, %v5528
  %v6489 = vpack.c.b16 %v5561, %v5529
  %v6490 = vpack.c.b16 %v5562, %v5530
  %v6491 = vpack.c.b16 %v5563, %v5531
  %v6492 = vpack.c.b16 %v5564, %v5532
  %v6493 = vpack.c.b16 %v5565, %v5533
  %v6494 = vpack.c.b16 %v5566, %v5534
  %v6495 = vpack.c.b16 %v5567, %v5535
  %v6496 = vpack.c.b16 %v5568, %v5536
  %v6497 = vpack.c.b16 %v5569, %v5537
  %v6498 = vpack.c.b16 %v5570, %v5538
  %v6499 = vpack.c.b16 %v5571, %v5539
  %v6500 = vpack.c.b16 %v5572, %v5540
  %v6501 = vpack.c.b16 %v5573, %v5541
  %v6502 = vpack.c.b16 %v5574, %v5542
  %v6503 = vpack.c.b16 %v5575, %v5543
  %v6504 = vpack.c.b16 %v5576, %v5544
  %v6505 = vpack.c.b16 %v5577, %v5545
  %v6506 = vpack.c.b16 %v5578, %v5546
  %v6507 = vpack.c.b16 %v5611, %v5579
  %v6508 = vpack.c.b16 %v5612, %v5580
  %v6509 = vpack.c.b16 %v5613, %v5581
  %v6510 = vpack.c.b16 %v5614, %v5582
  %v6511 = vpack.c.b16 %v5615, %v5583
  %v6512 = vpack.c.b16 %v5616, %v5584
  %v6513 = vpack.c.b16 %v5617, %v5585
  %v6514 = vpack.c.b16 %v5618, %v5586
  %v6515 = vpack.c.b16 %v5619, %v5587
  %v6516 = vpack.c.b16 %v5620, %v5588
  %v6517 = vpack.c.b16 %v5621, %v5589
  %v6518 = vpack.c.b16 %v5622, %v5590
  %v6519 = vpack.c.b16 %v5623, %v5591
  %v6520 = vpack.c.b16 %v5624, %v5592
  %v6521 = vpack.c.b16 %v5625, %v5593
  %v6522 = vpack.c.b16 %v5626, %v5594
  %v6523 = vpack.c.b16 %v5627, %v5595
  %v6524 = vpack.c.b16 %v5628, %v5596
  %v6525 = vpack.c.b16 %v5629, %v5597
  %v6526 = vpack.c.b16 %v5630, %v5598
  %v6527 = vpack.c.b16 %v5631, %v5599
  %v6528 = vpack.c.b16 %v5632, %v5600
  %v6529 = vpack.c.b16 %v5633, %v5601
  %v6530 = vpack.c.b16 %v5634, %v5602
  %v6531 = vpack.c.b16 %v5635, %v5603
  %v6532 = vpack.c.b16 %v5636, %v5604
  %v6533 = vpack.c.b16 %v5637, %v5605
  %v6534 = vpack.c.b16 %v5638, %v5606
  %v6535 = vpack.c.b16 %v5639, %v5607
  %v6536 = vpack.c.b16 %v5640, %v5608
  %v6537 = vpack.c.b16 %v5641, %v5609
  %v6538 = vpack.c.b16 %v5642, %v5610
  %v6539 = vpack.c.b16 %v5675, %v5643
  %v6540 = vpack.c.b16 %v5676, %v5644
  %v6541 = vpack.c.b16 %v5677, %v5645
  %v6542 = vpack.c.b16 %v5678, %v5646
  %v6543 = vpack.c.b16 %v5679, %v5647
  %v6544 = vpack.c.b16 %v5680, %v5648
  %v6545 = vpack.c.b16 %v5681, %v5649
  %v6546 = vpack.c.b16 %v5682, %v5650
  %v6547 = vpack.c.b16 %v5683, %v5651
  %v6548 = vpack.c.b16 %v5684, %v5652
  %v6549 = vpack.c.b16 %v5685, %v5653
  %v6550 = vpack.c.b16 %v5686, %v5654
  %v6551 = vpack.c.b16 %v5687, %v5655
  %v6552 = vpack.c.b16 %v5688, %v5656
  %v6553 = vpack.c.b16 %v5689, %v5657
  %v6554 = vpack.c.b16 %v5690, %v5658
  %v6555 = vpack.c.b16 %v5691, %v5659
  %v6556 = vpack.c.b16 %v5692, %v5660
  %v6557 = vpack.c.b16 %v5693, %v5661
  %v6558 = vpack.c.b16 %v5694, %v5662
  %v6559 = vpack.c.b16 %v5695, %v5663
  %v6560 = vpack.c.b16 %v5696, %v5664
  %v6561 = vpack.c.b16 %v5697, %v5665
  %v6562 = vpack.c.b16 %v5698, %v5666
  %v6563 = vpack.c.b16 %v5699, %v5667
  %v6564 = vpack.c.b16 %v5700, %v5668
  %v6565 = vpack.c.b16 %v5701, %v5669
  %v6566 = vpack.c.b16 %v5702, %v5670
  %v6567 = vpack.c.b16 %v5703, %v5671
  %v6568 = vpack.c.b16 %v5704, %v5672
  %v6569 = vpack.c.b16 %v5705, %v5673
  %v6570 = vpack.c.b16 %v5706, %v5674
  %v6571 = vpack.c.b16 %v5739, %v5707
  %v6572 = vpack.c.b16 %v5740, %v5708
  %v6573 = vpack.c.b16 %v5741, %v5709
  %v6574 = vpack.c.b16 %v5742, %v5710
  %v6575 = vpack.c.b16 %v5743, %v5711
  %v6576 = vpack.c.b16 %v5744, %v5712
  %v6577 = vpack.c.b16 %v5745, %v5713
  %v6578 = vpack.c.b16 %v5746, %v5714
  %v6579 = vpack.c.b16 %v5747, %v5715
  %v6580 = vpack.c.b16 %v5748, %v5716
  %v6581 = vpack.c.b16 %v5749, %v5717
  %v6582 = vpack.c.b16 %v5750, %v5718
  %v6583 = vpack.c.b16 %v5751, %v5719
  %v6584 = vpack.c.b16 %v5752, %v5720
  %v6585 = vpack.c.b16 %v5753, %v5721
  %v6586 = vpack.c.b16 %v5754, %v5722
  %v6587 = vpack.c.b16 %v5755, %v5723
  %v6588 = vpack.c.b16 %v5756, %v5724
  %v6589 = vpack.c.b16 %v5757, %v5725
  %v6590 = vpack.c.b16 %v5758, %v5726
  %v6591 = vpack.c.b16 %v5759, %v5727
  %v6592 = vpack.c.b16 %v5760, %v5728
  %v6593 = vpack.c.b16 %v5761, %v5729
  %v6594 = vpack.c.b16 %v5762, %v5730
  %v6595 = vpack.c.b16 %v5763, %v5731
  %v6596 = vpack.c.b16 %v5764, %v5732
  %v6597 = vpack.c.b16 %v5765, %v5733
  %v6598 = vpack.c.b16 %v5766, %v5734
  %v6599 = vpack.c.b16 %v5767, %v5735
  %v6600 = vpack.c.b16 %v5768, %v5736
  %v6601 = vpack.c.b16 %v5769, %v5737
  %v6602 = vpack.c.b16 %v5770, %v5738
  %v6603 = vpack.c.b16 %v5803, %v5771
  %v6604 = vpack.c.b16 %v5804, %v5772
  %v6605 = vpack.c.b16 %v5805, %v5773
  %v6606 = vpack.c.b16 %v5806, %v5774
  %v6607 = vpack.c.b16 %v5807, %v5775
  %v6608 = vpack.c.b16 %v5808, %v5776
  %v6609 = vpack.c.b16 %v5809, %v5777
  %v6610 = vpack.c.b16 %v5810, %v5778
  %v6611 = vpack.c.b16 %v5811, %v5779
  %v6612 = vpack.c.b16 %v5812, %v5780
  %v6613 = vpack.c.b16 %v5813, %v5781
  %v6614 = vpack.c.b16 %v5814, %v5782
  %v6615 = vpack.c.b16 %v5815, %v5783
  %v6616 = vpack.c.b16 %v5816, %v5784
  %v6617 = vpack.c.b16 %v5817, %v5785
  %v6618 = vpack.c.b16 %v5818, %v5786
  %v6619 = vpack.c.b16 %v5819, %v5787
  %v6620 = vpack.c.b16 %v5820, %v5788
  %v6621 = vpack.c.b16 %v5821, %v5789
  %v6622 = vpack.c.b16 %v5822, %v5790
  %v6623 = vpack.c.b16 %v5823, %v5791
  %v6624 = vpack.c.b16 %v5824, %v5792
  %v6625 = vpack.c.b16 %v5825, %v5793
  %v6626 = vpack.c.b16 %v5826, %v5794
  %v6627 = vpack.c.b16 %v5827, %v5795
  %v6628 = vpack.c.b16 %v5828, %v5796
  %v6629 = vpack.c.b16 %v5829, %v5797
  %v6630 = vpack.c.b16 %v5830, %v5798
  %v6631 = vpack.c.b16 %v5831, %v5799
  %v6632 = vpack.c.b16 %v5832, %v5800
  %v6633 = vpack.c.b16 %v5833, %v5801
  %v6634 = vpack.c.b16 %v5834, %v5802
  %v6635 = vpack.c.b16 %v5867, %v5835
  %v6636 = vpack.c.b16 %v5868, %v5836
  %v6637 = vpack.c.b16 %v5869, %v5837
  %v6638 = vpack.c.b16 %v5870, %v5838
  %v6639 = vpack.c.b16 %v5871, %v5839
  %v6640 = vpack.c.b16 %v5872, %v5840
  %v6641 = vpack.c.b16 %v5873, %v5841
  %v6642 = vpack.c.b16 %v5874, %v5842
  %v6643 = vpack.c.b16 %v5875, %v5843
  %v6644 = vpack.c.b16 %v5876, %v5844
  %v6645 = vpack.c.b16 %v5877, %v5845
  %v6646 = vpack.c.b16 %v5878, %v5846
  %v6647 = vpack.c.b16 %v5879, %v5847
  %v6648 = vpack.c.b16 %v5880, %v5848
  %v6649 = vpack.c.b16 %v5881, %v5849
  %v6650 = vpack.c.b16 %v5882, %v5850
  %v6651 = vpack.c.b16 %v5883, %v5851
  %v6652 = vpack.c.b16 %v5884, %v5852
  %v6653 = vpack.c.b16 %v5885, %v5853
  %v6654 = vpack.c.b16 %v5886, %v5854
  %v6655 = vpack.c.b16 %v5887, %v5855
  %v6656 = vpack.c.b16 %v5888, %v5856
  %v6657 = vpack.c.b16 %v5889, %v5857
  %v6658 = vpack.c.b16 %v5890, %v5858
  %v6659 = vpack.c.b16 %v5891, %v5859
  %v6660 = vpack.c.b16 %v5892, %v5860
  %v6661 = vpack.c.b16 %v5893, %v5861
  %v6662 = vpack.c.b16 %v5894, %v5862
  %v6663 = vpack.c.b16 %v5895, %v5863
  %v6664 = vpack.c.b16 %v5896, %v5864
  %v6665 = vpack.c.b16 %v5897, %v5865
  %v6666 = vpack.c.b16 %v5898, %v5866
  %v6667 = vpack.c.b16 %v5931, %v5899
  %v6668 = vpack.c.b16 %v5932, %v5900
  %v6669 = vpack.c.b16 %v5933, %v5901
  %v6670 = vpack.c.b16 %v5934, %v5902
  %v6671 = vpack.c.b16 %v5935, %v5903
  %v6672 = vpack.c.b16 %v5936, %v5904
  %v6673 = vpack.c.b16 %v5937, %v5905
  %v6674 = vpack.c.b16 %v5938, %v5906
  %v6675 = vpack.c.b16 %v5939, %v5907
  %v6676 = vpack.c.b16 %v5940, %v5908
  %v6677 = vpack.c.b16 %v5941, %v5909
  %v6678 = vpack.c.b16 %v5942, %v5910
  %v6679 = vpack.c.b16 %v5943, %v5911
  %v6680 = vpack.c.b16 %v5944, %v5912
  %v6681 = vpack.c.b16 %v5945, %v5913
  %v6682 = vpack.c.b16 %v5946, %v5914
  %v6683 = vpack.c.b16 %v5947, %v5915
  %v6684 = vpack.c.b16 %v5948, %v5916
  %v6685 = vpack.c.b16 %v5949, %v5917
  %v6686 = vpack.c.b16 %v5950, %v5918
  %v6687 = vpack.c.b16 %v5951, %v5919
  %v6688 = vpack.c.b16 %v5952, %v5920
  %v6689 = vpack.c.b16 %v5953, %v5921
  %v6690 = vpack.c.b16 %v5954, %v5922
  %v6691 = vpack.c.b16 %v5955, %v5923
  %v6692 = vpack.c.b16 %v5956, %v5924
  %v6693 = vpack.c.b16 %v5957, %v5925
  %v6694 = vpack.c.b16 %v5958, %v5926
  %v6695 = vpack.c.b16 %v5959, %v5927
  %v6696 = vpack.c.b16 %v5960, %v5928
  %v6697 = vpack.c.b16 %v5961, %v5929
  %v6698 = vpack.c.b16 %v5962, %v5930
  %v6699 = vpack.c.b16 %v5995, %v5963
  %v6700 = vpack.c.b16 %v5996, %v5964
  %v6701 = vpack.c.b16 %v5997, %v5965
  %v6702 = vpack.c.b16 %v5998, %v5966
  %v6703 = vpack.c.b16 %v5999, %v5967
  %v6704 = vpack.c.b16 %v6000, %v5968
  %v6705 = vpack.c.b16 %v6001, %v5969
  %v6706 = vpack.c.b16 %v6002, %v5970
  %v6707 = vpack.c.b16 %v6003, %v5971
  %v6708 = vpack.c.b16 %v6004, %v5972
  %v6709 = vpack.c.b16 %v6005, %v5973
  %v6710 = vpack.c.b16 %v6006, %v5974
  %v6711 = vpack.c.b16 %v6007, %v5975
  %v6712 = vpack.c.b16 %v6008, %v5976
  %v6713 = vpack.c.b16 %v6009, %v5977
  %v6714 = vpack.c.b16 %v6010, %v5978
  %v6715 = vpack.c.b16 %v6011, %v5979
  %v6716 = vpack.c.b16 %v6012, %v5980
  %v6717 = vpack.c.b16 %v6013, %v5981
  %v6718 = vpack.c.b16 %v6014, %v5982
  %v6719 = vpack.c.b16 %v6015, %v5983
  %v6720 = vpack.c.b16 %v6016, %v5984
  %v6721 = vpack.c.b16 %v6017, %v5985
  %v6722 = vpack.c.b16 %v6018, %v5986
  %v6723 = vpack.c.b16 %v6019, %v5987
  %v6724 = vpack.c.b16 %v6020, %v5988
  %v6725 = vpack.c.b16 %v6021, %v5989
  %v6726 = vpack.c.b16 %v6022, %v5990
  %v6727 = vpack.c.b16 %v6023, %v5991
  %v6728 = vpack.c.b16 %v6024, %v5992
  %v6729 = vpack.c.b16 %v6025, %v5993
  %v6730 = vpack.c.b16 %v6026, %v5994
  %v6731 = vpack.c.b16 %v6059, %v6027
  %v6732 = vpack.c.b16 %v6060, %v6028
  %v6733 = vpack.c.b16 %v6061, %v6029
  %v6734 = vpack.c.b16 %v6062, %v6030
  %v6735 = vpack.c.b16 %v6063, %v6031
  %v6736 = vpack.c.b16 %v6064, %v6032
  %v6737 = vpack.c.b16 %v6065, %v6033
  %v6738 = vpack.c.b16 %v6066, %v6034
  %v6739 = vpack.c.b16 %v6067, %v6035
  %v6740 = vpack.c.b16 %v6068, %v6036
  %v6741 = vpack.c.b16 %v6069, %v6037
  %v6742 = vpack.c.b16 %v6070, %v6038
  %v6743 = vpack.c.b16 %v6071, %v6039
  %v6744 = vpack.c.b16 %v6072, %v6040
  %v6745 = vpack.c.b16 %v6073, %v6041
  %v6746 = vpack.c.b16 %v6074, %v6042
  %v6747 = vpack.c.b16 %v6075, %v6043
  %v6748 = vpack.c.b16 %v6076, %v6044
  %v6749 = vpack.c.b16 %v6077, %v6045
  %v6750 = vpack.c.b16 %v6078, %v6046
  %v6751 = vpack.c.b16 %v6079, %v6047
  %v6752 = vpack.c.b16 %v6080, %v6048
  %v6753 = vpack.c.b16 %v6081, %v6049
  %v6754 = vpack.c.b16 %v6082, %v6050
  %v6755 = vpack.c.b16 %v6083, %v6051
  %v6756 = vpack.c.b16 %v6084, %v6052
  %v6757 = vpack.c.b16 %v6085, %v6053
  %v6758 = vpack.c.b16 %v6086, %v6054
  %v6759 = vpack.c.b16 %v6087, %v6055
  %v6760 = vpack.c.b16 %v6088, %v6056
  %v6761 = vpack.c.b16 %v6089, %v6057
  %v6762 = vpack.c.b16 %v6090, %v6058
  %v6763 = vpack.c.b16 %v6123, %v6091
  %v6764 = vpack.c.b16 %v6124, %v6092
  %v6765 = vpack.c.b16 %v6125, %v6093
  %v6766 = vpack.c.b16 %v6126, %v6094
  %v6767 = vpack.c.b16 %v6127, %v6095
  %v6768 = vpack.c.b16 %v6128, %v6096
  %v6769 = vpack.c.b16 %v6129, %v6097
  %v6770 = vpack.c.b16 %v6130, %v6098
  %v6771 = vpack.c.b16 %v6131, %v6099
  %v6772 = vpack.c.b16 %v6132, %v6100
  %v6773 = vpack.c.b16 %v6133, %v6101
  %v6774 = vpack.c.b16 %v6134, %v6102
  %v6775 = vpack.c.b16 %v6135, %v6103
  %v6776 = vpack.c.b16 %v6136, %v6104
  %v6777 = vpack.c.b16 %v6137, %v6105
  %v6778 = vpack.c.b16 %v6138, %v6106
  %v6779 = vpack.c.b16 %v6139, %v6107
  %v6780 = vpack.c.b16 %v6140, %v6108
  %v6781 = vpack.c.b16 %v6141, %v6109
  %v6782 = vpack.c.b16 %v6142, %v6110
  %v6783 = vpack.c.b16 %v6143, %v6111
  %v6784 = vpack.c.b16 %v6144, %v6112
  %v6785 = vpack.c.b16 %v6145, %v6113
  %v6786 = vpack.c.b16 %v6146, %v6114
  %v6787 = vpack.c.b16 %v6147, %v6115
  %v6788 = vpack.c.b16 %v6148, %v6116
  %v6789 = vpack.c.b16 %v6149, %v6117
  %v6790 = vpack.c.b16 %v6150, %v6118
  %v6791 = vpack.c.b16 %v6151, %v6119
  %v6792 = vpack.c.b16 %v6152, %v6120
  %v6793 = vpack.c.b16 %v6153, %v6121
  %v6794 = vpack.c.b16 %v6154, %v6122
  %v6795 = vpack.c.b16 %v6187, %v6155
  %v6796 = vpack.c.b16 %v6188, %v6156
  %v6797 = vpack.c.b16 %v6189, %v6157
  %v6798 = vpack.c.b16 %v6190, %v6158
  %v6799 = vpack.c.b16 %v6191, %v6159
  %v6800 = vpack.c.b16 %v6192, %v6160
  %v6801 = vpack.c.b16 %v6193, %v6161
  %v6802 = vpack.c.b16 %v6194, %v6162
  %v6803 = vpack.c.b16 %v6195, %v6163
  %v6804 = vpack.c.b16 %v6196, %v6164
  %v6805 = vpack.c.b16 %v6197, %v6165
  %v6806 = vpack.c.b16 %v6198, %v6166
  %v6807 = vpack.c.b16 %v6199, %v6167
  %v6808 = vpack.c.b16 %v6200, %v6168
  %v6809 = vpack.c.b16 %v6201, %v6169
  %v6810 = vpack.c.b16 %v6202, %v6170
  %v6811 = vpack.c.b16 %v6203, %v6171
  %v6812 = vpack.c.b16 %v6204, %v6172
  %v6813 = vpack.c.b16 %v6205, %v6173
  %v6814 = vpack.c.b16 %v6206, %v6174
  %v6815 = vpack.c.b16 %v6207, %v6175
  %v6816 = vpack.c.b16 %v6208, %v6176
  %v6817 = vpack.c.b16 %v6209, %v6177
  %v6818 = vpack.c.b16 %v6210, %v6178
  %v6819 = vpack.c.b16 %v6211, %v6179
  %v6820 = vpack.c.b16 %v6212, %v6180
  %v6821 = vpack.c.b16 %v6213, %v6181
  %v6822 = vpack.c.b16 %v6214, %v6182
  %v6823 = vpack.c.b16 %v6215, %v6183
  %v6824 = vpack.c.b16 %v6216, %v6184
  %v6825 = vpack.c.b16 %v6217, %v6185
  %v6826 = vpack.c.b16 %v6218, %v6186
  %v6827 = vpack.c.b16 %v6251, %v6219
  %v6828 = vpack.c.b16 %v6252, %v6220
  %v6829 = vpack.c.b16 %v6253, %v6221
  %v6830 = vpack.c.b16 %v6254, %v6222
  %v6831 = vpack.c.b16 %v6255, %v6223
  %v6832 = vpack.c.b16 %v6256, %v6224
  %v6833 = vpack.c.b16 %v6257, %v6225
  %v6834 = vpack.c.b16 %v6258, %v6226
  %v6835 = vpack.c.b16 %v6259, %v6227
  %v6836 = vpack.c.b16 %v6260, %v6228
  %v6837 = vpack.c.b16 %v6261, %v6229
  %v6838 = vpack.c.b16 %v6262, %v6230
  %v6839 = vpack.c.b16 %v6263, %v6231
  %v6840 = vpack.c.b16 %v6264, %v6232
  %v6841 = vpack.c.b16 %v6265, %v6233
  %v6842 = vpack.c.b16 %v6266, %v6234
  %v6843 = vpack.c.b16 %v6267, %v6235
  %v6844 = vpack.c.b16 %v6268, %v6236
  %v6845 = vpack.c.b16 %v6269, %v6237
  %v6846 = vpack.c.b16 %v6270, %v6238
  %v6847 = vpack.c.b16 %v6271, %v6239
  %v6848 = vpack.c.b16 %v6272, %v6240
  %v6849 = vpack.c.b16 %v6273, %v6241
  %v6850 = vpack.c.b16 %v6274, %v6242
  %v6851 = vpack.c.b16 %v6275, %v6243
  %v6852 = vpack.c.b16 %v6276, %v6244
  %v6853 = vpack.c.b16 %v6277, %v6245
  %v6854 = vpack.c.b16 %v6278, %v6246
  %v6855 = vpack.c.b16 %v6279, %v6247
  %v6856 = vpack.c.b16 %v6280, %v6248
  %v6857 = vpack.c.b16 %v6281, %v6249
  %v6858 = vpack.c.b16 %v6282, %v6250
  %v6859 = vpack.c.b16 %v6315, %v6283
  %v6860 = vpack.c.b16 %v6316, %v6284
  %v6861 = vpack.c.b16 %v6317, %v6285
  %v6862 = vpack.c.b16 %v6318, %v6286
  %v6863 = vpack.c.b16 %v6319, %v6287
  %v6864 = vpack.c.b16 %v6320, %v6288
  %v6865 = vpack.c.b16 %v6321, %v6289
  %v6866 = vpack.c.b16 %v6322, %v6290
  %v6867 = vpack.c.b16 %v6323, %v6291
  %v6868 = vpack.c.b16 %v6324, %v6292
  %v6869 = vpack.c.b16 %v6325, %v6293
  %v6870 = vpack.c.b16 %v6326, %v6294
  %v6871 = vpack.c.b16 %v6327, %v6295
  %v6872 = vpack.c.b16 %v6328, %v6296
  %v6873 = vpack.c.b16 %v6329, %v6297
  %v6874 = vpack.c.b16 %v6330, %v6298
  %v6875 = vpack.c.b16 %v6331, %v6299
  %v6876 = vpack.c.b16 %v6332, %v6300
  %v6877 = vpack.c.b16 %v6333, %v6301
  %v6878 = vpack.c.b16 %v6334, %v6302
  %v6879 = vpack.c.b16 %v6335, %v6303
  %v6880 = vpack.c.b16 %v6336, %v6304
  %v6881 = vpack.c.b16 %v6337, %v6305
  %v6882 = vpack.c.b16 %v6338, %v6306
  %v6883 = vpack.c.b16 %v6339, %v6307
  %v6884 = vpack.c.b16 %v6340, %v6308
  %v6885 = vpack.c.b16 %v6341, %v6309
  %v6886 = vpack.c.b16 %v6342, %v6310
  %v6887 = vpack.c.b16 %v6343, %v6311
  %v6888 = vpack.c.b16 %v6344, %v6312
  %v6889 = vpack.c.b16 %v6345, %v6313
  %v6890 = vpack.c.b16 %v6346, %v6314
  %v6891 = vpack.c.b16 %v6379, %v6347
  %v6892 = vpack.c.b16 %v6380, %v6348
  %v6893 = vpack.c.b16 %v6381, %v6349
  %v6894 = vpack.c.b16 %v6382, %v6350
  %v6895 = vpack.c.b16 %v6383, %v6351
  %v6896 = vpack.c.b16 %v6384, %v6352
  %v6897 = vpack.c.b16 %v6385, %v6353
  %v6898 = vpack.c.b16 %v6386, %v6354
  %v6899 = vpack.c.b16 %v6387, %v6355
  %v6900 = vpack.c.b16 %v6388, %v6356
  %v6901 = vpack.c.b16 %v6389, %v6357
  %v6902 = vpack.c.b16 %v6390, %v6358
  %v6903 = vpack.c.b16 %v6391, %v6359
  %v6904 = vpack.c.b16 %v6392, %v6360
  %v6905 = vpack.c.b16 %v6393, %v6361
  %v6906 = vpack.c.b16 %v6394, %v6362
  %v6907 = vpack.c.b16 %v6395, %v6363
  %v6908 = vpack.c.b16 %v6396, %v6364
  %v6909 = vpack.c.b16 %v6397, %v6365
  %v6910 = vpack.c.b16 %v6398, %v6366
  %v6911 = vpack.c.b16 %v6399, %v6367
  %v6912 = vpack.c.b16 %v6400, %v6368
  %v6913 = vpack.c.b16 %v6401, %v6369
  %v6914 = vpack.c.b16 %v6402, %v6370
  %v6915 = vpack.c.b16 %v6403, %v6371
  %v6916 = vpack.c.b16 %v6404, %v6372
  %v6917 = vpack.c.b16 %v6405, %v6373
  %v6918 = vpack.c.b16 %v6406, %v6374
  %v6919 = vpack.c.b16 %v6407, %v6375
  %v6920 = vpack.c.b16 %v6408, %v6376
  %v6921 = vpack.c.b16 %v6409, %v6377
  %v6922 = vpack.c.b16 %v6410, %v6378
  %7435 = vmatprep.subr.bf16.mxu0 %v6636
  %7436 = vmatpush1.bf16.msra.mxu0 %v6635
  %7437 = vmatprep.subr.bf16.mxu0 %v6604
  %7438 = vmatpush1.bf16.msra.mxu0 %v6603
  %7439 = vmatprep.subr.bf16.mxu0 %v6572
  %7440 = vmatpush1.bf16.msra.mxu0 %v6571
  %7441 = vmatprep.subr.bf16.mxu0 %v6540
  %7442 = vmatpush1.bf16.msra.mxu0 %v6539
  %7443 = vmatprep.subr.bf16.mxu0 %v6508
  %7444 = vmatpush1.bf16.msra.mxu0 %v6507
  %7445 = vmatprep.subr.bf16.mxu0 %v6476
  %7446 = vmatpush1.bf16.msra.mxu0 %v6475
  %7447 = vmatprep.subr.bf16.mxu0 %v6444
  %7448 = vmatpush1.bf16.msra.mxu0 %v6443
  %7449 = vmatprep.subr.bf16.mxu0 %v6412
  %7450 = vmatpush1.bf16.msra.mxu0 %v6411
  %7451 = vmatprep.subr.bf16.mxu0 %v6892
  %7452 = vmatpush2.bf16.msra.mxu0 %v6891
  %7453 = vmatprep.subr.bf16.mxu0 %v6860
  %7454 = vmatpush2.bf16.msra.mxu0 %v6859
  %7455 = vmatprep.subr.bf16.mxu0 %v6828
  %7456 = vmatpush2.bf16.msra.mxu0 %v6827
  %7457 = vmatprep.subr.bf16.mxu0 %v6796
  %7458 = vmatpush2.bf16.msra.mxu0 %v6795
  %7459 = vmatprep.subr.bf16.mxu0 %v6764
  %7460 = vmatpush2.bf16.msra.mxu0 %v6763
  %7461 = vmatprep.subr.bf16.mxu0 %v6732
  %7462 = vmatpush2.bf16.msra.mxu0 %v6731
  %7463 = vmatprep.subr.bf16.mxu0 %v6700
  %7464 = vmatpush2.bf16.msra.mxu0 %v6699
  %7465 = vmatprep.subr.bf16.mxu0 %v6668
  %7466 = vmatpush2.bf16.msra.mxu0 %v6667
  %7467 = vmatprep.mubr.bf16.mxu0 %v4844
  %7468 = vmatmul.mubr.bf16.gmra.mxu0 %v4843
  %v7469 = vpop.f32.mrf.mxu0
  %v7470 = vadd.f32 %v4718, %v7469
  %v7471 = vpop.f32.mrf.mxu0
  %v7472 = vadd.f32 %v4718, %v7471
  %v7473 = vpop.f32.mrf.mxu0
  %v7474 = vadd.f32 %v4723, %v7473
  %v7475 = vpop.f32.mrf.mxu0
  %v7476 = vadd.f32 %v4723, %v7475
  %7477 = vmatprep.mubr.bf16.mxu0 %v4846
  %7478 = vmatmul.mubr.bf16.gmra.mxu0 %v4845
  %v7479 = vpop.f32.mrf.mxu0
  %v7480 = vadd.f32 %v4728, %v7479
  %v7481 = vpop.f32.mrf.mxu0
  %v7482 = vadd.f32 %v4728, %v7481
  %v7483 = vpop.f32.mrf.mxu0
  %v7484 = vadd.f32 %v4733, %v7483
  %v7485 = vpop.f32.mrf.mxu0
  %v7486 = vadd.f32 %v4733, %v7485
  %7487 = vmatprep.mubr.bf16.mxu0 %v4848
  %7488 = vmatmul.mubr.bf16.gmra.mxu0 %v4847
  %v7489 = vpop.f32.mrf.mxu0
  %v7490 = vadd.f32 %v4738, %v7489
  %v7491 = vpop.f32.mrf.mxu0
  %v7492 = vadd.f32 %v4738, %v7491
  %v7493 = vpop.f32.mrf.mxu0
  %v7494 = vadd.f32 %v4743, %v7493
  %v7495 = vpop.f32.mrf.mxu0
  %v7496 = vadd.f32 %v4743, %v7495
  %7497 = vmatprep.mubr.bf16.mxu0 %v4850
  %7498 = vmatmul.mubr.bf16.gmra.mxu0 %v4849
  %v7499 = vpop.f32.mrf.mxu0
  %v7500 = vadd.f32 %v4748, %v7499
  %v7501 = vpop.f32.mrf.mxu0
  %v7502 = vadd.f32 %v4748, %v7501
  %v7503 = vpop.f32.mrf.mxu0
  %v7504 = vadd.f32 %v4753, %v7503
  %v7505 = vpop.f32.mrf.mxu0
  %v7506 = vadd.f32 %v4753, %v7505
  %7507 = vmatprep.mubr.bf16.mxu0 %v4852
  %7508 = vmatmul.mubr.bf16.gmra.mxu0 %v4851
  %v7509 = vpop.f32.mrf.mxu0
  %v7510 = vadd.f32 %v4758, %v7509
  %v7511 = vpop.f32.mrf.mxu0
  %v7512 = vadd.f32 %v4758, %v7511
  %v7513 = vpop.f32.mrf.mxu0
  %v7514 = vadd.f32 %v4763, %v7513
  %v7515 = vpop.f32.mrf.mxu0
  %v7516 = vadd.f32 %v4763, %v7515
  %7517 = vmatprep.mubr.bf16.mxu0 %v4854
  %7518 = vmatmul.mubr.bf16.gmra.mxu0 %v4853
  %v7519 = vpop.f32.mrf.mxu0
  %v7520 = vadd.f32 %v4768, %v7519
  %v7521 = vpop.f32.mrf.mxu0
  %v7522 = vadd.f32 %v4768, %v7521
  %v7523 = vpop.f32.mrf.mxu0
  %v7524 = vadd.f32 %v4773, %v7523
  %v7525 = vpop.f32.mrf.mxu0
  %v7526 = vadd.f32 %v4773, %v7525
  %7527 = vmatprep.mubr.bf16.mxu0 %v4856
  %7528 = vmatmul.mubr.bf16.gmra.mxu0 %v4855
  %v7529 = vpop.f32.mrf.mxu0
  %v7530 = vadd.f32 %v4778, %v7529
  %v7531 = vpop.f32.mrf.mxu0
  %v7532 = vadd.f32 %v4778, %v7531
  %v7533 = vpop.f32.mrf.mxu0
  %v7534 = vadd.f32 %v4783, %v7533
  %v7535 = vpop.f32.mrf.mxu0
  %v7536 = vadd.f32 %v4783, %v7535
  %7537 = vmatprep.mubr.bf16.mxu0 %v4858
  %7538 = vmatmul.mubr.bf16.gmra.mxu0 %v4857
  %v7539 = vpop.f32.mrf.mxu0
  %v7540 = vadd.f32 %v4788, %v7539
  %v7541 = vpop.f32.mrf.mxu0
  %v7542 = vadd.f32 %v4788, %v7541
  %v7543 = vpop.f32.mrf.mxu0
  %v7544 = vadd.f32 %v4793, %v7543
  %v7545 = vpop.f32.mrf.mxu0
  %v7546 = vadd.f32 %v4793, %v7545
  %7547 = vdwg.mxu0
  %7548 = vmatprep.subr.bf16.mxu0 %v6638
  %7549 = vmatpush1.bf16.msra.mxu0 %v6637
  %7550 = vmatprep.subr.bf16.mxu0 %v6606
  %7551 = vmatpush1.bf16.msra.mxu0 %v6605
  %7552 = vmatprep.subr.bf16.mxu0 %v6574
  %7553 = vmatpush1.bf16.msra.mxu0 %v6573
  %7554 = vmatprep.subr.bf16.mxu0 %v6542
  %7555 = vmatpush1.bf16.msra.mxu0 %v6541
  %7556 = vmatprep.subr.bf16.mxu0 %v6510
  %7557 = vmatpush1.bf16.msra.mxu0 %v6509
  %7558 = vmatprep.subr.bf16.mxu0 %v6478
  %7559 = vmatpush1.bf16.msra.mxu0 %v6477
  %7560 = vmatprep.subr.bf16.mxu0 %v6446
  %7561 = vmatpush1.bf16.msra.mxu0 %v6445
  %7562 = vmatprep.subr.bf16.mxu0 %v6414
  %7563 = vmatpush1.bf16.msra.mxu0 %v6413
  %7564 = vmatprep.subr.bf16.mxu0 %v6894
  %7565 = vmatpush2.bf16.msra.mxu0 %v6893
  %7566 = vmatprep.subr.bf16.mxu0 %v6862
  %7567 = vmatpush2.bf16.msra.mxu0 %v6861
  %7568 = vmatprep.subr.bf16.mxu0 %v6830
  %7569 = vmatpush2.bf16.msra.mxu0 %v6829
  %7570 = vmatprep.subr.bf16.mxu0 %v6798
  %7571 = vmatpush2.bf16.msra.mxu0 %v6797
  %7572 = vmatprep.subr.bf16.mxu0 %v6766
  %7573 = vmatpush2.bf16.msra.mxu0 %v6765
  %7574 = vmatprep.subr.bf16.mxu0 %v6734
  %7575 = vmatpush2.bf16.msra.mxu0 %v6733
  %7576 = vmatprep.subr.bf16.mxu0 %v6702
  %7577 = vmatpush2.bf16.msra.mxu0 %v6701
  %7578 = vmatprep.subr.bf16.mxu0 %v6670
  %7579 = vmatpush2.bf16.msra.mxu0 %v6669
  %7580 = vmatprep.mubr.bf16.mxu0 %v4844
  %7581 = vmatmul.mubr.bf16.gmra.mxu0 %v4843
  %v7582 = vpop.f32.mrf.mxu0
  %v7583 = vadd.f32 %v4718, %v7582
  %v7584 = vpop.f32.mrf.mxu0
  %v7585 = vadd.f32 %v4718, %v7584
  %v7586 = vpop.f32.mrf.mxu0
  %v7587 = vadd.f32 %v4723, %v7586
  %v7588 = vpop.f32.mrf.mxu0
  %v7589 = vadd.f32 %v4723, %v7588
  %7590 = vmatprep.mubr.bf16.mxu0 %v4846
  %7591 = vmatmul.mubr.bf16.gmra.mxu0 %v4845
  %v7592 = vpop.f32.mrf.mxu0
  %v7593 = vadd.f32 %v4728, %v7592
  %v7594 = vpop.f32.mrf.mxu0
  %v7595 = vadd.f32 %v4728, %v7594
  %v7596 = vpop.f32.mrf.mxu0
  %v7597 = vadd.f32 %v4733, %v7596
  %v7598 = vpop.f32.mrf.mxu0
  %v7599 = vadd.f32 %v4733, %v7598
  %7600 = vmatprep.mubr.bf16.mxu0 %v4848
  %7601 = vmatmul.mubr.bf16.gmra.mxu0 %v4847
  %v7602 = vpop.f32.mrf.mxu0
  %v7603 = vadd.f32 %v4738, %v7602
  %v7604 = vpop.f32.mrf.mxu0
  %v7605 = vadd.f32 %v4738, %v7604
  %v7606 = vpop.f32.mrf.mxu0
  %v7607 = vadd.f32 %v4743, %v7606
  %v7608 = vpop.f32.mrf.mxu0
  %v7609 = vadd.f32 %v4743, %v7608
  %7610 = vmatprep.mubr.bf16.mxu0 %v4850
  %7611 = vmatmul.mubr.bf16.gmra.mxu0 %v4849
  %v7612 = vpop.f32.mrf.mxu0
  %v7613 = vadd.f32 %v4748, %v7612
  %v7614 = vpop.f32.mrf.mxu0
  %v7615 = vadd.f32 %v4748, %v7614
  %v7616 = vpop.f32.mrf.mxu0
  %v7617 = vadd.f32 %v4753, %v7616
  %v7618 = vpop.f32.mrf.mxu0
  %v7619 = vadd.f32 %v4753, %v7618
  %7620 = vmatprep.mubr.bf16.mxu0 %v4852
  %7621 = vmatmul.mubr.bf16.gmra.mxu0 %v4851
  %v7622 = vpop.f32.mrf.mxu0
  %v7623 = vadd.f32 %v4758, %v7622
  %v7624 = vpop.f32.mrf.mxu0
  %v7625 = vadd.f32 %v4758, %v7624
  %v7626 = vpop.f32.mrf.mxu0
  %v7627 = vadd.f32 %v4763, %v7626
  %v7628 = vpop.f32.mrf.mxu0
  %v7629 = vadd.f32 %v4763, %v7628
  %7630 = vmatprep.mubr.bf16.mxu0 %v4854
  %7631 = vmatmul.mubr.bf16.gmra.mxu0 %v4853
  %v7632 = vpop.f32.mrf.mxu0
  %v7633 = vadd.f32 %v4768, %v7632
  %v7634 = vpop.f32.mrf.mxu0
  %v7635 = vadd.f32 %v4768, %v7634
  %v7636 = vpop.f32.mrf.mxu0
  %v7637 = vadd.f32 %v4773, %v7636
  %v7638 = vpop.f32.mrf.mxu0
  %v7639 = vadd.f32 %v4773, %v7638
  %7640 = vmatprep.mubr.bf16.mxu0 %v4856
  %7641 = vmatmul.mubr.bf16.gmra.mxu0 %v4855
  %v7642 = vpop.f32.mrf.mxu0
  %v7643 = vadd.f32 %v4778, %v7642
  %v7644 = vpop.f32.mrf.mxu0
  %v7645 = vadd.f32 %v4778, %v7644
  %v7646 = vpop.f32.mrf.mxu0
  %v7647 = vadd.f32 %v4783, %v7646
  %v7648 = vpop.f32.mrf.mxu0
  %v7649 = vadd.f32 %v4783, %v7648
  %7650 = vmatprep.mubr.bf16.mxu0 %v4858
  %7651 = vmatmul.mubr.bf16.gmra.mxu0 %v4857
  %v7652 = vpop.f32.mrf.mxu0
  %v7653 = vadd.f32 %v4788, %v7652
  %v7654 = vpop.f32.mrf.mxu0
  %v7655 = vadd.f32 %v4788, %v7654
  %v7656 = vpop.f32.mrf.mxu0
  %v7657 = vadd.f32 %v4793, %v7656
  %v7658 = vpop.f32.mrf.mxu0
  %v7659 = vadd.f32 %v4793, %v7658
  %7660 = vdwg.mxu0
  %7661 = vmatprep.subr.bf16.mxu0 %v6640
  %7662 = vmatpush1.bf16.msra.mxu0 %v6639
  %7663 = vmatprep.subr.bf16.mxu0 %v6608
  %7664 = vmatpush1.bf16.msra.mxu0 %v6607
  %7665 = vmatprep.subr.bf16.mxu0 %v6576
  %7666 = vmatpush1.bf16.msra.mxu0 %v6575
  %7667 = vmatprep.subr.bf16.mxu0 %v6544
  %7668 = vmatpush1.bf16.msra.mxu0 %v6543
  %7669 = vmatprep.subr.bf16.mxu0 %v6512
  %7670 = vmatpush1.bf16.msra.mxu0 %v6511
  %7671 = vmatprep.subr.bf16.mxu0 %v6480
  %7672 = vmatpush1.bf16.msra.mxu0 %v6479
  %7673 = vmatprep.subr.bf16.mxu0 %v6448
  %7674 = vmatpush1.bf16.msra.mxu0 %v6447
  %7675 = vmatprep.subr.bf16.mxu0 %v6416
  %7676 = vmatpush1.bf16.msra.mxu0 %v6415
  %7677 = vmatprep.subr.bf16.mxu0 %v6896
  %7678 = vmatpush2.bf16.msra.mxu0 %v6895
  %7679 = vmatprep.subr.bf16.mxu0 %v6864
  %7680 = vmatpush2.bf16.msra.mxu0 %v6863
  %7681 = vmatprep.subr.bf16.mxu0 %v6832
  %7682 = vmatpush2.bf16.msra.mxu0 %v6831
  %7683 = vmatprep.subr.bf16.mxu0 %v6800
  %7684 = vmatpush2.bf16.msra.mxu0 %v6799
  %7685 = vmatprep.subr.bf16.mxu0 %v6768
  %7686 = vmatpush2.bf16.msra.mxu0 %v6767
  %7687 = vmatprep.subr.bf16.mxu0 %v6736
  %7688 = vmatpush2.bf16.msra.mxu0 %v6735
  %7689 = vmatprep.subr.bf16.mxu0 %v6704
  %7690 = vmatpush2.bf16.msra.mxu0 %v6703
  %7691 = vmatprep.subr.bf16.mxu0 %v6672
  %7692 = vmatpush2.bf16.msra.mxu0 %v6671
  %7693 = vmatprep.mubr.bf16.mxu0 %v4844
  %7694 = vmatmul.mubr.bf16.gmra.mxu0 %v4843
  %v7695 = vpop.f32.mrf.mxu0
  %v7696 = vadd.f32 %v4718, %v7695
  %v7697 = vpop.f32.mrf.mxu0
  %v7698 = vadd.f32 %v4718, %v7697
  %v7699 = vpop.f32.mrf.mxu0
  %v7700 = vadd.f32 %v4723, %v7699
  %v7701 = vpop.f32.mrf.mxu0
  %v7702 = vadd.f32 %v4723, %v7701
  %7703 = vmatprep.mubr.bf16.mxu0 %v4846
  %7704 = vmatmul.mubr.bf16.gmra.mxu0 %v4845
  %v7705 = vpop.f32.mrf.mxu0
  %v7706 = vadd.f32 %v4728, %v7705
  %v7707 = vpop.f32.mrf.mxu0
  %v7708 = vadd.f32 %v4728, %v7707
  %v7709 = vpop.f32.mrf.mxu0
  %v7710 = vadd.f32 %v4733, %v7709
  %v7711 = vpop.f32.mrf.mxu0
  %v7712 = vadd.f32 %v4733, %v7711
  %7713 = vmatprep.mubr.bf16.mxu0 %v4848
  %7714 = vmatmul.mubr.bf16.gmra.mxu0 %v4847
  %v7715 = vpop.f32.mrf.mxu0
  %v7716 = vadd.f32 %v4738, %v7715
  %v7717 = vpop.f32.mrf.mxu0
  %v7718 = vadd.f32 %v4738, %v7717
  %v7719 = vpop.f32.mrf.mxu0
  %v7720 = vadd.f32 %v4743, %v7719
  %v7721 = vpop.f32.mrf.mxu0
  %v7722 = vadd.f32 %v4743, %v7721
  %7723 = vmatprep.mubr.bf16.mxu0 %v4850
  %7724 = vmatmul.mubr.bf16.gmra.mxu0 %v4849
  %v7725 = vpop.f32.mrf.mxu0
  %v7726 = vadd.f32 %v4748, %v7725
  %v7727 = vpop.f32.mrf.mxu0
  %v7728 = vadd.f32 %v4748, %v7727
  %v7729 = vpop.f32.mrf.mxu0
  %v7730 = vadd.f32 %v4753, %v7729
  %v7731 = vpop.f32.mrf.mxu0
  %v7732 = vadd.f32 %v4753, %v7731
  %7733 = vmatprep.mubr.bf16.mxu0 %v4852
  %7734 = vmatmul.mubr.bf16.gmra.mxu0 %v4851
  %v7735 = vpop.f32.mrf.mxu0
  %v7736 = vadd.f32 %v4758, %v7735
  %v7737 = vpop.f32.mrf.mxu0
  %v7738 = vadd.f32 %v4758, %v7737
  %v7739 = vpop.f32.mrf.mxu0
  %v7740 = vadd.f32 %v4763, %v7739
  %v7741 = vpop.f32.mrf.mxu0
  %v7742 = vadd.f32 %v4763, %v7741
  %7743 = vmatprep.mubr.bf16.mxu0 %v4854
  %7744 = vmatmul.mubr.bf16.gmra.mxu0 %v4853
  %v7745 = vpop.f32.mrf.mxu0
  %v7746 = vadd.f32 %v4768, %v7745
  %v7747 = vpop.f32.mrf.mxu0
  %v7748 = vadd.f32 %v4768, %v7747
  %v7749 = vpop.f32.mrf.mxu0
  %v7750 = vadd.f32 %v4773, %v7749
  %v7751 = vpop.f32.mrf.mxu0
  %v7752 = vadd.f32 %v4773, %v7751
  %7753 = vmatprep.mubr.bf16.mxu0 %v4856
  %7754 = vmatmul.mubr.bf16.gmra.mxu0 %v4855
  %v7755 = vpop.f32.mrf.mxu0
  %v7756 = vadd.f32 %v4778, %v7755
  %v7757 = vpop.f32.mrf.mxu0
  %v7758 = vadd.f32 %v4778, %v7757
  %v7759 = vpop.f32.mrf.mxu0
  %v7760 = vadd.f32 %v4783, %v7759
  %v7761 = vpop.f32.mrf.mxu0
  %v7762 = vadd.f32 %v4783, %v7761
  %7763 = vmatprep.mubr.bf16.mxu0 %v4858
  %7764 = vmatmul.mubr.bf16.gmra.mxu0 %v4857
  %v7765 = vpop.f32.mrf.mxu0
  %v7766 = vadd.f32 %v4788, %v7765
  %v7767 = vpop.f32.mrf.mxu0
  %v7768 = vadd.f32 %v4788, %v7767
  %v7769 = vpop.f32.mrf.mxu0
  %v7770 = vadd.f32 %v4793, %v7769
  %v7771 = vpop.f32.mrf.mxu0
  %v7772 = vadd.f32 %v4793, %v7771
  %7773 = vdwg.mxu0
  %7774 = vmatprep.subr.bf16.mxu0 %v6642
  %7775 = vmatpush1.bf16.msra.mxu0 %v6641
  %7776 = vmatprep.subr.bf16.mxu0 %v6610
  %7777 = vmatpush1.bf16.msra.mxu0 %v6609
  %7778 = vmatprep.subr.bf16.mxu0 %v6578
  %7779 = vmatpush1.bf16.msra.mxu0 %v6577
  %7780 = vmatprep.subr.bf16.mxu0 %v6546
  %7781 = vmatpush1.bf16.msra.mxu0 %v6545
  %7782 = vmatprep.subr.bf16.mxu0 %v6514
  %7783 = vmatpush1.bf16.msra.mxu0 %v6513
  %7784 = vmatprep.subr.bf16.mxu0 %v6482
  %7785 = vmatpush1.bf16.msra.mxu0 %v6481
  %7786 = vmatprep.subr.bf16.mxu0 %v6450
  %7787 = vmatpush1.bf16.msra.mxu0 %v6449
  %7788 = vmatprep.subr.bf16.mxu0 %v6418
  %7789 = vmatpush1.bf16.msra.mxu0 %v6417
  %7790 = vmatprep.subr.bf16.mxu0 %v6898
  %7791 = vmatpush2.bf16.msra.mxu0 %v6897
  %7792 = vmatprep.subr.bf16.mxu0 %v6866
  %7793 = vmatpush2.bf16.msra.mxu0 %v6865
  %7794 = vmatprep.subr.bf16.mxu0 %v6834
  %7795 = vmatpush2.bf16.msra.mxu0 %v6833
  %7796 = vmatprep.subr.bf16.mxu0 %v6802
  %7797 = vmatpush2.bf16.msra.mxu0 %v6801
  %7798 = vmatprep.subr.bf16.mxu0 %v6770
  %7799 = vmatpush2.bf16.msra.mxu0 %v6769
  %7800 = vmatprep.subr.bf16.mxu0 %v6738
  %7801 = vmatpush2.bf16.msra.mxu0 %v6737
  %7802 = vmatprep.subr.bf16.mxu0 %v6706
  %7803 = vmatpush2.bf16.msra.mxu0 %v6705
  %7804 = vmatprep.subr.bf16.mxu0 %v6674
  %7805 = vmatpush2.bf16.msra.mxu0 %v6673
  %7806 = vmatprep.mubr.bf16.mxu0 %v4844
  %7807 = vmatmul.mubr.bf16.gmra.mxu0 %v4843
  %v7808 = vpop.f32.mrf.mxu0
  %v7809 = vadd.f32 %v4718, %v7808
  %v7810 = vpop.f32.mrf.mxu0
  %v7811 = vadd.f32 %v4718, %v7810
  %v7812 = vpop.f32.mrf.mxu0
  %v7813 = vadd.f32 %v4723, %v7812
  %v7814 = vpop.f32.mrf.mxu0
  %v7815 = vadd.f32 %v4723, %v7814
  %7816 = vmatprep.mubr.bf16.mxu0 %v4846
  %7817 = vmatmul.mubr.bf16.gmra.mxu0 %v4845
  %v7818 = vpop.f32.mrf.mxu0
  %v7819 = vadd.f32 %v4728, %v7818
  %v7820 = vpop.f32.mrf.mxu0
  %v7821 = vadd.f32 %v4728, %v7820
  %v7822 = vpop.f32.mrf.mxu0
  %v7823 = vadd.f32 %v4733, %v7822
  %v7824 = vpop.f32.mrf.mxu0
  %v7825 = vadd.f32 %v4733, %v7824
  %7826 = vmatprep.mubr.bf16.mxu0 %v4848
  %7827 = vmatmul.mubr.bf16.gmra.mxu0 %v4847
  %v7828 = vpop.f32.mrf.mxu0
  %v7829 = vadd.f32 %v4738, %v7828
  %v7830 = vpop.f32.mrf.mxu0
  %v7831 = vadd.f32 %v4738, %v7830
  %v7832 = vpop.f32.mrf.mxu0
  %v7833 = vadd.f32 %v4743, %v7832
  %v7834 = vpop.f32.mrf.mxu0
  %v7835 = vadd.f32 %v4743, %v7834
  %7836 = vmatprep.mubr.bf16.mxu0 %v4850
  %7837 = vmatmul.mubr.bf16.gmra.mxu0 %v4849
  %v7838 = vpop.f32.mrf.mxu0
  %v7839 = vadd.f32 %v4748, %v7838
  %v7840 = vpop.f32.mrf.mxu0
  %v7841 = vadd.f32 %v4748, %v7840
  %v7842 = vpop.f32.mrf.mxu0
  %v7843 = vadd.f32 %v4753, %v7842
  %v7844 = vpop.f32.mrf.mxu0
  %v7845 = vadd.f32 %v4753, %v7844
  %7846 = vmatprep.mubr.bf16.mxu0 %v4852
  %7847 = vmatmul.mubr.bf16.gmra.mxu0 %v4851
  %v7848 = vpop.f32.mrf.mxu0
  %v7849 = vadd.f32 %v4758, %v7848
  %v7850 = vpop.f32.mrf.mxu0
  %v7851 = vadd.f32 %v4758, %v7850
  %v7852 = vpop.f32.mrf.mxu0
  %v7853 = vadd.f32 %v4763, %v7852
  %v7854 = vpop.f32.mrf.mxu0
  %v7855 = vadd.f32 %v4763, %v7854
  %7856 = vmatprep.mubr.bf16.mxu0 %v4854
  %7857 = vmatmul.mubr.bf16.gmra.mxu0 %v4853
  %v7858 = vpop.f32.mrf.mxu0
  %v7859 = vadd.f32 %v4768, %v7858
  %v7860 = vpop.f32.mrf.mxu0
  %v7861 = vadd.f32 %v4768, %v7860
  %v7862 = vpop.f32.mrf.mxu0
  %v7863 = vadd.f32 %v4773, %v7862
  %v7864 = vpop.f32.mrf.mxu0
  %v7865 = vadd.f32 %v4773, %v7864
  %7866 = vmatprep.mubr.bf16.mxu0 %v4856
  %7867 = vmatmul.mubr.bf16.gmra.mxu0 %v4855
  %v7868 = vpop.f32.mrf.mxu0
  %v7869 = vadd.f32 %v4778, %v7868
  %v7870 = vpop.f32.mrf.mxu0
  %v7871 = vadd.f32 %v4778, %v7870
  %v7872 = vpop.f32.mrf.mxu0
  %v7873 = vadd.f32 %v4783, %v7872
  %v7874 = vpop.f32.mrf.mxu0
  %v7875 = vadd.f32 %v4783, %v7874
  %7876 = vmatprep.mubr.bf16.mxu0 %v4858
  %7877 = vmatmul.mubr.bf16.gmra.mxu0 %v4857
  %v7878 = vpop.f32.mrf.mxu0
  %v7879 = vadd.f32 %v4788, %v7878
  %v7880 = vpop.f32.mrf.mxu0
  %v7881 = vadd.f32 %v4788, %v7880
  %v7882 = vpop.f32.mrf.mxu0
  %v7883 = vadd.f32 %v4793, %v7882
  %v7884 = vpop.f32.mrf.mxu0
  %v7885 = vadd.f32 %v4793, %v7884
  %7886 = vdwg.mxu0
  %7887 = vmatprep.subr.bf16.mxu0 %v6644
  %7888 = vmatpush1.bf16.msra.mxu0 %v6643
  %7889 = vmatprep.subr.bf16.mxu0 %v6612
  %7890 = vmatpush1.bf16.msra.mxu0 %v6611
  %7891 = vmatprep.subr.bf16.mxu0 %v6580
  %7892 = vmatpush1.bf16.msra.mxu0 %v6579
  %7893 = vmatprep.subr.bf16.mxu0 %v6548
  %7894 = vmatpush1.bf16.msra.mxu0 %v6547
  %7895 = vmatprep.subr.bf16.mxu0 %v6516
  %7896 = vmatpush1.bf16.msra.mxu0 %v6515
  %7897 = vmatprep.subr.bf16.mxu0 %v6484
  %7898 = vmatpush1.bf16.msra.mxu0 %v6483
  %7899 = vmatprep.subr.bf16.mxu0 %v6452
  %7900 = vmatpush1.bf16.msra.mxu0 %v6451
  %7901 = vmatprep.subr.bf16.mxu0 %v6420
  %7902 = vmatpush1.bf16.msra.mxu0 %v6419
  %7903 = vmatprep.subr.bf16.mxu0 %v6900
  %7904 = vmatpush2.bf16.msra.mxu0 %v6899
  %7905 = vmatprep.subr.bf16.mxu0 %v6868
  %7906 = vmatpush2.bf16.msra.mxu0 %v6867
  %7907 = vmatprep.subr.bf16.mxu0 %v6836
  %7908 = vmatpush2.bf16.msra.mxu0 %v6835
  %7909 = vmatprep.subr.bf16.mxu0 %v6804
  %7910 = vmatpush2.bf16.msra.mxu0 %v6803
  %7911 = vmatprep.subr.bf16.mxu0 %v6772
  %7912 = vmatpush2.bf16.msra.mxu0 %v6771
  %7913 = vmatprep.subr.bf16.mxu0 %v6740
  %7914 = vmatpush2.bf16.msra.mxu0 %v6739
  %7915 = vmatprep.subr.bf16.mxu0 %v6708
  %7916 = vmatpush2.bf16.msra.mxu0 %v6707
  %7917 = vmatprep.subr.bf16.mxu0 %v6676
  %7918 = vmatpush2.bf16.msra.mxu0 %v6675
  %7919 = vmatprep.mubr.bf16.mxu0 %v4844
  %7920 = vmatmul.mubr.bf16.gmra.mxu0 %v4843
  %v7921 = vpop.f32.mrf.mxu0
  %v7922 = vadd.f32 %v4718, %v7921
  %v7923 = vpop.f32.mrf.mxu0
  %v7924 = vadd.f32 %v4718, %v7923
  %v7925 = vpop.f32.mrf.mxu0
  %v7926 = vadd.f32 %v4723, %v7925
  %v7927 = vpop.f32.mrf.mxu0
  %v7928 = vadd.f32 %v4723, %v7927
  %7929 = vmatprep.mubr.bf16.mxu0 %v4846
  %7930 = vmatmul.mubr.bf16.gmra.mxu0 %v4845
  %v7931 = vpop.f32.mrf.mxu0
  %v7932 = vadd.f32 %v4728, %v7931
  %v7933 = vpop.f32.mrf.mxu0
  %v7934 = vadd.f32 %v4728, %v7933
  %v7935 = vpop.f32.mrf.mxu0
  %v7936 = vadd.f32 %v4733, %v7935
  %v7937 = vpop.f32.mrf.mxu0
  %v7938 = vadd.f32 %v4733, %v7937
  %7939 = vmatprep.mubr.bf16.mxu0 %v4848
  %7940 = vmatmul.mubr.bf16.gmra.mxu0 %v4847
  %v7941 = vpop.f32.mrf.mxu0
  %v7942 = vadd.f32 %v4738, %v7941
  %v7943 = vpop.f32.mrf.mxu0
  %v7944 = vadd.f32 %v4738, %v7943
  %v7945 = vpop.f32.mrf.mxu0
  %v7946 = vadd.f32 %v4743, %v7945
  %v7947 = vpop.f32.mrf.mxu0
  %v7948 = vadd.f32 %v4743, %v7947
  %7949 = vmatprep.mubr.bf16.mxu0 %v4850
  %7950 = vmatmul.mubr.bf16.gmra.mxu0 %v4849
  %v7951 = vpop.f32.mrf.mxu0
  %v7952 = vadd.f32 %v4748, %v7951
  %v7953 = vpop.f32.mrf.mxu0
  %v7954 = vadd.f32 %v4748, %v7953
  %v7955 = vpop.f32.mrf.mxu0
  %v7956 = vadd.f32 %v4753, %v7955
  %v7957 = vpop.f32.mrf.mxu0
  %v7958 = vadd.f32 %v4753, %v7957
  %7959 = vmatprep.mubr.bf16.mxu0 %v4852
  %7960 = vmatmul.mubr.bf16.gmra.mxu0 %v4851
  %v7961 = vpop.f32.mrf.mxu0
  %v7962 = vadd.f32 %v4758, %v7961
  %v7963 = vpop.f32.mrf.mxu0
  %v7964 = vadd.f32 %v4758, %v7963
  %v7965 = vpop.f32.mrf.mxu0
  %v7966 = vadd.f32 %v4763, %v7965
  %v7967 = vpop.f32.mrf.mxu0
  %v7968 = vadd.f32 %v4763, %v7967
  %7969 = vmatprep.mubr.bf16.mxu0 %v4854
  %7970 = vmatmul.mubr.bf16.gmra.mxu0 %v4853
  %v7971 = vpop.f32.mrf.mxu0
  %v7972 = vadd.f32 %v4768, %v7971
  %v7973 = vpop.f32.mrf.mxu0
  %v7974 = vadd.f32 %v4768, %v7973
  %v7975 = vpop.f32.mrf.mxu0
  %v7976 = vadd.f32 %v4773, %v7975
  %v7977 = vpop.f32.mrf.mxu0
  %v7978 = vadd.f32 %v4773, %v7977
  %7979 = vmatprep.mubr.bf16.mxu0 %v4856
  %7980 = vmatmul.mubr.bf16.gmra.mxu0 %v4855
  %v7981 = vpop.f32.mrf.mxu0
  %v7982 = vadd.f32 %v4778, %v7981
  %v7983 = vpop.f32.mrf.mxu0
  %v7984 = vadd.f32 %v4778, %v7983
  %v7985 = vpop.f32.mrf.mxu0
  %v7986 = vadd.f32 %v4783, %v7985
  %v7987 = vpop.f32.mrf.mxu0
  %v7988 = vadd.f32 %v4783, %v7987
  %7989 = vmatprep.mubr.bf16.mxu0 %v4858
  %7990 = vmatmul.mubr.bf16.gmra.mxu0 %v4857
  %v7991 = vpop.f32.mrf.mxu0
  %v7992 = vadd.f32 %v4788, %v7991
  %v7993 = vpop.f32.mrf.mxu0
  %v7994 = vadd.f32 %v4788, %v7993
  %v7995 = vpop.f32.mrf.mxu0
  %v7996 = vadd.f32 %v4793, %v7995
  %v7997 = vpop.f32.mrf.mxu0
  %v7998 = vadd.f32 %v4793, %v7997
  %7999 = vdwg.mxu0
  %8000 = vmatprep.subr.bf16.mxu0 %v6646
  %8001 = vmatpush1.bf16.msra.mxu0 %v6645
  %8002 = vmatprep.subr.bf16.mxu0 %v6614
  %8003 = vmatpush1.bf16.msra.mxu0 %v6613
  %8004 = vmatprep.subr.bf16.mxu0 %v6582
  %8005 = vmatpush1.bf16.msra.mxu0 %v6581
  %8006 = vmatprep.subr.bf16.mxu0 %v6550
  %8007 = vmatpush1.bf16.msra.mxu0 %v6549
  %8008 = vmatprep.subr.bf16.mxu0 %v6518
  %8009 = vmatpush1.bf16.msra.mxu0 %v6517
  %8010 = vmatprep.subr.bf16.mxu0 %v6486
  %8011 = vmatpush1.bf16.msra.mxu0 %v6485
  %8012 = vmatprep.subr.bf16.mxu0 %v6454
  %8013 = vmatpush1.bf16.msra.mxu0 %v6453
  %8014 = vmatprep.subr.bf16.mxu0 %v6422
  %8015 = vmatpush1.bf16.msra.mxu0 %v6421
  %8016 = vmatprep.subr.bf16.mxu0 %v6902
  %8017 = vmatpush2.bf16.msra.mxu0 %v6901
  %8018 = vmatprep.subr.bf16.mxu0 %v6870
  %8019 = vmatpush2.bf16.msra.mxu0 %v6869
  %8020 = vmatprep.subr.bf16.mxu0 %v6838
  %8021 = vmatpush2.bf16.msra.mxu0 %v6837
  %8022 = vmatprep.subr.bf16.mxu0 %v6806
  %8023 = vmatpush2.bf16.msra.mxu0 %v6805
  %8024 = vmatprep.subr.bf16.mxu0 %v6774
  %8025 = vmatpush2.bf16.msra.mxu0 %v6773
  %8026 = vmatprep.subr.bf16.mxu0 %v6742
  %8027 = vmatpush2.bf16.msra.mxu0 %v6741
  %8028 = vmatprep.subr.bf16.mxu0 %v6710
  %8029 = vmatpush2.bf16.msra.mxu0 %v6709
  %8030 = vmatprep.subr.bf16.mxu0 %v6678
  %8031 = vmatpush2.bf16.msra.mxu0 %v6677
  %8032 = vmatprep.mubr.bf16.mxu0 %v4844
  %8033 = vmatmul.mubr.bf16.gmra.mxu0 %v4843
  %v8034 = vpop.f32.mrf.mxu0
  %v8035 = vadd.f32 %v4718, %v8034
  %v8036 = vpop.f32.mrf.mxu0
  %v8037 = vadd.f32 %v4718, %v8036
  %v8038 = vpop.f32.mrf.mxu0
  %v8039 = vadd.f32 %v4723, %v8038
  %v8040 = vpop.f32.mrf.mxu0
  %v8041 = vadd.f32 %v4723, %v8040
  %8042 = vmatprep.mubr.bf16.mxu0 %v4846
  %8043 = vmatmul.mubr.bf16.gmra.mxu0 %v4845
  %v8044 = vpop.f32.mrf.mxu0
  %v8045 = vadd.f32 %v4728, %v8044
  %v8046 = vpop.f32.mrf.mxu0
  %v8047 = vadd.f32 %v4728, %v8046
  %v8048 = vpop.f32.mrf.mxu0
  %v8049 = vadd.f32 %v4733, %v8048
  %v8050 = vpop.f32.mrf.mxu0
  %v8051 = vadd.f32 %v4733, %v8050
  %8052 = vmatprep.mubr.bf16.mxu0 %v4848
  %8053 = vmatmul.mubr.bf16.gmra.mxu0 %v4847
  %v8054 = vpop.f32.mrf.mxu0
  %v8055 = vadd.f32 %v4738, %v8054
  %v8056 = vpop.f32.mrf.mxu0
  %v8057 = vadd.f32 %v4738, %v8056
  %v8058 = vpop.f32.mrf.mxu0
  %v8059 = vadd.f32 %v4743, %v8058
  %v8060 = vpop.f32.mrf.mxu0
  %v8061 = vadd.f32 %v4743, %v8060
  %8062 = vmatprep.mubr.bf16.mxu0 %v4850
  %8063 = vmatmul.mubr.bf16.gmra.mxu0 %v4849
  %v8064 = vpop.f32.mrf.mxu0
  %v8065 = vadd.f32 %v4748, %v8064
  %v8066 = vpop.f32.mrf.mxu0
  %v8067 = vadd.f32 %v4748, %v8066
  %v8068 = vpop.f32.mrf.mxu0
  %v8069 = vadd.f32 %v4753, %v8068
  %v8070 = vpop.f32.mrf.mxu0
  %v8071 = vadd.f32 %v4753, %v8070
  %8072 = vmatprep.mubr.bf16.mxu0 %v4852
  %8073 = vmatmul.mubr.bf16.gmra.mxu0 %v4851
  %v8074 = vpop.f32.mrf.mxu0
  %v8075 = vadd.f32 %v4758, %v8074
  %v8076 = vpop.f32.mrf.mxu0
  %v8077 = vadd.f32 %v4758, %v8076
  %v8078 = vpop.f32.mrf.mxu0
  %v8079 = vadd.f32 %v4763, %v8078
  %v8080 = vpop.f32.mrf.mxu0
  %v8081 = vadd.f32 %v4763, %v8080
  %8082 = vmatprep.mubr.bf16.mxu0 %v4854
  %8083 = vmatmul.mubr.bf16.gmra.mxu0 %v4853
  %v8084 = vpop.f32.mrf.mxu0
  %v8085 = vadd.f32 %v4768, %v8084
  %v8086 = vpop.f32.mrf.mxu0
  %v8087 = vadd.f32 %v4768, %v8086
  %v8088 = vpop.f32.mrf.mxu0
  %v8089 = vadd.f32 %v4773, %v8088
  %v8090 = vpop.f32.mrf.mxu0
  %v8091 = vadd.f32 %v4773, %v8090
  %8092 = vmatprep.mubr.bf16.mxu0 %v4856
  %8093 = vmatmul.mubr.bf16.gmra.mxu0 %v4855
  %v8094 = vpop.f32.mrf.mxu0
  %v8095 = vadd.f32 %v4778, %v8094
  %v8096 = vpop.f32.mrf.mxu0
  %v8097 = vadd.f32 %v4778, %v8096
  %v8098 = vpop.f32.mrf.mxu0
  %v8099 = vadd.f32 %v4783, %v8098
  %v8100 = vpop.f32.mrf.mxu0
  %v8101 = vadd.f32 %v4783, %v8100
  %8102 = vmatprep.mubr.bf16.mxu0 %v4858
  %8103 = vmatmul.mubr.bf16.gmra.mxu0 %v4857
  %v8104 = vpop.f32.mrf.mxu0
  %v8105 = vadd.f32 %v4788, %v8104
  %v8106 = vpop.f32.mrf.mxu0
  %v8107 = vadd.f32 %v4788, %v8106
  %v8108 = vpop.f32.mrf.mxu0
  %v8109 = vadd.f32 %v4793, %v8108
  %v8110 = vpop.f32.mrf.mxu0
  %v8111 = vadd.f32 %v4793, %v8110
  %8112 = vdwg.mxu0
  %8113 = vmatprep.subr.bf16.mxu0 %v6648
  %8114 = vmatpush1.bf16.msra.mxu0 %v6647
  %8115 = vmatprep.subr.bf16.mxu0 %v6616
  %8116 = vmatpush1.bf16.msra.mxu0 %v6615
  %8117 = vmatprep.subr.bf16.mxu0 %v6584
  %8118 = vmatpush1.bf16.msra.mxu0 %v6583
  %8119 = vmatprep.subr.bf16.mxu0 %v6552
  %8120 = vmatpush1.bf16.msra.mxu0 %v6551
  %8121 = vmatprep.subr.bf16.mxu0 %v6520
  %8122 = vmatpush1.bf16.msra.mxu0 %v6519
  %8123 = vmatprep.subr.bf16.mxu0 %v6488
  %8124 = vmatpush1.bf16.msra.mxu0 %v6487
  %8125 = vmatprep.subr.bf16.mxu0 %v6456
  %8126 = vmatpush1.bf16.msra.mxu0 %v6455
  %8127 = vmatprep.subr.bf16.mxu0 %v6424
  %8128 = vmatpush1.bf16.msra.mxu0 %v6423
  %8129 = vmatprep.subr.bf16.mxu0 %v6904
  %8130 = vmatpush2.bf16.msra.mxu0 %v6903
  %8131 = vmatprep.subr.bf16.mxu0 %v6872
  %8132 = vmatpush2.bf16.msra.mxu0 %v6871
  %8133 = vmatprep.subr.bf16.mxu0 %v6840
  %8134 = vmatpush2.bf16.msra.mxu0 %v6839
  %8135 = vmatprep.subr.bf16.mxu0 %v6808
  %8136 = vmatpush2.bf16.msra.mxu0 %v6807
  %8137 = vmatprep.subr.bf16.mxu0 %v6776
  %8138 = vmatpush2.bf16.msra.mxu0 %v6775
  %8139 = vmatprep.subr.bf16.mxu0 %v6744
  %8140 = vmatpush2.bf16.msra.mxu0 %v6743
  %8141 = vmatprep.subr.bf16.mxu0 %v6712
  %8142 = vmatpush2.bf16.msra.mxu0 %v6711
  %8143 = vmatprep.subr.bf16.mxu0 %v6680
  %8144 = vmatpush2.bf16.msra.mxu0 %v6679
  %8145 = vmatprep.mubr.bf16.mxu0 %v4844
  %8146 = vmatmul.mubr.bf16.gmra.mxu0 %v4843
  %v8147 = vpop.f32.mrf.mxu0
  %v8148 = vadd.f32 %v4718, %v8147
  %v8149 = vpop.f32.mrf.mxu0
  %v8150 = vadd.f32 %v4718, %v8149
  %v8151 = vpop.f32.mrf.mxu0
  %v8152 = vadd.f32 %v4723, %v8151
  %v8153 = vpop.f32.mrf.mxu0
  %v8154 = vadd.f32 %v4723, %v8153
  %8155 = vmatprep.mubr.bf16.mxu0 %v4846
  %8156 = vmatmul.mubr.bf16.gmra.mxu0 %v4845
  %v8157 = vpop.f32.mrf.mxu0
  %v8158 = vadd.f32 %v4728, %v8157
  %v8159 = vpop.f32.mrf.mxu0
  %v8160 = vadd.f32 %v4728, %v8159
  %v8161 = vpop.f32.mrf.mxu0
  %v8162 = vadd.f32 %v4733, %v8161
  %v8163 = vpop.f32.mrf.mxu0
  %v8164 = vadd.f32 %v4733, %v8163
  %8165 = vmatprep.mubr.bf16.mxu0 %v4848
  %8166 = vmatmul.mubr.bf16.gmra.mxu0 %v4847
  %v8167 = vpop.f32.mrf.mxu0
  %v8168 = vadd.f32 %v4738, %v8167
  %v8169 = vpop.f32.mrf.mxu0
  %v8170 = vadd.f32 %v4738, %v8169
  %v8171 = vpop.f32.mrf.mxu0
  %v8172 = vadd.f32 %v4743, %v8171
  %v8173 = vpop.f32.mrf.mxu0
  %v8174 = vadd.f32 %v4743, %v8173
  %8175 = vmatprep.mubr.bf16.mxu0 %v4850
  %8176 = vmatmul.mubr.bf16.gmra.mxu0 %v4849
  %v8177 = vpop.f32.mrf.mxu0
  %v8178 = vadd.f32 %v4748, %v8177
  %v8179 = vpop.f32.mrf.mxu0
  %v8180 = vadd.f32 %v4748, %v8179
  %v8181 = vpop.f32.mrf.mxu0
  %v8182 = vadd.f32 %v4753, %v8181
  %v8183 = vpop.f32.mrf.mxu0
  %v8184 = vadd.f32 %v4753, %v8183
  %8185 = vmatprep.mubr.bf16.mxu0 %v4852
  %8186 = vmatmul.mubr.bf16.gmra.mxu0 %v4851
  %v8187 = vpop.f32.mrf.mxu0
  %v8188 = vadd.f32 %v4758, %v8187
  %v8189 = vpop.f32.mrf.mxu0
  %v8190 = vadd.f32 %v4758, %v8189
  %v8191 = vpop.f32.mrf.mxu0
  %v8192 = vadd.f32 %v4763, %v8191
  %v8193 = vpop.f32.mrf.mxu0
  %v8194 = vadd.f32 %v4763, %v8193
  %8195 = vmatprep.mubr.bf16.mxu0 %v4854
  %8196 = vmatmul.mubr.bf16.gmra.mxu0 %v4853
  %v8197 = vpop.f32.mrf.mxu0
  %v8198 = vadd.f32 %v4768, %v8197
  %v8199 = vpop.f32.mrf.mxu0
  %v8200 = vadd.f32 %v4768, %v8199
  %v8201 = vpop.f32.mrf.mxu0
  %v8202 = vadd.f32 %v4773, %v8201
  %v8203 = vpop.f32.mrf.mxu0
  %v8204 = vadd.f32 %v4773, %v8203
  %8205 = vmatprep.mubr.bf16.mxu0 %v4856
  %8206 = vmatmul.mubr.bf16.gmra.mxu0 %v4855
  %v8207 = vpop.f32.mrf.mxu0
  %v8208 = vadd.f32 %v4778, %v8207
  %v8209 = vpop.f32.mrf.mxu0
  %v8210 = vadd.f32 %v4778, %v8209
  %v8211 = vpop.f32.mrf.mxu0
  %v8212 = vadd.f32 %v4783, %v8211
  %v8213 = vpop.f32.mrf.mxu0
  %v8214 = vadd.f32 %v4783, %v8213
  %8215 = vmatprep.mubr.bf16.mxu0 %v4858
  %8216 = vmatmul.mubr.bf16.gmra.mxu0 %v4857
  %v8217 = vpop.f32.mrf.mxu0
  %v8218 = vadd.f32 %v4788, %v8217
  %v8219 = vpop.f32.mrf.mxu0
  %v8220 = vadd.f32 %v4788, %v8219
  %v8221 = vpop.f32.mrf.mxu0
  %v8222 = vadd.f32 %v4793, %v8221
  %v8223 = vpop.f32.mrf.mxu0
  %v8224 = vadd.f32 %v4793, %v8223
  %8225 = vdwg.mxu0
  %8226 = vmatprep.subr.bf16.mxu0 %v6650
  %8227 = vmatpush1.bf16.msra.mxu0 %v6649
  %8228 = vmatprep.subr.bf16.mxu0 %v6618
  %8229 = vmatpush1.bf16.msra.mxu0 %v6617
  %8230 = vmatprep.subr.bf16.mxu0 %v6586
  %8231 = vmatpush1.bf16.msra.mxu0 %v6585
  %8232 = vmatprep.subr.bf16.mxu0 %v6554
  %8233 = vmatpush1.bf16.msra.mxu0 %v6553
  %8234 = vmatprep.subr.bf16.mxu0 %v6522
  %8235 = vmatpush1.bf16.msra.mxu0 %v6521
  %8236 = vmatprep.subr.bf16.mxu0 %v6490
  %8237 = vmatpush1.bf16.msra.mxu0 %v6489
  %8238 = vmatprep.subr.bf16.mxu0 %v6458
  %8239 = vmatpush1.bf16.msra.mxu0 %v6457
  %8240 = vmatprep.subr.bf16.mxu0 %v6426
  %8241 = vmatpush1.bf16.msra.mxu0 %v6425
  %8242 = vmatprep.subr.bf16.mxu0 %v6906
  %8243 = vmatpush2.bf16.msra.mxu0 %v6905
  %8244 = vmatprep.subr.bf16.mxu0 %v6874
  %8245 = vmatpush2.bf16.msra.mxu0 %v6873
  %8246 = vmatprep.subr.bf16.mxu0 %v6842
  %8247 = vmatpush2.bf16.msra.mxu0 %v6841
  %8248 = vmatprep.subr.bf16.mxu0 %v6810
  %8249 = vmatpush2.bf16.msra.mxu0 %v6809
  %8250 = vmatprep.subr.bf16.mxu0 %v6778
  %8251 = vmatpush2.bf16.msra.mxu0 %v6777
  %8252 = vmatprep.subr.bf16.mxu0 %v6746
  %8253 = vmatpush2.bf16.msra.mxu0 %v6745
  %8254 = vmatprep.subr.bf16.mxu0 %v6714
  %8255 = vmatpush2.bf16.msra.mxu0 %v6713
  %8256 = vmatprep.subr.bf16.mxu0 %v6682
  %8257 = vmatpush2.bf16.msra.mxu0 %v6681
  %8258 = vmatprep.mubr.bf16.mxu0 %v4844
  %8259 = vmatmul.mubr.bf16.gmra.mxu0 %v4843
  %v8260 = vpop.f32.mrf.mxu0
  %v8261 = vadd.f32 %v4718, %v8260
  %v8262 = vpop.f32.mrf.mxu0
  %v8263 = vadd.f32 %v4718, %v8262
  %v8264 = vpop.f32.mrf.mxu0
  %v8265 = vadd.f32 %v4723, %v8264
  %v8266 = vpop.f32.mrf.mxu0
  %v8267 = vadd.f32 %v4723, %v8266
  %8268 = vmatprep.mubr.bf16.mxu0 %v4846
  %8269 = vmatmul.mubr.bf16.gmra.mxu0 %v4845
  %v8270 = vpop.f32.mrf.mxu0
  %v8271 = vadd.f32 %v4728, %v8270
  %v8272 = vpop.f32.mrf.mxu0
  %v8273 = vadd.f32 %v4728, %v8272
  %v8274 = vpop.f32.mrf.mxu0
  %v8275 = vadd.f32 %v4733, %v8274
  %v8276 = vpop.f32.mrf.mxu0
  %v8277 = vadd.f32 %v4733, %v8276
  %8278 = vmatprep.mubr.bf16.mxu0 %v4848
  %8279 = vmatmul.mubr.bf16.gmra.mxu0 %v4847
  %v8280 = vpop.f32.mrf.mxu0
  %v8281 = vadd.f32 %v4738, %v8280
  %v8282 = vpop.f32.mrf.mxu0
  %v8283 = vadd.f32 %v4738, %v8282
  %v8284 = vpop.f32.mrf.mxu0
  %v8285 = vadd.f32 %v4743, %v8284
  %v8286 = vpop.f32.mrf.mxu0
  %v8287 = vadd.f32 %v4743, %v8286
  %8288 = vmatprep.mubr.bf16.mxu0 %v4850
  %8289 = vmatmul.mubr.bf16.gmra.mxu0 %v4849
  %v8290 = vpop.f32.mrf.mxu0
  %v8291 = vadd.f32 %v4748, %v8290
  %v8292 = vpop.f32.mrf.mxu0
  %v8293 = vadd.f32 %v4748, %v8292
  %v8294 = vpop.f32.mrf.mxu0
  %v8295 = vadd.f32 %v4753, %v8294
  %v8296 = vpop.f32.mrf.mxu0
  %v8297 = vadd.f32 %v4753, %v8296
  %8298 = vmatprep.mubr.bf16.mxu0 %v4852
  %8299 = vmatmul.mubr.bf16.gmra.mxu0 %v4851
  %v8300 = vpop.f32.mrf.mxu0
  %v8301 = vadd.f32 %v4758, %v8300
  %v8302 = vpop.f32.mrf.mxu0
  %v8303 = vadd.f32 %v4758, %v8302
  %v8304 = vpop.f32.mrf.mxu0
  %v8305 = vadd.f32 %v4763, %v8304
  %v8306 = vpop.f32.mrf.mxu0
  %v8307 = vadd.f32 %v4763, %v8306
  %8308 = vmatprep.mubr.bf16.mxu0 %v4854
  %8309 = vmatmul.mubr.bf16.gmra.mxu0 %v4853
  %v8310 = vpop.f32.mrf.mxu0
  %v8311 = vadd.f32 %v4768, %v8310
  %v8312 = vpop.f32.mrf.mxu0
  %v8313 = vadd.f32 %v4768, %v8312
  %v8314 = vpop.f32.mrf.mxu0
  %v8315 = vadd.f32 %v4773, %v8314
  %v8316 = vpop.f32.mrf.mxu0
  %v8317 = vadd.f32 %v4773, %v8316
  %8318 = vmatprep.mubr.bf16.mxu0 %v4856
  %8319 = vmatmul.mubr.bf16.gmra.mxu0 %v4855
  %v8320 = vpop.f32.mrf.mxu0
  %v8321 = vadd.f32 %v4778, %v8320
  %v8322 = vpop.f32.mrf.mxu0
  %v8323 = vadd.f32 %v4778, %v8322
  %v8324 = vpop.f32.mrf.mxu0
  %v8325 = vadd.f32 %v4783, %v8324
  %v8326 = vpop.f32.mrf.mxu0
  %v8327 = vadd.f32 %v4783, %v8326
  %8328 = vmatprep.mubr.bf16.mxu0 %v4858
  %8329 = vmatmul.mubr.bf16.gmra.mxu0 %v4857
  %v8330 = vpop.f32.mrf.mxu0
  %v8331 = vadd.f32 %v4788, %v8330
  %v8332 = vpop.f32.mrf.mxu0
  %v8333 = vadd.f32 %v4788, %v8332
  %v8334 = vpop.f32.mrf.mxu0
  %v8335 = vadd.f32 %v4793, %v8334
  %v8336 = vpop.f32.mrf.mxu0
  %v8337 = vadd.f32 %v4793, %v8336
  %8338 = vdwg.mxu0
  %8339 = vmatprep.subr.bf16.mxu0 %v6652
  %8340 = vmatpush1.bf16.msra.mxu0 %v6651
  %8341 = vmatprep.subr.bf16.mxu0 %v6620
  %8342 = vmatpush1.bf16.msra.mxu0 %v6619
  %8343 = vmatprep.subr.bf16.mxu0 %v6588
  %8344 = vmatpush1.bf16.msra.mxu0 %v6587
  %8345 = vmatprep.subr.bf16.mxu0 %v6556
  %8346 = vmatpush1.bf16.msra.mxu0 %v6555
  %8347 = vmatprep.subr.bf16.mxu0 %v6524
  %8348 = vmatpush1.bf16.msra.mxu0 %v6523
  %8349 = vmatprep.subr.bf16.mxu0 %v6492
  %8350 = vmatpush1.bf16.msra.mxu0 %v6491
  %8351 = vmatprep.subr.bf16.mxu0 %v6460
  %8352 = vmatpush1.bf16.msra.mxu0 %v6459
  %8353 = vmatprep.subr.bf16.mxu0 %v6428
  %8354 = vmatpush1.bf16.msra.mxu0 %v6427
  %8355 = vmatprep.subr.bf16.mxu0 %v6908
  %8356 = vmatpush2.bf16.msra.mxu0 %v6907
  %8357 = vmatprep.subr.bf16.mxu0 %v6876
  %8358 = vmatpush2.bf16.msra.mxu0 %v6875
  %8359 = vmatprep.subr.bf16.mxu0 %v6844
  %8360 = vmatpush2.bf16.msra.mxu0 %v6843
  %8361 = vmatprep.subr.bf16.mxu0 %v6812
  %8362 = vmatpush2.bf16.msra.mxu0 %v6811
  %8363 = vmatprep.subr.bf16.mxu0 %v6780
  %8364 = vmatpush2.bf16.msra.mxu0 %v6779
  %8365 = vmatprep.subr.bf16.mxu0 %v6748
  %8366 = vmatpush2.bf16.msra.mxu0 %v6747
  %8367 = vmatprep.subr.bf16.mxu0 %v6716
  %8368 = vmatpush2.bf16.msra.mxu0 %v6715
  %8369 = vmatprep.subr.bf16.mxu0 %v6684
  %8370 = vmatpush2.bf16.msra.mxu0 %v6683
  %8371 = vmatprep.mubr.bf16.mxu0 %v4844
  %8372 = vmatmul.mubr.bf16.gmra.mxu0 %v4843
  %v8373 = vpop.f32.mrf.mxu0
  %v8374 = vadd.f32 %v4718, %v8373
  %v8375 = vpop.f32.mrf.mxu0
  %v8376 = vadd.f32 %v4718, %v8375
  %v8377 = vpop.f32.mrf.mxu0
  %v8378 = vadd.f32 %v4723, %v8377
  %v8379 = vpop.f32.mrf.mxu0
  %v8380 = vadd.f32 %v4723, %v8379
  %8381 = vmatprep.mubr.bf16.mxu0 %v4846
  %8382 = vmatmul.mubr.bf16.gmra.mxu0 %v4845
  %v8383 = vpop.f32.mrf.mxu0
  %v8384 = vadd.f32 %v4728, %v8383
  %v8385 = vpop.f32.mrf.mxu0
  %v8386 = vadd.f32 %v4728, %v8385
  %v8387 = vpop.f32.mrf.mxu0
  %v8388 = vadd.f32 %v4733, %v8387
  %v8389 = vpop.f32.mrf.mxu0
  %v8390 = vadd.f32 %v4733, %v8389
  %8391 = vmatprep.mubr.bf16.mxu0 %v4848
  %8392 = vmatmul.mubr.bf16.gmra.mxu0 %v4847
  %v8393 = vpop.f32.mrf.mxu0
  %v8394 = vadd.f32 %v4738, %v8393
  %v8395 = vpop.f32.mrf.mxu0
  %v8396 = vadd.f32 %v4738, %v8395
  %v8397 = vpop.f32.mrf.mxu0
  %v8398 = vadd.f32 %v4743, %v8397
  %v8399 = vpop.f32.mrf.mxu0
  %v8400 = vadd.f32 %v4743, %v8399
  %8401 = vmatprep.mubr.bf16.mxu0 %v4850
  %8402 = vmatmul.mubr.bf16.gmra.mxu0 %v4849
  %v8403 = vpop.f32.mrf.mxu0
  %v8404 = vadd.f32 %v4748, %v8403
  %v8405 = vpop.f32.mrf.mxu0
  %v8406 = vadd.f32 %v4748, %v8405
  %v8407 = vpop.f32.mrf.mxu0
  %v8408 = vadd.f32 %v4753, %v8407
  %v8409 = vpop.f32.mrf.mxu0
  %v8410 = vadd.f32 %v4753, %v8409
  %8411 = vmatprep.mubr.bf16.mxu0 %v4852
  %8412 = vmatmul.mubr.bf16.gmra.mxu0 %v4851
  %v8413 = vpop.f32.mrf.mxu0
  %v8414 = vadd.f32 %v4758, %v8413
  %v8415 = vpop.f32.mrf.mxu0
  %v8416 = vadd.f32 %v4758, %v8415
  %v8417 = vpop.f32.mrf.mxu0
  %v8418 = vadd.f32 %v4763, %v8417
  %v8419 = vpop.f32.mrf.mxu0
  %v8420 = vadd.f32 %v4763, %v8419
  %8421 = vmatprep.mubr.bf16.mxu0 %v4854
  %8422 = vmatmul.mubr.bf16.gmra.mxu0 %v4853
  %v8423 = vpop.f32.mrf.mxu0
  %v8424 = vadd.f32 %v4768, %v8423
  %v8425 = vpop.f32.mrf.mxu0
  %v8426 = vadd.f32 %v4768, %v8425
  %v8427 = vpop.f32.mrf.mxu0
  %v8428 = vadd.f32 %v4773, %v8427
  %v8429 = vpop.f32.mrf.mxu0
  %v8430 = vadd.f32 %v4773, %v8429
  %8431 = vmatprep.mubr.bf16.mxu0 %v4856
  %8432 = vmatmul.mubr.bf16.gmra.mxu0 %v4855
  %v8433 = vpop.f32.mrf.mxu0
  %v8434 = vadd.f32 %v4778, %v8433
  %v8435 = vpop.f32.mrf.mxu0
  %v8436 = vadd.f32 %v4778, %v8435
  %v8437 = vpop.f32.mrf.mxu0
  %v8438 = vadd.f32 %v4783, %v8437
  %v8439 = vpop.f32.mrf.mxu0
  %v8440 = vadd.f32 %v4783, %v8439
  %8441 = vmatprep.mubr.bf16.mxu0 %v4858
  %8442 = vmatmul.mubr.bf16.gmra.mxu0 %v4857
  %v8443 = vpop.f32.mrf.mxu0
  %v8444 = vadd.f32 %v4788, %v8443
  %v8445 = vpop.f32.mrf.mxu0
  %v8446 = vadd.f32 %v4788, %v8445
  %v8447 = vpop.f32.mrf.mxu0
  %v8448 = vadd.f32 %v4793, %v8447
  %v8449 = vpop.f32.mrf.mxu0
  %v8450 = vadd.f32 %v4793, %v8449
  %8451 = vdwg.mxu0
  %8452 = vmatprep.subr.bf16.mxu0 %v6654
  %8453 = vmatpush1.bf16.msra.mxu0 %v6653
  %8454 = vmatprep.subr.bf16.mxu0 %v6622
  %8455 = vmatpush1.bf16.msra.mxu0 %v6621
  %8456 = vmatprep.subr.bf16.mxu0 %v6590
  %8457 = vmatpush1.bf16.msra.mxu0 %v6589
  %8458 = vmatprep.subr.bf16.mxu0 %v6558
  %8459 = vmatpush1.bf16.msra.mxu0 %v6557
  %8460 = vmatprep.subr.bf16.mxu0 %v6526
  %8461 = vmatpush1.bf16.msra.mxu0 %v6525
  %8462 = vmatprep.subr.bf16.mxu0 %v6494
  %8463 = vmatpush1.bf16.msra.mxu0 %v6493
  %8464 = vmatprep.subr.bf16.mxu0 %v6462
  %8465 = vmatpush1.bf16.msra.mxu0 %v6461
  %8466 = vmatprep.subr.bf16.mxu0 %v6430
  %8467 = vmatpush1.bf16.msra.mxu0 %v6429
  %8468 = vmatprep.subr.bf16.mxu0 %v6910
  %8469 = vmatpush2.bf16.msra.mxu0 %v6909
  %8470 = vmatprep.subr.bf16.mxu0 %v6878
  %8471 = vmatpush2.bf16.msra.mxu0 %v6877
  %8472 = vmatprep.subr.bf16.mxu0 %v6846
  %8473 = vmatpush2.bf16.msra.mxu0 %v6845
  %8474 = vmatprep.subr.bf16.mxu0 %v6814
  %8475 = vmatpush2.bf16.msra.mxu0 %v6813
  %8476 = vmatprep.subr.bf16.mxu0 %v6782
  %8477 = vmatpush2.bf16.msra.mxu0 %v6781
  %8478 = vmatprep.subr.bf16.mxu0 %v6750
  %8479 = vmatpush2.bf16.msra.mxu0 %v6749
  %8480 = vmatprep.subr.bf16.mxu0 %v6718
  %8481 = vmatpush2.bf16.msra.mxu0 %v6717
  %8482 = vmatprep.subr.bf16.mxu0 %v6686
  %8483 = vmatpush2.bf16.msra.mxu0 %v6685
  %8484 = vmatprep.mubr.bf16.mxu0 %v4844
  %8485 = vmatmul.mubr.bf16.gmra.mxu0 %v4843
  %v8486 = vpop.f32.mrf.mxu0
  %v8487 = vadd.f32 %v4718, %v8486
  %v8488 = vpop.f32.mrf.mxu0
  %v8489 = vadd.f32 %v4718, %v8488
  %v8490 = vpop.f32.mrf.mxu0
  %v8491 = vadd.f32 %v4723, %v8490
  %v8492 = vpop.f32.mrf.mxu0
  %v8493 = vadd.f32 %v4723, %v8492
  %8494 = vmatprep.mubr.bf16.mxu0 %v4846
  %8495 = vmatmul.mubr.bf16.gmra.mxu0 %v4845
  %v8496 = vpop.f32.mrf.mxu0
  %v8497 = vadd.f32 %v4728, %v8496
  %v8498 = vpop.f32.mrf.mxu0
  %v8499 = vadd.f32 %v4728, %v8498
  %v8500 = vpop.f32.mrf.mxu0
  %v8501 = vadd.f32 %v4733, %v8500
  %v8502 = vpop.f32.mrf.mxu0
  %v8503 = vadd.f32 %v4733, %v8502
  %8504 = vmatprep.mubr.bf16.mxu0 %v4848
  %8505 = vmatmul.mubr.bf16.gmra.mxu0 %v4847
  %v8506 = vpop.f32.mrf.mxu0
  %v8507 = vadd.f32 %v4738, %v8506
  %v8508 = vpop.f32.mrf.mxu0
  %v8509 = vadd.f32 %v4738, %v8508
  %v8510 = vpop.f32.mrf.mxu0
  %v8511 = vadd.f32 %v4743, %v8510
  %v8512 = vpop.f32.mrf.mxu0
  %v8513 = vadd.f32 %v4743, %v8512
  %8514 = vmatprep.mubr.bf16.mxu0 %v4850
  %8515 = vmatmul.mubr.bf16.gmra.mxu0 %v4849
  %v8516 = vpop.f32.mrf.mxu0
  %v8517 = vadd.f32 %v4748, %v8516
  %v8518 = vpop.f32.mrf.mxu0
  %v8519 = vadd.f32 %v4748, %v8518
  %v8520 = vpop.f32.mrf.mxu0
  %v8521 = vadd.f32 %v4753, %v8520
  %v8522 = vpop.f32.mrf.mxu0
  %v8523 = vadd.f32 %v4753, %v8522
  %8524 = vmatprep.mubr.bf16.mxu0 %v4852
  %8525 = vmatmul.mubr.bf16.gmra.mxu0 %v4851
  %v8526 = vpop.f32.mrf.mxu0
  %v8527 = vadd.f32 %v4758, %v8526
  %v8528 = vpop.f32.mrf.mxu0
  %v8529 = vadd.f32 %v4758, %v8528
  %v8530 = vpop.f32.mrf.mxu0
  %v8531 = vadd.f32 %v4763, %v8530
  %v8532 = vpop.f32.mrf.mxu0
  %v8533 = vadd.f32 %v4763, %v8532
  %8534 = vmatprep.mubr.bf16.mxu0 %v4854
  %8535 = vmatmul.mubr.bf16.gmra.mxu0 %v4853
  %v8536 = vpop.f32.mrf.mxu0
  %v8537 = vadd.f32 %v4768, %v8536
  %v8538 = vpop.f32.mrf.mxu0
  %v8539 = vadd.f32 %v4768, %v8538
  %v8540 = vpop.f32.mrf.mxu0
  %v8541 = vadd.f32 %v4773, %v8540
  %v8542 = vpop.f32.mrf.mxu0
  %v8543 = vadd.f32 %v4773, %v8542
  %8544 = vmatprep.mubr.bf16.mxu0 %v4856
  %8545 = vmatmul.mubr.bf16.gmra.mxu0 %v4855
  %v8546 = vpop.f32.mrf.mxu0
  %v8547 = vadd.f32 %v4778, %v8546
  %v8548 = vpop.f32.mrf.mxu0
  %v8549 = vadd.f32 %v4778, %v8548
  %v8550 = vpop.f32.mrf.mxu0
  %v8551 = vadd.f32 %v4783, %v8550
  %v8552 = vpop.f32.mrf.mxu0
  %v8553 = vadd.f32 %v4783, %v8552
  %8554 = vmatprep.mubr.bf16.mxu0 %v4858
  %8555 = vmatmul.mubr.bf16.gmra.mxu0 %v4857
  %v8556 = vpop.f32.mrf.mxu0
  %v8557 = vadd.f32 %v4788, %v8556
  %v8558 = vpop.f32.mrf.mxu0
  %v8559 = vadd.f32 %v4788, %v8558
  %v8560 = vpop.f32.mrf.mxu0
  %v8561 = vadd.f32 %v4793, %v8560
  %v8562 = vpop.f32.mrf.mxu0
  %v8563 = vadd.f32 %v4793, %v8562
  %8564 = vdwg.mxu0
  %8565 = vmatprep.subr.bf16.mxu0 %v6656
  %8566 = vmatpush1.bf16.msra.mxu0 %v6655
  %8567 = vmatprep.subr.bf16.mxu0 %v6624
  %8568 = vmatpush1.bf16.msra.mxu0 %v6623
  %8569 = vmatprep.subr.bf16.mxu0 %v6592
  %8570 = vmatpush1.bf16.msra.mxu0 %v6591
  %8571 = vmatprep.subr.bf16.mxu0 %v6560
  %8572 = vmatpush1.bf16.msra.mxu0 %v6559
  %8573 = vmatprep.subr.bf16.mxu0 %v6528
  %8574 = vmatpush1.bf16.msra.mxu0 %v6527
  %8575 = vmatprep.subr.bf16.mxu0 %v6496
  %8576 = vmatpush1.bf16.msra.mxu0 %v6495
  %8577 = vmatprep.subr.bf16.mxu0 %v6464
  %8578 = vmatpush1.bf16.msra.mxu0 %v6463
  %8579 = vmatprep.subr.bf16.mxu0 %v6432
  %8580 = vmatpush1.bf16.msra.mxu0 %v6431
  %8581 = vmatprep.subr.bf16.mxu0 %v6912
  %8582 = vmatpush2.bf16.msra.mxu0 %v6911
  %8583 = vmatprep.subr.bf16.mxu0 %v6880
  %8584 = vmatpush2.bf16.msra.mxu0 %v6879
  %8585 = vmatprep.subr.bf16.mxu0 %v6848
  %8586 = vmatpush2.bf16.msra.mxu0 %v6847
  %8587 = vmatprep.subr.bf16.mxu0 %v6816
  %8588 = vmatpush2.bf16.msra.mxu0 %v6815
  %8589 = vmatprep.subr.bf16.mxu0 %v6784
  %8590 = vmatpush2.bf16.msra.mxu0 %v6783
  %8591 = vmatprep.subr.bf16.mxu0 %v6752
  %8592 = vmatpush2.bf16.msra.mxu0 %v6751
  %8593 = vmatprep.subr.bf16.mxu0 %v6720
  %8594 = vmatpush2.bf16.msra.mxu0 %v6719
  %8595 = vmatprep.subr.bf16.mxu0 %v6688
  %8596 = vmatpush2.bf16.msra.mxu0 %v6687
  %8597 = vmatprep.mubr.bf16.mxu0 %v4844
  %8598 = vmatmul.mubr.bf16.gmra.mxu0 %v4843
  %v8599 = vpop.f32.mrf.mxu0
  %v8600 = vadd.f32 %v4718, %v8599
  %v8601 = vpop.f32.mrf.mxu0
  %v8602 = vadd.f32 %v4718, %v8601
  %v8603 = vpop.f32.mrf.mxu0
  %v8604 = vadd.f32 %v4723, %v8603
  %v8605 = vpop.f32.mrf.mxu0
  %v8606 = vadd.f32 %v4723, %v8605
  %8607 = vmatprep.mubr.bf16.mxu0 %v4846
  %8608 = vmatmul.mubr.bf16.gmra.mxu0 %v4845
  %v8609 = vpop.f32.mrf.mxu0
  %v8610 = vadd.f32 %v4728, %v8609
  %v8611 = vpop.f32.mrf.mxu0
  %v8612 = vadd.f32 %v4728, %v8611
  %v8613 = vpop.f32.mrf.mxu0
  %v8614 = vadd.f32 %v4733, %v8613
  %v8615 = vpop.f32.mrf.mxu0
  %v8616 = vadd.f32 %v4733, %v8615
  %8617 = vmatprep.mubr.bf16.mxu0 %v4848
  %8618 = vmatmul.mubr.bf16.gmra.mxu0 %v4847
  %v8619 = vpop.f32.mrf.mxu0
  %v8620 = vadd.f32 %v4738, %v8619
  %v8621 = vpop.f32.mrf.mxu0
  %v8622 = vadd.f32 %v4738, %v8621
  %v8623 = vpop.f32.mrf.mxu0
  %v8624 = vadd.f32 %v4743, %v8623
  %v8625 = vpop.f32.mrf.mxu0
  %v8626 = vadd.f32 %v4743, %v8625
  %8627 = vmatprep.mubr.bf16.mxu0 %v4850
  %8628 = vmatmul.mubr.bf16.gmra.mxu0 %v4849
  %v8629 = vpop.f32.mrf.mxu0
  %v8630 = vadd.f32 %v4748, %v8629
  %v8631 = vpop.f32.mrf.mxu0
  %v8632 = vadd.f32 %v4748, %v8631
  %v8633 = vpop.f32.mrf.mxu0
  %v8634 = vadd.f32 %v4753, %v8633
  %v8635 = vpop.f32.mrf.mxu0
  %v8636 = vadd.f32 %v4753, %v8635
  %8637 = vmatprep.mubr.bf16.mxu0 %v4852
  %8638 = vmatmul.mubr.bf16.gmra.mxu0 %v4851
  %v8639 = vpop.f32.mrf.mxu0
  %v8640 = vadd.f32 %v4758, %v8639
  %v8641 = vpop.f32.mrf.mxu0
  %v8642 = vadd.f32 %v4758, %v8641
  %v8643 = vpop.f32.mrf.mxu0
  %v8644 = vadd.f32 %v4763, %v8643
  %v8645 = vpop.f32.mrf.mxu0
  %v8646 = vadd.f32 %v4763, %v8645
  %8647 = vmatprep.mubr.bf16.mxu0 %v4854
  %8648 = vmatmul.mubr.bf16.gmra.mxu0 %v4853
  %v8649 = vpop.f32.mrf.mxu0
  %v8650 = vadd.f32 %v4768, %v8649
  %v8651 = vpop.f32.mrf.mxu0
  %v8652 = vadd.f32 %v4768, %v8651
  %v8653 = vpop.f32.mrf.mxu0
  %v8654 = vadd.f32 %v4773, %v8653
  %v8655 = vpop.f32.mrf.mxu0
  %v8656 = vadd.f32 %v4773, %v8655
  %8657 = vmatprep.mubr.bf16.mxu0 %v4856
  %8658 = vmatmul.mubr.bf16.gmra.mxu0 %v4855
  %v8659 = vpop.f32.mrf.mxu0
  %v8660 = vadd.f32 %v4778, %v8659
  %v8661 = vpop.f32.mrf.mxu0
  %v8662 = vadd.f32 %v4778, %v8661
  %v8663 = vpop.f32.mrf.mxu0
  %v8664 = vadd.f32 %v4783, %v8663
  %v8665 = vpop.f32.mrf.mxu0
  %v8666 = vadd.f32 %v4783, %v8665
  %8667 = vmatprep.mubr.bf16.mxu0 %v4858
  %8668 = vmatmul.mubr.bf16.gmra.mxu0 %v4857
  %v8669 = vpop.f32.mrf.mxu0
  %v8670 = vadd.f32 %v4788, %v8669
  %v8671 = vpop.f32.mrf.mxu0
  %v8672 = vadd.f32 %v4788, %v8671
  %v8673 = vpop.f32.mrf.mxu0
  %v8674 = vadd.f32 %v4793, %v8673
  %v8675 = vpop.f32.mrf.mxu0
  %v8676 = vadd.f32 %v4793, %v8675
  %8677 = vdwg.mxu0
  %8678 = vmatprep.subr.bf16.mxu0 %v6658
  %8679 = vmatpush1.bf16.msra.mxu0 %v6657
  %8680 = vmatprep.subr.bf16.mxu0 %v6626
  %8681 = vmatpush1.bf16.msra.mxu0 %v6625
  %8682 = vmatprep.subr.bf16.mxu0 %v6594
  %8683 = vmatpush1.bf16.msra.mxu0 %v6593
  %8684 = vmatprep.subr.bf16.mxu0 %v6562
  %8685 = vmatpush1.bf16.msra.mxu0 %v6561
  %8686 = vmatprep.subr.bf16.mxu0 %v6530
  %8687 = vmatpush1.bf16.msra.mxu0 %v6529
  %8688 = vmatprep.subr.bf16.mxu0 %v6498
  %8689 = vmatpush1.bf16.msra.mxu0 %v6497
  %8690 = vmatprep.subr.bf16.mxu0 %v6466
  %8691 = vmatpush1.bf16.msra.mxu0 %v6465
  %8692 = vmatprep.subr.bf16.mxu0 %v6434
  %8693 = vmatpush1.bf16.msra.mxu0 %v6433
  %8694 = vmatprep.subr.bf16.mxu0 %v6914
  %8695 = vmatpush2.bf16.msra.mxu0 %v6913
  %8696 = vmatprep.subr.bf16.mxu0 %v6882
  %8697 = vmatpush2.bf16.msra.mxu0 %v6881
  %8698 = vmatprep.subr.bf16.mxu0 %v6850
  %8699 = vmatpush2.bf16.msra.mxu0 %v6849
  %8700 = vmatprep.subr.bf16.mxu0 %v6818
  %8701 = vmatpush2.bf16.msra.mxu0 %v6817
  %8702 = vmatprep.subr.bf16.mxu0 %v6786
  %8703 = vmatpush2.bf16.msra.mxu0 %v6785
  %8704 = vmatprep.subr.bf16.mxu0 %v6754
  %8705 = vmatpush2.bf16.msra.mxu0 %v6753
  %8706 = vmatprep.subr.bf16.mxu0 %v6722
  %8707 = vmatpush2.bf16.msra.mxu0 %v6721
  %8708 = vmatprep.subr.bf16.mxu0 %v6690
  %8709 = vmatpush2.bf16.msra.mxu0 %v6689
  %8710 = vmatprep.mubr.bf16.mxu0 %v4844
  %8711 = vmatmul.mubr.bf16.gmra.mxu0 %v4843
  %v8712 = vpop.f32.mrf.mxu0
  %v8713 = vadd.f32 %v4718, %v8712
  %v8714 = vpop.f32.mrf.mxu0
  %v8715 = vadd.f32 %v4718, %v8714
  %v8716 = vpop.f32.mrf.mxu0
  %v8717 = vadd.f32 %v4723, %v8716
  %v8718 = vpop.f32.mrf.mxu0
  %v8719 = vadd.f32 %v4723, %v8718
  %8720 = vmatprep.mubr.bf16.mxu0 %v4846
  %8721 = vmatmul.mubr.bf16.gmra.mxu0 %v4845
  %v8722 = vpop.f32.mrf.mxu0
  %v8723 = vadd.f32 %v4728, %v8722
  %v8724 = vpop.f32.mrf.mxu0
  %v8725 = vadd.f32 %v4728, %v8724
  %v8726 = vpop.f32.mrf.mxu0
  %v8727 = vadd.f32 %v4733, %v8726
  %v8728 = vpop.f32.mrf.mxu0
  %v8729 = vadd.f32 %v4733, %v8728
  %8730 = vmatprep.mubr.bf16.mxu0 %v4848
  %8731 = vmatmul.mubr.bf16.gmra.mxu0 %v4847
  %v8732 = vpop.f32.mrf.mxu0
  %v8733 = vadd.f32 %v4738, %v8732
  %v8734 = vpop.f32.mrf.mxu0
  %v8735 = vadd.f32 %v4738, %v8734
  %v8736 = vpop.f32.mrf.mxu0
  %v8737 = vadd.f32 %v4743, %v8736
  %v8738 = vpop.f32.mrf.mxu0
  %v8739 = vadd.f32 %v4743, %v8738
  %8740 = vmatprep.mubr.bf16.mxu0 %v4850
  %8741 = vmatmul.mubr.bf16.gmra.mxu0 %v4849
  %v8742 = vpop.f32.mrf.mxu0
  %v8743 = vadd.f32 %v4748, %v8742
  %v8744 = vpop.f32.mrf.mxu0
  %v8745 = vadd.f32 %v4748, %v8744
  %v8746 = vpop.f32.mrf.mxu0
  %v8747 = vadd.f32 %v4753, %v8746
  %v8748 = vpop.f32.mrf.mxu0
  %v8749 = vadd.f32 %v4753, %v8748
  %8750 = vmatprep.mubr.bf16.mxu0 %v4852
  %8751 = vmatmul.mubr.bf16.gmra.mxu0 %v4851
  %v8752 = vpop.f32.mrf.mxu0
  %v8753 = vadd.f32 %v4758, %v8752
  %v8754 = vpop.f32.mrf.mxu0
  %v8755 = vadd.f32 %v4758, %v8754
  %v8756 = vpop.f32.mrf.mxu0
  %v8757 = vadd.f32 %v4763, %v8756
  %v8758 = vpop.f32.mrf.mxu0
  %v8759 = vadd.f32 %v4763, %v8758
  %8760 = vmatprep.mubr.bf16.mxu0 %v4854
  %8761 = vmatmul.mubr.bf16.gmra.mxu0 %v4853
  %v8762 = vpop.f32.mrf.mxu0
  %v8763 = vadd.f32 %v4768, %v8762
  %v8764 = vpop.f32.mrf.mxu0
  %v8765 = vadd.f32 %v4768, %v8764
  %v8766 = vpop.f32.mrf.mxu0
  %v8767 = vadd.f32 %v4773, %v8766
  %v8768 = vpop.f32.mrf.mxu0
  %v8769 = vadd.f32 %v4773, %v8768
  %8770 = vmatprep.mubr.bf16.mxu0 %v4856
  %8771 = vmatmul.mubr.bf16.gmra.mxu0 %v4855
  %v8772 = vpop.f32.mrf.mxu0
  %v8773 = vadd.f32 %v4778, %v8772
  %v8774 = vpop.f32.mrf.mxu0
  %v8775 = vadd.f32 %v4778, %v8774
  %v8776 = vpop.f32.mrf.mxu0
  %v8777 = vadd.f32 %v4783, %v8776
  %v8778 = vpop.f32.mrf.mxu0
  %v8779 = vadd.f32 %v4783, %v8778
  %8780 = vmatprep.mubr.bf16.mxu0 %v4858
  %8781 = vmatmul.mubr.bf16.gmra.mxu0 %v4857
  %v8782 = vpop.f32.mrf.mxu0
  %v8783 = vadd.f32 %v4788, %v8782
  %v8784 = vpop.f32.mrf.mxu0
  %v8785 = vadd.f32 %v4788, %v8784
  %v8786 = vpop.f32.mrf.mxu0
  %v8787 = vadd.f32 %v4793, %v8786
  %v8788 = vpop.f32.mrf.mxu0
  %v8789 = vadd.f32 %v4793, %v8788
  %8790 = vdwg.mxu0
  %8791 = vmatprep.subr.bf16.mxu0 %v6660
  %8792 = vmatpush1.bf16.msra.mxu0 %v6659
  %8793 = vmatprep.subr.bf16.mxu0 %v6628
  %8794 = vmatpush1.bf16.msra.mxu0 %v6627
  %8795 = vmatprep.subr.bf16.mxu0 %v6596
  %8796 = vmatpush1.bf16.msra.mxu0 %v6595
  %8797 = vmatprep.subr.bf16.mxu0 %v6564
  %8798 = vmatpush1.bf16.msra.mxu0 %v6563
  %8799 = vmatprep.subr.bf16.mxu0 %v6532
  %8800 = vmatpush1.bf16.msra.mxu0 %v6531
  %8801 = vmatprep.subr.bf16.mxu0 %v6500
  %8802 = vmatpush1.bf16.msra.mxu0 %v6499
  %8803 = vmatprep.subr.bf16.mxu0 %v6468
  %8804 = vmatpush1.bf16.msra.mxu0 %v6467
  %8805 = vmatprep.subr.bf16.mxu0 %v6436
  %8806 = vmatpush1.bf16.msra.mxu0 %v6435
  %8807 = vmatprep.subr.bf16.mxu0 %v6916
  %8808 = vmatpush2.bf16.msra.mxu0 %v6915
  %8809 = vmatprep.subr.bf16.mxu0 %v6884
  %8810 = vmatpush2.bf16.msra.mxu0 %v6883
  %8811 = vmatprep.subr.bf16.mxu0 %v6852
  %8812 = vmatpush2.bf16.msra.mxu0 %v6851
  %8813 = vmatprep.subr.bf16.mxu0 %v6820
  %8814 = vmatpush2.bf16.msra.mxu0 %v6819
  %8815 = vmatprep.subr.bf16.mxu0 %v6788
  %8816 = vmatpush2.bf16.msra.mxu0 %v6787
  %8817 = vmatprep.subr.bf16.mxu0 %v6756
  %8818 = vmatpush2.bf16.msra.mxu0 %v6755
  %8819 = vmatprep.subr.bf16.mxu0 %v6724
  %8820 = vmatpush2.bf16.msra.mxu0 %v6723
  %8821 = vmatprep.subr.bf16.mxu0 %v6692
  %8822 = vmatpush2.bf16.msra.mxu0 %v6691
  %8823 = vmatprep.mubr.bf16.mxu0 %v4844
  %8824 = vmatmul.mubr.bf16.gmra.mxu0 %v4843
  %v8825 = vpop.f32.mrf.mxu0
  %v8826 = vadd.f32 %v4718, %v8825
  %v8827 = vpop.f32.mrf.mxu0
  %v8828 = vadd.f32 %v4718, %v8827
  %v8829 = vpop.f32.mrf.mxu0
  %v8830 = vadd.f32 %v4723, %v8829
  %v8831 = vpop.f32.mrf.mxu0
  %v8832 = vadd.f32 %v4723, %v8831
  %8833 = vmatprep.mubr.bf16.mxu0 %v4846
  %8834 = vmatmul.mubr.bf16.gmra.mxu0 %v4845
  %v8835 = vpop.f32.mrf.mxu0
  %v8836 = vadd.f32 %v4728, %v8835
  %v8837 = vpop.f32.mrf.mxu0
  %v8838 = vadd.f32 %v4728, %v8837
  %v8839 = vpop.f32.mrf.mxu0
  %v8840 = vadd.f32 %v4733, %v8839
  %v8841 = vpop.f32.mrf.mxu0
  %v8842 = vadd.f32 %v4733, %v8841
  %8843 = vmatprep.mubr.bf16.mxu0 %v4848
  %8844 = vmatmul.mubr.bf16.gmra.mxu0 %v4847
  %v8845 = vpop.f32.mrf.mxu0
  %v8846 = vadd.f32 %v4738, %v8845
  %v8847 = vpop.f32.mrf.mxu0
  %v8848 = vadd.f32 %v4738, %v8847
  %v8849 = vpop.f32.mrf.mxu0
  %v8850 = vadd.f32 %v4743, %v8849
  %v8851 = vpop.f32.mrf.mxu0
  %v8852 = vadd.f32 %v4743, %v8851
  %8853 = vmatprep.mubr.bf16.mxu0 %v4850
  %8854 = vmatmul.mubr.bf16.gmra.mxu0 %v4849
  %v8855 = vpop.f32.mrf.mxu0
  %v8856 = vadd.f32 %v4748, %v8855
  %v8857 = vpop.f32.mrf.mxu0
  %v8858 = vadd.f32 %v4748, %v8857
  %v8859 = vpop.f32.mrf.mxu0
  %v8860 = vadd.f32 %v4753, %v8859
  %v8861 = vpop.f32.mrf.mxu0
  %v8862 = vadd.f32 %v4753, %v8861
  %8863 = vmatprep.mubr.bf16.mxu0 %v4852
  %8864 = vmatmul.mubr.bf16.gmra.mxu0 %v4851
  %v8865 = vpop.f32.mrf.mxu0
  %v8866 = vadd.f32 %v4758, %v8865
  %v8867 = vpop.f32.mrf.mxu0
  %v8868 = vadd.f32 %v4758, %v8867
  %v8869 = vpop.f32.mrf.mxu0
  %v8870 = vadd.f32 %v4763, %v8869
  %v8871 = vpop.f32.mrf.mxu0
  %v8872 = vadd.f32 %v4763, %v8871
  %8873 = vmatprep.mubr.bf16.mxu0 %v4854
  %8874 = vmatmul.mubr.bf16.gmra.mxu0 %v4853
  %v8875 = vpop.f32.mrf.mxu0
  %v8876 = vadd.f32 %v4768, %v8875
  %v8877 = vpop.f32.mrf.mxu0
  %v8878 = vadd.f32 %v4768, %v8877
  %v8879 = vpop.f32.mrf.mxu0
  %v8880 = vadd.f32 %v4773, %v8879
  %v8881 = vpop.f32.mrf.mxu0
  %v8882 = vadd.f32 %v4773, %v8881
  %8883 = vmatprep.mubr.bf16.mxu0 %v4856
  %8884 = vmatmul.mubr.bf16.gmra.mxu0 %v4855
  %v8885 = vpop.f32.mrf.mxu0
  %v8886 = vadd.f32 %v4778, %v8885
  %v8887 = vpop.f32.mrf.mxu0
  %v8888 = vadd.f32 %v4778, %v8887
  %v8889 = vpop.f32.mrf.mxu0
  %v8890 = vadd.f32 %v4783, %v8889
  %v8891 = vpop.f32.mrf.mxu0
  %v8892 = vadd.f32 %v4783, %v8891
  %8893 = vmatprep.mubr.bf16.mxu0 %v4858
  %8894 = vmatmul.mubr.bf16.gmra.mxu0 %v4857
  %v8895 = vpop.f32.mrf.mxu0
  %v8896 = vadd.f32 %v4788, %v8895
  %v8897 = vpop.f32.mrf.mxu0
  %v8898 = vadd.f32 %v4788, %v8897
  %v8899 = vpop.f32.mrf.mxu0
  %v8900 = vadd.f32 %v4793, %v8899
  %v8901 = vpop.f32.mrf.mxu0
  %v8902 = vadd.f32 %v4793, %v8901
  %8903 = vdwg.mxu0
  %8904 = vmatprep.subr.bf16.mxu0 %v6662
  %8905 = vmatpush1.bf16.msra.mxu0 %v6661
  %8906 = vmatprep.subr.bf16.mxu0 %v6630
  %8907 = vmatpush1.bf16.msra.mxu0 %v6629
  %8908 = vmatprep.subr.bf16.mxu0 %v6598
  %8909 = vmatpush1.bf16.msra.mxu0 %v6597
  %8910 = vmatprep.subr.bf16.mxu0 %v6566
  %8911 = vmatpush1.bf16.msra.mxu0 %v6565
  %8912 = vmatprep.subr.bf16.mxu0 %v6534
  %8913 = vmatpush1.bf16.msra.mxu0 %v6533
  %8914 = vmatprep.subr.bf16.mxu0 %v6502
  %8915 = vmatpush1.bf16.msra.mxu0 %v6501
  %8916 = vmatprep.subr.bf16.mxu0 %v6470
  %8917 = vmatpush1.bf16.msra.mxu0 %v6469
  %8918 = vmatprep.subr.bf16.mxu0 %v6438
  %8919 = vmatpush1.bf16.msra.mxu0 %v6437
  %8920 = vmatprep.subr.bf16.mxu0 %v6918
  %8921 = vmatpush2.bf16.msra.mxu0 %v6917
  %8922 = vmatprep.subr.bf16.mxu0 %v6886
  %8923 = vmatpush2.bf16.msra.mxu0 %v6885
  %8924 = vmatprep.subr.bf16.mxu0 %v6854
  %8925 = vmatpush2.bf16.msra.mxu0 %v6853
  %8926 = vmatprep.subr.bf16.mxu0 %v6822
  %8927 = vmatpush2.bf16.msra.mxu0 %v6821
  %8928 = vmatprep.subr.bf16.mxu0 %v6790
  %8929 = vmatpush2.bf16.msra.mxu0 %v6789
  %8930 = vmatprep.subr.bf16.mxu0 %v6758
  %8931 = vmatpush2.bf16.msra.mxu0 %v6757
  %8932 = vmatprep.subr.bf16.mxu0 %v6726
  %8933 = vmatpush2.bf16.msra.mxu0 %v6725
  %8934 = vmatprep.subr.bf16.mxu0 %v6694
  %8935 = vmatpush2.bf16.msra.mxu0 %v6693
  %8936 = vmatprep.mubr.bf16.mxu0 %v4844
  %8937 = vmatmul.mubr.bf16.gmra.mxu0 %v4843
  %v8938 = vpop.f32.mrf.mxu0
  %v8939 = vadd.f32 %v4718, %v8938
  %v8940 = vpop.f32.mrf.mxu0
  %v8941 = vadd.f32 %v4718, %v8940
  %v8942 = vpop.f32.mrf.mxu0
  %v8943 = vadd.f32 %v4723, %v8942
  %v8944 = vpop.f32.mrf.mxu0
  %v8945 = vadd.f32 %v4723, %v8944
  %8946 = vmatprep.mubr.bf16.mxu0 %v4846
  %8947 = vmatmul.mubr.bf16.gmra.mxu0 %v4845
  %v8948 = vpop.f32.mrf.mxu0
  %v8949 = vadd.f32 %v4728, %v8948
  %v8950 = vpop.f32.mrf.mxu0
  %v8951 = vadd.f32 %v4728, %v8950
  %v8952 = vpop.f32.mrf.mxu0
  %v8953 = vadd.f32 %v4733, %v8952
  %v8954 = vpop.f32.mrf.mxu0
  %v8955 = vadd.f32 %v4733, %v8954
  %8956 = vmatprep.mubr.bf16.mxu0 %v4848
  %8957 = vmatmul.mubr.bf16.gmra.mxu0 %v4847
  %v8958 = vpop.f32.mrf.mxu0
  %v8959 = vadd.f32 %v4738, %v8958
  %v8960 = vpop.f32.mrf.mxu0
  %v8961 = vadd.f32 %v4738, %v8960
  %v8962 = vpop.f32.mrf.mxu0
  %v8963 = vadd.f32 %v4743, %v8962
  %v8964 = vpop.f32.mrf.mxu0
  %v8965 = vadd.f32 %v4743, %v8964
  %8966 = vmatprep.mubr.bf16.mxu0 %v4850
  %8967 = vmatmul.mubr.bf16.gmra.mxu0 %v4849
  %v8968 = vpop.f32.mrf.mxu0
  %v8969 = vadd.f32 %v4748, %v8968
  %v8970 = vpop.f32.mrf.mxu0
  %v8971 = vadd.f32 %v4748, %v8970
  %v8972 = vpop.f32.mrf.mxu0
  %v8973 = vadd.f32 %v4753, %v8972
  %v8974 = vpop.f32.mrf.mxu0
  %v8975 = vadd.f32 %v4753, %v8974
  %8976 = vmatprep.mubr.bf16.mxu0 %v4852
  %8977 = vmatmul.mubr.bf16.gmra.mxu0 %v4851
  %v8978 = vpop.f32.mrf.mxu0
  %v8979 = vadd.f32 %v4758, %v8978
  %v8980 = vpop.f32.mrf.mxu0
  %v8981 = vadd.f32 %v4758, %v8980
  %v8982 = vpop.f32.mrf.mxu0
  %v8983 = vadd.f32 %v4763, %v8982
  %v8984 = vpop.f32.mrf.mxu0
  %v8985 = vadd.f32 %v4763, %v8984
  %8986 = vmatprep.mubr.bf16.mxu0 %v4854
  %8987 = vmatmul.mubr.bf16.gmra.mxu0 %v4853
  %v8988 = vpop.f32.mrf.mxu0
  %v8989 = vadd.f32 %v4768, %v8988
  %v8990 = vpop.f32.mrf.mxu0
  %v8991 = vadd.f32 %v4768, %v8990
  %v8992 = vpop.f32.mrf.mxu0
  %v8993 = vadd.f32 %v4773, %v8992
  %v8994 = vpop.f32.mrf.mxu0
  %v8995 = vadd.f32 %v4773, %v8994
  %8996 = vmatprep.mubr.bf16.mxu0 %v4856
  %8997 = vmatmul.mubr.bf16.gmra.mxu0 %v4855
  %v8998 = vpop.f32.mrf.mxu0
  %v8999 = vadd.f32 %v4778, %v8998
  %v9000 = vpop.f32.mrf.mxu0
  %v9001 = vadd.f32 %v4778, %v9000
  %v9002 = vpop.f32.mrf.mxu0
  %v9003 = vadd.f32 %v4783, %v9002
  %v9004 = vpop.f32.mrf.mxu0
  %v9005 = vadd.f32 %v4783, %v9004
  %9006 = vmatprep.mubr.bf16.mxu0 %v4858
  %9007 = vmatmul.mubr.bf16.gmra.mxu0 %v4857
  %v9008 = vpop.f32.mrf.mxu0
  %v9009 = vadd.f32 %v4788, %v9008
  %v9010 = vpop.f32.mrf.mxu0
  %v9011 = vadd.f32 %v4788, %v9010
  %v9012 = vpop.f32.mrf.mxu0
  %v9013 = vadd.f32 %v4793, %v9012
  %v9014 = vpop.f32.mrf.mxu0
  %v9015 = vadd.f32 %v4793, %v9014
  %9016 = vdwg.mxu0
  %9017 = vmatprep.subr.bf16.mxu0 %v6664
  %9018 = vmatpush1.bf16.msra.mxu0 %v6663
  %9019 = vmatprep.subr.bf16.mxu0 %v6632
  %9020 = vmatpush1.bf16.msra.mxu0 %v6631
  %9021 = vmatprep.subr.bf16.mxu0 %v6600
  %9022 = vmatpush1.bf16.msra.mxu0 %v6599
  %9023 = vmatprep.subr.bf16.mxu0 %v6568
  %9024 = vmatpush1.bf16.msra.mxu0 %v6567
  %9025 = vmatprep.subr.bf16.mxu0 %v6536
  %9026 = vmatpush1.bf16.msra.mxu0 %v6535
  %9027 = vmatprep.subr.bf16.mxu0 %v6504
  %9028 = vmatpush1.bf16.msra.mxu0 %v6503
  %9029 = vmatprep.subr.bf16.mxu0 %v6472
  %9030 = vmatpush1.bf16.msra.mxu0 %v6471
  %9031 = vmatprep.subr.bf16.mxu0 %v6440
  %9032 = vmatpush1.bf16.msra.mxu0 %v6439
  %9033 = vmatprep.subr.bf16.mxu0 %v6920
  %9034 = vmatpush2.bf16.msra.mxu0 %v6919
  %9035 = vmatprep.subr.bf16.mxu0 %v6888
  %9036 = vmatpush2.bf16.msra.mxu0 %v6887
  %9037 = vmatprep.subr.bf16.mxu0 %v6856
  %9038 = vmatpush2.bf16.msra.mxu0 %v6855
  %9039 = vmatprep.subr.bf16.mxu0 %v6824
  %9040 = vmatpush2.bf16.msra.mxu0 %v6823
  %9041 = vmatprep.subr.bf16.mxu0 %v6792
  %9042 = vmatpush2.bf16.msra.mxu0 %v6791
  %9043 = vmatprep.subr.bf16.mxu0 %v6760
  %9044 = vmatpush2.bf16.msra.mxu0 %v6759
  %9045 = vmatprep.subr.bf16.mxu0 %v6728
  %9046 = vmatpush2.bf16.msra.mxu0 %v6727
  %9047 = vmatprep.subr.bf16.mxu0 %v6696
  %9048 = vmatpush2.bf16.msra.mxu0 %v6695
  %9049 = vmatprep.mubr.bf16.mxu0 %v4844
  %9050 = vmatmul.mubr.bf16.gmra.mxu0 %v4843
  %v9051 = vpop.f32.mrf.mxu0
  %v9052 = vadd.f32 %v4718, %v9051
  %v9053 = vpop.f32.mrf.mxu0
  %v9054 = vadd.f32 %v4718, %v9053
  %v9055 = vpop.f32.mrf.mxu0
  %v9056 = vadd.f32 %v4723, %v9055
  %v9057 = vpop.f32.mrf.mxu0
  %v9058 = vadd.f32 %v4723, %v9057
  %9059 = vmatprep.mubr.bf16.mxu0 %v4846
  %9060 = vmatmul.mubr.bf16.gmra.mxu0 %v4845
  %v9061 = vpop.f32.mrf.mxu0
  %v9062 = vadd.f32 %v4728, %v9061
  %v9063 = vpop.f32.mrf.mxu0
  %v9064 = vadd.f32 %v4728, %v9063
  %v9065 = vpop.f32.mrf.mxu0
  %v9066 = vadd.f32 %v4733, %v9065
  %v9067 = vpop.f32.mrf.mxu0
  %v9068 = vadd.f32 %v4733, %v9067
  %9069 = vmatprep.mubr.bf16.mxu0 %v4848
  %9070 = vmatmul.mubr.bf16.gmra.mxu0 %v4847
  %v9071 = vpop.f32.mrf.mxu0
  %v9072 = vadd.f32 %v4738, %v9071
  %v9073 = vpop.f32.mrf.mxu0
  %v9074 = vadd.f32 %v4738, %v9073
  %v9075 = vpop.f32.mrf.mxu0
  %v9076 = vadd.f32 %v4743, %v9075
  %v9077 = vpop.f32.mrf.mxu0
  %v9078 = vadd.f32 %v4743, %v9077
  %9079 = vmatprep.mubr.bf16.mxu0 %v4850
  %9080 = vmatmul.mubr.bf16.gmra.mxu0 %v4849
  %v9081 = vpop.f32.mrf.mxu0
  %v9082 = vadd.f32 %v4748, %v9081
  %v9083 = vpop.f32.mrf.mxu0
  %v9084 = vadd.f32 %v4748, %v9083
  %v9085 = vpop.f32.mrf.mxu0
  %v9086 = vadd.f32 %v4753, %v9085
  %v9087 = vpop.f32.mrf.mxu0
  %v9088 = vadd.f32 %v4753, %v9087
  %9089 = vmatprep.mubr.bf16.mxu0 %v4852
  %9090 = vmatmul.mubr.bf16.gmra.mxu0 %v4851
  %v9091 = vpop.f32.mrf.mxu0
  %v9092 = vadd.f32 %v4758, %v9091
  %v9093 = vpop.f32.mrf.mxu0
  %v9094 = vadd.f32 %v4758, %v9093
  %v9095 = vpop.f32.mrf.mxu0
  %v9096 = vadd.f32 %v4763, %v9095
  %v9097 = vpop.f32.mrf.mxu0
  %v9098 = vadd.f32 %v4763, %v9097
  %9099 = vmatprep.mubr.bf16.mxu0 %v4854
  %9100 = vmatmul.mubr.bf16.gmra.mxu0 %v4853
  %v9101 = vpop.f32.mrf.mxu0
  %v9102 = vadd.f32 %v4768, %v9101
  %v9103 = vpop.f32.mrf.mxu0
  %v9104 = vadd.f32 %v4768, %v9103
  %v9105 = vpop.f32.mrf.mxu0
  %v9106 = vadd.f32 %v4773, %v9105
  %v9107 = vpop.f32.mrf.mxu0
  %v9108 = vadd.f32 %v4773, %v9107
  %9109 = vmatprep.mubr.bf16.mxu0 %v4856
  %9110 = vmatmul.mubr.bf16.gmra.mxu0 %v4855
  %v9111 = vpop.f32.mrf.mxu0
  %v9112 = vadd.f32 %v4778, %v9111
  %v9113 = vpop.f32.mrf.mxu0
  %v9114 = vadd.f32 %v4778, %v9113
  %v9115 = vpop.f32.mrf.mxu0
  %v9116 = vadd.f32 %v4783, %v9115
  %v9117 = vpop.f32.mrf.mxu0
  %v9118 = vadd.f32 %v4783, %v9117
  %9119 = vmatprep.mubr.bf16.mxu0 %v4858
  %9120 = vmatmul.mubr.bf16.gmra.mxu0 %v4857
  %v9121 = vpop.f32.mrf.mxu0
  %v9122 = vadd.f32 %v4788, %v9121
  %v9123 = vpop.f32.mrf.mxu0
  %v9124 = vadd.f32 %v4788, %v9123
  %v9125 = vpop.f32.mrf.mxu0
  %v9126 = vadd.f32 %v4793, %v9125
  %v9127 = vpop.f32.mrf.mxu0
  %v9128 = vadd.f32 %v4793, %v9127
  %9129 = vdwg.mxu0
  %9130 = vmatprep.subr.bf16.mxu0 %v6666
  %9131 = vmatpush1.bf16.msra.mxu0 %v6665
  %9132 = vmatprep.subr.bf16.mxu0 %v6634
  %9133 = vmatpush1.bf16.msra.mxu0 %v6633
  %9134 = vmatprep.subr.bf16.mxu0 %v6602
  %9135 = vmatpush1.bf16.msra.mxu0 %v6601
  %9136 = vmatprep.subr.bf16.mxu0 %v6570
  %9137 = vmatpush1.bf16.msra.mxu0 %v6569
  %9138 = vmatprep.subr.bf16.mxu0 %v6538
  %9139 = vmatpush1.bf16.msra.mxu0 %v6537
  %9140 = vmatprep.subr.bf16.mxu0 %v6506
  %9141 = vmatpush1.bf16.msra.mxu0 %v6505
  %9142 = vmatprep.subr.bf16.mxu0 %v6474
  %9143 = vmatpush1.bf16.msra.mxu0 %v6473
  %9144 = vmatprep.subr.bf16.mxu0 %v6442
  %9145 = vmatpush1.bf16.msra.mxu0 %v6441
  %9146 = vmatprep.subr.bf16.mxu0 %v6922
  %9147 = vmatpush2.bf16.msra.mxu0 %v6921
  %9148 = vmatprep.subr.bf16.mxu0 %v6890
  %9149 = vmatpush2.bf16.msra.mxu0 %v6889
  %9150 = vmatprep.subr.bf16.mxu0 %v6858
  %9151 = vmatpush2.bf16.msra.mxu0 %v6857
  %9152 = vmatprep.subr.bf16.mxu0 %v6826
  %9153 = vmatpush2.bf16.msra.mxu0 %v6825
  %9154 = vmatprep.subr.bf16.mxu0 %v6794
  %9155 = vmatpush2.bf16.msra.mxu0 %v6793
  %9156 = vmatprep.subr.bf16.mxu0 %v6762
  %9157 = vmatpush2.bf16.msra.mxu0 %v6761
  %9158 = vmatprep.subr.bf16.mxu0 %v6730
  %9159 = vmatpush2.bf16.msra.mxu0 %v6729
  %9160 = vmatprep.subr.bf16.mxu0 %v6698
  %9161 = vmatpush2.bf16.msra.mxu0 %v6697
  %9162 = vmatprep.mubr.bf16.mxu0 %v4844
  %9163 = vmatmul.mubr.bf16.gmra.mxu0 %v4843
  %v9164 = vpop.f32.mrf.mxu0
  %v9165 = vadd.f32 %v4718, %v9164
  %v9166 = vpop.f32.mrf.mxu0
  %v9167 = vadd.f32 %v4718, %v9166
  %v9168 = vpop.f32.mrf.mxu0
  %v9169 = vadd.f32 %v4723, %v9168
  %v9170 = vpop.f32.mrf.mxu0
  %v9171 = vadd.f32 %v4723, %v9170
  %9172 = vmatprep.mubr.bf16.mxu0 %v4846
  %9173 = vmatmul.mubr.bf16.gmra.mxu0 %v4845
  %v9174 = vpop.f32.mrf.mxu0
  %v9175 = vadd.f32 %v4728, %v9174
  %v9176 = vpop.f32.mrf.mxu0
  %v9177 = vadd.f32 %v4728, %v9176
  %v9178 = vpop.f32.mrf.mxu0
  %v9179 = vadd.f32 %v4733, %v9178
  %v9180 = vpop.f32.mrf.mxu0
  %v9181 = vadd.f32 %v4733, %v9180
  %9182 = vmatprep.mubr.bf16.mxu0 %v4848
  %9183 = vmatmul.mubr.bf16.gmra.mxu0 %v4847
  %v9184 = vpop.f32.mrf.mxu0
  %v9185 = vadd.f32 %v4738, %v9184
  %v9186 = vpop.f32.mrf.mxu0
  %v9187 = vadd.f32 %v4738, %v9186
  %v9188 = vpop.f32.mrf.mxu0
  %v9189 = vadd.f32 %v4743, %v9188
  %v9190 = vpop.f32.mrf.mxu0
  %v9191 = vadd.f32 %v4743, %v9190
  %9192 = vmatprep.mubr.bf16.mxu0 %v4850
  %9193 = vmatmul.mubr.bf16.gmra.mxu0 %v4849
  %v9194 = vpop.f32.mrf.mxu0
  %v9195 = vadd.f32 %v4748, %v9194
  %v9196 = vpop.f32.mrf.mxu0
  %v9197 = vadd.f32 %v4748, %v9196
  %v9198 = vpop.f32.mrf.mxu0
  %v9199 = vadd.f32 %v4753, %v9198
  %v9200 = vpop.f32.mrf.mxu0
  %v9201 = vadd.f32 %v4753, %v9200
  %9202 = vmatprep.mubr.bf16.mxu0 %v4852
  %9203 = vmatmul.mubr.bf16.gmra.mxu0 %v4851
  %v9204 = vpop.f32.mrf.mxu0
  %v9205 = vadd.f32 %v4758, %v9204
  %v9206 = vpop.f32.mrf.mxu0
  %v9207 = vadd.f32 %v4758, %v9206
  %v9208 = vpop.f32.mrf.mxu0
  %v9209 = vadd.f32 %v4763, %v9208
  %v9210 = vpop.f32.mrf.mxu0
  %v9211 = vadd.f32 %v4763, %v9210
  %9212 = vmatprep.mubr.bf16.mxu0 %v4854
  %9213 = vmatmul.mubr.bf16.gmra.mxu0 %v4853
  %v9214 = vpop.f32.mrf.mxu0
  %v9215 = vadd.f32 %v4768, %v9214
  %v9216 = vpop.f32.mrf.mxu0
  %v9217 = vadd.f32 %v4768, %v9216
  %v9218 = vpop.f32.mrf.mxu0
  %v9219 = vadd.f32 %v4773, %v9218
  %v9220 = vpop.f32.mrf.mxu0
  %v9221 = vadd.f32 %v4773, %v9220
  %9222 = vmatprep.mubr.bf16.mxu0 %v4856
  %9223 = vmatmul.mubr.bf16.gmra.mxu0 %v4855
  %v9224 = vpop.f32.mrf.mxu0
  %v9225 = vadd.f32 %v4778, %v9224
  %v9226 = vpop.f32.mrf.mxu0
  %v9227 = vadd.f32 %v4778, %v9226
  %v9228 = vpop.f32.mrf.mxu0
  %v9229 = vadd.f32 %v4783, %v9228
  %v9230 = vpop.f32.mrf.mxu0
  %v9231 = vadd.f32 %v4783, %v9230
  %9232 = vmatprep.mubr.bf16.mxu0 %v4858
  %9233 = vmatmul.mubr.bf16.gmra.mxu0 %v4857
  %v9234 = vpop.f32.mrf.mxu0
  %v9235 = vadd.f32 %v4788, %v9234
  %v9236 = vpop.f32.mrf.mxu0
  %v9237 = vadd.f32 %v4788, %v9236
  %v9238 = vpop.f32.mrf.mxu0
  %v9239 = vadd.f32 %v4793, %v9238
  %v9240 = vpop.f32.mrf.mxu0
  %v9241 = vadd.f32 %v4793, %v9240
  %9242 = vdwg.mxu0
  %v9243 = vmax.f32 %v7470, 0.0
  %v9244 = vmax.f32 %v7472, 0.0
  %v9245 = vmax.f32 %v7583, 0.0
  %v9246 = vmax.f32 %v7585, 0.0
  %v9247 = vmax.f32 %v7696, 0.0
  %v9248 = vmax.f32 %v7698, 0.0
  %v9249 = vmax.f32 %v7809, 0.0
  %v9250 = vmax.f32 %v7811, 0.0
  %v9251 = vmax.f32 %v7922, 0.0
  %v9252 = vmax.f32 %v7924, 0.0
  %v9253 = vmax.f32 %v8035, 0.0
  %v9254 = vmax.f32 %v8037, 0.0
  %v9255 = vmax.f32 %v8148, 0.0
  %v9256 = vmax.f32 %v8150, 0.0
  %v9257 = vmax.f32 %v8261, 0.0
  %v9258 = vmax.f32 %v8263, 0.0
  %v9259 = vmax.f32 %v8374, 0.0
  %v9260 = vmax.f32 %v8376, 0.0
  %v9261 = vmax.f32 %v8487, 0.0
  %v9262 = vmax.f32 %v8489, 0.0
  %v9263 = vmax.f32 %v8600, 0.0
  %v9264 = vmax.f32 %v8602, 0.0
  %v9265 = vmax.f32 %v8713, 0.0
  %v9266 = vmax.f32 %v8715, 0.0
  %v9267 = vmax.f32 %v8826, 0.0
  %v9268 = vmax.f32 %v8828, 0.0
  %v9269 = vmax.f32 %v8939, 0.0
  %v9270 = vmax.f32 %v8941, 0.0
  %v9271 = vmax.f32 %v9052, 0.0
  %v9272 = vmax.f32 %v9054, 0.0
  %v9273 = vmax.f32 %v9165, 0.0
  %v9274 = vmax.f32 %v9167, 0.0
  %v9275 = vmax.f32 %v7474, 0.0
  %v9276 = vmax.f32 %v7476, 0.0
  %v9277 = vmax.f32 %v7587, 0.0
  %v9278 = vmax.f32 %v7589, 0.0
  %v9279 = vmax.f32 %v7700, 0.0
  %v9280 = vmax.f32 %v7702, 0.0
  %v9281 = vmax.f32 %v7813, 0.0
  %v9282 = vmax.f32 %v7815, 0.0
  %v9283 = vmax.f32 %v7926, 0.0
  %v9284 = vmax.f32 %v7928, 0.0
  %v9285 = vmax.f32 %v8039, 0.0
  %v9286 = vmax.f32 %v8041, 0.0
  %v9287 = vmax.f32 %v8152, 0.0
  %v9288 = vmax.f32 %v8154, 0.0
  %v9289 = vmax.f32 %v8265, 0.0
  %v9290 = vmax.f32 %v8267, 0.0
  %v9291 = vmax.f32 %v8378, 0.0
  %v9292 = vmax.f32 %v8380, 0.0
  %v9293 = vmax.f32 %v8491, 0.0
  %v9294 = vmax.f32 %v8493, 0.0
  %v9295 = vmax.f32 %v8604, 0.0
  %v9296 = vmax.f32 %v8606, 0.0
  %v9297 = vmax.f32 %v8717, 0.0
  %v9298 = vmax.f32 %v8719, 0.0
  %v9299 = vmax.f32 %v8830, 0.0
  %v9300 = vmax.f32 %v8832, 0.0
  %v9301 = vmax.f32 %v8943, 0.0
  %v9302 = vmax.f32 %v8945, 0.0
  %v9303 = vmax.f32 %v9056, 0.0
  %v9304 = vmax.f32 %v9058, 0.0
  %v9305 = vmax.f32 %v9169, 0.0
  %v9306 = vmax.f32 %v9171, 0.0
  %v9307 = vmax.f32 %v7480, 0.0
  %v9308 = vmax.f32 %v7482, 0.0
  %v9309 = vmax.f32 %v7593, 0.0
  %v9310 = vmax.f32 %v7595, 0.0
  %v9311 = vmax.f32 %v7706, 0.0
  %v9312 = vmax.f32 %v7708, 0.0
  %v9313 = vmax.f32 %v7819, 0.0
  %v9314 = vmax.f32 %v7821, 0.0
  %v9315 = vmax.f32 %v7932, 0.0
  %v9316 = vmax.f32 %v7934, 0.0
  %v9317 = vmax.f32 %v8045, 0.0
  %v9318 = vmax.f32 %v8047, 0.0
  %v9319 = vmax.f32 %v8158, 0.0
  %v9320 = vmax.f32 %v8160, 0.0
  %v9321 = vmax.f32 %v8271, 0.0
  %v9322 = vmax.f32 %v8273, 0.0
  %v9323 = vmax.f32 %v8384, 0.0
  %v9324 = vmax.f32 %v8386, 0.0
  %v9325 = vmax.f32 %v8497, 0.0
  %v9326 = vmax.f32 %v8499, 0.0
  %v9327 = vmax.f32 %v8610, 0.0
  %v9328 = vmax.f32 %v8612, 0.0
  %v9329 = vmax.f32 %v8723, 0.0
  %v9330 = vmax.f32 %v8725, 0.0
  %v9331 = vmax.f32 %v8836, 0.0
  %v9332 = vmax.f32 %v8838, 0.0
  %v9333 = vmax.f32 %v8949, 0.0
  %v9334 = vmax.f32 %v8951, 0.0
  %v9335 = vmax.f32 %v9062, 0.0
  %v9336 = vmax.f32 %v9064, 0.0
  %v9337 = vmax.f32 %v9175, 0.0
  %v9338 = vmax.f32 %v9177, 0.0
  %v9339 = vmax.f32 %v7484, 0.0
  %v9340 = vmax.f32 %v7486, 0.0
  %v9341 = vmax.f32 %v7597, 0.0
  %v9342 = vmax.f32 %v7599, 0.0
  %v9343 = vmax.f32 %v7710, 0.0
  %v9344 = vmax.f32 %v7712, 0.0
  %v9345 = vmax.f32 %v7823, 0.0
  %v9346 = vmax.f32 %v7825, 0.0
  %v9347 = vmax.f32 %v7936, 0.0
  %v9348 = vmax.f32 %v7938, 0.0
  %v9349 = vmax.f32 %v8049, 0.0
  %v9350 = vmax.f32 %v8051, 0.0
  %v9351 = vmax.f32 %v8162, 0.0
  %v9352 = vmax.f32 %v8164, 0.0
  %v9353 = vmax.f32 %v8275, 0.0
  %v9354 = vmax.f32 %v8277, 0.0
  %v9355 = vmax.f32 %v8388, 0.0
  %v9356 = vmax.f32 %v8390, 0.0
  %v9357 = vmax.f32 %v8501, 0.0
  %v9358 = vmax.f32 %v8503, 0.0
  %v9359 = vmax.f32 %v8614, 0.0
  %v9360 = vmax.f32 %v8616, 0.0
  %v9361 = vmax.f32 %v8727, 0.0
  %v9362 = vmax.f32 %v8729, 0.0
  %v9363 = vmax.f32 %v8840, 0.0
  %v9364 = vmax.f32 %v8842, 0.0
  %v9365 = vmax.f32 %v8953, 0.0
  %v9366 = vmax.f32 %v8955, 0.0
  %v9367 = vmax.f32 %v9066, 0.0
  %v9368 = vmax.f32 %v9068, 0.0
  %v9369 = vmax.f32 %v9179, 0.0
  %v9370 = vmax.f32 %v9181, 0.0
  %v9371 = vmax.f32 %v7490, 0.0
  %v9372 = vmax.f32 %v7492, 0.0
  %v9373 = vmax.f32 %v7603, 0.0
  %v9374 = vmax.f32 %v7605, 0.0
  %v9375 = vmax.f32 %v7716, 0.0
  %v9376 = vmax.f32 %v7718, 0.0
  %v9377 = vmax.f32 %v7829, 0.0
  %v9378 = vmax.f32 %v7831, 0.0
  %v9379 = vmax.f32 %v7942, 0.0
  %v9380 = vmax.f32 %v7944, 0.0
  %v9381 = vmax.f32 %v8055, 0.0
  %v9382 = vmax.f32 %v8057, 0.0
  %v9383 = vmax.f32 %v8168, 0.0
  %v9384 = vmax.f32 %v8170, 0.0
  %v9385 = vmax.f32 %v8281, 0.0
  %v9386 = vmax.f32 %v8283, 0.0
  %v9387 = vmax.f32 %v8394, 0.0
  %v9388 = vmax.f32 %v8396, 0.0
  %v9389 = vmax.f32 %v8507, 0.0
  %v9390 = vmax.f32 %v8509, 0.0
  %v9391 = vmax.f32 %v8620, 0.0
  %v9392 = vmax.f32 %v8622, 0.0
  %v9393 = vmax.f32 %v8733, 0.0
  %v9394 = vmax.f32 %v8735, 0.0
  %v9395 = vmax.f32 %v8846, 0.0
  %v9396 = vmax.f32 %v8848, 0.0
  %v9397 = vmax.f32 %v8959, 0.0
  %v9398 = vmax.f32 %v8961, 0.0
  %v9399 = vmax.f32 %v9072, 0.0
  %v9400 = vmax.f32 %v9074, 0.0
  %v9401 = vmax.f32 %v9185, 0.0
  %v9402 = vmax.f32 %v9187, 0.0
  %v9403 = vmax.f32 %v7494, 0.0
  %v9404 = vmax.f32 %v7496, 0.0
  %v9405 = vmax.f32 %v7607, 0.0
  %v9406 = vmax.f32 %v7609, 0.0
  %v9407 = vmax.f32 %v7720, 0.0
  %v9408 = vmax.f32 %v7722, 0.0
  %v9409 = vmax.f32 %v7833, 0.0
  %v9410 = vmax.f32 %v7835, 0.0
  %v9411 = vmax.f32 %v7946, 0.0
  %v9412 = vmax.f32 %v7948, 0.0
  %v9413 = vmax.f32 %v8059, 0.0
  %v9414 = vmax.f32 %v8061, 0.0
  %v9415 = vmax.f32 %v8172, 0.0
  %v9416 = vmax.f32 %v8174, 0.0
  %v9417 = vmax.f32 %v8285, 0.0
  %v9418 = vmax.f32 %v8287, 0.0
  %v9419 = vmax.f32 %v8398, 0.0
  %v9420 = vmax.f32 %v8400, 0.0
  %v9421 = vmax.f32 %v8511, 0.0
  %v9422 = vmax.f32 %v8513, 0.0
  %v9423 = vmax.f32 %v8624, 0.0
  %v9424 = vmax.f32 %v8626, 0.0
  %v9425 = vmax.f32 %v8737, 0.0
  %v9426 = vmax.f32 %v8739, 0.0
  %v9427 = vmax.f32 %v8850, 0.0
  %v9428 = vmax.f32 %v8852, 0.0
  %v9429 = vmax.f32 %v8963, 0.0
  %v9430 = vmax.f32 %v8965, 0.0
  %v9431 = vmax.f32 %v9076, 0.0
  %v9432 = vmax.f32 %v9078, 0.0
  %v9433 = vmax.f32 %v9189, 0.0
  %v9434 = vmax.f32 %v9191, 0.0
  %v9435 = vmax.f32 %v7500, 0.0
  %v9436 = vmax.f32 %v7502, 0.0
  %v9437 = vmax.f32 %v7613, 0.0
  %v9438 = vmax.f32 %v7615, 0.0
  %v9439 = vmax.f32 %v7726, 0.0
  %v9440 = vmax.f32 %v7728, 0.0
  %v9441 = vmax.f32 %v7839, 0.0
  %v9442 = vmax.f32 %v7841, 0.0
  %v9443 = vmax.f32 %v7952, 0.0
  %v9444 = vmax.f32 %v7954, 0.0
  %v9445 = vmax.f32 %v8065, 0.0
  %v9446 = vmax.f32 %v8067, 0.0
  %v9447 = vmax.f32 %v8178, 0.0
  %v9448 = vmax.f32 %v8180, 0.0
  %v9449 = vmax.f32 %v8291, 0.0
  %v9450 = vmax.f32 %v8293, 0.0
  %v9451 = vmax.f32 %v8404, 0.0
  %v9452 = vmax.f32 %v8406, 0.0
  %v9453 = vmax.f32 %v8517, 0.0
  %v9454 = vmax.f32 %v8519, 0.0
  %v9455 = vmax.f32 %v8630, 0.0
  %v9456 = vmax.f32 %v8632, 0.0
  %v9457 = vmax.f32 %v8743, 0.0
  %v9458 = vmax.f32 %v8745, 0.0
  %v9459 = vmax.f32 %v8856, 0.0
  %v9460 = vmax.f32 %v8858, 0.0
  %v9461 = vmax.f32 %v8969, 0.0
  %v9462 = vmax.f32 %v8971, 0.0
  %v9463 = vmax.f32 %v9082, 0.0
  %v9464 = vmax.f32 %v9084, 0.0
  %v9465 = vmax.f32 %v9195, 0.0
  %v9466 = vmax.f32 %v9197, 0.0
  %v9467 = vmax.f32 %v7504, 0.0
  %v9468 = vmax.f32 %v7506, 0.0
  %v9469 = vmax.f32 %v7617, 0.0
  %v9470 = vmax.f32 %v7619, 0.0
  %v9471 = vmax.f32 %v7730, 0.0
  %v9472 = vmax.f32 %v7732, 0.0
  %v9473 = vmax.f32 %v7843, 0.0
  %v9474 = vmax.f32 %v7845, 0.0
  %v9475 = vmax.f32 %v7956, 0.0
  %v9476 = vmax.f32 %v7958, 0.0
  %v9477 = vmax.f32 %v8069, 0.0
  %v9478 = vmax.f32 %v8071, 0.0
  %v9479 = vmax.f32 %v8182, 0.0
  %v9480 = vmax.f32 %v8184, 0.0
  %v9481 = vmax.f32 %v8295, 0.0
  %v9482 = vmax.f32 %v8297, 0.0
  %v9483 = vmax.f32 %v8408, 0.0
  %v9484 = vmax.f32 %v8410, 0.0
  %v9485 = vmax.f32 %v8521, 0.0
  %v9486 = vmax.f32 %v8523, 0.0
  %v9487 = vmax.f32 %v8634, 0.0
  %v9488 = vmax.f32 %v8636, 0.0
  %v9489 = vmax.f32 %v8747, 0.0
  %v9490 = vmax.f32 %v8749, 0.0
  %v9491 = vmax.f32 %v8860, 0.0
  %v9492 = vmax.f32 %v8862, 0.0
  %v9493 = vmax.f32 %v8973, 0.0
  %v9494 = vmax.f32 %v8975, 0.0
  %v9495 = vmax.f32 %v9086, 0.0
  %v9496 = vmax.f32 %v9088, 0.0
  %v9497 = vmax.f32 %v9199, 0.0
  %v9498 = vmax.f32 %v9201, 0.0
  %v9499 = vmax.f32 %v7510, 0.0
  %v9500 = vmax.f32 %v7512, 0.0
  %v9501 = vmax.f32 %v7623, 0.0
  %v9502 = vmax.f32 %v7625, 0.0
  %v9503 = vmax.f32 %v7736, 0.0
  %v9504 = vmax.f32 %v7738, 0.0
  %v9505 = vmax.f32 %v7849, 0.0
  %v9506 = vmax.f32 %v7851, 0.0
  %v9507 = vmax.f32 %v7962, 0.0
  %v9508 = vmax.f32 %v7964, 0.0
  %v9509 = vmax.f32 %v8075, 0.0
  %v9510 = vmax.f32 %v8077, 0.0
  %v9511 = vmax.f32 %v8188, 0.0
  %v9512 = vmax.f32 %v8190, 0.0
  %v9513 = vmax.f32 %v8301, 0.0
  %v9514 = vmax.f32 %v8303, 0.0
  %v9515 = vmax.f32 %v8414, 0.0
  %v9516 = vmax.f32 %v8416, 0.0
  %v9517 = vmax.f32 %v8527, 0.0
  %v9518 = vmax.f32 %v8529, 0.0
  %v9519 = vmax.f32 %v8640, 0.0
  %v9520 = vmax.f32 %v8642, 0.0
  %v9521 = vmax.f32 %v8753, 0.0
  %v9522 = vmax.f32 %v8755, 0.0
  %v9523 = vmax.f32 %v8866, 0.0
  %v9524 = vmax.f32 %v8868, 0.0
  %v9525 = vmax.f32 %v8979, 0.0
  %v9526 = vmax.f32 %v8981, 0.0
  %v9527 = vmax.f32 %v9092, 0.0
  %v9528 = vmax.f32 %v9094, 0.0
  %v9529 = vmax.f32 %v9205, 0.0
  %v9530 = vmax.f32 %v9207, 0.0
  %v9531 = vmax.f32 %v7514, 0.0
  %v9532 = vmax.f32 %v7516, 0.0
  %v9533 = vmax.f32 %v7627, 0.0
  %v9534 = vmax.f32 %v7629, 0.0
  %v9535 = vmax.f32 %v7740, 0.0
  %v9536 = vmax.f32 %v7742, 0.0
  %v9537 = vmax.f32 %v7853, 0.0
  %v9538 = vmax.f32 %v7855, 0.0
  %v9539 = vmax.f32 %v7966, 0.0
  %v9540 = vmax.f32 %v7968, 0.0
  %v9541 = vmax.f32 %v8079, 0.0
  %v9542 = vmax.f32 %v8081, 0.0
  %v9543 = vmax.f32 %v8192, 0.0
  %v9544 = vmax.f32 %v8194, 0.0
  %v9545 = vmax.f32 %v8305, 0.0
  %v9546 = vmax.f32 %v8307, 0.0
  %v9547 = vmax.f32 %v8418, 0.0
  %v9548 = vmax.f32 %v8420, 0.0
  %v9549 = vmax.f32 %v8531, 0.0
  %v9550 = vmax.f32 %v8533, 0.0
  %v9551 = vmax.f32 %v8644, 0.0
  %v9552 = vmax.f32 %v8646, 0.0
  %v9553 = vmax.f32 %v8757, 0.0
  %v9554 = vmax.f32 %v8759, 0.0
  %v9555 = vmax.f32 %v8870, 0.0
  %v9556 = vmax.f32 %v8872, 0.0
  %v9557 = vmax.f32 %v8983, 0.0
  %v9558 = vmax.f32 %v8985, 0.0
  %v9559 = vmax.f32 %v9096, 0.0
  %v9560 = vmax.f32 %v9098, 0.0
  %v9561 = vmax.f32 %v9209, 0.0
  %v9562 = vmax.f32 %v9211, 0.0
  %v9563 = vmax.f32 %v7520, 0.0
  %v9564 = vmax.f32 %v7522, 0.0
  %v9565 = vmax.f32 %v7633, 0.0
  %v9566 = vmax.f32 %v7635, 0.0
  %v9567 = vmax.f32 %v7746, 0.0
  %v9568 = vmax.f32 %v7748, 0.0
  %v9569 = vmax.f32 %v7859, 0.0
  %v9570 = vmax.f32 %v7861, 0.0
  %v9571 = vmax.f32 %v7972, 0.0
  %v9572 = vmax.f32 %v7974, 0.0
  %v9573 = vmax.f32 %v8085, 0.0
  %v9574 = vmax.f32 %v8087, 0.0
  %v9575 = vmax.f32 %v8198, 0.0
  %v9576 = vmax.f32 %v8200, 0.0
  %v9577 = vmax.f32 %v8311, 0.0
  %v9578 = vmax.f32 %v8313, 0.0
  %v9579 = vmax.f32 %v8424, 0.0
  %v9580 = vmax.f32 %v8426, 0.0
  %v9581 = vmax.f32 %v8537, 0.0
  %v9582 = vmax.f32 %v8539, 0.0
  %v9583 = vmax.f32 %v8650, 0.0
  %v9584 = vmax.f32 %v8652, 0.0
  %v9585 = vmax.f32 %v8763, 0.0
  %v9586 = vmax.f32 %v8765, 0.0
  %v9587 = vmax.f32 %v8876, 0.0
  %v9588 = vmax.f32 %v8878, 0.0
  %v9589 = vmax.f32 %v8989, 0.0
  %v9590 = vmax.f32 %v8991, 0.0
  %v9591 = vmax.f32 %v9102, 0.0
  %v9592 = vmax.f32 %v9104, 0.0
  %v9593 = vmax.f32 %v9215, 0.0
  %v9594 = vmax.f32 %v9217, 0.0
  %v9595 = vmax.f32 %v7524, 0.0
  %v9596 = vmax.f32 %v7526, 0.0
  %v9597 = vmax.f32 %v7637, 0.0
  %v9598 = vmax.f32 %v7639, 0.0
  %v9599 = vmax.f32 %v7750, 0.0
  %v9600 = vmax.f32 %v7752, 0.0
  %v9601 = vmax.f32 %v7863, 0.0
  %v9602 = vmax.f32 %v7865, 0.0
  %v9603 = vmax.f32 %v7976, 0.0
  %v9604 = vmax.f32 %v7978, 0.0
  %v9605 = vmax.f32 %v8089, 0.0
  %v9606 = vmax.f32 %v8091, 0.0
  %v9607 = vmax.f32 %v8202, 0.0
  %v9608 = vmax.f32 %v8204, 0.0
  %v9609 = vmax.f32 %v8315, 0.0
  %v9610 = vmax.f32 %v8317, 0.0
  %v9611 = vmax.f32 %v8428, 0.0
  %v9612 = vmax.f32 %v8430, 0.0
  %v9613 = vmax.f32 %v8541, 0.0
  %v9614 = vmax.f32 %v8543, 0.0
  %v9615 = vmax.f32 %v8654, 0.0
  %v9616 = vmax.f32 %v8656, 0.0
  %v9617 = vmax.f32 %v8767, 0.0
  %v9618 = vmax.f32 %v8769, 0.0
  %v9619 = vmax.f32 %v8880, 0.0
  %v9620 = vmax.f32 %v8882, 0.0
  %v9621 = vmax.f32 %v8993, 0.0
  %v9622 = vmax.f32 %v8995, 0.0
  %v9623 = vmax.f32 %v9106, 0.0
  %v9624 = vmax.f32 %v9108, 0.0
  %v9625 = vmax.f32 %v9219, 0.0
  %v9626 = vmax.f32 %v9221, 0.0
  %v9627 = vmax.f32 %v7530, 0.0
  %v9628 = vmax.f32 %v7532, 0.0
  %v9629 = vmax.f32 %v7643, 0.0
  %v9630 = vmax.f32 %v7645, 0.0
  %v9631 = vmax.f32 %v7756, 0.0
  %v9632 = vmax.f32 %v7758, 0.0
  %v9633 = vmax.f32 %v7869, 0.0
  %v9634 = vmax.f32 %v7871, 0.0
  %v9635 = vmax.f32 %v7982, 0.0
  %v9636 = vmax.f32 %v7984, 0.0
  %v9637 = vmax.f32 %v8095, 0.0
  %v9638 = vmax.f32 %v8097, 0.0
  %v9639 = vmax.f32 %v8208, 0.0
  %v9640 = vmax.f32 %v8210, 0.0
  %v9641 = vmax.f32 %v8321, 0.0
  %v9642 = vmax.f32 %v8323, 0.0
  %v9643 = vmax.f32 %v8434, 0.0
  %v9644 = vmax.f32 %v8436, 0.0
  %v9645 = vmax.f32 %v8547, 0.0
  %v9646 = vmax.f32 %v8549, 0.0
  %v9647 = vmax.f32 %v8660, 0.0
  %v9648 = vmax.f32 %v8662, 0.0
  %v9649 = vmax.f32 %v8773, 0.0
  %v9650 = vmax.f32 %v8775, 0.0
  %v9651 = vmax.f32 %v8886, 0.0
  %v9652 = vmax.f32 %v8888, 0.0
  %v9653 = vmax.f32 %v8999, 0.0
  %v9654 = vmax.f32 %v9001, 0.0
  %v9655 = vmax.f32 %v9112, 0.0
  %v9656 = vmax.f32 %v9114, 0.0
  %v9657 = vmax.f32 %v9225, 0.0
  %v9658 = vmax.f32 %v9227, 0.0
  %v9659 = vmax.f32 %v7534, 0.0
  %v9660 = vmax.f32 %v7536, 0.0
  %v9661 = vmax.f32 %v7647, 0.0
  %v9662 = vmax.f32 %v7649, 0.0
  %v9663 = vmax.f32 %v7760, 0.0
  %v9664 = vmax.f32 %v7762, 0.0
  %v9665 = vmax.f32 %v7873, 0.0
  %v9666 = vmax.f32 %v7875, 0.0
  %v9667 = vmax.f32 %v7986, 0.0
  %v9668 = vmax.f32 %v7988, 0.0
  %v9669 = vmax.f32 %v8099, 0.0
  %v9670 = vmax.f32 %v8101, 0.0
  %v9671 = vmax.f32 %v8212, 0.0
  %v9672 = vmax.f32 %v8214, 0.0
  %v9673 = vmax.f32 %v8325, 0.0
  %v9674 = vmax.f32 %v8327, 0.0
  %v9675 = vmax.f32 %v8438, 0.0
  %v9676 = vmax.f32 %v8440, 0.0
  %v9677 = vmax.f32 %v8551, 0.0
  %v9678 = vmax.f32 %v8553, 0.0
  %v9679 = vmax.f32 %v8664, 0.0
  %v9680 = vmax.f32 %v8666, 0.0
  %v9681 = vmax.f32 %v8777, 0.0
  %v9682 = vmax.f32 %v8779, 0.0
  %v9683 = vmax.f32 %v8890, 0.0
  %v9684 = vmax.f32 %v8892, 0.0
  %v9685 = vmax.f32 %v9003, 0.0
  %v9686 = vmax.f32 %v9005, 0.0
  %v9687 = vmax.f32 %v9116, 0.0
  %v9688 = vmax.f32 %v9118, 0.0
  %v9689 = vmax.f32 %v9229, 0.0
  %v9690 = vmax.f32 %v9231, 0.0
  %v9691 = vmax.f32 %v7540, 0.0
  %v9692 = vmax.f32 %v7542, 0.0
  %v9693 = vmax.f32 %v7653, 0.0
  %v9694 = vmax.f32 %v7655, 0.0
  %v9695 = vmax.f32 %v7766, 0.0
  %v9696 = vmax.f32 %v7768, 0.0
  %v9697 = vmax.f32 %v7879, 0.0
  %v9698 = vmax.f32 %v7881, 0.0
  %v9699 = vmax.f32 %v7992, 0.0
  %v9700 = vmax.f32 %v7994, 0.0
  %v9701 = vmax.f32 %v8105, 0.0
  %v9702 = vmax.f32 %v8107, 0.0
  %v9703 = vmax.f32 %v8218, 0.0
  %v9704 = vmax.f32 %v8220, 0.0
  %v9705 = vmax.f32 %v8331, 0.0
  %v9706 = vmax.f32 %v8333, 0.0
  %v9707 = vmax.f32 %v8444, 0.0
  %v9708 = vmax.f32 %v8446, 0.0
  %v9709 = vmax.f32 %v8557, 0.0
  %v9710 = vmax.f32 %v8559, 0.0
  %v9711 = vmax.f32 %v8670, 0.0
  %v9712 = vmax.f32 %v8672, 0.0
  %v9713 = vmax.f32 %v8783, 0.0
  %v9714 = vmax.f32 %v8785, 0.0
  %v9715 = vmax.f32 %v8896, 0.0
  %v9716 = vmax.f32 %v8898, 0.0
  %v9717 = vmax.f32 %v9009, 0.0
  %v9718 = vmax.f32 %v9011, 0.0
  %v9719 = vmax.f32 %v9122, 0.0
  %v9720 = vmax.f32 %v9124, 0.0
  %v9721 = vmax.f32 %v9235, 0.0
  %v9722 = vmax.f32 %v9237, 0.0
  %v9723 = vmax.f32 %v7544, 0.0
  %v9724 = vmax.f32 %v7546, 0.0
  %v9725 = vmax.f32 %v7657, 0.0
  %v9726 = vmax.f32 %v7659, 0.0
  %v9727 = vmax.f32 %v7770, 0.0
  %v9728 = vmax.f32 %v7772, 0.0
  %v9729 = vmax.f32 %v7883, 0.0
  %v9730 = vmax.f32 %v7885, 0.0
  %v9731 = vmax.f32 %v7996, 0.0
  %v9732 = vmax.f32 %v7998, 0.0
  %v9733 = vmax.f32 %v8109, 0.0
  %v9734 = vmax.f32 %v8111, 0.0
  %v9735 = vmax.f32 %v8222, 0.0
  %v9736 = vmax.f32 %v8224, 0.0
  %v9737 = vmax.f32 %v8335, 0.0
  %v9738 = vmax.f32 %v8337, 0.0
  %v9739 = vmax.f32 %v8448, 0.0
  %v9740 = vmax.f32 %v8450, 0.0
  %v9741 = vmax.f32 %v8561, 0.0
  %v9742 = vmax.f32 %v8563, 0.0
  %v9743 = vmax.f32 %v8674, 0.0
  %v9744 = vmax.f32 %v8676, 0.0
  %v9745 = vmax.f32 %v8787, 0.0
  %v9746 = vmax.f32 %v8789, 0.0
  %v9747 = vmax.f32 %v8900, 0.0
  %v9748 = vmax.f32 %v8902, 0.0
  %v9749 = vmax.f32 %v9013, 0.0
  %v9750 = vmax.f32 %v9015, 0.0
  %v9751 = vmax.f32 %v9126, 0.0
  %v9752 = vmax.f32 %v9128, 0.0
  %v9753 = vmax.f32 %v9239, 0.0
  %v9754 = vmax.f32 %v9241, 0.0
  %v9755 = vld [vmem:[%s6] sm:$0xff]
  %v9756 = vld [vmem:[%s6 + $0x8] sm:$0xff]
  %v9757 = vld [vmem:[%s6 + $0x10] sm:$0xff]
  %v9758 = vld [vmem:[%s6 + $0x18] sm:$0xff]
  %v9759 = vld [vmem:[%s6 + $0x20] sm:$0xff]
  %v9760 = vld [vmem:[%s6 + $0x28] sm:$0xff]
  %v9761 = vld [vmem:[%s6 + $0x30] sm:$0xff]
  %v9762 = vld [vmem:[%s6 + $0x38] sm:$0xff]
  %v9763 = vld [vmem:[%s6 + $0x40] sm:$0xff]
  %v9764 = vld [vmem:[%s6 + $0x48] sm:$0xff]
  %v9765 = vld [vmem:[%s6 + $0x50] sm:$0xff]
  %v9766 = vld [vmem:[%s6 + $0x58] sm:$0xff]
  %v9767 = vld [vmem:[%s6 + $0x60] sm:$0xff]
  %v9768 = vld [vmem:[%s6 + $0x68] sm:$0xff]
  %v9769 = vld [vmem:[%s6 + $0x70] sm:$0xff]
  %v9770 = vld [vmem:[%s6 + $0x78] sm:$0xff]
  %9772 = vset.pattern.permute.xlu0 0
  %9773 = vperm.xlu0 %9772, %v9755
  %v9774 = vpop.permute.xlu0 %9773
  %9777 = vset.pattern.permute.xlu0 0
  %9778 = vperm.xlu0 %9777, %v9756
  %v9779 = vpop.permute.xlu0 %9778
  %9782 = vset.pattern.permute.xlu0 0
  %9783 = vperm.xlu0 %9782, %v9757
  %v9784 = vpop.permute.xlu0 %9783
  %9787 = vset.pattern.permute.xlu0 0
  %9788 = vperm.xlu0 %9787, %v9758
  %v9789 = vpop.permute.xlu0 %9788
  %9792 = vset.pattern.permute.xlu0 0
  %9793 = vperm.xlu0 %9792, %v9759
  %v9794 = vpop.permute.xlu0 %9793
  %9797 = vset.pattern.permute.xlu0 0
  %9798 = vperm.xlu0 %9797, %v9760
  %v9799 = vpop.permute.xlu0 %9798
  %9802 = vset.pattern.permute.xlu0 0
  %9803 = vperm.xlu0 %9802, %v9761
  %v9804 = vpop.permute.xlu0 %9803
  %9807 = vset.pattern.permute.xlu0 0
  %9808 = vperm.xlu0 %9807, %v9762
  %v9809 = vpop.permute.xlu0 %9808
  %9812 = vset.pattern.permute.xlu0 0
  %9813 = vperm.xlu0 %9812, %v9763
  %v9814 = vpop.permute.xlu0 %9813
  %9817 = vset.pattern.permute.xlu0 0
  %9818 = vperm.xlu0 %9817, %v9764
  %v9819 = vpop.permute.xlu0 %9818
  %9822 = vset.pattern.permute.xlu0 0
  %9823 = vperm.xlu0 %9822, %v9765
  %v9824 = vpop.permute.xlu0 %9823
  %9827 = vset.pattern.permute.xlu0 0
  %9828 = vperm.xlu0 %9827, %v9766
  %v9829 = vpop.permute.xlu0 %9828
  %9832 = vset.pattern.permute.xlu0 0
  %9833 = vperm.xlu0 %9832, %v9767
  %v9834 = vpop.permute.xlu0 %9833
  %9837 = vset.pattern.permute.xlu0 0
  %9838 = vperm.xlu0 %9837, %v9768
  %v9839 = vpop.permute.xlu0 %9838
  %9842 = vset.pattern.permute.xlu0 0
  %9843 = vperm.xlu0 %9842, %v9769
  %v9844 = vpop.permute.xlu0 %9843
  %9847 = vset.pattern.permute.xlu0 0
  %9848 = vperm.xlu0 %9847, %v9770
  %v9849 = vpop.permute.xlu0 %9848
  %v9851 = vmul.f32 %v9243, %v9774
  %v9852 = vmul.f32 %v9244, %v9774
  %v9853 = vmul.f32 %v9245, %v9774
  %v9854 = vmul.f32 %v9246, %v9774
  %v9855 = vmul.f32 %v9247, %v9774
  %v9856 = vmul.f32 %v9248, %v9774
  %v9857 = vmul.f32 %v9249, %v9774
  %v9858 = vmul.f32 %v9250, %v9774
  %v9859 = vmul.f32 %v9251, %v9774
  %v9860 = vmul.f32 %v9252, %v9774
  %v9861 = vmul.f32 %v9253, %v9774
  %v9862 = vmul.f32 %v9254, %v9774
  %v9863 = vmul.f32 %v9255, %v9774
  %v9864 = vmul.f32 %v9256, %v9774
  %v9865 = vmul.f32 %v9257, %v9774
  %v9866 = vmul.f32 %v9258, %v9774
  %v9867 = vmul.f32 %v9259, %v9774
  %v9868 = vmul.f32 %v9260, %v9774
  %v9869 = vmul.f32 %v9261, %v9774
  %v9870 = vmul.f32 %v9262, %v9774
  %v9871 = vmul.f32 %v9263, %v9774
  %v9872 = vmul.f32 %v9264, %v9774
  %v9873 = vmul.f32 %v9265, %v9774
  %v9874 = vmul.f32 %v9266, %v9774
  %v9875 = vmul.f32 %v9267, %v9774
  %v9876 = vmul.f32 %v9268, %v9774
  %v9877 = vmul.f32 %v9269, %v9774
  %v9878 = vmul.f32 %v9270, %v9774
  %v9879 = vmul.f32 %v9271, %v9774
  %v9880 = vmul.f32 %v9272, %v9774
  %v9881 = vmul.f32 %v9273, %v9774
  %v9882 = vmul.f32 %v9274, %v9774
  %v9883 = vmul.f32 %v9275, %v9779
  %v9884 = vmul.f32 %v9276, %v9779
  %v9885 = vmul.f32 %v9277, %v9779
  %v9886 = vmul.f32 %v9278, %v9779
  %v9887 = vmul.f32 %v9279, %v9779
  %v9888 = vmul.f32 %v9280, %v9779
  %v9889 = vmul.f32 %v9281, %v9779
  %v9890 = vmul.f32 %v9282, %v9779
  %v9891 = vmul.f32 %v9283, %v9779
  %v9892 = vmul.f32 %v9284, %v9779
  %v9893 = vmul.f32 %v9285, %v9779
  %v9894 = vmul.f32 %v9286, %v9779
  %v9895 = vmul.f32 %v9287, %v9779
  %v9896 = vmul.f32 %v9288, %v9779
  %v9897 = vmul.f32 %v9289, %v9779
  %v9898 = vmul.f32 %v9290, %v9779
  %v9899 = vmul.f32 %v9291, %v9779
  %v9900 = vmul.f32 %v9292, %v9779
  %v9901 = vmul.f32 %v9293, %v9779
  %v9902 = vmul.f32 %v9294, %v9779
  %v9903 = vmul.f32 %v9295, %v9779
  %v9904 = vmul.f32 %v9296, %v9779
  %v9905 = vmul.f32 %v9297, %v9779
  %v9906 = vmul.f32 %v9298, %v9779
  %v9907 = vmul.f32 %v9299, %v9779
  %v9908 = vmul.f32 %v9300, %v9779
  %v9909 = vmul.f32 %v9301, %v9779
  %v9910 = vmul.f32 %v9302, %v9779
  %v9911 = vmul.f32 %v9303, %v9779
  %v9912 = vmul.f32 %v9304, %v9779
  %v9913 = vmul.f32 %v9305, %v9779
  %v9914 = vmul.f32 %v9306, %v9779
  %v9915 = vmul.f32 %v9307, %v9784
  %v9916 = vmul.f32 %v9308, %v9784
  %v9917 = vmul.f32 %v9309, %v9784
  %v9918 = vmul.f32 %v9310, %v9784
  %v9919 = vmul.f32 %v9311, %v9784
  %v9920 = vmul.f32 %v9312, %v9784
  %v9921 = vmul.f32 %v9313, %v9784
  %v9922 = vmul.f32 %v9314, %v9784
  %v9923 = vmul.f32 %v9315, %v9784
  %v9924 = vmul.f32 %v9316, %v9784
  %v9925 = vmul.f32 %v9317, %v9784
  %v9926 = vmul.f32 %v9318, %v9784
  %v9927 = vmul.f32 %v9319, %v9784
  %v9928 = vmul.f32 %v9320, %v9784
  %v9929 = vmul.f32 %v9321, %v9784
  %v9930 = vmul.f32 %v9322, %v9784
  %v9931 = vmul.f32 %v9323, %v9784
  %v9932 = vmul.f32 %v9324, %v9784
  %v9933 = vmul.f32 %v9325, %v9784
  %v9934 = vmul.f32 %v9326, %v9784
  %v9935 = vmul.f32 %v9327, %v9784
  %v9936 = vmul.f32 %v9328, %v9784
  %v9937 = vmul.f32 %v9329, %v9784
  %v9938 = vmul.f32 %v9330, %v9784
  %v9939 = vmul.f32 %v9331, %v9784
  %v9940 = vmul.f32 %v9332, %v9784
  %v9941 = vmul.f32 %v9333, %v9784
  %v9942 = vmul.f32 %v9334, %v9784
  %v9943 = vmul.f32 %v9335, %v9784
  %v9944 = vmul.f32 %v9336, %v9784
  %v9945 = vmul.f32 %v9337, %v9784
  %v9946 = vmul.f32 %v9338, %v9784
  %v9947 = vmul.f32 %v9339, %v9789
  %v9948 = vmul.f32 %v9340, %v9789
  %v9949 = vmul.f32 %v9341, %v9789
  %v9950 = vmul.f32 %v9342, %v9789
  %v9951 = vmul.f32 %v9343, %v9789
  %v9952 = vmul.f32 %v9344, %v9789
  %v9953 = vmul.f32 %v9345, %v9789
  %v9954 = vmul.f32 %v9346, %v9789
  %v9955 = vmul.f32 %v9347, %v9789
  %v9956 = vmul.f32 %v9348, %v9789
  %v9957 = vmul.f32 %v9349, %v9789
  %v9958 = vmul.f32 %v9350, %v9789
  %v9959 = vmul.f32 %v9351, %v9789
  %v9960 = vmul.f32 %v9352, %v9789
  %v9961 = vmul.f32 %v9353, %v9789
  %v9962 = vmul.f32 %v9354, %v9789
  %v9963 = vmul.f32 %v9355, %v9789
  %v9964 = vmul.f32 %v9356, %v9789
  %v9965 = vmul.f32 %v9357, %v9789
  %v9966 = vmul.f32 %v9358, %v9789
  %v9967 = vmul.f32 %v9359, %v9789
  %v9968 = vmul.f32 %v9360, %v9789
  %v9969 = vmul.f32 %v9361, %v9789
  %v9970 = vmul.f32 %v9362, %v9789
  %v9971 = vmul.f32 %v9363, %v9789
  %v9972 = vmul.f32 %v9364, %v9789
  %v9973 = vmul.f32 %v9365, %v9789
  %v9974 = vmul.f32 %v9366, %v9789
  %v9975 = vmul.f32 %v9367, %v9789
  %v9976 = vmul.f32 %v9368, %v9789
  %v9977 = vmul.f32 %v9369, %v9789
  %v9978 = vmul.f32 %v9370, %v9789
  %v9979 = vmul.f32 %v9371, %v9794
  %v9980 = vmul.f32 %v9372, %v9794
  %v9981 = vmul.f32 %v9373, %v9794
  %v9982 = vmul.f32 %v9374, %v9794
  %v9983 = vmul.f32 %v9375, %v9794
  %v9984 = vmul.f32 %v9376, %v9794
  %v9985 = vmul.f32 %v9377, %v9794
  %v9986 = vmul.f32 %v9378, %v9794
  %v9987 = vmul.f32 %v9379, %v9794
  %v9988 = vmul.f32 %v9380, %v9794
  %v9989 = vmul.f32 %v9381, %v9794
  %v9990 = vmul.f32 %v9382, %v9794
  %v9991 = vmul.f32 %v9383, %v9794
  %v9992 = vmul.f32 %v9384, %v9794
  %v9993 = vmul.f32 %v9385, %v9794
  %v9994 = vmul.f32 %v9386, %v9794
  %v9995 = vmul.f32 %v9387, %v9794
  %v9996 = vmul.f32 %v9388, %v9794
  %v9997 = vmul.f32 %v9389, %v9794
  %v9998 = vmul.f32 %v9390, %v9794
  %v9999 = vmul.f32 %v9391, %v9794
  %v10000 = vmul.f32 %v9392, %v9794
  %v10001 = vmul.f32 %v9393, %v9794
  %v10002 = vmul.f32 %v9394, %v9794
  %v10003 = vmul.f32 %v9395, %v9794
  %v10004 = vmul.f32 %v9396, %v9794
  %v10005 = vmul.f32 %v9397, %v9794
  %v10006 = vmul.f32 %v9398, %v9794
  %v10007 = vmul.f32 %v9399, %v9794
  %v10008 = vmul.f32 %v9400, %v9794
  %v10009 = vmul.f32 %v9401, %v9794
  %v10010 = vmul.f32 %v9402, %v9794
  %v10011 = vmul.f32 %v9403, %v9799
  %v10012 = vmul.f32 %v9404, %v9799
  %v10013 = vmul.f32 %v9405, %v9799
  %v10014 = vmul.f32 %v9406, %v9799
  %v10015 = vmul.f32 %v9407, %v9799
  %v10016 = vmul.f32 %v9408, %v9799
  %v10017 = vmul.f32 %v9409, %v9799
  %v10018 = vmul.f32 %v9410, %v9799
  %v10019 = vmul.f32 %v9411, %v9799
  %v10020 = vmul.f32 %v9412, %v9799
  %v10021 = vmul.f32 %v9413, %v9799
  %v10022 = vmul.f32 %v9414, %v9799
  %v10023 = vmul.f32 %v9415, %v9799
  %v10024 = vmul.f32 %v9416, %v9799
  %v10025 = vmul.f32 %v9417, %v9799
  %v10026 = vmul.f32 %v9418, %v9799
  %v10027 = vmul.f32 %v9419, %v9799
  %v10028 = vmul.f32 %v9420, %v9799
  %v10029 = vmul.f32 %v9421, %v9799
  %v10030 = vmul.f32 %v9422, %v9799
  %v10031 = vmul.f32 %v9423, %v9799
  %v10032 = vmul.f32 %v9424, %v9799
  %v10033 = vmul.f32 %v9425, %v9799
  %v10034 = vmul.f32 %v9426, %v9799
  %v10035 = vmul.f32 %v9427, %v9799
  %v10036 = vmul.f32 %v9428, %v9799
  %v10037 = vmul.f32 %v9429, %v9799
  %v10038 = vmul.f32 %v9430, %v9799
  %v10039 = vmul.f32 %v9431, %v9799
  %v10040 = vmul.f32 %v9432, %v9799
  %v10041 = vmul.f32 %v9433, %v9799
  %v10042 = vmul.f32 %v9434, %v9799
  %v10043 = vmul.f32 %v9435, %v9804
  %v10044 = vmul.f32 %v9436, %v9804
  %v10045 = vmul.f32 %v9437, %v9804
  %v10046 = vmul.f32 %v9438, %v9804
  %v10047 = vmul.f32 %v9439, %v9804
  %v10048 = vmul.f32 %v9440, %v9804
  %v10049 = vmul.f32 %v9441, %v9804
  %v10050 = vmul.f32 %v9442, %v9804
  %v10051 = vmul.f32 %v9443, %v9804
  %v10052 = vmul.f32 %v9444, %v9804
  %v10053 = vmul.f32 %v9445, %v9804
  %v10054 = vmul.f32 %v9446, %v9804
  %v10055 = vmul.f32 %v9447, %v9804
  %v10056 = vmul.f32 %v9448, %v9804
  %v10057 = vmul.f32 %v9449, %v9804
  %v10058 = vmul.f32 %v9450, %v9804
  %v10059 = vmul.f32 %v9451, %v9804
  %v10060 = vmul.f32 %v9452, %v9804
  %v10061 = vmul.f32 %v9453, %v9804
  %v10062 = vmul.f32 %v9454, %v9804
  %v10063 = vmul.f32 %v9455, %v9804
  %v10064 = vmul.f32 %v9456, %v9804
  %v10065 = vmul.f32 %v9457, %v9804
  %v10066 = vmul.f32 %v9458, %v9804
  %v10067 = vmul.f32 %v9459, %v9804
  %v10068 = vmul.f32 %v9460, %v9804
  %v10069 = vmul.f32 %v9461, %v9804
  %v10070 = vmul.f32 %v9462, %v9804
  %v10071 = vmul.f32 %v9463, %v9804
  %v10072 = vmul.f32 %v9464, %v9804
  %v10073 = vmul.f32 %v9465, %v9804
  %v10074 = vmul.f32 %v9466, %v9804
  %v10075 = vmul.f32 %v9467, %v9809
  %v10076 = vmul.f32 %v9468, %v9809
  %v10077 = vmul.f32 %v9469, %v9809
  %v10078 = vmul.f32 %v9470, %v9809
  %v10079 = vmul.f32 %v9471, %v9809
  %v10080 = vmul.f32 %v9472, %v9809
  %v10081 = vmul.f32 %v9473, %v9809
  %v10082 = vmul.f32 %v9474, %v9809
  %v10083 = vmul.f32 %v9475, %v9809
  %v10084 = vmul.f32 %v9476, %v9809
  %v10085 = vmul.f32 %v9477, %v9809
  %v10086 = vmul.f32 %v9478, %v9809
  %v10087 = vmul.f32 %v9479, %v9809
  %v10088 = vmul.f32 %v9480, %v9809
  %v10089 = vmul.f32 %v9481, %v9809
  %v10090 = vmul.f32 %v9482, %v9809
  %v10091 = vmul.f32 %v9483, %v9809
  %v10092 = vmul.f32 %v9484, %v9809
  %v10093 = vmul.f32 %v9485, %v9809
  %v10094 = vmul.f32 %v9486, %v9809
  %v10095 = vmul.f32 %v9487, %v9809
  %v10096 = vmul.f32 %v9488, %v9809
  %v10097 = vmul.f32 %v9489, %v9809
  %v10098 = vmul.f32 %v9490, %v9809
  %v10099 = vmul.f32 %v9491, %v9809
  %v10100 = vmul.f32 %v9492, %v9809
  %v10101 = vmul.f32 %v9493, %v9809
  %v10102 = vmul.f32 %v9494, %v9809
  %v10103 = vmul.f32 %v9495, %v9809
  %v10104 = vmul.f32 %v9496, %v9809
  %v10105 = vmul.f32 %v9497, %v9809
  %v10106 = vmul.f32 %v9498, %v9809
  %v10107 = vmul.f32 %v9499, %v9814
  %v10108 = vmul.f32 %v9500, %v9814
  %v10109 = vmul.f32 %v9501, %v9814
  %v10110 = vmul.f32 %v9502, %v9814
  %v10111 = vmul.f32 %v9503, %v9814
  %v10112 = vmul.f32 %v9504, %v9814
  %v10113 = vmul.f32 %v9505, %v9814
  %v10114 = vmul.f32 %v9506, %v9814
  %v10115 = vmul.f32 %v9507, %v9814
  %v10116 = vmul.f32 %v9508, %v9814
  %v10117 = vmul.f32 %v9509, %v9814
  %v10118 = vmul.f32 %v9510, %v9814
  %v10119 = vmul.f32 %v9511, %v9814
  %v10120 = vmul.f32 %v9512, %v9814
  %v10121 = vmul.f32 %v9513, %v9814
  %v10122 = vmul.f32 %v9514, %v9814
  %v10123 = vmul.f32 %v9515, %v9814
  %v10124 = vmul.f32 %v9516, %v9814
  %v10125 = vmul.f32 %v9517, %v9814
  %v10126 = vmul.f32 %v9518, %v9814
  %v10127 = vmul.f32 %v9519, %v9814
  %v10128 = vmul.f32 %v9520, %v9814
  %v10129 = vmul.f32 %v9521, %v9814
  %v10130 = vmul.f32 %v9522, %v9814
  %v10131 = vmul.f32 %v9523, %v9814
  %v10132 = vmul.f32 %v9524, %v9814
  %v10133 = vmul.f32 %v9525, %v9814
  %v10134 = vmul.f32 %v9526, %v9814
  %v10135 = vmul.f32 %v9527, %v9814
  %v10136 = vmul.f32 %v9528, %v9814
  %v10137 = vmul.f32 %v9529, %v9814
  %v10138 = vmul.f32 %v9530, %v9814
  %v10139 = vmul.f32 %v9531, %v9819
  %v10140 = vmul.f32 %v9532, %v9819
  %v10141 = vmul.f32 %v9533, %v9819
  %v10142 = vmul.f32 %v9534, %v9819
  %v10143 = vmul.f32 %v9535, %v9819
  %v10144 = vmul.f32 %v9536, %v9819
  %v10145 = vmul.f32 %v9537, %v9819
  %v10146 = vmul.f32 %v9538, %v9819
  %v10147 = vmul.f32 %v9539, %v9819
  %v10148 = vmul.f32 %v9540, %v9819
  %v10149 = vmul.f32 %v9541, %v9819
  %v10150 = vmul.f32 %v9542, %v9819
  %v10151 = vmul.f32 %v9543, %v9819
  %v10152 = vmul.f32 %v9544, %v9819
  %v10153 = vmul.f32 %v9545, %v9819
  %v10154 = vmul.f32 %v9546, %v9819
  %v10155 = vmul.f32 %v9547, %v9819
  %v10156 = vmul.f32 %v9548, %v9819
  %v10157 = vmul.f32 %v9549, %v9819
  %v10158 = vmul.f32 %v9550, %v9819
  %v10159 = vmul.f32 %v9551, %v9819
  %v10160 = vmul.f32 %v9552, %v9819
  %v10161 = vmul.f32 %v9553, %v9819
  %v10162 = vmul.f32 %v9554, %v9819
  %v10163 = vmul.f32 %v9555, %v9819
  %v10164 = vmul.f32 %v9556, %v9819
  %v10165 = vmul.f32 %v9557, %v9819
  %v10166 = vmul.f32 %v9558, %v9819
  %v10167 = vmul.f32 %v9559, %v9819
  %v10168 = vmul.f32 %v9560, %v9819
  %v10169 = vmul.f32 %v9561, %v9819
  %v10170 = vmul.f32 %v9562, %v9819
  %v10171 = vmul.f32 %v9563, %v9824
  %v10172 = vmul.f32 %v9564, %v9824
  %v10173 = vmul.f32 %v9565, %v9824
  %v10174 = vmul.f32 %v9566, %v9824
  %v10175 = vmul.f32 %v9567, %v9824
  %v10176 = vmul.f32 %v9568, %v9824
  %v10177 = vmul.f32 %v9569, %v9824
  %v10178 = vmul.f32 %v9570, %v9824
  %v10179 = vmul.f32 %v9571, %v9824
  %v10180 = vmul.f32 %v9572, %v9824
  %v10181 = vmul.f32 %v9573, %v9824
  %v10182 = vmul.f32 %v9574, %v9824
  %v10183 = vmul.f32 %v9575, %v9824
  %v10184 = vmul.f32 %v9576, %v9824
  %v10185 = vmul.f32 %v9577, %v9824
  %v10186 = vmul.f32 %v9578, %v9824
  %v10187 = vmul.f32 %v9579, %v9824
  %v10188 = vmul.f32 %v9580, %v9824
  %v10189 = vmul.f32 %v9581, %v9824
  %v10190 = vmul.f32 %v9582, %v9824
  %v10191 = vmul.f32 %v9583, %v9824
  %v10192 = vmul.f32 %v9584, %v9824
  %v10193 = vmul.f32 %v9585, %v9824
  %v10194 = vmul.f32 %v9586, %v9824
  %v10195 = vmul.f32 %v9587, %v9824
  %v10196 = vmul.f32 %v9588, %v9824
  %v10197 = vmul.f32 %v9589, %v9824
  %v10198 = vmul.f32 %v9590, %v9824
  %v10199 = vmul.f32 %v9591, %v9824
  %v10200 = vmul.f32 %v9592, %v9824
  %v10201 = vmul.f32 %v9593, %v9824
  %v10202 = vmul.f32 %v9594, %v9824
  %v10203 = vmul.f32 %v9595, %v9829
  %v10204 = vmul.f32 %v9596, %v9829
  %v10205 = vmul.f32 %v9597, %v9829
  %v10206 = vmul.f32 %v9598, %v9829
  %v10207 = vmul.f32 %v9599, %v9829
  %v10208 = vmul.f32 %v9600, %v9829
  %v10209 = vmul.f32 %v9601, %v9829
  %v10210 = vmul.f32 %v9602, %v9829
  %v10211 = vmul.f32 %v9603, %v9829
  %v10212 = vmul.f32 %v9604, %v9829
  %v10213 = vmul.f32 %v9605, %v9829
  %v10214 = vmul.f32 %v9606, %v9829
  %v10215 = vmul.f32 %v9607, %v9829
  %v10216 = vmul.f32 %v9608, %v9829
  %v10217 = vmul.f32 %v9609, %v9829
  %v10218 = vmul.f32 %v9610, %v9829
  %v10219 = vmul.f32 %v9611, %v9829
  %v10220 = vmul.f32 %v9612, %v9829
  %v10221 = vmul.f32 %v9613, %v9829
  %v10222 = vmul.f32 %v9614, %v9829
  %v10223 = vmul.f32 %v9615, %v9829
  %v10224 = vmul.f32 %v9616, %v9829
  %v10225 = vmul.f32 %v9617, %v9829
  %v10226 = vmul.f32 %v9618, %v9829
  %v10227 = vmul.f32 %v9619, %v9829
  %v10228 = vmul.f32 %v9620, %v9829
  %v10229 = vmul.f32 %v9621, %v9829
  %v10230 = vmul.f32 %v9622, %v9829
  %v10231 = vmul.f32 %v9623, %v9829
  %v10232 = vmul.f32 %v9624, %v9829
  %v10233 = vmul.f32 %v9625, %v9829
  %v10234 = vmul.f32 %v9626, %v9829
  %v10235 = vmul.f32 %v9627, %v9834
  %v10236 = vmul.f32 %v9628, %v9834
  %v10237 = vmul.f32 %v9629, %v9834
  %v10238 = vmul.f32 %v9630, %v9834
  %v10239 = vmul.f32 %v9631, %v9834
  %v10240 = vmul.f32 %v9632, %v9834
  %v10241 = vmul.f32 %v9633, %v9834
  %v10242 = vmul.f32 %v9634, %v9834
  %v10243 = vmul.f32 %v9635, %v9834
  %v10244 = vmul.f32 %v9636, %v9834
  %v10245 = vmul.f32 %v9637, %v9834
  %v10246 = vmul.f32 %v9638, %v9834
  %v10247 = vmul.f32 %v9639, %v9834
  %v10248 = vmul.f32 %v9640, %v9834
  %v10249 = vmul.f32 %v9641, %v9834
  %v10250 = vmul.f32 %v9642, %v9834
  %v10251 = vmul.f32 %v9643, %v9834
  %v10252 = vmul.f32 %v9644, %v9834
  %v10253 = vmul.f32 %v9645, %v9834
  %v10254 = vmul.f32 %v9646, %v9834
  %v10255 = vmul.f32 %v9647, %v9834
  %v10256 = vmul.f32 %v9648, %v9834
  %v10257 = vmul.f32 %v9649, %v9834
  %v10258 = vmul.f32 %v9650, %v9834
  %v10259 = vmul.f32 %v9651, %v9834
  %v10260 = vmul.f32 %v9652, %v9834
  %v10261 = vmul.f32 %v9653, %v9834
  %v10262 = vmul.f32 %v9654, %v9834
  %v10263 = vmul.f32 %v9655, %v9834
  %v10264 = vmul.f32 %v9656, %v9834
  %v10265 = vmul.f32 %v9657, %v9834
  %v10266 = vmul.f32 %v9658, %v9834
  %v10267 = vmul.f32 %v9659, %v9839
  %v10268 = vmul.f32 %v9660, %v9839
  %v10269 = vmul.f32 %v9661, %v9839
  %v10270 = vmul.f32 %v9662, %v9839
  %v10271 = vmul.f32 %v9663, %v9839
  %v10272 = vmul.f32 %v9664, %v9839
  %v10273 = vmul.f32 %v9665, %v9839
  %v10274 = vmul.f32 %v9666, %v9839
  %v10275 = vmul.f32 %v9667, %v9839
  %v10276 = vmul.f32 %v9668, %v9839
  %v10277 = vmul.f32 %v9669, %v9839
  %v10278 = vmul.f32 %v9670, %v9839
  %v10279 = vmul.f32 %v9671, %v9839
  %v10280 = vmul.f32 %v9672, %v9839
  %v10281 = vmul.f32 %v9673, %v9839
  %v10282 = vmul.f32 %v9674, %v9839
  %v10283 = vmul.f32 %v9675, %v9839
  %v10284 = vmul.f32 %v9676, %v9839
  %v10285 = vmul.f32 %v9677, %v9839
  %v10286 = vmul.f32 %v9678, %v9839
  %v10287 = vmul.f32 %v9679, %v9839
  %v10288 = vmul.f32 %v9680, %v9839
  %v10289 = vmul.f32 %v9681, %v9839
  %v10290 = vmul.f32 %v9682, %v9839
  %v10291 = vmul.f32 %v9683, %v9839
  %v10292 = vmul.f32 %v9684, %v9839
  %v10293 = vmul.f32 %v9685, %v9839
  %v10294 = vmul.f32 %v9686, %v9839
  %v10295 = vmul.f32 %v9687, %v9839
  %v10296 = vmul.f32 %v9688, %v9839
  %v10297 = vmul.f32 %v9689, %v9839
  %v10298 = vmul.f32 %v9690, %v9839
  %v10299 = vmul.f32 %v9691, %v9844
  %v10300 = vmul.f32 %v9692, %v9844
  %v10301 = vmul.f32 %v9693, %v9844
  %v10302 = vmul.f32 %v9694, %v9844
  %v10303 = vmul.f32 %v9695, %v9844
  %v10304 = vmul.f32 %v9696, %v9844
  %v10305 = vmul.f32 %v9697, %v9844
  %v10306 = vmul.f32 %v9698, %v9844
  %v10307 = vmul.f32 %v9699, %v9844
  %v10308 = vmul.f32 %v9700, %v9844
  %v10309 = vmul.f32 %v9701, %v9844
  %v10310 = vmul.f32 %v9702, %v9844
  %v10311 = vmul.f32 %v9703, %v9844
  %v10312 = vmul.f32 %v9704, %v9844
  %v10313 = vmul.f32 %v9705, %v9844
  %v10314 = vmul.f32 %v9706, %v9844
  %v10315 = vmul.f32 %v9707, %v9844
  %v10316 = vmul.f32 %v9708, %v9844
  %v10317 = vmul.f32 %v9709, %v9844
  %v10318 = vmul.f32 %v9710, %v9844
  %v10319 = vmul.f32 %v9711, %v9844
  %v10320 = vmul.f32 %v9712, %v9844
  %v10321 = vmul.f32 %v9713, %v9844
  %v10322 = vmul.f32 %v9714, %v9844
  %v10323 = vmul.f32 %v9715, %v9844
  %v10324 = vmul.f32 %v9716, %v9844
  %v10325 = vmul.f32 %v9717, %v9844
  %v10326 = vmul.f32 %v9718, %v9844
  %v10327 = vmul.f32 %v9719, %v9844
  %v10328 = vmul.f32 %v9720, %v9844
  %v10329 = vmul.f32 %v9721, %v9844
  %v10330 = vmul.f32 %v9722, %v9844
  %v10331 = vmul.f32 %v9723, %v9849
  %v10332 = vmul.f32 %v9724, %v9849
  %v10333 = vmul.f32 %v9725, %v9849
  %v10334 = vmul.f32 %v9726, %v9849
  %v10335 = vmul.f32 %v9727, %v9849
  %v10336 = vmul.f32 %v9728, %v9849
  %v10337 = vmul.f32 %v9729, %v9849
  %v10338 = vmul.f32 %v9730, %v9849
  %v10339 = vmul.f32 %v9731, %v9849
  %v10340 = vmul.f32 %v9732, %v9849
  %v10341 = vmul.f32 %v9733, %v9849
  %v10342 = vmul.f32 %v9734, %v9849
  %v10343 = vmul.f32 %v9735, %v9849
  %v10344 = vmul.f32 %v9736, %v9849
  %v10345 = vmul.f32 %v9737, %v9849
  %v10346 = vmul.f32 %v9738, %v9849
  %v10347 = vmul.f32 %v9739, %v9849
  %v10348 = vmul.f32 %v9740, %v9849
  %v10349 = vmul.f32 %v9741, %v9849
  %v10350 = vmul.f32 %v9742, %v9849
  %v10351 = vmul.f32 %v9743, %v9849
  %v10352 = vmul.f32 %v9744, %v9849
  %v10353 = vmul.f32 %v9745, %v9849
  %v10354 = vmul.f32 %v9746, %v9849
  %v10355 = vmul.f32 %v9747, %v9849
  %v10356 = vmul.f32 %v9748, %v9849
  %v10357 = vmul.f32 %v9749, %v9849
  %v10358 = vmul.f32 %v9750, %v9849
  %v10359 = vmul.f32 %v9751, %v9849
  %v10360 = vmul.f32 %v9752, %v9849
  %v10361 = vmul.f32 %v9753, %v9849
  %v10362 = vmul.f32 %v9754, %v9849
  %v10363 = vadd.f32 %v9851, %v9883
  %v10364 = vadd.f32 %v10363, %v9915
  %v10365 = vadd.f32 %v10364, %v9947
  %v10366 = vadd.f32 %v10365, %v9979
  %v10367 = vadd.f32 %v10366, %v10011
  %v10368 = vadd.f32 %v10367, %v10043
  %v10369 = vadd.f32 %v10368, %v10075
  %v10370 = vadd.f32 %v10369, %v10107
  %v10371 = vadd.f32 %v10370, %v10139
  %v10372 = vadd.f32 %v10371, %v10171
  %v10373 = vadd.f32 %v10372, %v10203
  %v10374 = vadd.f32 %v10373, %v10235
  %v10375 = vadd.f32 %v10374, %v10267
  %v10376 = vadd.f32 %v10375, %v10299
  %v10377 = vadd.f32 %v10376, %v10331
  %v10378 = vrot.slane %v10377, 4
  %v10379 = vadd.f32 %v10377, %v10378
  %v10380 = vrot.slane %v10379, 2
  %v10381 = vadd.f32 %v10379, %v10380
  %v10382 = vrot.slane %v10381, 1
  %v10383 = vadd.f32 %v10381, %v10382
  %v10384 = vadd.f32 %v9852, %v9884
  %v10385 = vadd.f32 %v10384, %v9916
  %v10386 = vadd.f32 %v10385, %v9948
  %v10387 = vadd.f32 %v10386, %v9980
  %v10388 = vadd.f32 %v10387, %v10012
  %v10389 = vadd.f32 %v10388, %v10044
  %v10390 = vadd.f32 %v10389, %v10076
  %v10391 = vadd.f32 %v10390, %v10108
  %v10392 = vadd.f32 %v10391, %v10140
  %v10393 = vadd.f32 %v10392, %v10172
  %v10394 = vadd.f32 %v10393, %v10204
  %v10395 = vadd.f32 %v10394, %v10236
  %v10396 = vadd.f32 %v10395, %v10268
  %v10397 = vadd.f32 %v10396, %v10300
  %v10398 = vadd.f32 %v10397, %v10332
  %v10399 = vrot.slane %v10398, 4
  %v10400 = vadd.f32 %v10398, %v10399
  %v10401 = vrot.slane %v10400, 2
  %v10402 = vadd.f32 %v10400, %v10401
  %v10403 = vrot.slane %v10402, 1
  %v10404 = vadd.f32 %v10402, %v10403
  %v10405 = vadd.f32 %v9853, %v9885
  %v10406 = vadd.f32 %v10405, %v9917
  %v10407 = vadd.f32 %v10406, %v9949
  %v10408 = vadd.f32 %v10407, %v9981
  %v10409 = vadd.f32 %v10408, %v10013
  %v10410 = vadd.f32 %v10409, %v10045
  %v10411 = vadd.f32 %v10410, %v10077
  %v10412 = vadd.f32 %v10411, %v10109
  %v10413 = vadd.f32 %v10412, %v10141
  %v10414 = vadd.f32 %v10413, %v10173
  %v10415 = vadd.f32 %v10414, %v10205
  %v10416 = vadd.f32 %v10415, %v10237
  %v10417 = vadd.f32 %v10416, %v10269
  %v10418 = vadd.f32 %v10417, %v10301
  %v10419 = vadd.f32 %v10418, %v10333
  %v10420 = vrot.slane %v10419, 4
  %v10421 = vadd.f32 %v10419, %v10420
  %v10422 = vrot.slane %v10421, 2
  %v10423 = vadd.f32 %v10421, %v10422
  %v10424 = vrot.slane %v10423, 1
  %v10425 = vadd.f32 %v10423, %v10424
  %v10426 = vadd.f32 %v9854, %v9886
  %v10427 = vadd.f32 %v10426, %v9918
  %v10428 = vadd.f32 %v10427, %v9950
  %v10429 = vadd.f32 %v10428, %v9982
  %v10430 = vadd.f32 %v10429, %v10014
  %v10431 = vadd.f32 %v10430, %v10046
  %v10432 = vadd.f32 %v10431, %v10078
  %v10433 = vadd.f32 %v10432, %v10110
  %v10434 = vadd.f32 %v10433, %v10142
  %v10435 = vadd.f32 %v10434, %v10174
  %v10436 = vadd.f32 %v10435, %v10206
  %v10437 = vadd.f32 %v10436, %v10238
  %v10438 = vadd.f32 %v10437, %v10270
  %v10439 = vadd.f32 %v10438, %v10302
  %v10440 = vadd.f32 %v10439, %v10334
  %v10441 = vrot.slane %v10440, 4
  %v10442 = vadd.f32 %v10440, %v10441
  %v10443 = vrot.slane %v10442, 2
  %v10444 = vadd.f32 %v10442, %v10443
  %v10445 = vrot.slane %v10444, 1
  %v10446 = vadd.f32 %v10444, %v10445
  %v10447 = vadd.f32 %v9855, %v9887
  %v10448 = vadd.f32 %v10447, %v9919
  %v10449 = vadd.f32 %v10448, %v9951
  %v10450 = vadd.f32 %v10449, %v9983
  %v10451 = vadd.f32 %v10450, %v10015
  %v10452 = vadd.f32 %v10451, %v10047
  %v10453 = vadd.f32 %v10452, %v10079
  %v10454 = vadd.f32 %v10453, %v10111
  %v10455 = vadd.f32 %v10454, %v10143
  %v10456 = vadd.f32 %v10455, %v10175
  %v10457 = vadd.f32 %v10456, %v10207
  %v10458 = vadd.f32 %v10457, %v10239
  %v10459 = vadd.f32 %v10458, %v10271
  %v10460 = vadd.f32 %v10459, %v10303
  %v10461 = vadd.f32 %v10460, %v10335
  %v10462 = vrot.slane %v10461, 4
  %v10463 = vadd.f32 %v10461, %v10462
  %v10464 = vrot.slane %v10463, 2
  %v10465 = vadd.f32 %v10463, %v10464
  %v10466 = vrot.slane %v10465, 1
  %v10467 = vadd.f32 %v10465, %v10466
  %v10468 = vadd.f32 %v9856, %v9888
  %v10469 = vadd.f32 %v10468, %v9920
  %v10470 = vadd.f32 %v10469, %v9952
  %v10471 = vadd.f32 %v10470, %v9984
  %v10472 = vadd.f32 %v10471, %v10016
  %v10473 = vadd.f32 %v10472, %v10048
  %v10474 = vadd.f32 %v10473, %v10080
  %v10475 = vadd.f32 %v10474, %v10112
  %v10476 = vadd.f32 %v10475, %v10144
  %v10477 = vadd.f32 %v10476, %v10176
  %v10478 = vadd.f32 %v10477, %v10208
  %v10479 = vadd.f32 %v10478, %v10240
  %v10480 = vadd.f32 %v10479, %v10272
  %v10481 = vadd.f32 %v10480, %v10304
  %v10482 = vadd.f32 %v10481, %v10336
  %v10483 = vrot.slane %v10482, 4
  %v10484 = vadd.f32 %v10482, %v10483
  %v10485 = vrot.slane %v10484, 2
  %v10486 = vadd.f32 %v10484, %v10485
  %v10487 = vrot.slane %v10486, 1
  %v10488 = vadd.f32 %v10486, %v10487
  %v10489 = vadd.f32 %v9857, %v9889
  %v10490 = vadd.f32 %v10489, %v9921
  %v10491 = vadd.f32 %v10490, %v9953
  %v10492 = vadd.f32 %v10491, %v9985
  %v10493 = vadd.f32 %v10492, %v10017
  %v10494 = vadd.f32 %v10493, %v10049
  %v10495 = vadd.f32 %v10494, %v10081
  %v10496 = vadd.f32 %v10495, %v10113
  %v10497 = vadd.f32 %v10496, %v10145
  %v10498 = vadd.f32 %v10497, %v10177
  %v10499 = vadd.f32 %v10498, %v10209
  %v10500 = vadd.f32 %v10499, %v10241
  %v10501 = vadd.f32 %v10500, %v10273
  %v10502 = vadd.f32 %v10501, %v10305
  %v10503 = vadd.f32 %v10502, %v10337
  %v10504 = vrot.slane %v10503, 4
  %v10505 = vadd.f32 %v10503, %v10504
  %v10506 = vrot.slane %v10505, 2
  %v10507 = vadd.f32 %v10505, %v10506
  %v10508 = vrot.slane %v10507, 1
  %v10509 = vadd.f32 %v10507, %v10508
  %v10510 = vadd.f32 %v9858, %v9890
  %v10511 = vadd.f32 %v10510, %v9922
  %v10512 = vadd.f32 %v10511, %v9954
  %v10513 = vadd.f32 %v10512, %v9986
  %v10514 = vadd.f32 %v10513, %v10018
  %v10515 = vadd.f32 %v10514, %v10050
  %v10516 = vadd.f32 %v10515, %v10082
  %v10517 = vadd.f32 %v10516, %v10114
  %v10518 = vadd.f32 %v10517, %v10146
  %v10519 = vadd.f32 %v10518, %v10178
  %v10520 = vadd.f32 %v10519, %v10210
  %v10521 = vadd.f32 %v10520, %v10242
  %v10522 = vadd.f32 %v10521, %v10274
  %v10523 = vadd.f32 %v10522, %v10306
  %v10524 = vadd.f32 %v10523, %v10338
  %v10525 = vrot.slane %v10524, 4
  %v10526 = vadd.f32 %v10524, %v10525
  %v10527 = vrot.slane %v10526, 2
  %v10528 = vadd.f32 %v10526, %v10527
  %v10529 = vrot.slane %v10528, 1
  %v10530 = vadd.f32 %v10528, %v10529
  %v10531 = vadd.f32 %v9859, %v9891
  %v10532 = vadd.f32 %v10531, %v9923
  %v10533 = vadd.f32 %v10532, %v9955
  %v10534 = vadd.f32 %v10533, %v9987
  %v10535 = vadd.f32 %v10534, %v10019
  %v10536 = vadd.f32 %v10535, %v10051
  %v10537 = vadd.f32 %v10536, %v10083
  %v10538 = vadd.f32 %v10537, %v10115
  %v10539 = vadd.f32 %v10538, %v10147
  %v10540 = vadd.f32 %v10539, %v10179
  %v10541 = vadd.f32 %v10540, %v10211
  %v10542 = vadd.f32 %v10541, %v10243
  %v10543 = vadd.f32 %v10542, %v10275
  %v10544 = vadd.f32 %v10543, %v10307
  %v10545 = vadd.f32 %v10544, %v10339
  %v10546 = vrot.slane %v10545, 4
  %v10547 = vadd.f32 %v10545, %v10546
  %v10548 = vrot.slane %v10547, 2
  %v10549 = vadd.f32 %v10547, %v10548
  %v10550 = vrot.slane %v10549, 1
  %v10551 = vadd.f32 %v10549, %v10550
  %v10552 = vadd.f32 %v9860, %v9892
  %v10553 = vadd.f32 %v10552, %v9924
  %v10554 = vadd.f32 %v10553, %v9956
  %v10555 = vadd.f32 %v10554, %v9988
  %v10556 = vadd.f32 %v10555, %v10020
  %v10557 = vadd.f32 %v10556, %v10052
  %v10558 = vadd.f32 %v10557, %v10084
  %v10559 = vadd.f32 %v10558, %v10116
  %v10560 = vadd.f32 %v10559, %v10148
  %v10561 = vadd.f32 %v10560, %v10180
  %v10562 = vadd.f32 %v10561, %v10212
  %v10563 = vadd.f32 %v10562, %v10244
  %v10564 = vadd.f32 %v10563, %v10276
  %v10565 = vadd.f32 %v10564, %v10308
  %v10566 = vadd.f32 %v10565, %v10340
  %v10567 = vrot.slane %v10566, 4
  %v10568 = vadd.f32 %v10566, %v10567
  %v10569 = vrot.slane %v10568, 2
  %v10570 = vadd.f32 %v10568, %v10569
  %v10571 = vrot.slane %v10570, 1
  %v10572 = vadd.f32 %v10570, %v10571
  %v10573 = vadd.f32 %v9861, %v9893
  %v10574 = vadd.f32 %v10573, %v9925
  %v10575 = vadd.f32 %v10574, %v9957
  %v10576 = vadd.f32 %v10575, %v9989
  %v10577 = vadd.f32 %v10576, %v10021
  %v10578 = vadd.f32 %v10577, %v10053
  %v10579 = vadd.f32 %v10578, %v10085
  %v10580 = vadd.f32 %v10579, %v10117
  %v10581 = vadd.f32 %v10580, %v10149
  %v10582 = vadd.f32 %v10581, %v10181
  %v10583 = vadd.f32 %v10582, %v10213
  %v10584 = vadd.f32 %v10583, %v10245
  %v10585 = vadd.f32 %v10584, %v10277
  %v10586 = vadd.f32 %v10585, %v10309
  %v10587 = vadd.f32 %v10586, %v10341
  %v10588 = vrot.slane %v10587, 4
  %v10589 = vadd.f32 %v10587, %v10588
  %v10590 = vrot.slane %v10589, 2
  %v10591 = vadd.f32 %v10589, %v10590
  %v10592 = vrot.slane %v10591, 1
  %v10593 = vadd.f32 %v10591, %v10592
  %v10594 = vadd.f32 %v9862, %v9894
  %v10595 = vadd.f32 %v10594, %v9926
  %v10596 = vadd.f32 %v10595, %v9958
  %v10597 = vadd.f32 %v10596, %v9990
  %v10598 = vadd.f32 %v10597, %v10022
  %v10599 = vadd.f32 %v10598, %v10054
  %v10600 = vadd.f32 %v10599, %v10086
  %v10601 = vadd.f32 %v10600, %v10118
  %v10602 = vadd.f32 %v10601, %v10150
  %v10603 = vadd.f32 %v10602, %v10182
  %v10604 = vadd.f32 %v10603, %v10214
  %v10605 = vadd.f32 %v10604, %v10246
  %v10606 = vadd.f32 %v10605, %v10278
  %v10607 = vadd.f32 %v10606, %v10310
  %v10608 = vadd.f32 %v10607, %v10342
  %v10609 = vrot.slane %v10608, 4
  %v10610 = vadd.f32 %v10608, %v10609
  %v10611 = vrot.slane %v10610, 2
  %v10612 = vadd.f32 %v10610, %v10611
  %v10613 = vrot.slane %v10612, 1
  %v10614 = vadd.f32 %v10612, %v10613
  %v10615 = vadd.f32 %v9863, %v9895
  %v10616 = vadd.f32 %v10615, %v9927
  %v10617 = vadd.f32 %v10616, %v9959
  %v10618 = vadd.f32 %v10617, %v9991
  %v10619 = vadd.f32 %v10618, %v10023
  %v10620 = vadd.f32 %v10619, %v10055
  %v10621 = vadd.f32 %v10620, %v10087
  %v10622 = vadd.f32 %v10621, %v10119
  %v10623 = vadd.f32 %v10622, %v10151
  %v10624 = vadd.f32 %v10623, %v10183
  %v10625 = vadd.f32 %v10624, %v10215
  %v10626 = vadd.f32 %v10625, %v10247
  %v10627 = vadd.f32 %v10626, %v10279
  %v10628 = vadd.f32 %v10627, %v10311
  %v10629 = vadd.f32 %v10628, %v10343
  %v10630 = vrot.slane %v10629, 4
  %v10631 = vadd.f32 %v10629, %v10630
  %v10632 = vrot.slane %v10631, 2
  %v10633 = vadd.f32 %v10631, %v10632
  %v10634 = vrot.slane %v10633, 1
  %v10635 = vadd.f32 %v10633, %v10634
  %v10636 = vadd.f32 %v9864, %v9896
  %v10637 = vadd.f32 %v10636, %v9928
  %v10638 = vadd.f32 %v10637, %v9960
  %v10639 = vadd.f32 %v10638, %v9992
  %v10640 = vadd.f32 %v10639, %v10024
  %v10641 = vadd.f32 %v10640, %v10056
  %v10642 = vadd.f32 %v10641, %v10088
  %v10643 = vadd.f32 %v10642, %v10120
  %v10644 = vadd.f32 %v10643, %v10152
  %v10645 = vadd.f32 %v10644, %v10184
  %v10646 = vadd.f32 %v10645, %v10216
  %v10647 = vadd.f32 %v10646, %v10248
  %v10648 = vadd.f32 %v10647, %v10280
  %v10649 = vadd.f32 %v10648, %v10312
  %v10650 = vadd.f32 %v10649, %v10344
  %v10651 = vrot.slane %v10650, 4
  %v10652 = vadd.f32 %v10650, %v10651
  %v10653 = vrot.slane %v10652, 2
  %v10654 = vadd.f32 %v10652, %v10653
  %v10655 = vrot.slane %v10654, 1
  %v10656 = vadd.f32 %v10654, %v10655
  %v10657 = vadd.f32 %v9865, %v9897
  %v10658 = vadd.f32 %v10657, %v9929
  %v10659 = vadd.f32 %v10658, %v9961
  %v10660 = vadd.f32 %v10659, %v9993
  %v10661 = vadd.f32 %v10660, %v10025
  %v10662 = vadd.f32 %v10661, %v10057
  %v10663 = vadd.f32 %v10662, %v10089
  %v10664 = vadd.f32 %v10663, %v10121
  %v10665 = vadd.f32 %v10664, %v10153
  %v10666 = vadd.f32 %v10665, %v10185
  %v10667 = vadd.f32 %v10666, %v10217
  %v10668 = vadd.f32 %v10667, %v10249
  %v10669 = vadd.f32 %v10668, %v10281
  %v10670 = vadd.f32 %v10669, %v10313
  %v10671 = vadd.f32 %v10670, %v10345
  %v10672 = vrot.slane %v10671, 4
  %v10673 = vadd.f32 %v10671, %v10672
  %v10674 = vrot.slane %v10673, 2
  %v10675 = vadd.f32 %v10673, %v10674
  %v10676 = vrot.slane %v10675, 1
  %v10677 = vadd.f32 %v10675, %v10676
  %v10678 = vadd.f32 %v9866, %v9898
  %v10679 = vadd.f32 %v10678, %v9930
  %v10680 = vadd.f32 %v10679, %v9962
  %v10681 = vadd.f32 %v10680, %v9994
  %v10682 = vadd.f32 %v10681, %v10026
  %v10683 = vadd.f32 %v10682, %v10058
  %v10684 = vadd.f32 %v10683, %v10090
  %v10685 = vadd.f32 %v10684, %v10122
  %v10686 = vadd.f32 %v10685, %v10154
  %v10687 = vadd.f32 %v10686, %v10186
  %v10688 = vadd.f32 %v10687, %v10218
  %v10689 = vadd.f32 %v10688, %v10250
  %v10690 = vadd.f32 %v10689, %v10282
  %v10691 = vadd.f32 %v10690, %v10314
  %v10692 = vadd.f32 %v10691, %v10346
  %v10693 = vrot.slane %v10692, 4
  %v10694 = vadd.f32 %v10692, %v10693
  %v10695 = vrot.slane %v10694, 2
  %v10696 = vadd.f32 %v10694, %v10695
  %v10697 = vrot.slane %v10696, 1
  %v10698 = vadd.f32 %v10696, %v10697
  %v10699 = vadd.f32 %v9867, %v9899
  %v10700 = vadd.f32 %v10699, %v9931
  %v10701 = vadd.f32 %v10700, %v9963
  %v10702 = vadd.f32 %v10701, %v9995
  %v10703 = vadd.f32 %v10702, %v10027
  %v10704 = vadd.f32 %v10703, %v10059
  %v10705 = vadd.f32 %v10704, %v10091
  %v10706 = vadd.f32 %v10705, %v10123
  %v10707 = vadd.f32 %v10706, %v10155
  %v10708 = vadd.f32 %v10707, %v10187
  %v10709 = vadd.f32 %v10708, %v10219
  %v10710 = vadd.f32 %v10709, %v10251
  %v10711 = vadd.f32 %v10710, %v10283
  %v10712 = vadd.f32 %v10711, %v10315
  %v10713 = vadd.f32 %v10712, %v10347
  %v10714 = vrot.slane %v10713, 4
  %v10715 = vadd.f32 %v10713, %v10714
  %v10716 = vrot.slane %v10715, 2
  %v10717 = vadd.f32 %v10715, %v10716
  %v10718 = vrot.slane %v10717, 1
  %v10719 = vadd.f32 %v10717, %v10718
  %v10720 = vadd.f32 %v9868, %v9900
  %v10721 = vadd.f32 %v10720, %v9932
  %v10722 = vadd.f32 %v10721, %v9964
  %v10723 = vadd.f32 %v10722, %v9996
  %v10724 = vadd.f32 %v10723, %v10028
  %v10725 = vadd.f32 %v10724, %v10060
  %v10726 = vadd.f32 %v10725, %v10092
  %v10727 = vadd.f32 %v10726, %v10124
  %v10728 = vadd.f32 %v10727, %v10156
  %v10729 = vadd.f32 %v10728, %v10188
  %v10730 = vadd.f32 %v10729, %v10220
  %v10731 = vadd.f32 %v10730, %v10252
  %v10732 = vadd.f32 %v10731, %v10284
  %v10733 = vadd.f32 %v10732, %v10316
  %v10734 = vadd.f32 %v10733, %v10348
  %v10735 = vrot.slane %v10734, 4
  %v10736 = vadd.f32 %v10734, %v10735
  %v10737 = vrot.slane %v10736, 2
  %v10738 = vadd.f32 %v10736, %v10737
  %v10739 = vrot.slane %v10738, 1
  %v10740 = vadd.f32 %v10738, %v10739
  %v10741 = vadd.f32 %v9869, %v9901
  %v10742 = vadd.f32 %v10741, %v9933
  %v10743 = vadd.f32 %v10742, %v9965
  %v10744 = vadd.f32 %v10743, %v9997
  %v10745 = vadd.f32 %v10744, %v10029
  %v10746 = vadd.f32 %v10745, %v10061
  %v10747 = vadd.f32 %v10746, %v10093
  %v10748 = vadd.f32 %v10747, %v10125
  %v10749 = vadd.f32 %v10748, %v10157
  %v10750 = vadd.f32 %v10749, %v10189
  %v10751 = vadd.f32 %v10750, %v10221
  %v10752 = vadd.f32 %v10751, %v10253
  %v10753 = vadd.f32 %v10752, %v10285
  %v10754 = vadd.f32 %v10753, %v10317
  %v10755 = vadd.f32 %v10754, %v10349
  %v10756 = vrot.slane %v10755, 4
  %v10757 = vadd.f32 %v10755, %v10756
  %v10758 = vrot.slane %v10757, 2
  %v10759 = vadd.f32 %v10757, %v10758
  %v10760 = vrot.slane %v10759, 1
  %v10761 = vadd.f32 %v10759, %v10760
  %v10762 = vadd.f32 %v9870, %v9902
  %v10763 = vadd.f32 %v10762, %v9934
  %v10764 = vadd.f32 %v10763, %v9966
  %v10765 = vadd.f32 %v10764, %v9998
  %v10766 = vadd.f32 %v10765, %v10030
  %v10767 = vadd.f32 %v10766, %v10062
  %v10768 = vadd.f32 %v10767, %v10094
  %v10769 = vadd.f32 %v10768, %v10126
  %v10770 = vadd.f32 %v10769, %v10158
  %v10771 = vadd.f32 %v10770, %v10190
  %v10772 = vadd.f32 %v10771, %v10222
  %v10773 = vadd.f32 %v10772, %v10254
  %v10774 = vadd.f32 %v10773, %v10286
  %v10775 = vadd.f32 %v10774, %v10318
  %v10776 = vadd.f32 %v10775, %v10350
  %v10777 = vrot.slane %v10776, 4
  %v10778 = vadd.f32 %v10776, %v10777
  %v10779 = vrot.slane %v10778, 2
  %v10780 = vadd.f32 %v10778, %v10779
  %v10781 = vrot.slane %v10780, 1
  %v10782 = vadd.f32 %v10780, %v10781
  %v10783 = vadd.f32 %v9871, %v9903
  %v10784 = vadd.f32 %v10783, %v9935
  %v10785 = vadd.f32 %v10784, %v9967
  %v10786 = vadd.f32 %v10785, %v9999
  %v10787 = vadd.f32 %v10786, %v10031
  %v10788 = vadd.f32 %v10787, %v10063
  %v10789 = vadd.f32 %v10788, %v10095
  %v10790 = vadd.f32 %v10789, %v10127
  %v10791 = vadd.f32 %v10790, %v10159
  %v10792 = vadd.f32 %v10791, %v10191
  %v10793 = vadd.f32 %v10792, %v10223
  %v10794 = vadd.f32 %v10793, %v10255
  %v10795 = vadd.f32 %v10794, %v10287
  %v10796 = vadd.f32 %v10795, %v10319
  %v10797 = vadd.f32 %v10796, %v10351
  %v10798 = vrot.slane %v10797, 4
  %v10799 = vadd.f32 %v10797, %v10798
  %v10800 = vrot.slane %v10799, 2
  %v10801 = vadd.f32 %v10799, %v10800
  %v10802 = vrot.slane %v10801, 1
  %v10803 = vadd.f32 %v10801, %v10802
  %v10804 = vadd.f32 %v9872, %v9904
  %v10805 = vadd.f32 %v10804, %v9936
  %v10806 = vadd.f32 %v10805, %v9968
  %v10807 = vadd.f32 %v10806, %v10000
  %v10808 = vadd.f32 %v10807, %v10032
  %v10809 = vadd.f32 %v10808, %v10064
  %v10810 = vadd.f32 %v10809, %v10096
  %v10811 = vadd.f32 %v10810, %v10128
  %v10812 = vadd.f32 %v10811, %v10160
  %v10813 = vadd.f32 %v10812, %v10192
  %v10814 = vadd.f32 %v10813, %v10224
  %v10815 = vadd.f32 %v10814, %v10256
  %v10816 = vadd.f32 %v10815, %v10288
  %v10817 = vadd.f32 %v10816, %v10320
  %v10818 = vadd.f32 %v10817, %v10352
  %v10819 = vrot.slane %v10818, 4
  %v10820 = vadd.f32 %v10818, %v10819
  %v10821 = vrot.slane %v10820, 2
  %v10822 = vadd.f32 %v10820, %v10821
  %v10823 = vrot.slane %v10822, 1
  %v10824 = vadd.f32 %v10822, %v10823
  %v10825 = vadd.f32 %v9873, %v9905
  %v10826 = vadd.f32 %v10825, %v9937
  %v10827 = vadd.f32 %v10826, %v9969
  %v10828 = vadd.f32 %v10827, %v10001
  %v10829 = vadd.f32 %v10828, %v10033
  %v10830 = vadd.f32 %v10829, %v10065
  %v10831 = vadd.f32 %v10830, %v10097
  %v10832 = vadd.f32 %v10831, %v10129
  %v10833 = vadd.f32 %v10832, %v10161
  %v10834 = vadd.f32 %v10833, %v10193
  %v10835 = vadd.f32 %v10834, %v10225
  %v10836 = vadd.f32 %v10835, %v10257
  %v10837 = vadd.f32 %v10836, %v10289
  %v10838 = vadd.f32 %v10837, %v10321
  %v10839 = vadd.f32 %v10838, %v10353
  %v10840 = vrot.slane %v10839, 4
  %v10841 = vadd.f32 %v10839, %v10840
  %v10842 = vrot.slane %v10841, 2
  %v10843 = vadd.f32 %v10841, %v10842
  %v10844 = vrot.slane %v10843, 1
  %v10845 = vadd.f32 %v10843, %v10844
  %v10846 = vadd.f32 %v9874, %v9906
  %v10847 = vadd.f32 %v10846, %v9938
  %v10848 = vadd.f32 %v10847, %v9970
  %v10849 = vadd.f32 %v10848, %v10002
  %v10850 = vadd.f32 %v10849, %v10034
  %v10851 = vadd.f32 %v10850, %v10066
  %v10852 = vadd.f32 %v10851, %v10098
  %v10853 = vadd.f32 %v10852, %v10130
  %v10854 = vadd.f32 %v10853, %v10162
  %v10855 = vadd.f32 %v10854, %v10194
  %v10856 = vadd.f32 %v10855, %v10226
  %v10857 = vadd.f32 %v10856, %v10258
  %v10858 = vadd.f32 %v10857, %v10290
  %v10859 = vadd.f32 %v10858, %v10322
  %v10860 = vadd.f32 %v10859, %v10354
  %v10861 = vrot.slane %v10860, 4
  %v10862 = vadd.f32 %v10860, %v10861
  %v10863 = vrot.slane %v10862, 2
  %v10864 = vadd.f32 %v10862, %v10863
  %v10865 = vrot.slane %v10864, 1
  %v10866 = vadd.f32 %v10864, %v10865
  %v10867 = vadd.f32 %v9875, %v9907
  %v10868 = vadd.f32 %v10867, %v9939
  %v10869 = vadd.f32 %v10868, %v9971
  %v10870 = vadd.f32 %v10869, %v10003
  %v10871 = vadd.f32 %v10870, %v10035
  %v10872 = vadd.f32 %v10871, %v10067
  %v10873 = vadd.f32 %v10872, %v10099
  %v10874 = vadd.f32 %v10873, %v10131
  %v10875 = vadd.f32 %v10874, %v10163
  %v10876 = vadd.f32 %v10875, %v10195
  %v10877 = vadd.f32 %v10876, %v10227
  %v10878 = vadd.f32 %v10877, %v10259
  %v10879 = vadd.f32 %v10878, %v10291
  %v10880 = vadd.f32 %v10879, %v10323
  %v10881 = vadd.f32 %v10880, %v10355
  %v10882 = vrot.slane %v10881, 4
  %v10883 = vadd.f32 %v10881, %v10882
  %v10884 = vrot.slane %v10883, 2
  %v10885 = vadd.f32 %v10883, %v10884
  %v10886 = vrot.slane %v10885, 1
  %v10887 = vadd.f32 %v10885, %v10886
  %v10888 = vadd.f32 %v9876, %v9908
  %v10889 = vadd.f32 %v10888, %v9940
  %v10890 = vadd.f32 %v10889, %v9972
  %v10891 = vadd.f32 %v10890, %v10004
  %v10892 = vadd.f32 %v10891, %v10036
  %v10893 = vadd.f32 %v10892, %v10068
  %v10894 = vadd.f32 %v10893, %v10100
  %v10895 = vadd.f32 %v10894, %v10132
  %v10896 = vadd.f32 %v10895, %v10164
  %v10897 = vadd.f32 %v10896, %v10196
  %v10898 = vadd.f32 %v10897, %v10228
  %v10899 = vadd.f32 %v10898, %v10260
  %v10900 = vadd.f32 %v10899, %v10292
  %v10901 = vadd.f32 %v10900, %v10324
  %v10902 = vadd.f32 %v10901, %v10356
  %v10903 = vrot.slane %v10902, 4
  %v10904 = vadd.f32 %v10902, %v10903
  %v10905 = vrot.slane %v10904, 2
  %v10906 = vadd.f32 %v10904, %v10905
  %v10907 = vrot.slane %v10906, 1
  %v10908 = vadd.f32 %v10906, %v10907
  %v10909 = vadd.f32 %v9877, %v9909
  %v10910 = vadd.f32 %v10909, %v9941
  %v10911 = vadd.f32 %v10910, %v9973
  %v10912 = vadd.f32 %v10911, %v10005
  %v10913 = vadd.f32 %v10912, %v10037
  %v10914 = vadd.f32 %v10913, %v10069
  %v10915 = vadd.f32 %v10914, %v10101
  %v10916 = vadd.f32 %v10915, %v10133
  %v10917 = vadd.f32 %v10916, %v10165
  %v10918 = vadd.f32 %v10917, %v10197
  %v10919 = vadd.f32 %v10918, %v10229
  %v10920 = vadd.f32 %v10919, %v10261
  %v10921 = vadd.f32 %v10920, %v10293
  %v10922 = vadd.f32 %v10921, %v10325
  %v10923 = vadd.f32 %v10922, %v10357
  %v10924 = vrot.slane %v10923, 4
  %v10925 = vadd.f32 %v10923, %v10924
  %v10926 = vrot.slane %v10925, 2
  %v10927 = vadd.f32 %v10925, %v10926
  %v10928 = vrot.slane %v10927, 1
  %v10929 = vadd.f32 %v10927, %v10928
  %v10930 = vadd.f32 %v9878, %v9910
  %v10931 = vadd.f32 %v10930, %v9942
  %v10932 = vadd.f32 %v10931, %v9974
  %v10933 = vadd.f32 %v10932, %v10006
  %v10934 = vadd.f32 %v10933, %v10038
  %v10935 = vadd.f32 %v10934, %v10070
  %v10936 = vadd.f32 %v10935, %v10102
  %v10937 = vadd.f32 %v10936, %v10134
  %v10938 = vadd.f32 %v10937, %v10166
  %v10939 = vadd.f32 %v10938, %v10198
  %v10940 = vadd.f32 %v10939, %v10230
  %v10941 = vadd.f32 %v10940, %v10262
  %v10942 = vadd.f32 %v10941, %v10294
  %v10943 = vadd.f32 %v10942, %v10326
  %v10944 = vadd.f32 %v10943, %v10358
  %v10945 = vrot.slane %v10944, 4
  %v10946 = vadd.f32 %v10944, %v10945
  %v10947 = vrot.slane %v10946, 2
  %v10948 = vadd.f32 %v10946, %v10947
  %v10949 = vrot.slane %v10948, 1
  %v10950 = vadd.f32 %v10948, %v10949
  %v10951 = vadd.f32 %v9879, %v9911
  %v10952 = vadd.f32 %v10951, %v9943
  %v10953 = vadd.f32 %v10952, %v9975
  %v10954 = vadd.f32 %v10953, %v10007
  %v10955 = vadd.f32 %v10954, %v10039
  %v10956 = vadd.f32 %v10955, %v10071
  %v10957 = vadd.f32 %v10956, %v10103
  %v10958 = vadd.f32 %v10957, %v10135
  %v10959 = vadd.f32 %v10958, %v10167
  %v10960 = vadd.f32 %v10959, %v10199
  %v10961 = vadd.f32 %v10960, %v10231
  %v10962 = vadd.f32 %v10961, %v10263
  %v10963 = vadd.f32 %v10962, %v10295
  %v10964 = vadd.f32 %v10963, %v10327
  %v10965 = vadd.f32 %v10964, %v10359
  %v10966 = vrot.slane %v10965, 4
  %v10967 = vadd.f32 %v10965, %v10966
  %v10968 = vrot.slane %v10967, 2
  %v10969 = vadd.f32 %v10967, %v10968
  %v10970 = vrot.slane %v10969, 1
  %v10971 = vadd.f32 %v10969, %v10970
  %v10972 = vadd.f32 %v9880, %v9912
  %v10973 = vadd.f32 %v10972, %v9944
  %v10974 = vadd.f32 %v10973, %v9976
  %v10975 = vadd.f32 %v10974, %v10008
  %v10976 = vadd.f32 %v10975, %v10040
  %v10977 = vadd.f32 %v10976, %v10072
  %v10978 = vadd.f32 %v10977, %v10104
  %v10979 = vadd.f32 %v10978, %v10136
  %v10980 = vadd.f32 %v10979, %v10168
  %v10981 = vadd.f32 %v10980, %v10200
  %v10982 = vadd.f32 %v10981, %v10232
  %v10983 = vadd.f32 %v10982, %v10264
  %v10984 = vadd.f32 %v10983, %v10296
  %v10985 = vadd.f32 %v10984, %v10328
  %v10986 = vadd.f32 %v10985, %v10360
  %v10987 = vrot.slane %v10986, 4
  %v10988 = vadd.f32 %v10986, %v10987
  %v10989 = vrot.slane %v10988, 2
  %v10990 = vadd.f32 %v10988, %v10989
  %v10991 = vrot.slane %v10990, 1
  %v10992 = vadd.f32 %v10990, %v10991
  %v10993 = vadd.f32 %v9881, %v9913
  %v10994 = vadd.f32 %v10993, %v9945
  %v10995 = vadd.f32 %v10994, %v9977
  %v10996 = vadd.f32 %v10995, %v10009
  %v10997 = vadd.f32 %v10996, %v10041
  %v10998 = vadd.f32 %v10997, %v10073
  %v10999 = vadd.f32 %v10998, %v10105
  %v11000 = vadd.f32 %v10999, %v10137
  %v11001 = vadd.f32 %v11000, %v10169
  %v11002 = vadd.f32 %v11001, %v10201
  %v11003 = vadd.f32 %v11002, %v10233
  %v11004 = vadd.f32 %v11003, %v10265
  %v11005 = vadd.f32 %v11004, %v10297
  %v11006 = vadd.f32 %v11005, %v10329
  %v11007 = vadd.f32 %v11006, %v10361
  %v11008 = vrot.slane %v11007, 4
  %v11009 = vadd.f32 %v11007, %v11008
  %v11010 = vrot.slane %v11009, 2
  %v11011 = vadd.f32 %v11009, %v11010
  %v11012 = vrot.slane %v11011, 1
  %v11013 = vadd.f32 %v11011, %v11012
  %v11014 = vadd.f32 %v9882, %v9914
  %v11015 = vadd.f32 %v11014, %v9946
  %v11016 = vadd.f32 %v11015, %v9978
  %v11017 = vadd.f32 %v11016, %v10010
  %v11018 = vadd.f32 %v11017, %v10042
  %v11019 = vadd.f32 %v11018, %v10074
  %v11020 = vadd.f32 %v11019, %v10106
  %v11021 = vadd.f32 %v11020, %v10138
  %v11022 = vadd.f32 %v11021, %v10170
  %v11023 = vadd.f32 %v11022, %v10202
  %v11024 = vadd.f32 %v11023, %v10234
  %v11025 = vadd.f32 %v11024, %v10266
  %v11026 = vadd.f32 %v11025, %v10298
  %v11027 = vadd.f32 %v11026, %v10330
  %v11028 = vadd.f32 %v11027, %v10362
  %v11029 = vrot.slane %v11028, 4
  %v11030 = vadd.f32 %v11028, %v11029
  %v11031 = vrot.slane %v11030, 2
  %v11032 = vadd.f32 %v11030, %v11031
  %v11033 = vrot.slane %v11032, 1
  %v11034 = vadd.f32 %v11032, %v11033
  %s11035 = sld [smem:[#allocation2]]
  %v11036 = vstv %s11035
  %v11037 = vadd.f32 %v10383, %v11036
  %v11038 = vadd.f32 %v10404, %v11036
  %v11039 = vadd.f32 %v10425, %v11036
  %v11040 = vadd.f32 %v10446, %v11036
  %v11041 = vadd.f32 %v10467, %v11036
  %v11042 = vadd.f32 %v10488, %v11036
  %v11043 = vadd.f32 %v10509, %v11036
  %v11044 = vadd.f32 %v10530, %v11036
  %v11045 = vadd.f32 %v10551, %v11036
  %v11046 = vadd.f32 %v10572, %v11036
  %v11047 = vadd.f32 %v10593, %v11036
  %v11048 = vadd.f32 %v10614, %v11036
  %v11049 = vadd.f32 %v10635, %v11036
  %v11050 = vadd.f32 %v10656, %v11036
  %v11051 = vadd.f32 %v10677, %v11036
  %v11052 = vadd.f32 %v10698, %v11036
  %v11053 = vadd.f32 %v10719, %v11036
  %v11054 = vadd.f32 %v10740, %v11036
  %v11055 = vadd.f32 %v10761, %v11036
  %v11056 = vadd.f32 %v10782, %v11036
  %v11057 = vadd.f32 %v10803, %v11036
  %v11058 = vadd.f32 %v10824, %v11036
  %v11059 = vadd.f32 %v10845, %v11036
  %v11060 = vadd.f32 %v10866, %v11036
  %v11061 = vadd.f32 %v10887, %v11036
  %v11062 = vadd.f32 %v10908, %v11036
  %v11063 = vadd.f32 %v10929, %v11036
  %v11064 = vadd.f32 %v10950, %v11036
  %v11065 = vadd.f32 %v10971, %v11036
  %v11066 = vadd.f32 %v10992, %v11036
  %v11067 = vadd.f32 %v11013, %v11036
  %v11068 = vadd.f32 %v11034, %v11036
  %v11101 = vcombine.low %v11037, %v11038
  %v11102 = vcombine.low %v11039, %v11040
  %v11103 = vcombine.low %v11041, %v11042
  %v11104 = vcombine.low %v11043, %v11044
  %v11106 = vunpack.c.l.s4 1966171168
  %v11107 = vunpack.c.0.s8 %v11106
  %v11108 = vlaneseq
  %v11109 = vshrl.u32 %v11108, 7
  %v11110 = vsub.s32 %v11107, %v11109
  %v11111 = vrot.slane %v11101, %v11110
  %v11113 = vunpack.c.l.s4 1966171168
  %v11114 = vunpack.c.0.s8 %v11113
  %v11115 = vlaneseq
  %v11116 = vshrl.u32 %v11115, 7
  %v11117 = vsub.s32 %v11114, %v11116
  %v11118 = vrot.slane %v11102, %v11117
  %v11120 = vunpack.c.l.s4 1966171168
  %v11121 = vunpack.c.0.s8 %v11120
  %v11122 = vlaneseq
  %v11123 = vshrl.u32 %v11122, 7
  %v11124 = vsub.s32 %v11121, %v11123
  %v11125 = vrot.slane %v11103, %v11124
  %v11127 = vunpack.c.l.s4 1966171168
  %v11128 = vunpack.c.0.s8 %v11127
  %v11129 = vlaneseq
  %v11130 = vshrl.u32 %v11129, 7
  %v11131 = vsub.s32 %v11128, %v11130
  %v11132 = vrot.slane %v11104, %v11131
  %v11133 = vcombine.low %v11111, %v11118
  %v11134 = vcombine.low %v11125, %v11132
  %v11136 = vunpack.c.l.s4 1966171168
  %v11137 = vunpack.c.0.s8 %v11136
  %v11138 = vlaneseq
  %v11139 = vshrl.u32 %v11138, 7
  %v11140 = vsub.s32 %v11137, %v11139
  %v11141 = vrot.slane %v11133, %v11140
  %v11143 = vunpack.c.l.s4 1966171168
  %v11144 = vunpack.c.0.s8 %v11143
  %v11145 = vlaneseq
  %v11146 = vshrl.u32 %v11145, 7
  %v11147 = vsub.s32 %v11144, %v11146
  %v11148 = vrot.slane %v11134, %v11147
  %v11149 = vcombine.low %v11141, %v11148
  %v11150 = vcombine.low %v11045, %v11046
  %v11151 = vcombine.low %v11047, %v11048
  %v11152 = vcombine.low %v11049, %v11050
  %v11153 = vcombine.low %v11051, %v11052
  %v11155 = vunpack.c.l.s4 1966171168
  %v11156 = vunpack.c.0.s8 %v11155
  %v11157 = vlaneseq
  %v11158 = vshrl.u32 %v11157, 7
  %v11159 = vsub.s32 %v11156, %v11158
  %v11160 = vrot.slane %v11150, %v11159
  %v11162 = vunpack.c.l.s4 1966171168
  %v11163 = vunpack.c.0.s8 %v11162
  %v11164 = vlaneseq
  %v11165 = vshrl.u32 %v11164, 7
  %v11166 = vsub.s32 %v11163, %v11165
  %v11167 = vrot.slane %v11151, %v11166
  %v11169 = vunpack.c.l.s4 1966171168
  %v11170 = vunpack.c.0.s8 %v11169
  %v11171 = vlaneseq
  %v11172 = vshrl.u32 %v11171, 7
  %v11173 = vsub.s32 %v11170, %v11172
  %v11174 = vrot.slane %v11152, %v11173
  %v11176 = vunpack.c.l.s4 1966171168
  %v11177 = vunpack.c.0.s8 %v11176
  %v11178 = vlaneseq
  %v11179 = vshrl.u32 %v11178, 7
  %v11180 = vsub.s32 %v11177, %v11179
  %v11181 = vrot.slane %v11153, %v11180
  %v11182 = vcombine.low %v11160, %v11167
  %v11183 = vcombine.low %v11174, %v11181
  %v11185 = vunpack.c.l.s4 1966171168
  %v11186 = vunpack.c.0.s8 %v11185
  %v11187 = vlaneseq
  %v11188 = vshrl.u32 %v11187, 7
  %v11189 = vsub.s32 %v11186, %v11188
  %v11190 = vrot.slane %v11182, %v11189
  %v11192 = vunpack.c.l.s4 1966171168
  %v11193 = vunpack.c.0.s8 %v11192
  %v11194 = vlaneseq
  %v11195 = vshrl.u32 %v11194, 7
  %v11196 = vsub.s32 %v11193, %v11195
  %v11197 = vrot.slane %v11183, %v11196
  %v11198 = vcombine.low %v11190, %v11197
  %v11199 = vcombine.low %v11053, %v11054
  %v11200 = vcombine.low %v11055, %v11056
  %v11201 = vcombine.low %v11057, %v11058
  %v11202 = vcombine.low %v11059, %v11060
  %v11204 = vunpack.c.l.s4 1966171168
  %v11205 = vunpack.c.0.s8 %v11204
  %v11206 = vlaneseq
  %v11207 = vshrl.u32 %v11206, 7
  %v11208 = vsub.s32 %v11205, %v11207
  %v11209 = vrot.slane %v11199, %v11208
  %v11211 = vunpack.c.l.s4 1966171168
  %v11212 = vunpack.c.0.s8 %v11211
  %v11213 = vlaneseq
  %v11214 = vshrl.u32 %v11213, 7
  %v11215 = vsub.s32 %v11212, %v11214
  %v11216 = vrot.slane %v11200, %v11215
  %v11218 = vunpack.c.l.s4 1966171168
  %v11219 = vunpack.c.0.s8 %v11218
  %v11220 = vlaneseq
  %v11221 = vshrl.u32 %v11220, 7
  %v11222 = vsub.s32 %v11219, %v11221
  %v11223 = vrot.slane %v11201, %v11222
  %v11225 = vunpack.c.l.s4 1966171168
  %v11226 = vunpack.c.0.s8 %v11225
  %v11227 = vlaneseq
  %v11228 = vshrl.u32 %v11227, 7
  %v11229 = vsub.s32 %v11226, %v11228
  %v11230 = vrot.slane %v11202, %v11229
  %v11231 = vcombine.low %v11209, %v11216
  %v11232 = vcombine.low %v11223, %v11230
  %v11234 = vunpack.c.l.s4 1966171168
  %v11235 = vunpack.c.0.s8 %v11234
  %v11236 = vlaneseq
  %v11237 = vshrl.u32 %v11236, 7
  %v11238 = vsub.s32 %v11235, %v11237
  %v11239 = vrot.slane %v11231, %v11238
  %v11241 = vunpack.c.l.s4 1966171168
  %v11242 = vunpack.c.0.s8 %v11241
  %v11243 = vlaneseq
  %v11244 = vshrl.u32 %v11243, 7
  %v11245 = vsub.s32 %v11242, %v11244
  %v11246 = vrot.slane %v11232, %v11245
  %v11247 = vcombine.low %v11239, %v11246
  %v11248 = vcombine.low %v11061, %v11062
  %v11249 = vcombine.low %v11063, %v11064
  %v11250 = vcombine.low %v11065, %v11066
  %v11251 = vcombine.low %v11067, %v11068
  %v11253 = vunpack.c.l.s4 1966171168
  %v11254 = vunpack.c.0.s8 %v11253
  %v11255 = vlaneseq
  %v11256 = vshrl.u32 %v11255, 7
  %v11257 = vsub.s32 %v11254, %v11256
  %v11258 = vrot.slane %v11248, %v11257
  %v11260 = vunpack.c.l.s4 1966171168
  %v11261 = vunpack.c.0.s8 %v11260
  %v11262 = vlaneseq
  %v11263 = vshrl.u32 %v11262, 7
  %v11264 = vsub.s32 %v11261, %v11263
  %v11265 = vrot.slane %v11249, %v11264
  %v11267 = vunpack.c.l.s4 1966171168
  %v11268 = vunpack.c.0.s8 %v11267
  %v11269 = vlaneseq
  %v11270 = vshrl.u32 %v11269, 7
  %v11271 = vsub.s32 %v11268, %v11270
  %v11272 = vrot.slane %v11250, %v11271
  %v11274 = vunpack.c.l.s4 1966171168
  %v11275 = vunpack.c.0.s8 %v11274
  %v11276 = vlaneseq
  %v11277 = vshrl.u32 %v11276, 7
  %v11278 = vsub.s32 %v11275, %v11277
  %v11279 = vrot.slane %v11251, %v11278
  %v11280 = vcombine.low %v11258, %v11265
  %v11281 = vcombine.low %v11272, %v11279
  %v11283 = vunpack.c.l.s4 1966171168
  %v11284 = vunpack.c.0.s8 %v11283
  %v11285 = vlaneseq
  %v11286 = vshrl.u32 %v11285, 7
  %v11287 = vsub.s32 %v11284, %v11286
  %v11288 = vrot.slane %v11280, %v11287
  %v11290 = vunpack.c.l.s4 1966171168
  %v11291 = vunpack.c.0.s8 %v11290
  %v11292 = vlaneseq
  %v11293 = vshrl.u32 %v11292, 7
  %v11294 = vsub.s32 %v11291, %v11293
  %v11295 = vrot.slane %v11281, %v11294
  %v11296 = vcombine.low %v11288, %v11295
  %11301 = vst [vmem:[%s8] sm:$0xff] %v11149
  %11302 = vst [vmem:[%s8 + $0x8] sm:$0xff] %v11198
  %11303 = vst [vmem:[%s8 + $0x10] sm:$0xff] %v11247
  %11304 = vst [vmem:[%s8 + $0x18] sm:$0xff] %v11296
  // Predicated region
  $region34: #{_stdnet_forward_impl.1} parent=0 // pred_check
    _
  $region35: #{_stdnet_forward_impl.1} parent=0 // pred_check_branch
    %11306 = sbr.rel (0) target = $region37
  $region36: #{_stdnet_forward_impl.1} parent=0 // pred_region
    _
  $region37: #{_stdnet_forward_impl.1} parent=0 // pred_fallthru
    _
  // Predicated region
  $region38: #{_stdnet_forward_impl.1} parent=0 // pred_check
    _
  $region39: #{_stdnet_forward_impl.1} parent=0 // pred_check_branch
    %11308 = sbr.rel (0) target = $region41
  $region40: #{_stdnet_forward_impl.1} parent=0 // pred_region
    _
  $region41: #{_stdnet_forward_impl.1} parent=0 // pred_fallthru
    _

</llo_original>
